<compile_context>
chip_gen: v6e
topology: v6e:2x2x1
jax: 0.10.0
libtpu: 0.0.40
codegen_flags: <defaults>
</compile_context>

<pallas_src>
import functools

import numpy as np
import jax
import jax.numpy as jnp
from jax.experimental import pallas as pl
from jax.experimental.pallas import tpu as pltpu


# ---------------------------------------------------------------------------
# Static network geometry (the module requires 32x32 inputs: 16*5*5 flatten).
# ---------------------------------------------------------------------------
K = 5
H1 = W1 = 32
C1, OC1 = 3, 8
OH1 = OW1 = H1 - K + 1        # 28
PH1 = PW1 = OH1 // 2          # 14
C2, OC2 = 8, 16
H2 = W2 = PH1                 # 14
OH2 = OW2 = H2 - K + 1        # 10
PH2 = PW2 = OH2 // 2          # 5
FC1, FC2, FC3 = 120, 84, 10
EPS = 1e-5


# ---------------------------------------------------------------------------
# The single fused Pallas kernel
# ---------------------------------------------------------------------------
def _lenet_kernel(
    x_ref,                               # (N*32, 96)  rows=(n,h), lanes=(w*3+c)
    bn1_g_ref, bn1_b_ref,                # (1, 3)
    g1_ref, g1t_ref,                     # (96, 3), (3, 96)
    b1_ref, bias1_ref,                   # (5, 96, 224), (1, 224)
    s1_ref, l1_ref,                      # (2, 14, 28), (2, 224, 112)
    bn2_g_ref, bn2_b_ref,                # (1, 8)
    g2_ref, g2t_ref,                     # (112, 8), (8, 112)
    b2_ref, bias2_ref,                   # (5, 112, 160), (1, 160)
    s2_ref, l2_ref,                      # (2, 5, 10), (2, 160, 80)
    fc1_w_ref, fc1_b_ref,                # (5, 80, 120), (1, 120)
    fc2_w_ref, fc2_b_ref,                # (120, 84), (1, 84)
    fc3_w_ref, fc3_b_ref,                # (84, 10), (1, 10)
    out_ref,                             # (N, 10)
    xbn1_ref,                            # scratch VMEM (N*32, 96)
    xbn2_ref,                            # scratch VMEM (N*14, 112)
    p2_ref,                              # scratch VMEM (N*5, 80)
    *, n_batch,
):
    f32 = jnp.float32

    def dot(a, b):
        return jnp.dot(a, b, preferred_element_type=f32)

    # -------------------- bn1 (batch statistics) ----------------------------
    x = x_ref[...]                                            # (N*32, 96)
    inv1 = 1.0 / float(n_batch * H1 * W1)
    ch_sum = dot(jnp.sum(x, axis=0, keepdims=True), g1_ref[...])       # (1, 3)
    mean1_t = dot(ch_sum * inv1, g1t_ref[...])                         # (1, 96)
    xc = x - mean1_t
    var1 = dot(jnp.sum(xc * xc, axis=0, keepdims=True), g1_ref[...]) * inv1
    scale1_t = dot(bn1_g_ref[...] * jax.lax.rsqrt(var1 + EPS), g1t_ref[...])
    shift1_t = dot(bn1_b_ref[...], g1t_ref[...])
    xbn1_ref[...] = xc * scale1_t + shift1_t

    # -------------------- conv1 + relu + 2x2 maxpool -------------------------
    p1 = []
    for n in range(n_batch):
        acc = dot(xbn1_ref[n * H1: n * H1 + OH1, :], b1_ref[0])
        for i in range(1, K):
            acc = acc + dot(xbn1_ref[n * H1 + i: n * H1 + i + OH1, :], b1_ref[i])
        y = jnp.maximum(acc + bias1_ref[...], 0.0)                      # (28, 224)
        rp = jnp.maximum(dot(s1_ref[0], y), dot(s1_ref[1], y))          # (14, 224)
        p1.append(jnp.maximum(dot(rp, l1_ref[0]), dot(rp, l1_ref[1])))  # (14, 112)

    # -------------------- bn2 (batch statistics) ----------------------------
    inv2 = 1.0 / float(n_batch * H2 * W2)
    rs2 = p1[0].sum(axis=0, keepdims=True)
    for n in range(1, n_batch):
        rs2 = rs2 + p1[n].sum(axis=0, keepdims=True)
    mean2_t = dot(dot(rs2, g2_ref[...]) * inv2, g2t_ref[...])           # (1, 112)
    xc2 = [p - mean2_t for p in p1]
    sq2 = (xc2[0] * xc2[0]).sum(axis=0, keepdims=True)
    for n in range(1, n_batch):
        sq2 = sq2 + (xc2[n] * xc2[n]).sum(axis=0, keepdims=True)
    var2 = dot(sq2, g2_ref[...]) * inv2                                 # (1, 8)
    scale2_t = dot(bn2_g_ref[...] * jax.lax.rsqrt(var2 + EPS), g2t_ref[...])
    shift2_t = dot(bn2_b_ref[...], g2t_ref[...])
    for n in range(n_batch):
        xbn2_ref[n * H2:(n + 1) * H2, :] = xc2[n] * scale2_t + shift2_t

    # -------------------- conv2 + relu + 2x2 maxpool -------------------------
    for n in range(n_batch):
        acc = dot(xbn2_ref[n * H2: n * H2 + OH2, :], b2_ref[0])
        for i in range(1, K):
            acc = acc + dot(xbn2_ref[n * H2 + i: n * H2 + i + OH2, :], b2_ref[i])
        y = jnp.maximum(acc + bias2_ref[...], 0.0)                      # (10, 160)
        rp = jnp.maximum(dot(s2_ref[0], y), dot(s2_ref[1], y))          # (5, 160)
        p2_ref[n * PH2:(n + 1) * PH2, :] = jnp.maximum(
            dot(rp, l2_ref[0]), dot(rp, l2_ref[1]))                     # (5, 80)

    # -------------------- fc1 -> fc2 -> fc3 -> softmax -----------------------
    for n in range(n_batch):
        h = dot(p2_ref[n * PH2: n * PH2 + 1, :], fc1_w_ref[0])
        for ph in range(1, PH2):
            h = h + dot(p2_ref[n * PH2 + ph: n * PH2 + ph + 1, :], fc1_w_ref[ph])
        h = jnp.maximum(h + fc1_b_ref[...], 0.0)                        # (1, 120)
        h = jnp.maximum(dot(h, fc2_w_ref[...]) + fc2_b_ref[...], 0.0)   # (1, 84)
        logits = dot(h, fc3_w_ref[...]) + fc3_b_ref[...]                # (1, 10)
        z = jnp.exp(logits - jnp.max(logits, axis=-1, keepdims=True))
        out_ref[n:n + 1, :] = z * pl.reciprocal(
            jnp.sum(z, axis=-1, keepdims=True), approx=True)


def _lenet_fused(x2, pp):
    n_batch = x2.shape[0] // H1
    operands = (
        x2,
        pp["bn1_g"], pp["bn1_b"], pp["g1"], pp["g1t"], pp["b1"], pp["bias1"],
        pp["s1"], pp["l1"],
        pp["bn2_g"], pp["bn2_b"], pp["g2"], pp["g2t"], pp["b2"], pp["bias2"],
        pp["s2"], pp["l2"],
        pp["fc1_w"], pp["fc1_b"], pp["fc2_w"], pp["fc2_b"], pp["fc3_w"], pp["fc3_b"],
    )
    in_specs = [pl.BlockSpec(a.shape, lambda i, nd=a.ndim: (0,) * nd)
                for a in operands]
    return pl.pallas_call(
        functools.partial(_lenet_kernel, n_batch=n_batch),
        out_shape=jax.ShapeDtypeStruct((n_batch, FC3), jnp.float32),
        grid=(1,),
        in_specs=in_specs,
        out_specs=pl.BlockSpec((n_batch, FC3), lambda i: (0, 0)),
        scratch_shapes=[
            pltpu.VMEM((n_batch * H1, W1 * C1), jnp.float32),
            pltpu.VMEM((n_batch * H2, W2 * C2), jnp.float32),
            pltpu.VMEM((n_batch * PH2, PW2 * OC2), jnp.float32),
        ],
        compiler_params=pltpu.CompilerParams(
            dimension_semantics=("arbitrary",),
            vmem_limit_bytes=32 * 1024 * 1024,
        ),
    )(*operands)


@jax.jit
def forward(prepped, x_nchw):
    # NCHW (PyTorch) -> lane-dense 2-D slab (rows=(n,h), lanes=(w*C+c)).
    n = x_nchw.shape[0]
    x2 = jnp.transpose(x_nchw.astype(jnp.float32), (0, 2, 3, 1)).reshape(
        n * H1, W1 * C1)
    return _lenet_fused(x2, prepped)


# ---------------------------------------------------------------------------
# Parameter init (matches the PyTorch module's shapes/default-init style)
# ---------------------------------------------------------------------------
def init_params(key):
    ks = jax.random.split(key, 10)

    def u(k, shape, fan_in):
        bound = 1.0 / jnp.sqrt(fan_in)
        return jax.random.uniform(k, shape, jnp.float32, -bound, bound)

    return {
        "bn1_g": jnp.ones((C1,), jnp.float32),
        "bn1_b": jnp.zeros((C1,), jnp.float32),
        "bn2_g": jnp.ones((C2,), jnp.float32),
        "bn2_b": jnp.zeros((C2,), jnp.float32),
        "conv1_w": u(ks[0], (OC1, C1, K, K), C1 * K * K),
        "conv1_b": u(ks[1], (OC1,), C1 * K * K),
        "conv2_w": u(ks[2], (OC2, C2, K, K), C2 * K * K),
        "conv2_b": u(ks[3], (OC2,), C2 * K * K),
        "fc1_w": u(ks[4], (OC2 * PH2 * PW2, FC1), OC2 * PH2 * PW2),
        "fc1_b": u(ks[5], (FC1,), OC2 * PH2 * PW2),
        "fc2_w": u(ks[6], (FC1, FC2), FC1),
        "fc2_b": u(ks[7], (FC2,), FC1),
        "fc3_w": u(ks[8], (FC2, FC3), FC2),
        "fc3_b": u(ks[9], (FC3,), FC2),
    }


def prepare_params(p):
    """One-time layout preparation (hoisted out of the per-call path):
    banded conv weights, pool selection matrices, channel-gather matrices,
    tiled biases and flatten-order-permuted fc1 weights."""

    def chan_gather(width, chans):
        g = np.zeros((width * chans, chans), np.float32)
        for w in range(width):
            for c in range(chans):
                g[w * chans + c, c] = 1.0
        return g

    def banded_conv(w_oihw, w_in, c_in, ow_out, oc_out):
        # B[i, w'*Cin + c, ow*OC + oc] = W[oc, c, i, w'-ow]  (0 <= w'-ow < K)
        w = np.asarray(w_oihw, np.float32)
        b = np.zeros((K, w_in * c_in, ow_out * oc_out), np.float32)
        for i in range(K):
            for ow in range(ow_out):
                for j in range(K):
                    wp = ow + j
                    b[i, wp * c_in:(wp + 1) * c_in,
                      ow * oc_out:(ow + 1) * oc_out] = w[:, :, i, j].T
        return b

    def pool_row_sel(oh):
        s = np.zeros((2, oh // 2, oh), np.float32)
        for ph in range(oh // 2):
            s[0, ph, 2 * ph] = 1.0
            s[1, ph, 2 * ph + 1] = 1.0
        return s

    def pool_lane_sel(ow, oc_n):
        l = np.zeros((2, ow * oc_n, (ow // 2) * oc_n), np.float32)
        for pw in range(ow // 2):
            for oc in range(oc_n):
                l[0, (2 * pw) * oc_n + oc, pw * oc_n + oc] = 1.0
                l[1, (2 * pw + 1) * oc_n + oc, pw * oc_n + oc] = 1.0
        return l

    # fc1 weights permuted to the kernel's pooled layout (ph rows, pw*OC2+oc lanes),
    # matching torch's x.view(-1, 16*5*5) C,H,W flatten order.
    fc1_w = np.asarray(p["fc1_w"], np.float32)              # (400, 120)
    fc1_wp = np.zeros((PH2, PW2 * OC2, FC1), np.float32)
    for ph in range(PH2):
        for pw in range(PW2):
            for oc in range(OC2):
                fc1_wp[ph, pw * OC2 + oc, :] = fc1_w[oc * PH2 * PW2 + ph * PW2 + pw, :]

    g1 = chan_gather(W1, C1)
    g2 = chan_gather(W2, C2)
    pp = {
        "bn1_g": np.asarray(p["bn1_g"], np.float32).reshape(1, C1),
        "bn1_b": np.asarray(p["bn1_b"], np.float32).reshape(1, C1),
        "g1": g1, "g1t": g1.T.copy(),
        "b1": banded_conv(p["conv1_w"], W1, C1, OW1, OC1),
        "bias1": np.tile(np.asarray(p["conv1_b"], np.float32), OW1).reshape(1, OW1 * OC1),
        "s1": pool_row_sel(OH1),
        "l1": pool_lane_sel(OW1, OC1),
        "bn2_g": np.asarray(p["bn2_g"], np.float32).reshape(1, C2),
        "bn2_b": np.asarray(p["bn2_b"], np.float32).reshape(1, C2),
        "g2": g2, "g2t": g2.T.copy(),
        "b2": banded_conv(p["conv2_w"], W2, C2, OW2, OC2),
        "bias2": np.tile(np.asarray(p["conv2_b"], np.float32), OW2).reshape(1, OW2 * OC2),
        "s2": pool_row_sel(OH2),
        "l2": pool_lane_sel(OW2, OC2),
        "fc1_w": fc1_wp,
        "fc1_b": np.asarray(p["fc1_b"], np.float32).reshape(1, FC1),
        "fc2_w": np.asarray(p["fc2_w"], np.float32),
        "fc2_b": np.asarray(p["fc2_b"], np.float32).reshape(1, FC2),
        "fc3_w": np.asarray(p["fc3_w"], np.float32),
        "fc3_b": np.asarray(p["fc3_b"], np.float32).reshape(1, FC3),
    }
    return {k: jnp.asarray(v) for k, v in pp.items()}


# ---------------------------------------------------------------------------
# Pure-JAX reference (for an in-script sanity check of the fused kernel)
# ---------------------------------------------------------------------------
@jax.jit
def _reference_forward(params, x_nchw):
    x = x_nchw.astype(jnp.float32)

    def bn(x, g, b):
        mean = jnp.mean(x, axis=(0, 2, 3), keepdims=True)
        var = jnp.mean((x - mean) ** 2, axis=(0, 2, 3), keepdims=True)
        return (x - mean) * jax.lax.rsqrt(var + EPS) * g.reshape(1, -1, 1, 1) \
            + b.reshape(1, -1, 1, 1)

    def conv(x, w, b):
        y = jax.lax.conv_general_dilated(
            x, w, (1, 1), "VALID", dimension_numbers=("NCHW", "OIHW", "NCHW"))
        return y + b.reshape(1, -1, 1, 1)

    def pool(x):
        return jax.lax.reduce_window(x, -jnp.inf, jax.lax.max,
                                     (1, 1, 2, 2), (1, 1, 2, 2), "VALID")

    x = bn(x, params["bn1_g"], params["bn1_b"])
    x = pool(jax.nn.relu(conv(x, params["conv1_w"], params["conv1_b"])))
    x = bn(x, params["bn2_g"], params["bn2_b"])
    x = pool(jax.nn.relu(conv(x, params["conv2_w"], params["conv2_b"])))
    x = x.reshape(x.shape[0], -1)
    x = jax.nn.relu(x @ params["fc1_w"] + params["fc1_b"])
    x = jax.nn.relu(x @ params["fc2_w"] + params["fc2_b"])
    x = x @ params["fc3_w"] + params["fc3_b"]
    return jax.nn.softmax(x, axis=-1)


if __name__ == "__main__":
    key = jax.random.PRNGKey(0)
    pkey, xkey = jax.random.split(key)
    params = init_params(pkey)
    prepped = prepare_params(params)          # one-time layout prep

    # Module requires 32x32 spatial input (16*5*5 flatten).
    x = jax.random.normal(xkey, (2, 3, 32, 32), jnp.float32)

    out = jax.block_until_ready(forward(prepped, x))
    assert out.shape == (2, 10)
    assert bool(jnp.all(jnp.isfinite(out)))
    # softmax rows sum to ~1 (approx reciprocal on the denominator)
    assert bool(jnp.allclose(jnp.sum(out, axis=1), 1.0, atol=5e-3))

    # Check against a pure-JAX reference of the same (training-mode BN) model.
    ref = jax.block_until_ready(_reference_forward(params, x))
    assert float(jnp.max(jnp.abs(out - ref))) < 1e-2

    print("KERNEL_OK")
</pallas_src>

<mosaic_0001>
module attributes {stable_mosaic.version = 11 : i64} {
  func.func @_lenet_kernel(%arg0: i32, %arg1: memref<64x96xf32, #tpu.memory_space<vmem>>, %arg2: memref<1x3xf32, #tpu.memory_space<vmem>>, %arg3: memref<1x3xf32, #tpu.memory_space<vmem>>, %arg4: memref<96x3xf32, #tpu.memory_space<vmem>>, %arg5: memref<3x96xf32, #tpu.memory_space<vmem>>, %arg6: memref<5x96x224xf32, #tpu.memory_space<vmem>>, %arg7: memref<1x224xf32, #tpu.memory_space<vmem>>, %arg8: memref<2x14x28xf32, #tpu.memory_space<vmem>>, %arg9: memref<2x224x112xf32, #tpu.memory_space<vmem>>, %arg10: memref<1x8xf32, #tpu.memory_space<vmem>>, %arg11: memref<1x8xf32, #tpu.memory_space<vmem>>, %arg12: memref<112x8xf32, #tpu.memory_space<vmem>>, %arg13: memref<8x112xf32, #tpu.memory_space<vmem>>, %arg14: memref<5x112x160xf32, #tpu.memory_space<vmem>>, %arg15: memref<1x160xf32, #tpu.memory_space<vmem>>, %arg16: memref<2x5x10xf32, #tpu.memory_space<vmem>>, %arg17: memref<2x160x80xf32, #tpu.memory_space<vmem>>, %arg18: memref<5x80x120xf32, #tpu.memory_space<vmem>>, %arg19: memref<1x120xf32, #tpu.memory_space<vmem>>, %arg20: memref<120x84xf32, #tpu.memory_space<vmem>>, %arg21: memref<1x84xf32, #tpu.memory_space<vmem>>, %arg22: memref<84x10xf32, #tpu.memory_space<vmem>>, %arg23: memref<1x10xf32, #tpu.memory_space<vmem>>, %arg24: memref<2x10xf32, #tpu.memory_space<vmem>>, %arg25: memref<64x96xf32, #tpu.memory_space<vmem>>, %arg26: memref<28x112xf32, #tpu.memory_space<vmem>>, %arg27: memref<10x80xf32, #tpu.memory_space<vmem>>) attributes {dimension_semantics = [#tpu.dimension_semantics<arbitrary>], iteration_bounds = array<i64: 1>, scalar_prefetch = 0 : i64, scratch_operands = 3 : i64, tpu.core_type = #tpu.core_type<tc>, window_params = [{pipeline_mode = #tpu.pipeline_mode<synchronous>, transform_indices = @transform_0, window_bounds = array<i64: 64, 96>}, {pipeline_mode = #tpu.pipeline_mode<synchronous>, transform_indices = @transform_1, window_bounds = array<i64: 1, 3>}, {pipeline_mode = #tpu.pipeline_mode<synchronous>, transform_indices = @transform_2, window_bounds = array<i64: 1, 3>}, {pipeline_mode = #tpu.pipeline_mode<synchronous>, transform_indices = @transform_3, window_bounds = array<i64: 96, 3>}, {pipeline_mode = #tpu.pipeline_mode<synchronous>, transform_indices = @transform_4, window_bounds = array<i64: 3, 96>}, {pipeline_mode = #tpu.pipeline_mode<synchronous>, transform_indices = @transform_5, window_bounds = array<i64: 5, 96, 224>}, {pipeline_mode = #tpu.pipeline_mode<synchronous>, transform_indices = @transform_6, window_bounds = array<i64: 1, 224>}, {pipeline_mode = #tpu.pipeline_mode<synchronous>, transform_indices = @transform_7, window_bounds = array<i64: 2, 14, 28>}, {pipeline_mode = #tpu.pipeline_mode<synchronous>, transform_indices = @transform_8, window_bounds = array<i64: 2, 224, 112>}, {pipeline_mode = #tpu.pipeline_mode<synchronous>, transform_indices = @transform_9, window_bounds = array<i64: 1, 8>}, {pipeline_mode = #tpu.pipeline_mode<synchronous>, transform_indices = @transform_10, window_bounds = array<i64: 1, 8>}, {pipeline_mode = #tpu.pipeline_mode<synchronous>, transform_indices = @transform_11, window_bounds = array<i64: 112, 8>}, {pipeline_mode = #tpu.pipeline_mode<synchronous>, transform_indices = @transform_12, window_bounds = array<i64: 8, 112>}, {pipeline_mode = #tpu.pipeline_mode<synchronous>, transform_indices = @transform_13, window_bounds = array<i64: 5, 112, 160>}, {pipeline_mode = #tpu.pipeline_mode<synchronous>, transform_indices = @transform_14, window_bounds = array<i64: 1, 160>}, {pipeline_mode = #tpu.pipeline_mode<synchronous>, transform_indices = @transform_15, window_bounds = array<i64: 2, 5, 10>}, {pipeline_mode = #tpu.pipeline_mode<synchronous>, transform_indices = @transform_16, window_bounds = array<i64: 2, 160, 80>}, {pipeline_mode = #tpu.pipeline_mode<synchronous>, transform_indices = @transform_17, window_bounds = array<i64: 5, 80, 120>}, {pipeline_mode = #tpu.pipeline_mode<synchronous>, transform_indices = @transform_18, window_bounds = array<i64: 1, 120>}, {pipeline_mode = #tpu.pipeline_mode<synchronous>, transform_indices = @transform_19, window_bounds = array<i64: 120, 84>}, {pipeline_mode = #tpu.pipeline_mode<synchronous>, transform_indices = @transform_20, window_bounds = array<i64: 1, 84>}, {pipeline_mode = #tpu.pipeline_mode<synchronous>, transform_indices = @transform_21, window_bounds = array<i64: 84, 10>}, {pipeline_mode = #tpu.pipeline_mode<synchronous>, transform_indices = @transform_22, window_bounds = array<i64: 1, 10>}, {pipeline_mode = #tpu.pipeline_mode<synchronous>, transform_indices = @transform_23, window_bounds = array<i64: 2, 10>}]} {
    %c0 = arith.constant 0 : index
    %c0_0 = arith.constant 0 : index
    %0 = vector.load %arg1[%c0, %c0_0] : memref<64x96xf32, #tpu.memory_space<vmem>>, vector<64x96xf32>
    %cst = arith.constant dense<0.000000e+00> : vector<96xf32>
    %1 = vector.multi_reduction <add>, %0, %cst [0] : vector<64x96xf32> to vector<96xf32>
    %2 = vector.shape_cast %1 : vector<96xf32> to vector<1x96xf32>
    %c0_1 = arith.constant 0 : index
    %c0_2 = arith.constant 0 : index
    %3 = vector.load %arg4[%c0_1, %c0_2] : memref<96x3xf32, #tpu.memory_space<vmem>>, vector<96x3xf32>
    %cst_3 = arith.constant dense<0.000000e+00> : vector<1x3xf32>
    %4 = tpu.matmul %2, %3, %cst_3 {dimension_numbers = #tpu.dot_dimension_numbers<[1], [0], [0], [1], [0, 0, 1, 1], [], []>} : vector<1x96xf32>, vector<96x3xf32>, vector<1x3xf32> -> vector<1x3xf32>
    %cst_4 = arith.constant 4.8828125E-4 : f32
    %5 = vector.broadcast %cst_4 : f32 to vector<1x3xf32>
    %6 = arith.mulf %4, %5 : vector<1x3xf32>
    %c0_5 = arith.constant 0 : index
    %c0_6 = arith.constant 0 : index
    %7 = vector.load %arg5[%c0_5, %c0_6] : memref<3x96xf32, #tpu.memory_space<vmem>>, vector<3x96xf32>
    %cst_7 = arith.constant dense<0.000000e+00> : vector<1x96xf32>
    %8 = tpu.matmul %6, %7, %cst_7 {dimension_numbers = #tpu.dot_dimension_numbers<[1], [0], [0], [1], [0, 0, 1, 1], [], []>} : vector<1x3xf32>, vector<3x96xf32>, vector<1x96xf32> -> vector<1x96xf32>
    %9 = vector.broadcast %8 : vector<1x96xf32> to vector<64x96xf32>
    %10 = arith.subf %0, %9 : vector<64x96xf32>
    %11 = arith.mulf %10, %10 : vector<64x96xf32>
    %cst_8 = arith.constant dense<0.000000e+00> : vector<96xf32>
    %12 = vector.multi_reduction <add>, %11, %cst_8 [0] : vector<64x96xf32> to vector<96xf32>
    %13 = vector.shape_cast %12 : vector<96xf32> to vector<1x96xf32>
    %c0_9 = arith.constant 0 : index
    %c0_10 = arith.constant 0 : index
    %14 = vector.load %arg4[%c0_9, %c0_10] : memref<96x3xf32, #tpu.memory_space<vmem>>, vector<96x3xf32>
    %cst_11 = arith.constant dense<0.000000e+00> : vector<1x3xf32>
    %15 = tpu.matmul %13, %14, %cst_11 {dimension_numbers = #tpu.dot_dimension_numbers<[1], [0], [0], [1], [0, 0, 1, 1], [], []>} : vector<1x96xf32>, vector<96x3xf32>, vector<1x3xf32> -> vector<1x3xf32>
    %cst_12 = arith.constant 4.8828125E-4 : f32
    %16 = vector.broadcast %cst_12 : f32 to vector<1x3xf32>
    %17 = arith.mulf %15, %16 : vector<1x3xf32>
    %c0_13 = arith.constant 0 : index
    %c0_14 = arith.constant 0 : index
    %18 = vector.load %arg2[%c0_13, %c0_14] : memref<1x3xf32, #tpu.memory_space<vmem>>, vector<1x3xf32>
    %cst_15 = arith.constant 9.99999974E-6 : f32
    %19 = vector.broadcast %cst_15 : f32 to vector<1x3xf32>
    %20 = arith.addf %17, %19 : vector<1x3xf32>
    %21 = math.rsqrt %20 : vector<1x3xf32>
    %22 = arith.mulf %18, %21 : vector<1x3xf32>
    %c0_16 = arith.constant 0 : index
    %c0_17 = arith.constant 0 : index
    %23 = vector.load %arg5[%c0_16, %c0_17] : memref<3x96xf32, #tpu.memory_space<vmem>>, vector<3x96xf32>
    %cst_18 = arith.constant dense<0.000000e+00> : vector<1x96xf32>
    %24 = tpu.matmul %22, %23, %cst_18 {dimension_numbers = #tpu.dot_dimension_numbers<[1], [0], [0], [1], [0, 0, 1, 1], [], []>} : vector<1x3xf32>, vector<3x96xf32>, vector<1x96xf32> -> vector<1x96xf32>
    %c0_19 = arith.constant 0 : index
    %c0_20 = arith.constant 0 : index
    %25 = vector.load %arg3[%c0_19, %c0_20] : memref<1x3xf32, #tpu.memory_space<vmem>>, vector<1x3xf32>
    %c0_21 = arith.constant 0 : index
    %c0_22 = arith.constant 0 : index
    %26 = vector.load %arg5[%c0_21, %c0_22] : memref<3x96xf32, #tpu.memory_space<vmem>>, vector<3x96xf32>
    %cst_23 = arith.constant dense<0.000000e+00> : vector<1x96xf32>
    %27 = tpu.matmul %25, %26, %cst_23 {dimension_numbers = #tpu.dot_dimension_numbers<[1], [0], [0], [1], [0, 0, 1, 1], [], []>} : vector<1x3xf32>, vector<3x96xf32>, vector<1x96xf32> -> vector<1x96xf32>
    %28 = vector.broadcast %24 : vector<1x96xf32> to vector<64x96xf32>
    %29 = arith.mulf %10, %28 : vector<64x96xf32>
    %30 = vector.broadcast %27 : vector<1x96xf32> to vector<64x96xf32>
    %31 = arith.addf %29, %30 : vector<64x96xf32>
    %c0_24 = arith.constant 0 : index
    %c0_25 = arith.constant 0 : index
    %32 = vector.load %arg25[%c0_24, %c0_25] : memref<64x96xf32, #tpu.memory_space<vmem>>, vector<64x96xf32>
    tpu.vector_store %arg25[%c0_24, %c0_25], %31 {strides = array<i32>} : memref<64x96xf32, #tpu.memory_space<vmem>>, vector<64x96xf32>,
    %c0_26 = arith.constant 0 : index
    %c0_27 = arith.constant 0 : index
    %33 = vector.load %arg25[%c0_26, %c0_27] : memref<64x96xf32, #tpu.memory_space<vmem>>, vector<28x96xf32>
    %c0_28 = arith.constant 0 : index
    %c0_29 = arith.constant 0 : index
    %c0_30 = arith.constant 0 : index
    %34 = vector.load %arg6[%c0_28, %c0_29, %c0_30] : memref<5x96x224xf32, #tpu.memory_space<vmem>>, vector<1x96x224xf32>
    %35 = vector.shape_cast %34 : vector<1x96x224xf32> to vector<96x224xf32>
    %cst_31 = arith.constant dense<0.000000e+00> : vector<28x224xf32>
    %36 = tpu.matmul %33, %35, %cst_31 {dimension_numbers = #tpu.dot_dimension_numbers<[1], [0], [0], [1], [0, 0, 1, 1], [], []>} : vector<28x96xf32>, vector<96x224xf32>, vector<28x224xf32> -> vector<28x224xf32>
    %c1 = arith.constant 1 : index
    %c0_32 = arith.constant 0 : index
    %37 = vector.load %arg25[%c1, %c0_32] : memref<64x96xf32, #tpu.memory_space<vmem>>, vector<28x96xf32>
    %c1_33 = arith.constant 1 : index
    %c0_34 = arith.constant 0 : index
    %c0_35 = arith.constant 0 : index
    %38 = vector.load %arg6[%c1_33, %c0_34, %c0_35] : memref<5x96x224xf32, #tpu.memory_space<vmem>>, vector<1x96x224xf32>
    %39 = vector.shape_cast %38 : vector<1x96x224xf32> to vector<96x224xf32>
    %cst_36 = arith.constant dense<0.000000e+00> : vector<28x224xf32>
    %40 = tpu.matmul %37, %39, %cst_36 {dimension_numbers = #tpu.dot_dimension_numbers<[1], [0], [0], [1], [0, 0, 1, 1], [], []>} : vector<28x96xf32>, vector<96x224xf32>, vector<28x224xf32> -> vector<28x224xf32>
    %41 = arith.addf %36, %40 : vector<28x224xf32>
    %c2 = arith.constant 2 : index
    %c0_37 = arith.constant 0 : index
    %42 = vector.load %arg25[%c2, %c0_37] : memref<64x96xf32, #tpu.memory_space<vmem>>, vector<28x96xf32>
    %c2_38 = arith.constant 2 : index
    %c0_39 = arith.constant 0 : index
    %c0_40 = arith.constant 0 : index
    %43 = vector.load %arg6[%c2_38, %c0_39, %c0_40] : memref<5x96x224xf32, #tpu.memory_space<vmem>>, vector<1x96x224xf32>
    %44 = vector.shape_cast %43 : vector<1x96x224xf32> to vector<96x224xf32>
    %cst_41 = arith.constant dense<0.000000e+00> : vector<28x224xf32>
    %45 = tpu.matmul %42, %44, %cst_41 {dimension_numbers = #tpu.dot_dimension_numbers<[1], [0], [0], [1], [0, 0, 1, 1], [], []>} : vector<28x96xf32>, vector<96x224xf32>, vector<28x224xf32> -> vector<28x224xf32>
    %46 = arith.addf %41, %45 : vector<28x224xf32>
    %c3 = arith.constant 3 : index
    %c0_42 = arith.constant 0 : index
    %47 = vector.load %arg25[%c3, %c0_42] : memref<64x96xf32, #tpu.memory_space<vmem>>, vector<28x96xf32>
    %c3_43 = arith.constant 3 : index
    %c0_44 = arith.constant 0 : index
    %c0_45 = arith.constant 0 : index
    %48 = vector.load %arg6[%c3_43, %c0_44, %c0_45] : memref<5x96x224xf32, #tpu.memory_space<vmem>>, vector<1x96x224xf32>
    %49 = vector.shape_cast %48 : vector<1x96x224xf32> to vector<96x224xf32>
    %cst_46 = arith.constant dense<0.000000e+00> : vector<28x224xf32>
    %50 = tpu.matmul %47, %49, %cst_46 {dimension_numbers = #tpu.dot_dimension_numbers<[1], [0], [0], [1], [0, 0, 1, 1], [], []>} : vector<28x96xf32>, vector<96x224xf32>, vector<28x224xf32> -> vector<28x224xf32>
    %51 = arith.addf %46, %50 : vector<28x224xf32>
    %c4 = arith.constant 4 : index
    %c0_47 = arith.constant 0 : index
    %52 = vector.load %arg25[%c4, %c0_47] : memref<64x96xf32, #tpu.memory_space<vmem>>, vector<28x96xf32>
    %c4_48 = arith.constant 4 : index
    %c0_49 = arith.constant 0 : index
    %c0_50 = arith.constant 0 : index
    %53 = vector.load %arg6[%c4_48, %c0_49, %c0_50] : memref<5x96x224xf32, #tpu.memory_space<vmem>>, vector<1x96x224xf32>
    %54 = vector.shape_cast %53 : vector<1x96x224xf32> to vector<96x224xf32>
    %cst_51 = arith.constant dense<0.000000e+00> : vector<28x224xf32>
    %55 = tpu.matmul %52, %54, %cst_51 {dimension_numbers = #tpu.dot_dimension_numbers<[1], [0], [0], [1], [0, 0, 1, 1], [], []>} : vector<28x96xf32>, vector<96x224xf32>, vector<28x224xf32> -> vector<28x224xf32>
    %56 = arith.addf %51, %55 : vector<28x224xf32>
    %c0_52 = arith.constant 0 : index
    %c0_53 = arith.constant 0 : index
    %57 = vector.load %arg7[%c0_52, %c0_53] : memref<1x224xf32, #tpu.memory_space<vmem>>, vector<1x224xf32>
    %58 = vector.broadcast %57 : vector<1x224xf32> to vector<28x224xf32>
    %59 = arith.addf %56, %58 : vector<28x224xf32>
    %cst_54 = arith.constant 0.000000e+00 : f32
    %60 = vector.broadcast %cst_54 : f32 to vector<28x224xf32>
    %61 = arith.maximumf %59, %60 : vector<28x224xf32>
    %c0_55 = arith.constant 0 : index
    %c0_56 = arith.constant 0 : index
    %c0_57 = arith.constant 0 : index
    %62 = vector.load %arg8[%c0_55, %c0_56, %c0_57] : memref<2x14x28xf32, #tpu.memory_space<vmem>>, vector<1x14x28xf32>
    %63 = vector.shape_cast %62 : vector<1x14x28xf32> to vector<14x28xf32>
    %cst_58 = arith.constant dense<0.000000e+00> : vector<14x224xf32>
    %64 = tpu.matmul %63, %61, %cst_58 {dimension_numbers = #tpu.dot_dimension_numbers<[1], [0], [0], [1], [0, 0, 1, 1], [], []>} : vector<14x28xf32>, vector<28x224xf32>, vector<14x224xf32> -> vector<14x224xf32>
    %c1_59 = arith.constant 1 : index
    %c0_60 = arith.constant 0 : index
    %c0_61 = arith.constant 0 : index
    %65 = vector.load %arg8[%c1_59, %c0_60, %c0_61] : memref<2x14x28xf32, #tpu.memory_space<vmem>>, vector<1x14x28xf32>
    %66 = vector.shape_cast %65 : vector<1x14x28xf32> to vector<14x28xf32>
    %cst_62 = arith.constant dense<0.000000e+00> : vector<14x224xf32>
    %67 = tpu.matmul %66, %61, %cst_62 {dimension_numbers = #tpu.dot_dimension_numbers<[1], [0], [0], [1], [0, 0, 1, 1], [], []>} : vector<14x28xf32>, vector<28x224xf32>, vector<14x224xf32> -> vector<14x224xf32>
    %68 = arith.maximumf %64, %67 : vector<14x224xf32>
    %c0_63 = arith.constant 0 : index
    %c0_64 = arith.constant 0 : index
    %c0_65 = arith.constant 0 : index
    %69 = vector.load %arg9[%c0_63, %c0_64, %c0_65] : memref<2x224x112xf32, #tpu.memory_space<vmem>>, vector<1x224x112xf32>
    %70 = vector.shape_cast %69 : vector<1x224x112xf32> to vector<224x112xf32>
    %cst_66 = arith.constant dense<0.000000e+00> : vector<14x112xf32>
    %71 = tpu.matmul %68, %70, %cst_66 {dimension_numbers = #tpu.dot_dimension_numbers<[1], [0], [0], [1], [0, 0, 1, 1], [], []>} : vector<14x224xf32>, vector<224x112xf32>, vector<14x112xf32> -> vector<14x112xf32>
    %c1_67 = arith.constant 1 : index
    %c0_68 = arith.constant 0 : index
    %c0_69 = arith.constant 0 : index
    %72 = vector.load %arg9[%c1_67, %c0_68, %c0_69] : memref<2x224x112xf32, #tpu.memory_space<vmem>>, vector<1x224x112xf32>
    %73 = vector.shape_cast %72 : vector<1x224x112xf32> to vector<224x112xf32>
    %cst_70 = arith.constant dense<0.000000e+00> : vector<14x112xf32>
    %74 = tpu.matmul %68, %73, %cst_70 {dimension_numbers = #tpu.dot_dimension_numbers<[1], [0], [0], [1], [0, 0, 1, 1], [], []>} : vector<14x224xf32>, vector<224x112xf32>, vector<14x112xf32> -> vector<14x112xf32>
    %75 = arith.maximumf %71, %74 : vector<14x112xf32>
    %c32 = arith.constant 32 : index
    %c0_71 = arith.constant 0 : index
    %76 = vector.load %arg25[%c32, %c0_71] : memref<64x96xf32, #tpu.memory_space<vmem>>, vector<28x96xf32>
    %c0_72 = arith.constant 0 : index
    %c0_73 = arith.constant 0 : index
    %c0_74 = arith.constant 0 : index
    %77 = vector.load %arg6[%c0_72, %c0_73, %c0_74] : memref<5x96x224xf32, #tpu.memory_space<vmem>>, vector<1x96x224xf32>
    %78 = vector.shape_cast %77 : vector<1x96x224xf32> to vector<96x224xf32>
    %cst_75 = arith.constant dense<0.000000e+00> : vector<28x224xf32>
    %79 = tpu.matmul %76, %78, %cst_75 {dimension_numbers = #tpu.dot_dimension_numbers<[1], [0], [0], [1], [0, 0, 1, 1], [], []>} : vector<28x96xf32>, vector<96x224xf32>, vector<28x224xf32> -> vector<28x224xf32>
    %c33 = arith.constant 33 : index
    %c0_76 = arith.constant 0 : index
    %80 = vector.load %arg25[%c33, %c0_76] : memref<64x96xf32, #tpu.memory_space<vmem>>, vector<28x96xf32>
    %c1_77 = arith.constant 1 : index
    %c0_78 = arith.constant 0 : index
    %c0_79 = arith.constant 0 : index
    %81 = vector.load %arg6[%c1_77, %c0_78, %c0_79] : memref<5x96x224xf32, #tpu.memory_space<vmem>>, vector<1x96x224xf32>
    %82 = vector.shape_cast %81 : vector<1x96x224xf32> to vector<96x224xf32>
    %cst_80 = arith.constant dense<0.000000e+00> : vector<28x224xf32>
    %83 = tpu.matmul %80, %82, %cst_80 {dimension_numbers = #tpu.dot_dimension_numbers<[1], [0], [0], [1], [0, 0, 1, 1], [], []>} : vector<28x96xf32>, vector<96x224xf32>, vector<28x224xf32> -> vector<28x224xf32>
    %84 = arith.addf %79, %83 : vector<28x224xf32>
    %c34 = arith.constant 34 : index
    %c0_81 = arith.constant 0 : index
    %85 = vector.load %arg25[%c34, %c0_81] : memref<64x96xf32, #tpu.memory_space<vmem>>, vector<28x96xf32>
    %c2_82 = arith.constant 2 : index
    %c0_83 = arith.constant 0 : index
    %c0_84 = arith.constant 0 : index
    %86 = vector.load %arg6[%c2_82, %c0_83, %c0_84] : memref<5x96x224xf32, #tpu.memory_space<vmem>>, vector<1x96x224xf32>
    %87 = vector.shape_cast %86 : vector<1x96x224xf32> to vector<96x224xf32>
    %cst_85 = arith.constant dense<0.000000e+00> : vector<28x224xf32>
    %88 = tpu.matmul %85, %87, %cst_85 {dimension_numbers = #tpu.dot_dimension_numbers<[1], [0], [0], [1], [0, 0, 1, 1], [], []>} : vector<28x96xf32>, vector<96x224xf32>, vector<28x224xf32> -> vector<28x224xf32>
    %89 = arith.addf %84, %88 : vector<28x224xf32>
    %c35 = arith.constant 35 : index
    %c0_86 = arith.constant 0 : index
    %90 = vector.load %arg25[%c35, %c0_86] : memref<64x96xf32, #tpu.memory_space<vmem>>, vector<28x96xf32>
    %c3_87 = arith.constant 3 : index
    %c0_88 = arith.constant 0 : index
    %c0_89 = arith.constant 0 : index
    %91 = vector.load %arg6[%c3_87, %c0_88, %c0_89] : memref<5x96x224xf32, #tpu.memory_space<vmem>>, vector<1x96x224xf32>
    %92 = vector.shape_cast %91 : vector<1x96x224xf32> to vector<96x224xf32>
    %cst_90 = arith.constant dense<0.000000e+00> : vector<28x224xf32>
    %93 = tpu.matmul %90, %92, %cst_90 {dimension_numbers = #tpu.dot_dimension_numbers<[1], [0], [0], [1], [0, 0, 1, 1], [], []>} : vector<28x96xf32>, vector<96x224xf32>, vector<28x224xf32> -> vector<28x224xf32>
    %94 = arith.addf %89, %93 : vector<28x224xf32>
    %c36 = arith.constant 36 : index
    %c0_91 = arith.constant 0 : index
    %95 = vector.load %arg25[%c36, %c0_91] : memref<64x96xf32, #tpu.memory_space<vmem>>, vector<28x96xf32>
    %c4_92 = arith.constant 4 : index
    %c0_93 = arith.constant 0 : index
    %c0_94 = arith.constant 0 : index
    %96 = vector.load %arg6[%c4_92, %c0_93, %c0_94] : memref<5x96x224xf32, #tpu.memory_space<vmem>>, vector<1x96x224xf32>
    %97 = vector.shape_cast %96 : vector<1x96x224xf32> to vector<96x224xf32>
    %cst_95 = arith.constant dense<0.000000e+00> : vector<28x224xf32>
    %98 = tpu.matmul %95, %97, %cst_95 {dimension_numbers = #tpu.dot_dimension_numbers<[1], [0], [0], [1], [0, 0, 1, 1], [], []>} : vector<28x96xf32>, vector<96x224xf32>, vector<28x224xf32> -> vector<28x224xf32>
    %99 = arith.addf %94, %98 : vector<28x224xf32>
    %c0_96 = arith.constant 0 : index
    %c0_97 = arith.constant 0 : index
    %100 = vector.load %arg7[%c0_96, %c0_97] : memref<1x224xf32, #tpu.memory_space<vmem>>, vector<1x224xf32>
    %101 = vector.broadcast %100 : vector<1x224xf32> to vector<28x224xf32>
    %102 = arith.addf %99, %101 : vector<28x224xf32>
    %cst_98 = arith.constant 0.000000e+00 : f32
    %103 = vector.broadcast %cst_98 : f32 to vector<28x224xf32>
    %104 = arith.maximumf %102, %103 : vector<28x224xf32>
    %c0_99 = arith.constant 0 : index
    %c0_100 = arith.constant 0 : index
    %c0_101 = arith.constant 0 : index
    %105 = vector.load %arg8[%c0_99, %c0_100, %c0_101] : memref<2x14x28xf32, #tpu.memory_space<vmem>>, vector<1x14x28xf32>
    %106 = vector.shape_cast %105 : vector<1x14x28xf32> to vector<14x28xf32>
    %cst_102 = arith.constant dense<0.000000e+00> : vector<14x224xf32>
    %107 = tpu.matmul %106, %104, %cst_102 {dimension_numbers = #tpu.dot_dimension_numbers<[1], [0], [0], [1], [0, 0, 1, 1], [], []>} : vector<14x28xf32>, vector<28x224xf32>, vector<14x224xf32> -> vector<14x224xf32>
    %c1_103 = arith.constant 1 : index
    %c0_104 = arith.constant 0 : index
    %c0_105 = arith.constant 0 : index
    %108 = vector.load %arg8[%c1_103, %c0_104, %c0_105] : memref<2x14x28xf32, #tpu.memory_space<vmem>>, vector<1x14x28xf32>
    %109 = vector.shape_cast %108 : vector<1x14x28xf32> to vector<14x28xf32>
    %cst_106 = arith.constant dense<0.000000e+00> : vector<14x224xf32>
    %110 = tpu.matmul %109, %104, %cst_106 {dimension_numbers = #tpu.dot_dimension_numbers<[1], [0], [0], [1], [0, 0, 1, 1], [], []>} : vector<14x28xf32>, vector<28x224xf32>, vector<14x224xf32> -> vector<14x224xf32>
    %111 = arith.maximumf %107, %110 : vector<14x224xf32>
    %c0_107 = arith.constant 0 : index
    %c0_108 = arith.constant 0 : index
    %c0_109 = arith.constant 0 : index
    %112 = vector.load %arg9[%c0_107, %c0_108, %c0_109] : memref<2x224x112xf32, #tpu.memory_space<vmem>>, vector<1x224x112xf32>
    %113 = vector.shape_cast %112 : vector<1x224x112xf32> to vector<224x112xf32>
    %cst_110 = arith.constant dense<0.000000e+00> : vector<14x112xf32>
    %114 = tpu.matmul %111, %113, %cst_110 {dimension_numbers = #tpu.dot_dimension_numbers<[1], [0], [0], [1], [0, 0, 1, 1], [], []>} : vector<14x224xf32>, vector<224x112xf32>, vector<14x112xf32> -> vector<14x112xf32>
    %c1_111 = arith.constant 1 : index
    %c0_112 = arith.constant 0 : index
    %c0_113 = arith.constant 0 : index
    %115 = vector.load %arg9[%c1_111, %c0_112, %c0_113] : memref<2x224x112xf32, #tpu.memory_space<vmem>>, vector<1x224x112xf32>
    %116 = vector.shape_cast %115 : vector<1x224x112xf32> to vector<224x112xf32>
    %cst_114 = arith.constant dense<0.000000e+00> : vector<14x112xf32>
    %117 = tpu.matmul %111, %116, %cst_114 {dimension_numbers = #tpu.dot_dimension_numbers<[1], [0], [0], [1], [0, 0, 1, 1], [], []>} : vector<14x224xf32>, vector<224x112xf32>, vector<14x112xf32> -> vector<14x112xf32>
    %118 = arith.maximumf %114, %117 : vector<14x112xf32>
    %cst_115 = arith.constant dense<0.000000e+00> : vector<112xf32>
    %119 = vector.multi_reduction <add>, %75, %cst_115 [0] : vector<14x112xf32> to vector<112xf32>
    %120 = vector.shape_cast %119 : vector<112xf32> to vector<1x112xf32>
    %cst_116 = arith.constant dense<0.000000e+00> : vector<112xf32>
    %121 = vector.multi_reduction <add>, %118, %cst_116 [0] : vector<14x112xf32> to vector<112xf32>
    %122 = vector.shape_cast %121 : vector<112xf32> to vector<1x112xf32>
    %123 = arith.addf %120, %122 : vector<1x112xf32>
    %c0_117 = arith.constant 0 : index
    %c0_118 = arith.constant 0 : index
    %124 = vector.load %arg12[%c0_117, %c0_118] : memref<112x8xf32, #tpu.memory_space<vmem>>, vector<112x8xf32>
    %cst_119 = arith.constant dense<0.000000e+00> : vector<1x8xf32>
    %125 = tpu.matmul %123, %124, %cst_119 {dimension_numbers = #tpu.dot_dimension_numbers<[1], [0], [0], [1], [0, 0, 1, 1], [], []>} : vector<1x112xf32>, vector<112x8xf32>, vector<1x8xf32> -> vector<1x8xf32>
    %cst_120 = arith.constant 0.00255102036 : f32
    %126 = vector.broadcast %cst_120 : f32 to vector<1x8xf32>
    %127 = arith.mulf %125, %126 : vector<1x8xf32>
    %c0_121 = arith.constant 0 : index
    %c0_122 = arith.constant 0 : index
    %128 = vector.load %arg13[%c0_121, %c0_122] : memref<8x112xf32, #tpu.memory_space<vmem>>, vector<8x112xf32>
    %cst_123 = arith.constant dense<0.000000e+00> : vector<1x112xf32>
    %129 = tpu.matmul %127, %128, %cst_123 {dimension_numbers = #tpu.dot_dimension_numbers<[1], [0], [0], [1], [0, 0, 1, 1], [], []>} : vector<1x8xf32>, vector<8x112xf32>, vector<1x112xf32> -> vector<1x112xf32>
    %130 = vector.broadcast %129 : vector<1x112xf32> to vector<14x112xf32>
    %131 = arith.subf %75, %130 : vector<14x112xf32>
    %132 = vector.broadcast %129 : vector<1x112xf32> to vector<14x112xf32>
    %133 = arith.subf %118, %132 : vector<14x112xf32>
    %134 = arith.mulf %131, %131 : vector<14x112xf32>
    %cst_124 = arith.constant dense<0.000000e+00> : vector<112xf32>
    %135 = vector.multi_reduction <add>, %134, %cst_124 [0] : vector<14x112xf32> to vector<112xf32>
    %136 = vector.shape_cast %135 : vector<112xf32> to vector<1x112xf32>
    %137 = arith.mulf %133, %133 : vector<14x112xf32>
    %cst_125 = arith.constant dense<0.000000e+00> : vector<112xf32>
    %138 = vector.multi_reduction <add>, %137, %cst_125 [0] : vector<14x112xf32> to vector<112xf32>
    %139 = vector.shape_cast %138 : vector<112xf32> to vector<1x112xf32>
    %140 = arith.addf %136, %139 : vector<1x112xf32>
    %c0_126 = arith.constant 0 : index
    %c0_127 = arith.constant 0 : index
    %141 = vector.load %arg12[%c0_126, %c0_127] : memref<112x8xf32, #tpu.memory_space<vmem>>, vector<112x8xf32>
    %cst_128 = arith.constant dense<0.000000e+00> : vector<1x8xf32>
    %142 = tpu.matmul %140, %141, %cst_128 {dimension_numbers = #tpu.dot_dimension_numbers<[1], [0], [0], [1], [0, 0, 1, 1], [], []>} : vector<1x112xf32>, vector<112x8xf32>, vector<1x8xf32> -> vector<1x8xf32>
    %cst_129 = arith.constant 0.00255102036 : f32
    %143 = vector.broadcast %cst_129 : f32 to vector<1x8xf32>
    %144 = arith.mulf %142, %143 : vector<1x8xf32>
    %c0_130 = arith.constant 0 : index
    %c0_131 = arith.constant 0 : index
    %145 = vector.load %arg10[%c0_130, %c0_131] : memref<1x8xf32, #tpu.memory_space<vmem>>, vector<1x8xf32>
    %cst_132 = arith.constant 9.99999974E-6 : f32
    %146 = vector.broadcast %cst_132 : f32 to vector<1x8xf32>
    %147 = arith.addf %144, %146 : vector<1x8xf32>
    %148 = math.rsqrt %147 : vector<1x8xf32>
    %149 = arith.mulf %145, %148 : vector<1x8xf32>
    %c0_133 = arith.constant 0 : index
    %c0_134 = arith.constant 0 : index
    %150 = vector.load %arg13[%c0_133, %c0_134] : memref<8x112xf32, #tpu.memory_space<vmem>>, vector<8x112xf32>
    %cst_135 = arith.constant dense<0.000000e+00> : vector<1x112xf32>
    %151 = tpu.matmul %149, %150, %cst_135 {dimension_numbers = #tpu.dot_dimension_numbers<[1], [0], [0], [1], [0, 0, 1, 1], [], []>} : vector<1x8xf32>, vector<8x112xf32>, vector<1x112xf32> -> vector<1x112xf32>
    %c0_136 = arith.constant 0 : index
    %c0_137 = arith.constant 0 : index
    %152 = vector.load %arg11[%c0_136, %c0_137] : memref<1x8xf32, #tpu.memory_space<vmem>>, vector<1x8xf32>
    %c0_138 = arith.constant 0 : index
    %c0_139 = arith.constant 0 : index
    %153 = vector.load %arg13[%c0_138, %c0_139] : memref<8x112xf32, #tpu.memory_space<vmem>>, vector<8x112xf32>
    %cst_140 = arith.constant dense<0.000000e+00> : vector<1x112xf32>
    %154 = tpu.matmul %152, %153, %cst_140 {dimension_numbers = #tpu.dot_dimension_numbers<[1], [0], [0], [1], [0, 0, 1, 1], [], []>} : vector<1x8xf32>, vector<8x112xf32>, vector<1x112xf32> -> vector<1x112xf32>
    %155 = vector.broadcast %151 : vector<1x112xf32> to vector<14x112xf32>
    %156 = arith.mulf %131, %155 : vector<14x112xf32>
    %157 = vector.broadcast %154 : vector<1x112xf32> to vector<14x112xf32>
    %158 = arith.addf %156, %157 : vector<14x112xf32>
    %c0_141 = arith.constant 0 : index
    %c0_142 = arith.constant 0 : index
    %159 = vector.load %arg26[%c0_141, %c0_142] : memref<28x112xf32, #tpu.memory_space<vmem>>, vector<14x112xf32>
    tpu.vector_store %arg26[%c0_141, %c0_142], %158 {strides = array<i32>} : memref<28x112xf32, #tpu.memory_space<vmem>>, vector<14x112xf32>,
    %160 = vector.broadcast %151 : vector<1x112xf32> to vector<14x112xf32>
    %161 = arith.mulf %133, %160 : vector<14x112xf32>
    %162 = vector.broadcast %154 : vector<1x112xf32> to vector<14x112xf32>
    %163 = arith.addf %161, %162 : vector<14x112xf32>
    %c14 = arith.constant 14 : index
    %c0_143 = arith.constant 0 : index
    %164 = vector.load %arg26[%c14, %c0_143] : memref<28x112xf32, #tpu.memory_space<vmem>>, vector<14x112xf32>
    tpu.vector_store %arg26[%c14, %c0_143], %163 {strides = array<i32>} : memref<28x112xf32, #tpu.memory_space<vmem>>, vector<14x112xf32>,
    %c0_144 = arith.constant 0 : index
    %c0_145 = arith.constant 0 : index
    %165 = vector.load %arg26[%c0_144, %c0_145] : memref<28x112xf32, #tpu.memory_space<vmem>>, vector<10x112xf32>
    %c0_146 = arith.constant 0 : index
    %c0_147 = arith.constant 0 : index
    %c0_148 = arith.constant 0 : index
    %166 = vector.load %arg14[%c0_146, %c0_147, %c0_148] : memref<5x112x160xf32, #tpu.memory_space<vmem>>, vector<1x112x160xf32>
    %167 = vector.shape_cast %166 : vector<1x112x160xf32> to vector<112x160xf32>
    %cst_149 = arith.constant dense<0.000000e+00> : vector<10x160xf32>
    %168 = tpu.matmul %165, %167, %cst_149 {dimension_numbers = #tpu.dot_dimension_numbers<[1], [0], [0], [1], [0, 0, 1, 1], [], []>} : vector<10x112xf32>, vector<112x160xf32>, vector<10x160xf32> -> vector<10x160xf32>
    %c1_150 = arith.constant 1 : index
    %c0_151 = arith.constant 0 : index
    %169 = vector.load %arg26[%c1_150, %c0_151] : memref<28x112xf32, #tpu.memory_space<vmem>>, vector<10x112xf32>
    %c1_152 = arith.constant 1 : index
    %c0_153 = arith.constant 0 : index
    %c0_154 = arith.constant 0 : index
    %170 = vector.load %arg14[%c1_152, %c0_153, %c0_154] : memref<5x112x160xf32, #tpu.memory_space<vmem>>, vector<1x112x160xf32>
    %171 = vector.shape_cast %170 : vector<1x112x160xf32> to vector<112x160xf32>
    %cst_155 = arith.constant dense<0.000000e+00> : vector<10x160xf32>
    %172 = tpu.matmul %169, %171, %cst_155 {dimension_numbers = #tpu.dot_dimension_numbers<[1], [0], [0], [1], [0, 0, 1, 1], [], []>} : vector<10x112xf32>, vector<112x160xf32>, vector<10x160xf32> -> vector<10x160xf32>
    %173 = arith.addf %168, %172 : vector<10x160xf32>
    %c2_156 = arith.constant 2 : index
    %c0_157 = arith.constant 0 : index
    %174 = vector.load %arg26[%c2_156, %c0_157] : memref<28x112xf32, #tpu.memory_space<vmem>>, vector<10x112xf32>
    %c2_158 = arith.constant 2 : index
    %c0_159 = arith.constant 0 : index
    %c0_160 = arith.constant 0 : index
    %175 = vector.load %arg14[%c2_158, %c0_159, %c0_160] : memref<5x112x160xf32, #tpu.memory_space<vmem>>, vector<1x112x160xf32>
    %176 = vector.shape_cast %175 : vector<1x112x160xf32> to vector<112x160xf32>
    %cst_161 = arith.constant dense<0.000000e+00> : vector<10x160xf32>
    %177 = tpu.matmul %174, %176, %cst_161 {dimension_numbers = #tpu.dot_dimension_numbers<[1], [0], [0], [1], [0, 0, 1, 1], [], []>} : vector<10x112xf32>, vector<112x160xf32>, vector<10x160xf32> -> vector<10x160xf32>
    %178 = arith.addf %173, %177 : vector<10x160xf32>
    %c3_162 = arith.constant 3 : index
    %c0_163 = arith.constant 0 : index
    %179 = vector.load %arg26[%c3_162, %c0_163] : memref<28x112xf32, #tpu.memory_space<vmem>>, vector<10x112xf32>
    %c3_164 = arith.constant 3 : index
    %c0_165 = arith.constant 0 : index
    %c0_166 = arith.constant 0 : index
    %180 = vector.load %arg14[%c3_164, %c0_165, %c0_166] : memref<5x112x160xf32, #tpu.memory_space<vmem>>, vector<1x112x160xf32>
    %181 = vector.shape_cast %180 : vector<1x112x160xf32> to vector<112x160xf32>
    %cst_167 = arith.constant dense<0.000000e+00> : vector<10x160xf32>
    %182 = tpu.matmul %179, %181, %cst_167 {dimension_numbers = #tpu.dot_dimension_numbers<[1], [0], [0], [1], [0, 0, 1, 1], [], []>} : vector<10x112xf32>, vector<112x160xf32>, vector<10x160xf32> -> vector<10x160xf32>
    %183 = arith.addf %178, %182 : vector<10x160xf32>
    %c4_168 = arith.constant 4 : index
    %c0_169 = arith.constant 0 : index
    %184 = vector.load %arg26[%c4_168, %c0_169] : memref<28x112xf32, #tpu.memory_space<vmem>>, vector<10x112xf32>
    %c4_170 = arith.constant 4 : index
    %c0_171 = arith.constant 0 : index
    %c0_172 = arith.constant 0 : index
    %185 = vector.load %arg14[%c4_170, %c0_171, %c0_172] : memref<5x112x160xf32, #tpu.memory_space<vmem>>, vector<1x112x160xf32>
    %186 = vector.shape_cast %185 : vector<1x112x160xf32> to vector<112x160xf32>
    %cst_173 = arith.constant dense<0.000000e+00> : vector<10x160xf32>
    %187 = tpu.matmul %184, %186, %cst_173 {dimension_numbers = #tpu.dot_dimension_numbers<[1], [0], [0], [1], [0, 0, 1, 1], [], []>} : vector<10x112xf32>, vector<112x160xf32>, vector<10x160xf32> -> vector<10x160xf32>
    %188 = arith.addf %183, %187 : vector<10x160xf32>
    %c0_174 = arith.constant 0 : index
    %c0_175 = arith.constant 0 : index
    %189 = vector.load %arg15[%c0_174, %c0_175] : memref<1x160xf32, #tpu.memory_space<vmem>>, vector<1x160xf32>
    %190 = vector.broadcast %189 : vector<1x160xf32> to vector<10x160xf32>
    %191 = arith.addf %188, %190 : vector<10x160xf32>
    %cst_176 = arith.constant 0.000000e+00 : f32
    %192 = vector.broadcast %cst_176 : f32 to vector<10x160xf32>
    %193 = arith.maximumf %191, %192 : vector<10x160xf32>
    %c0_177 = arith.constant 0 : index
    %c0_178 = arith.constant 0 : index
    %c0_179 = arith.constant 0 : index
    %194 = vector.load %arg16[%c0_177, %c0_178, %c0_179] : memref<2x5x10xf32, #tpu.memory_space<vmem>>, vector<1x5x10xf32>
    %195 = vector.shape_cast %194 : vector<1x5x10xf32> to vector<5x10xf32>
    %cst_180 = arith.constant dense<0.000000e+00> : vector<5x160xf32>
    %196 = tpu.matmul %195, %193, %cst_180 {dimension_numbers = #tpu.dot_dimension_numbers<[1], [0], [0], [1], [0, 0, 1, 1], [], []>} : vector<5x10xf32>, vector<10x160xf32>, vector<5x160xf32> -> vector<5x160xf32>
    %c1_181 = arith.constant 1 : index
    %c0_182 = arith.constant 0 : index
    %c0_183 = arith.constant 0 : index
    %197 = vector.load %arg16[%c1_181, %c0_182, %c0_183] : memref<2x5x10xf32, #tpu.memory_space<vmem>>, vector<1x5x10xf32>
    %198 = vector.shape_cast %197 : vector<1x5x10xf32> to vector<5x10xf32>
    %cst_184 = arith.constant dense<0.000000e+00> : vector<5x160xf32>
    %199 = tpu.matmul %198, %193, %cst_184 {dimension_numbers = #tpu.dot_dimension_numbers<[1], [0], [0], [1], [0, 0, 1, 1], [], []>} : vector<5x10xf32>, vector<10x160xf32>, vector<5x160xf32> -> vector<5x160xf32>
    %200 = arith.maximumf %196, %199 : vector<5x160xf32>
    %c0_185 = arith.constant 0 : index
    %c0_186 = arith.constant 0 : index
    %c0_187 = arith.constant 0 : index
    %201 = vector.load %arg17[%c0_185, %c0_186, %c0_187] : memref<2x160x80xf32, #tpu.memory_space<vmem>>, vector<1x160x80xf32>
    %202 = vector.shape_cast %201 : vector<1x160x80xf32> to vector<160x80xf32>
    %cst_188 = arith.constant dense<0.000000e+00> : vector<5x80xf32>
    %203 = tpu.matmul %200, %202, %cst_188 {dimension_numbers = #tpu.dot_dimension_numbers<[1], [0], [0], [1], [0, 0, 1, 1], [], []>} : vector<5x160xf32>, vector<160x80xf32>, vector<5x80xf32> -> vector<5x80xf32>
    %c1_189 = arith.constant 1 : index
    %c0_190 = arith.constant 0 : index
    %c0_191 = arith.constant 0 : index
    %204 = vector.load %arg17[%c1_189, %c0_190, %c0_191] : memref<2x160x80xf32, #tpu.memory_space<vmem>>, vector<1x160x80xf32>
    %205 = vector.shape_cast %204 : vector<1x160x80xf32> to vector<160x80xf32>
    %cst_192 = arith.constant dense<0.000000e+00> : vector<5x80xf32>
    %206 = tpu.matmul %200, %205, %cst_192 {dimension_numbers = #tpu.dot_dimension_numbers<[1], [0], [0], [1], [0, 0, 1, 1], [], []>} : vector<5x160xf32>, vector<160x80xf32>, vector<5x80xf32> -> vector<5x80xf32>
    %207 = arith.maximumf %203, %206 : vector<5x80xf32>
    %c0_193 = arith.constant 0 : index
    %c0_194 = arith.constant 0 : index
    %208 = vector.load %arg27[%c0_193, %c0_194] : memref<10x80xf32, #tpu.memory_space<vmem>>, vector<5x80xf32>
    tpu.vector_store %arg27[%c0_193, %c0_194], %207 {strides = array<i32>} : memref<10x80xf32, #tpu.memory_space<vmem>>, vector<5x80xf32>,
    %c14_195 = arith.constant 14 : index
    %c0_196 = arith.constant 0 : index
    %209 = vector.load %arg26[%c14_195, %c0_196] : memref<28x112xf32, #tpu.memory_space<vmem>>, vector<10x112xf32>
    %c0_197 = arith.constant 0 : index
    %c0_198 = arith.constant 0 : index
    %c0_199 = arith.constant 0 : index
    %210 = vector.load %arg14[%c0_197, %c0_198, %c0_199] : memref<5x112x160xf32, #tpu.memory_space<vmem>>, vector<1x112x160xf32>
    %211 = vector.shape_cast %210 : vector<1x112x160xf32> to vector<112x160xf32>
    %cst_200 = arith.constant dense<0.000000e+00> : vector<10x160xf32>
    %212 = tpu.matmul %209, %211, %cst_200 {dimension_numbers = #tpu.dot_dimension_numbers<[1], [0], [0], [1], [0, 0, 1, 1], [], []>} : vector<10x112xf32>, vector<112x160xf32>, vector<10x160xf32> -> vector<10x160xf32>
    %c15 = arith.constant 15 : index
    %c0_201 = arith.constant 0 : index
    %213 = vector.load %arg26[%c15, %c0_201] : memref<28x112xf32, #tpu.memory_space<vmem>>, vector<10x112xf32>
    %c1_202 = arith.constant 1 : index
    %c0_203 = arith.constant 0 : index
    %c0_204 = arith.constant 0 : index
    %214 = vector.load %arg14[%c1_202, %c0_203, %c0_204] : memref<5x112x160xf32, #tpu.memory_space<vmem>>, vector<1x112x160xf32>
    %215 = vector.shape_cast %214 : vector<1x112x160xf32> to vector<112x160xf32>
    %cst_205 = arith.constant dense<0.000000e+00> : vector<10x160xf32>
    %216 = tpu.matmul %213, %215, %cst_205 {dimension_numbers = #tpu.dot_dimension_numbers<[1], [0], [0], [1], [0, 0, 1, 1], [], []>} : vector<10x112xf32>, vector<112x160xf32>, vector<10x160xf32> -> vector<10x160xf32>
    %217 = arith.addf %212, %216 : vector<10x160xf32>
    %c16 = arith.constant 16 : index
    %c0_206 = arith.constant 0 : index
    %218 = vector.load %arg26[%c16, %c0_206] : memref<28x112xf32, #tpu.memory_space<vmem>>, vector<10x112xf32>
    %c2_207 = arith.constant 2 : index
    %c0_208 = arith.constant 0 : index
    %c0_209 = arith.constant 0 : index
    %219 = vector.load %arg14[%c2_207, %c0_208, %c0_209] : memref<5x112x160xf32, #tpu.memory_space<vmem>>, vector<1x112x160xf32>
    %220 = vector.shape_cast %219 : vector<1x112x160xf32> to vector<112x160xf32>
    %cst_210 = arith.constant dense<0.000000e+00> : vector<10x160xf32>
    %221 = tpu.matmul %218, %220, %cst_210 {dimension_numbers = #tpu.dot_dimension_numbers<[1], [0], [0], [1], [0, 0, 1, 1], [], []>} : vector<10x112xf32>, vector<112x160xf32>, vector<10x160xf32> -> vector<10x160xf32>
    %222 = arith.addf %217, %221 : vector<10x160xf32>
    %c17 = arith.constant 17 : index
    %c0_211 = arith.constant 0 : index
    %223 = vector.load %arg26[%c17, %c0_211] : memref<28x112xf32, #tpu.memory_space<vmem>>, vector<10x112xf32>
    %c3_212 = arith.constant 3 : index
    %c0_213 = arith.constant 0 : index
    %c0_214 = arith.constant 0 : index
    %224 = vector.load %arg14[%c3_212, %c0_213, %c0_214] : memref<5x112x160xf32, #tpu.memory_space<vmem>>, vector<1x112x160xf32>
    %225 = vector.shape_cast %224 : vector<1x112x160xf32> to vector<112x160xf32>
    %cst_215 = arith.constant dense<0.000000e+00> : vector<10x160xf32>
    %226 = tpu.matmul %223, %225, %cst_215 {dimension_numbers = #tpu.dot_dimension_numbers<[1], [0], [0], [1], [0, 0, 1, 1], [], []>} : vector<10x112xf32>, vector<112x160xf32>, vector<10x160xf32> -> vector<10x160xf32>
    %227 = arith.addf %222, %226 : vector<10x160xf32>
    %c18 = arith.constant 18 : index
    %c0_216 = arith.constant 0 : index
    %228 = vector.load %arg26[%c18, %c0_216] : memref<28x112xf32, #tpu.memory_space<vmem>>, vector<10x112xf32>
    %c4_217 = arith.constant 4 : index
    %c0_218 = arith.constant 0 : index
    %c0_219 = arith.constant 0 : index
    %229 = vector.load %arg14[%c4_217, %c0_218, %c0_219] : memref<5x112x160xf32, #tpu.memory_space<vmem>>, vector<1x112x160xf32>
    %230 = vector.shape_cast %229 : vector<1x112x160xf32> to vector<112x160xf32>
    %cst_220 = arith.constant dense<0.000000e+00> : vector<10x160xf32>
    %231 = tpu.matmul %228, %230, %cst_220 {dimension_numbers = #tpu.dot_dimension_numbers<[1], [0], [0], [1], [0, 0, 1, 1], [], []>} : vector<10x112xf32>, vector<112x160xf32>, vector<10x160xf32> -> vector<10x160xf32>
    %232 = arith.addf %227, %231 : vector<10x160xf32>
    %c0_221 = arith.constant 0 : index
    %c0_222 = arith.constant 0 : index
    %233 = vector.load %arg15[%c0_221, %c0_222] : memref<1x160xf32, #tpu.memory_space<vmem>>, vector<1x160xf32>
    %234 = vector.broadcast %233 : vector<1x160xf32> to vector<10x160xf32>
    %235 = arith.addf %232, %234 : vector<10x160xf32>
    %cst_223 = arith.constant 0.000000e+00 : f32
    %236 = vector.broadcast %cst_223 : f32 to vector<10x160xf32>
    %237 = arith.maximumf %235, %236 : vector<10x160xf32>
    %c0_224 = arith.constant 0 : index
    %c0_225 = arith.constant 0 : index
    %c0_226 = arith.constant 0 : index
    %238 = vector.load %arg16[%c0_224, %c0_225, %c0_226] : memref<2x5x10xf32, #tpu.memory_space<vmem>>, vector<1x5x10xf32>
    %239 = vector.shape_cast %238 : vector<1x5x10xf32> to vector<5x10xf32>
    %cst_227 = arith.constant dense<0.000000e+00> : vector<5x160xf32>
    %240 = tpu.matmul %239, %237, %cst_227 {dimension_numbers = #tpu.dot_dimension_numbers<[1], [0], [0], [1], [0, 0, 1, 1], [], []>} : vector<5x10xf32>, vector<10x160xf32>, vector<5x160xf32> -> vector<5x160xf32>
    %c1_228 = arith.constant 1 : index
    %c0_229 = arith.constant 0 : index
    %c0_230 = arith.constant 0 : index
    %241 = vector.load %arg16[%c1_228, %c0_229, %c0_230] : memref<2x5x10xf32, #tpu.memory_space<vmem>>, vector<1x5x10xf32>
    %242 = vector.shape_cast %241 : vector<1x5x10xf32> to vector<5x10xf32>
    %cst_231 = arith.constant dense<0.000000e+00> : vector<5x160xf32>
    %243 = tpu.matmul %242, %237, %cst_231 {dimension_numbers = #tpu.dot_dimension_numbers<[1], [0], [0], [1], [0, 0, 1, 1], [], []>} : vector<5x10xf32>, vector<10x160xf32>, vector<5x160xf32> -> vector<5x160xf32>
    %244 = arith.maximumf %240, %243 : vector<5x160xf32>
    %c0_232 = arith.constant 0 : index
    %c0_233 = arith.constant 0 : index
    %c0_234 = arith.constant 0 : index
    %245 = vector.load %arg17[%c0_232, %c0_233, %c0_234] : memref<2x160x80xf32, #tpu.memory_space<vmem>>, vector<1x160x80xf32>
    %246 = vector.shape_cast %245 : vector<1x160x80xf32> to vector<160x80xf32>
    %cst_235 = arith.constant dense<0.000000e+00> : vector<5x80xf32>
    %247 = tpu.matmul %244, %246, %cst_235 {dimension_numbers = #tpu.dot_dimension_numbers<[1], [0], [0], [1], [0, 0, 1, 1], [], []>} : vector<5x160xf32>, vector<160x80xf32>, vector<5x80xf32> -> vector<5x80xf32>
    %c1_236 = arith.constant 1 : index
    %c0_237 = arith.constant 0 : index
    %c0_238 = arith.constant 0 : index
    %248 = vector.load %arg17[%c1_236, %c0_237, %c0_238] : memref<2x160x80xf32, #tpu.memory_space<vmem>>, vector<1x160x80xf32>
    %249 = vector.shape_cast %248 : vector<1x160x80xf32> to vector<160x80xf32>
    %cst_239 = arith.constant dense<0.000000e+00> : vector<5x80xf32>
    %250 = tpu.matmul %244, %249, %cst_239 {dimension_numbers = #tpu.dot_dimension_numbers<[1], [0], [0], [1], [0, 0, 1, 1], [], []>} : vector<5x160xf32>, vector<160x80xf32>, vector<5x80xf32> -> vector<5x80xf32>
    %251 = arith.maximumf %247, %250 : vector<5x80xf32>
    %c5 = arith.constant 5 : index
    %c0_240 = arith.constant 0 : index
    %252 = vector.load %arg27[%c5, %c0_240] : memref<10x80xf32, #tpu.memory_space<vmem>>, vector<5x80xf32>
    tpu.vector_store %arg27[%c5, %c0_240], %251 {strides = array<i32>} : memref<10x80xf32, #tpu.memory_space<vmem>>, vector<5x80xf32>,
    %c0_241 = arith.constant 0 : index
    %c0_242 = arith.constant 0 : index
    %253 = vector.load %arg27[%c0_241, %c0_242] : memref<10x80xf32, #tpu.memory_space<vmem>>, vector<1x80xf32>
    %c0_243 = arith.constant 0 : index
    %c0_244 = arith.constant 0 : index
    %c0_245 = arith.constant 0 : index
    %254 = vector.load %arg18[%c0_243, %c0_244, %c0_245] : memref<5x80x120xf32, #tpu.memory_space<vmem>>, vector<1x80x120xf32>
    %255 = vector.shape_cast %254 : vector<1x80x120xf32> to vector<80x120xf32>
    %cst_246 = arith.constant dense<0.000000e+00> : vector<1x120xf32>
    %256 = tpu.matmul %253, %255, %cst_246 {dimension_numbers = #tpu.dot_dimension_numbers<[1], [0], [0], [1], [0, 0, 1, 1], [], []>} : vector<1x80xf32>, vector<80x120xf32>, vector<1x120xf32> -> vector<1x120xf32>
    %c1_247 = arith.constant 1 : index
    %c0_248 = arith.constant 0 : index
    %257 = vector.load %arg27[%c1_247, %c0_248] : memref<10x80xf32, #tpu.memory_space<vmem>>, vector<1x80xf32>
    %c1_249 = arith.constant 1 : index
    %c0_250 = arith.constant 0 : index
    %c0_251 = arith.constant 0 : index
    %258 = vector.load %arg18[%c1_249, %c0_250, %c0_251] : memref<5x80x120xf32, #tpu.memory_space<vmem>>, vector<1x80x120xf32>
    %259 = vector.shape_cast %258 : vector<1x80x120xf32> to vector<80x120xf32>
    %cst_252 = arith.constant dense<0.000000e+00> : vector<1x120xf32>
    %260 = tpu.matmul %257, %259, %cst_252 {dimension_numbers = #tpu.dot_dimension_numbers<[1], [0], [0], [1], [0, 0, 1, 1], [], []>} : vector<1x80xf32>, vector<80x120xf32>, vector<1x120xf32> -> vector<1x120xf32>
    %261 = arith.addf %256, %260 : vector<1x120xf32>
    %c2_253 = arith.constant 2 : index
    %c0_254 = arith.constant 0 : index
    %262 = vector.load %arg27[%c2_253, %c0_254] : memref<10x80xf32, #tpu.memory_space<vmem>>, vector<1x80xf32>
    %c2_255 = arith.constant 2 : index
    %c0_256 = arith.constant 0 : index
    %c0_257 = arith.constant 0 : index
    %263 = vector.load %arg18[%c2_255, %c0_256, %c0_257] : memref<5x80x120xf32, #tpu.memory_space<vmem>>, vector<1x80x120xf32>
    %264 = vector.shape_cast %263 : vector<1x80x120xf32> to vector<80x120xf32>
    %cst_258 = arith.constant dense<0.000000e+00> : vector<1x120xf32>
    %265 = tpu.matmul %262, %264, %cst_258 {dimension_numbers = #tpu.dot_dimension_numbers<[1], [0], [0], [1], [0, 0, 1, 1], [], []>} : vector<1x80xf32>, vector<80x120xf32>, vector<1x120xf32> -> vector<1x120xf32>
    %266 = arith.addf %261, %265 : vector<1x120xf32>
    %c3_259 = arith.constant 3 : index
    %c0_260 = arith.constant 0 : index
    %267 = vector.load %arg27[%c3_259, %c0_260] : memref<10x80xf32, #tpu.memory_space<vmem>>, vector<1x80xf32>
    %c3_261 = arith.constant 3 : index
    %c0_262 = arith.constant 0 : index
    %c0_263 = arith.constant 0 : index
    %268 = vector.load %arg18[%c3_261, %c0_262, %c0_263] : memref<5x80x120xf32, #tpu.memory_space<vmem>>, vector<1x80x120xf32>
    %269 = vector.shape_cast %268 : vector<1x80x120xf32> to vector<80x120xf32>
    %cst_264 = arith.constant dense<0.000000e+00> : vector<1x120xf32>
    %270 = tpu.matmul %267, %269, %cst_264 {dimension_numbers = #tpu.dot_dimension_numbers<[1], [0], [0], [1], [0, 0, 1, 1], [], []>} : vector<1x80xf32>, vector<80x120xf32>, vector<1x120xf32> -> vector<1x120xf32>
    %271 = arith.addf %266, %270 : vector<1x120xf32>
    %c4_265 = arith.constant 4 : index
    %c0_266 = arith.constant 0 : index
    %272 = vector.load %arg27[%c4_265, %c0_266] : memref<10x80xf32, #tpu.memory_space<vmem>>, vector<1x80xf32>
    %c4_267 = arith.constant 4 : index
    %c0_268 = arith.constant 0 : index
    %c0_269 = arith.constant 0 : index
    %273 = vector.load %arg18[%c4_267, %c0_268, %c0_269] : memref<5x80x120xf32, #tpu.memory_space<vmem>>, vector<1x80x120xf32>
    %274 = vector.shape_cast %273 : vector<1x80x120xf32> to vector<80x120xf32>
    %cst_270 = arith.constant dense<0.000000e+00> : vector<1x120xf32>
    %275 = tpu.matmul %272, %274, %cst_270 {dimension_numbers = #tpu.dot_dimension_numbers<[1], [0], [0], [1], [0, 0, 1, 1], [], []>} : vector<1x80xf32>, vector<80x120xf32>, vector<1x120xf32> -> vector<1x120xf32>
    %276 = arith.addf %271, %275 : vector<1x120xf32>
    %c0_271 = arith.constant 0 : index
    %c0_272 = arith.constant 0 : index
    %277 = vector.load %arg19[%c0_271, %c0_272] : memref<1x120xf32, #tpu.memory_space<vmem>>, vector<1x120xf32>
    %278 = arith.addf %276, %277 : vector<1x120xf32>
    %cst_273 = arith.constant 0.000000e+00 : f32
    %279 = vector.broadcast %cst_273 : f32 to vector<1x120xf32>
    %280 = arith.maximumf %278, %279 : vector<1x120xf32>
    %c0_274 = arith.constant 0 : index
    %c0_275 = arith.constant 0 : index
    %281 = vector.load %arg20[%c0_274, %c0_275] : memref<120x84xf32, #tpu.memory_space<vmem>>, vector<120x84xf32>
    %cst_276 = arith.constant dense<0.000000e+00> : vector<1x84xf32>
    %282 = tpu.matmul %280, %281, %cst_276 {dimension_numbers = #tpu.dot_dimension_numbers<[1], [0], [0], [1], [0, 0, 1, 1], [], []>} : vector<1x120xf32>, vector<120x84xf32>, vector<1x84xf32> -> vector<1x84xf32>
    %c0_277 = arith.constant 0 : index
    %c0_278 = arith.constant 0 : index
    %283 = vector.load %arg21[%c0_277, %c0_278] : memref<1x84xf32, #tpu.memory_space<vmem>>, vector<1x84xf32>
    %284 = arith.addf %282, %283 : vector<1x84xf32>
    %cst_279 = arith.constant 0.000000e+00 : f32
    %285 = vector.broadcast %cst_279 : f32 to vector<1x84xf32>
    %286 = arith.maximumf %284, %285 : vector<1x84xf32>
    %c0_280 = arith.constant 0 : index
    %c0_281 = arith.constant 0 : index
    %287 = vector.load %arg22[%c0_280, %c0_281] : memref<84x10xf32, #tpu.memory_space<vmem>>, vector<84x10xf32>
    %cst_282 = arith.constant dense<0.000000e+00> : vector<1x10xf32>
    %288 = tpu.matmul %286, %287, %cst_282 {dimension_numbers = #tpu.dot_dimension_numbers<[1], [0], [0], [1], [0, 0, 1, 1], [], []>} : vector<1x84xf32>, vector<84x10xf32>, vector<1x10xf32> -> vector<1x10xf32>
    %c0_283 = arith.constant 0 : index
    %c0_284 = arith.constant 0 : index
    %289 = vector.load %arg23[%c0_283, %c0_284] : memref<1x10xf32, #tpu.memory_space<vmem>>, vector<1x10xf32>
    %290 = arith.addf %288, %289 : vector<1x10xf32>
    %cst_285 = arith.constant dense<0xFF800000> : vector<1xf32>
    %291 = vector.multi_reduction <maximumf>, %290, %cst_285 [1] : vector<1x10xf32> to vector<1xf32>
    %292 = vector.shape_cast %291 : vector<1xf32> to vector<1x1xf32>
    %293 = vector.broadcast %292 : vector<1x1xf32> to vector<1x10xf32>
    %294 = arith.subf %290, %293 : vector<1x10xf32>
    %295 = math.exp %294 : vector<1x10xf32>
    %cst_286 = arith.constant dense<0.000000e+00> : vector<1xf32>
    %296 = vector.multi_reduction <add>, %295, %cst_286 [1] : vector<1x10xf32> to vector<1xf32>
    %297 = vector.shape_cast %296 : vector<1xf32> to vector<1x1xf32>
    %298 = tpu.reciprocal %297 {approx = true} : vector<1x1xf32> -> vector<1x1xf32>
    %299 = vector.broadcast %298 : vector<1x1xf32> to vector<1x10xf32>
    %300 = arith.mulf %295, %299 : vector<1x10xf32>
    %c0_287 = arith.constant 0 : index
    %c0_288 = arith.constant 0 : index
    %301 = vector.load %arg24[%c0_287, %c0_288] : memref<2x10xf32, #tpu.memory_space<vmem>>, vector<1x10xf32>
    tpu.vector_store %arg24[%c0_287, %c0_288], %300 {strides = array<i32>} : memref<2x10xf32, #tpu.memory_space<vmem>>, vector<1x10xf32>,
    %c5_289 = arith.constant 5 : index
    %c0_290 = arith.constant 0 : index
    %302 = vector.load %arg27[%c5_289, %c0_290] : memref<10x80xf32, #tpu.memory_space<vmem>>, vector<1x80xf32>
    %c0_291 = arith.constant 0 : index
    %c0_292 = arith.constant 0 : index
    %c0_293 = arith.constant 0 : index
    %303 = vector.load %arg18[%c0_291, %c0_292, %c0_293] : memref<5x80x120xf32, #tpu.memory_space<vmem>>, vector<1x80x120xf32>
    %304 = vector.shape_cast %303 : vector<1x80x120xf32> to vector<80x120xf32>
    %cst_294 = arith.constant dense<0.000000e+00> : vector<1x120xf32>
    %305 = tpu.matmul %302, %304, %cst_294 {dimension_numbers = #tpu.dot_dimension_numbers<[1], [0], [0], [1], [0, 0, 1, 1], [], []>} : vector<1x80xf32>, vector<80x120xf32>, vector<1x120xf32> -> vector<1x120xf32>
    %c6 = arith.constant 6 : index
    %c0_295 = arith.constant 0 : index
    %306 = vector.load %arg27[%c6, %c0_295] : memref<10x80xf32, #tpu.memory_space<vmem>>, vector<1x80xf32>
    %c1_296 = arith.constant 1 : index
    %c0_297 = arith.constant 0 : index
    %c0_298 = arith.constant 0 : index
    %307 = vector.load %arg18[%c1_296, %c0_297, %c0_298] : memref<5x80x120xf32, #tpu.memory_space<vmem>>, vector<1x80x120xf32>
    %308 = vector.shape_cast %307 : vector<1x80x120xf32> to vector<80x120xf32>
    %cst_299 = arith.constant dense<0.000000e+00> : vector<1x120xf32>
    %309 = tpu.matmul %306, %308, %cst_299 {dimension_numbers = #tpu.dot_dimension_numbers<[1], [0], [0], [1], [0, 0, 1, 1], [], []>} : vector<1x80xf32>, vector<80x120xf32>, vector<1x120xf32> -> vector<1x120xf32>
    %310 = arith.addf %305, %309 : vector<1x120xf32>
    %c7 = arith.constant 7 : index
    %c0_300 = arith.constant 0 : index
    %311 = vector.load %arg27[%c7, %c0_300] : memref<10x80xf32, #tpu.memory_space<vmem>>, vector<1x80xf32>
    %c2_301 = arith.constant 2 : index
    %c0_302 = arith.constant 0 : index
    %c0_303 = arith.constant 0 : index
    %312 = vector.load %arg18[%c2_301, %c0_302, %c0_303] : memref<5x80x120xf32, #tpu.memory_space<vmem>>, vector<1x80x120xf32>
    %313 = vector.shape_cast %312 : vector<1x80x120xf32> to vector<80x120xf32>
    %cst_304 = arith.constant dense<0.000000e+00> : vector<1x120xf32>
    %314 = tpu.matmul %311, %313, %cst_304 {dimension_numbers = #tpu.dot_dimension_numbers<[1], [0], [0], [1], [0, 0, 1, 1], [], []>} : vector<1x80xf32>, vector<80x120xf32>, vector<1x120xf32> -> vector<1x120xf32>
    %315 = arith.addf %310, %314 : vector<1x120xf32>
    %c8 = arith.constant 8 : index
    %c0_305 = arith.constant 0 : index
    %316 = vector.load %arg27[%c8, %c0_305] : memref<10x80xf32, #tpu.memory_space<vmem>>, vector<1x80xf32>
    %c3_306 = arith.constant 3 : index
    %c0_307 = arith.constant 0 : index
    %c0_308 = arith.constant 0 : index
    %317 = vector.load %arg18[%c3_306, %c0_307, %c0_308] : memref<5x80x120xf32, #tpu.memory_space<vmem>>, vector<1x80x120xf32>
    %318 = vector.shape_cast %317 : vector<1x80x120xf32> to vector<80x120xf32>
    %cst_309 = arith.constant dense<0.000000e+00> : vector<1x120xf32>
    %319 = tpu.matmul %316, %318, %cst_309 {dimension_numbers = #tpu.dot_dimension_numbers<[1], [0], [0], [1], [0, 0, 1, 1], [], []>} : vector<1x80xf32>, vector<80x120xf32>, vector<1x120xf32> -> vector<1x120xf32>
    %320 = arith.addf %315, %319 : vector<1x120xf32>
    %c9 = arith.constant 9 : index
    %c0_310 = arith.constant 0 : index
    %321 = vector.load %arg27[%c9, %c0_310] : memref<10x80xf32, #tpu.memory_space<vmem>>, vector<1x80xf32>
    %c4_311 = arith.constant 4 : index
    %c0_312 = arith.constant 0 : index
    %c0_313 = arith.constant 0 : index
    %322 = vector.load %arg18[%c4_311, %c0_312, %c0_313] : memref<5x80x120xf32, #tpu.memory_space<vmem>>, vector<1x80x120xf32>
    %323 = vector.shape_cast %322 : vector<1x80x120xf32> to vector<80x120xf32>
    %cst_314 = arith.constant dense<0.000000e+00> : vector<1x120xf32>
    %324 = tpu.matmul %321, %323, %cst_314 {dimension_numbers = #tpu.dot_dimension_numbers<[1], [0], [0], [1], [0, 0, 1, 1], [], []>} : vector<1x80xf32>, vector<80x120xf32>, vector<1x120xf32> -> vector<1x120xf32>
    %325 = arith.addf %320, %324 : vector<1x120xf32>
    %c0_315 = arith.constant 0 : index
    %c0_316 = arith.constant 0 : index
    %326 = vector.load %arg19[%c0_315, %c0_316] : memref<1x120xf32, #tpu.memory_space<vmem>>, vector<1x120xf32>
    %327 = arith.addf %325, %326 : vector<1x120xf32>
    %cst_317 = arith.constant 0.000000e+00 : f32
    %328 = vector.broadcast %cst_317 : f32 to vector<1x120xf32>
    %329 = arith.maximumf %327, %328 : vector<1x120xf32>
    %c0_318 = arith.constant 0 : index
    %c0_319 = arith.constant 0 : index
    %330 = vector.load %arg20[%c0_318, %c0_319] : memref<120x84xf32, #tpu.memory_space<vmem>>, vector<120x84xf32>
    %cst_320 = arith.constant dense<0.000000e+00> : vector<1x84xf32>
    %331 = tpu.matmul %329, %330, %cst_320 {dimension_numbers = #tpu.dot_dimension_numbers<[1], [0], [0], [1], [0, 0, 1, 1], [], []>} : vector<1x120xf32>, vector<120x84xf32>, vector<1x84xf32> -> vector<1x84xf32>
    %c0_321 = arith.constant 0 : index
    %c0_322 = arith.constant 0 : index
    %332 = vector.load %arg21[%c0_321, %c0_322] : memref<1x84xf32, #tpu.memory_space<vmem>>, vector<1x84xf32>
    %333 = arith.addf %331, %332 : vector<1x84xf32>
    %cst_323 = arith.constant 0.000000e+00 : f32
    %334 = vector.broadcast %cst_323 : f32 to vector<1x84xf32>
    %335 = arith.maximumf %333, %334 : vector<1x84xf32>
    %c0_324 = arith.constant 0 : index
    %c0_325 = arith.constant 0 : index
    %336 = vector.load %arg22[%c0_324, %c0_325] : memref<84x10xf32, #tpu.memory_space<vmem>>, vector<84x10xf32>
    %cst_326 = arith.constant dense<0.000000e+00> : vector<1x10xf32>
    %337 = tpu.matmul %335, %336, %cst_326 {dimension_numbers = #tpu.dot_dimension_numbers<[1], [0], [0], [1], [0, 0, 1, 1], [], []>} : vector<1x84xf32>, vector<84x10xf32>, vector<1x10xf32> -> vector<1x10xf32>
    %c0_327 = arith.constant 0 : index
    %c0_328 = arith.constant 0 : index
    %338 = vector.load %arg23[%c0_327, %c0_328] : memref<1x10xf32, #tpu.memory_space<vmem>>, vector<1x10xf32>
    %339 = arith.addf %337, %338 : vector<1x10xf32>
    %cst_329 = arith.constant dense<0xFF800000> : vector<1xf32>
    %340 = vector.multi_reduction <maximumf>, %339, %cst_329 [1] : vector<1x10xf32> to vector<1xf32>
    %341 = vector.shape_cast %340 : vector<1xf32> to vector<1x1xf32>
    %342 = vector.broadcast %341 : vector<1x1xf32> to vector<1x10xf32>
    %343 = arith.subf %339, %342 : vector<1x10xf32>
    %344 = math.exp %343 : vector<1x10xf32>
    %cst_330 = arith.constant dense<0.000000e+00> : vector<1xf32>
    %345 = vector.multi_reduction <add>, %344, %cst_330 [1] : vector<1x10xf32> to vector<1xf32>
    %346 = vector.shape_cast %345 : vector<1xf32> to vector<1x1xf32>
    %347 = tpu.reciprocal %346 {approx = true} : vector<1x1xf32> -> vector<1x1xf32>
    %348 = vector.broadcast %347 : vector<1x1xf32> to vector<1x10xf32>
    %349 = arith.mulf %344, %348 : vector<1x10xf32>
    %c1_331 = arith.constant 1 : index
    %c0_332 = arith.constant 0 : index
    %350 = vector.load %arg24[%c1_331, %c0_332] : memref<2x10xf32, #tpu.memory_space<vmem>>, vector<1x10xf32>
    tpu.vector_store %arg24[%c1_331, %c0_332], %349 {strides = array<i32>} : memref<2x10xf32, #tpu.memory_space<vmem>>, vector<1x10xf32>,
    return
  }
  func.func @transform_0(%arg0: i32) -> (i32, i32) {
    %c0_i32 = arith.constant 0 : i32
    %c0_i32_0 = arith.constant 0 : i32
    %c0_i32_1 = arith.constant 0 : i32
    return %c0_i32, %c0_i32_0 : i32, i32
  }
  func.func @transform_1(%arg0: i32) -> (i32, i32) {
    %c0_i32 = arith.constant 0 : i32
    %c0_i32_0 = arith.constant 0 : i32
    %c0_i32_1 = arith.constant 0 : i32
    return %c0_i32, %c0_i32_0 : i32, i32
  }
  func.func @transform_2(%arg0: i32) -> (i32, i32) {
    %c0_i32 = arith.constant 0 : i32
    %c0_i32_0 = arith.constant 0 : i32
    %c0_i32_1 = arith.constant 0 : i32
    return %c0_i32, %c0_i32_0 : i32, i32
  }
  func.func @transform_3(%arg0: i32) -> (i32, i32) {
    %c0_i32 = arith.constant 0 : i32
    %c0_i32_0 = arith.constant 0 : i32
    %c0_i32_1 = arith.constant 0 : i32
    return %c0_i32, %c0_i32_0 : i32, i32
  }
  func.func @transform_4(%arg0: i32) -> (i32, i32) {
    %c0_i32 = arith.constant 0 : i32
    %c0_i32_0 = arith.constant 0 : i32
    %c0_i32_1 = arith.constant 0 : i32
    return %c0_i32, %c0_i32_0 : i32, i32
  }
  func.func @transform_5(%arg0: i32) -> (i32, i32, i32) {
    %c0_i32 = arith.constant 0 : i32
    %c0_i32_0 = arith.constant 0 : i32
    %c0_i32_1 = arith.constant 0 : i32
    %c0_i32_2 = arith.constant 0 : i32
    return %c0_i32, %c0_i32_0, %c0_i32_1 : i32, i32, i32
  }
  func.func @transform_6(%arg0: i32) -> (i32, i32) {
    %c0_i32 = arith.constant 0 : i32
    %c0_i32_0 = arith.constant 0 : i32
    %c0_i32_1 = arith.constant 0 : i32
    return %c0_i32, %c0_i32_0 : i32, i32
  }
  func.func @transform_7(%arg0: i32) -> (i32, i32, i32) {
    %c0_i32 = arith.constant 0 : i32
    %c0_i32_0 = arith.constant 0 : i32
    %c0_i32_1 = arith.constant 0 : i32
    %c0_i32_2 = arith.constant 0 : i32
    return %c0_i32, %c0_i32_0, %c0_i32_1 : i32, i32, i32
  }
  func.func @transform_8(%arg0: i32) -> (i32, i32, i32) {
    %c0_i32 = arith.constant 0 : i32
    %c0_i32_0 = arith.constant 0 : i32
    %c0_i32_1 = arith.constant 0 : i32
    %c0_i32_2 = arith.constant 0 : i32
    return %c0_i32, %c0_i32_0, %c0_i32_1 : i32, i32, i32
  }
  func.func @transform_9(%arg0: i32) -> (i32, i32) {
    %c0_i32 = arith.constant 0 : i32
    %c0_i32_0 = arith.constant 0 : i32
    %c0_i32_1 = arith.constant 0 : i32
    return %c0_i32, %c0_i32_0 : i32, i32
  }
  func.func @transform_10(%arg0: i32) -> (i32, i32) {
    %c0_i32 = arith.constant 0 : i32
    %c0_i32_0 = arith.constant 0 : i32
    %c0_i32_1 = arith.constant 0 : i32
    return %c0_i32, %c0_i32_0 : i32, i32
  }
  func.func @transform_11(%arg0: i32) -> (i32, i32) {
    %c0_i32 = arith.constant 0 : i32
    %c0_i32_0 = arith.constant 0 : i32
    %c0_i32_1 = arith.constant 0 : i32
    return %c0_i32, %c0_i32_0 : i32, i32
  }
  func.func @transform_12(%arg0: i32) -> (i32, i32) {
    %c0_i32 = arith.constant 0 : i32
    %c0_i32_0 = arith.constant 0 : i32
    %c0_i32_1 = arith.constant 0 : i32
    return %c0_i32, %c0_i32_0 : i32, i32
  }
  func.func @transform_13(%arg0: i32) -> (i32, i32, i32) {
    %c0_i32 = arith.constant 0 : i32
    %c0_i32_0 = arith.constant 0 : i32
    %c0_i32_1 = arith.constant 0 : i32
    %c0_i32_2 = arith.constant 0 : i32
    return %c0_i32, %c0_i32_0, %c0_i32_1 : i32, i32, i32
  }
  func.func @transform_14(%arg0: i32) -> (i32, i32) {
    %c0_i32 = arith.constant 0 : i32
    %c0_i32_0 = arith.constant 0 : i32
    %c0_i32_1 = arith.constant 0 : i32
    return %c0_i32, %c0_i32_0 : i32, i32
  }
  func.func @transform_15(%arg0: i32) -> (i32, i32, i32) {
    %c0_i32 = arith.constant 0 : i32
    %c0_i32_0 = arith.constant 0 : i32
    %c0_i32_1 = arith.constant 0 : i32
    %c0_i32_2 = arith.constant 0 : i32
    return %c0_i32, %c0_i32_0, %c0_i32_1 : i32, i32, i32
  }
  func.func @transform_16(%arg0: i32) -> (i32, i32, i32) {
    %c0_i32 = arith.constant 0 : i32
    %c0_i32_0 = arith.constant 0 : i32
    %c0_i32_1 = arith.constant 0 : i32
    %c0_i32_2 = arith.constant 0 : i32
    return %c0_i32, %c0_i32_0, %c0_i32_1 : i32, i32, i32
  }
  func.func @transform_17(%arg0: i32) -> (i32, i32, i32) {
    %c0_i32 = arith.constant 0 : i32
    %c0_i32_0 = arith.constant 0 : i32
    %c0_i32_1 = arith.constant 0 : i32
    %c0_i32_2 = arith.constant 0 : i32
    return %c0_i32, %c0_i32_0, %c0_i32_1 : i32, i32, i32
  }
  func.func @transform_18(%arg0: i32) -> (i32, i32) {
    %c0_i32 = arith.constant 0 : i32
    %c0_i32_0 = arith.constant 0 : i32
    %c0_i32_1 = arith.constant 0 : i32
    return %c0_i32, %c0_i32_0 : i32, i32
  }
  func.func @transform_19(%arg0: i32) -> (i32, i32) {
    %c0_i32 = arith.constant 0 : i32
    %c0_i32_0 = arith.constant 0 : i32
    %c0_i32_1 = arith.constant 0 : i32
    return %c0_i32, %c0_i32_0 : i32, i32
  }
  func.func @transform_20(%arg0: i32) -> (i32, i32) {
    %c0_i32 = arith.constant 0 : i32
    %c0_i32_0 = arith.constant 0 : i32
    %c0_i32_1 = arith.constant 0 : i32
    return %c0_i32, %c0_i32_0 : i32, i32
  }
  func.func @transform_21(%arg0: i32) -> (i32, i32) {
    %c0_i32 = arith.constant 0 : i32
    %c0_i32_0 = arith.constant 0 : i32
    %c0_i32_1 = arith.constant 0 : i32
    return %c0_i32, %c0_i32_0 : i32, i32
  }
  func.func @transform_22(%arg0: i32) -> (i32, i32) {
    %c0_i32 = arith.constant 0 : i32
    %c0_i32_0 = arith.constant 0 : i32
    %c0_i32_1 = arith.constant 0 : i32
    return %c0_i32, %c0_i32_0 : i32, i32
  }
  func.func @transform_23(%arg0: i32) -> (i32, i32) {
    %c0_i32 = arith.constant 0 : i32
    %c0_i32_0 = arith.constant 0 : i32
    %c0_i32_1 = arith.constant 0 : i32
    return %c0_i32, %c0_i32_0 : i32, i32
  }
}

</mosaic_0001>

<llo_original>
// kernel: forward.1
$region0: #{forward.1}
  #allocation0 [shape = 'u32[]', space=smem, size = 0x4, offset = 0x4, fixed_abs, tag = 'smem constant byte address 0x4 - core index']
  #allocation1 [shape = 'u32[144,128]{1,0:T(1,128)}', space=vmem, size = 0x12000, scoped, tag = 'internal scratch']
  #allocation2 [shape = 'f32[64,96]{1,0:T(8,128)}', space=vmem, size = 0x8000, scoped, tag = 'scratch operand']
  #allocation3 [shape = 'f32[28,112]{1,0:T(8,128)}', space=vmem, size = 0x4000, scoped, tag = 'scratch operand']
  #allocation4 [shape = 'f32[10,80]{1,0:T(8,128)}', space=vmem, size = 0x2000, scoped, tag = 'scratch operand']
  %s0 = inlined_call_operand.vmem [shape: f32[64,96], index: 0, kind: input, shape index: {}]
  %s1 = inlined_call_operand.vmem [shape: f32[1,3], index: 1, kind: input, shape index: {}]
  %s2 = inlined_call_operand.vmem [shape: f32[1,3], index: 2, kind: input, shape index: {}]
  %s3 = inlined_call_operand.vmem [shape: f32[96,3], index: 3, kind: input, shape index: {}]
  %s4 = inlined_call_operand.vmem [shape: f32[3,96], index: 4, kind: input, shape index: {}]
  %s5 = inlined_call_operand.vmem [shape: f32[5,96,224], index: 5, kind: input, shape index: {}]
  %s6 = inlined_call_operand.vmem [shape: f32[1,224], index: 6, kind: input, shape index: {}]
  %s7 = inlined_call_operand.vmem [shape: f32[2,14,28], index: 7, kind: input, shape index: {}]
  %s8 = inlined_call_operand.vmem [shape: f32[2,224,112], index: 8, kind: input, shape index: {}]
  %s9 = inlined_call_operand.vmem [shape: f32[1,8], index: 9, kind: input, shape index: {}]
  %s10 = inlined_call_operand.vmem [shape: f32[1,8], index: 10, kind: input, shape index: {}]
  %s11 = inlined_call_operand.vmem [shape: f32[112,8], index: 11, kind: input, shape index: {}]
  %s12 = inlined_call_operand.vmem [shape: f32[8,112], index: 12, kind: input, shape index: {}]
  %s13 = inlined_call_operand.vmem [shape: f32[5,112,160], index: 13, kind: input, shape index: {}]
  %s14 = inlined_call_operand.vmem [shape: f32[1,160], index: 14, kind: input, shape index: {}]
  %s15 = inlined_call_operand.vmem [shape: f32[2,5,10], index: 15, kind: input, shape index: {}]
  %s16 = inlined_call_operand.vmem [shape: f32[2,160,80], index: 16, kind: input, shape index: {}]
  %s17 = inlined_call_operand.vmem [shape: f32[5,80,120], index: 17, kind: input, shape index: {}]
  %s18 = inlined_call_operand.vmem [shape: f32[1,120], index: 18, kind: input, shape index: {}]
  %s19 = inlined_call_operand.vmem [shape: f32[120,84], index: 19, kind: input, shape index: {}]
  %s20 = inlined_call_operand.vmem [shape: f32[1,84], index: 20, kind: input, shape index: {}]
  %s21 = inlined_call_operand.vmem [shape: f32[84,10], index: 21, kind: input, shape index: {}]
  %s22 = inlined_call_operand.vmem [shape: f32[1,10], index: 22, kind: input, shape index: {}]
  %s23 = inlined_call_operand.hbm [shape: f32[2,10], index: 23, kind: output, shape index: {}]
  %s24 = sld [smem:[#allocation0]]
  $region102: #{forward.1} parent=0
    _
  %s26 = ssub.s32 1, %s24
  %s27 = scalar_select 0, %s26, %s24
  $region1: #{forward.1} parent=0
    #allocation5 [shape = 'u8[1024]{0}', space=vmem, size = 0x400, scoped, tag = 'output window, operand 0, single buffered']
    #allocation6 [shape = 's32[1]{0}', space=sflag, size = 0x4, scoped, tag = 'scoped memory for forward.1']
    %28 = vsyncpa [#allocation6], 0
    // Predicated region
    $region2: #{forward.1} parent=1 // pred_check
      _
    $region3: #{forward.1} parent=1 // pred_check_branch
      %30 = sbr.rel (0) target = $region5
    $region4: #{forward.1} parent=1 // pred_region
      _
    $region5: #{forward.1} parent=1 // pred_fallthru
      _
    // Predicated region
    $region6: #{forward.1} parent=1 // pred_check
      _
    $region7: #{forward.1} parent=1 // pred_check_branch
      %32 = sbr.rel (0) target = $region9
    $region8: #{forward.1} parent=1 // pred_region
      _
    $region9: #{forward.1} parent=1 // pred_fallthru
      _
    // Predicated region
    $region10: #{forward.1} parent=1 // pred_check
      _
    $region11: #{forward.1} parent=1 // pred_check_branch
      %34 = sbr.rel (0) target = $region13
    $region12: #{forward.1} parent=1 // pred_region
      _
    $region13: #{forward.1} parent=1 // pred_fallthru
      _
    // Predicated region
    $region14: #{forward.1} parent=1 // pred_check
      _
    $region15: #{forward.1} parent=1 // pred_check_branch
      %36 = sbr.rel (0) target = $region17
    $region16: #{forward.1} parent=1 // pred_region
      _
    $region17: #{forward.1} parent=1 // pred_fallthru
      _
    // Predicated region
    $region18: #{forward.1} parent=1 // pred_check
      _
    $region19: #{forward.1} parent=1 // pred_check_branch
      %38 = sbr.rel (0) target = $region21
    $region20: #{forward.1} parent=1 // pred_region
      _
    $region21: #{forward.1} parent=1 // pred_fallthru
      _
    // Predicated region
    $region22: #{forward.1} parent=1 // pred_check
      _
    $region23: #{forward.1} parent=1 // pred_check_branch
      %40 = sbr.rel (0) target = $region25
    $region24: #{forward.1} parent=1 // pred_region
      _
    $region25: #{forward.1} parent=1 // pred_fallthru
      _
    // Predicated region
    $region26: #{forward.1} parent=1 // pred_check
      _
    $region27: #{forward.1} parent=1 // pred_check_branch
      %42 = sbr.rel (0) target = $region29
    $region28: #{forward.1} parent=1 // pred_region
      _
    $region29: #{forward.1} parent=1 // pred_fallthru
      _
    // Predicated region
    $region30: #{forward.1} parent=1 // pred_check
      _
    $region31: #{forward.1} parent=1 // pred_check_branch
      %44 = sbr.rel (0) target = $region33
    $region32: #{forward.1} parent=1 // pred_region
      _
    $region33: #{forward.1} parent=1 // pred_fallthru
      _
    // Predicated region
    $region34: #{forward.1} parent=1 // pred_check
      _
    $region35: #{forward.1} parent=1 // pred_check_branch
      %46 = sbr.rel (0) target = $region37
    $region36: #{forward.1} parent=1 // pred_region
      _
    $region37: #{forward.1} parent=1 // pred_fallthru
      _
    // Predicated region
    $region38: #{forward.1} parent=1 // pred_check
      _
    $region39: #{forward.1} parent=1 // pred_check_branch
      %48 = sbr.rel (0) target = $region41
    $region40: #{forward.1} parent=1 // pred_region
      _
    $region41: #{forward.1} parent=1 // pred_fallthru
      _
    // Predicated region
    $region42: #{forward.1} parent=1 // pred_check
      _
    $region43: #{forward.1} parent=1 // pred_check_branch
      %50 = sbr.rel (0) target = $region45
    $region44: #{forward.1} parent=1 // pred_region
      _
    $region45: #{forward.1} parent=1 // pred_fallthru
      _
    // Predicated region
    $region46: #{forward.1} parent=1 // pred_check
      _
    $region47: #{forward.1} parent=1 // pred_check_branch
      %52 = sbr.rel (0) target = $region49
    $region48: #{forward.1} parent=1 // pred_region
      _
    $region49: #{forward.1} parent=1 // pred_fallthru
      _
    // Predicated region
    $region50: #{forward.1} parent=1 // pred_check
      _
    $region51: #{forward.1} parent=1 // pred_check_branch
      %54 = sbr.rel (0) target = $region53
    $region52: #{forward.1} parent=1 // pred_region
      _
    $region53: #{forward.1} parent=1 // pred_fallthru
      _
    // Predicated region
    $region54: #{forward.1} parent=1 // pred_check
      _
    $region55: #{forward.1} parent=1 // pred_check_branch
      %56 = sbr.rel (0) target = $region57
    $region56: #{forward.1} parent=1 // pred_region
      _
    $region57: #{forward.1} parent=1 // pred_fallthru
      _
    // Predicated region
    $region58: #{forward.1} parent=1 // pred_check
      _
    $region59: #{forward.1} parent=1 // pred_check_branch
      %58 = sbr.rel (0) target = $region61
    $region60: #{forward.1} parent=1 // pred_region
      _
    $region61: #{forward.1} parent=1 // pred_fallthru
      _
    // Predicated region
    $region62: #{forward.1} parent=1 // pred_check
      _
    $region63: #{forward.1} parent=1 // pred_check_branch
      %60 = sbr.rel (0) target = $region65
    $region64: #{forward.1} parent=1 // pred_region
      _
    $region65: #{forward.1} parent=1 // pred_fallthru
      _
    // Predicated region
    $region66: #{forward.1} parent=1 // pred_check
      _
    $region67: #{forward.1} parent=1 // pred_check_branch
      %62 = sbr.rel (0) target = $region69
    $region68: #{forward.1} parent=1 // pred_region
      _
    $region69: #{forward.1} parent=1 // pred_fallthru
      _
    // Predicated region
    $region70: #{forward.1} parent=1 // pred_check
      _
    $region71: #{forward.1} parent=1 // pred_check_branch
      %64 = sbr.rel (0) target = $region73
    $region72: #{forward.1} parent=1 // pred_region
      _
    $region73: #{forward.1} parent=1 // pred_fallthru
      _
    // Predicated region
    $region74: #{forward.1} parent=1 // pred_check
      _
    $region75: #{forward.1} parent=1 // pred_check_branch
      %66 = sbr.rel (0) target = $region77
    $region76: #{forward.1} parent=1 // pred_region
      _
    $region77: #{forward.1} parent=1 // pred_fallthru
      _
    // Predicated region
    $region78: #{forward.1} parent=1 // pred_check
      _
    $region79: #{forward.1} parent=1 // pred_check_branch
      %68 = sbr.rel (0) target = $region81
    $region80: #{forward.1} parent=1 // pred_region
      _
    $region81: #{forward.1} parent=1 // pred_fallthru
      _
    // Predicated region
    $region82: #{forward.1} parent=1 // pred_check
      _
    $region83: #{forward.1} parent=1 // pred_check_branch
      %70 = sbr.rel (0) target = $region85
    $region84: #{forward.1} parent=1 // pred_region
      _
    $region85: #{forward.1} parent=1 // pred_fallthru
      _
    // Predicated region
    $region86: #{forward.1} parent=1 // pred_check
      _
    $region87: #{forward.1} parent=1 // pred_check_branch
      %72 = sbr.rel (0) target = $region89
    $region88: #{forward.1} parent=1 // pred_region
      _
    $region89: #{forward.1} parent=1 // pred_fallthru
      _
    // Predicated region
    $region90: #{forward.1} parent=1 // pred_check
      _
    $region91: #{forward.1} parent=1 // pred_check_branch
      %74 = sbr.rel (0) target = $region93
    $region92: #{forward.1} parent=1 // pred_region
      _
    $region93: #{forward.1} parent=1 // pred_fallthru
      _
    %v75 = vld [vmem:[%s0] sm:$0xff]
    %v76 = vld [vmem:[%s0 + $0x8] sm:$0xff]
    %v77 = vld [vmem:[%s0 + $0x10] sm:$0xff]
    %v78 = vld [vmem:[%s0 + $0x18] sm:$0xff]
    %v79 = vld [vmem:[%s0 + $0x20] sm:$0xff]
    %v80 = vld [vmem:[%s0 + $0x28] sm:$0xff]
    %v81 = vld [vmem:[%s0 + $0x30] sm:$0xff]
    %v82 = vld [vmem:[%s0 + $0x38] sm:$0xff]
    %vm83 = vcmask 785408
    %v84 = vsel %vm83, %v75, 0.0
    %v85 = vsel %vm83, %v76, 0.0
    %v86 = vadd.f32 %v84, %v85
    %v87 = vsel %vm83, %v77, 0.0
    %v88 = vadd.f32 %v86, %v87
    %v89 = vsel %vm83, %v78, 0.0
    %v90 = vadd.f32 %v88, %v89
    %v91 = vsel %vm83, %v79, 0.0
    %v92 = vadd.f32 %v90, %v91
    %v93 = vsel %vm83, %v80, 0.0
    %v94 = vadd.f32 %v92, %v93
    %v95 = vsel %vm83, %v81, 0.0
    %v96 = vadd.f32 %v94, %v95
    %v97 = vsel %vm83, %v82, 0.0
    %v98 = vadd.f32 %v96, %v97
    %v99 = vrot.slane %v98, 4
    %v100 = vadd.f32 %v98, %v99
    %v101 = vrot.slane %v100, 2
    %v102 = vadd.f32 %v100, %v101
    %v103 = vrot.slane %v102, 1
    %v104 = vadd.f32 %v102, %v103
    %v105 = vld [vmem:[%s3] sm:$0xff]
    %v106 = vld [vmem:[%s3 + $0x8] sm:$0xff]
    %v107 = vld [vmem:[%s3 + $0x10] sm:$0xff]
    %v108 = vld [vmem:[%s3 + $0x18] sm:$0xff]
    %v109 = vld [vmem:[%s3 + $0x20] sm:$0xff]
    %v110 = vld [vmem:[%s3 + $0x28] sm:$0xff]
    %v111 = vld [vmem:[%s3 + $0x30] sm:$0xff]
    %v112 = vld [vmem:[%s3 + $0x38] sm:$0xff]
    %v113 = vld [vmem:[%s3 + $0x40] sm:$0xff]
    %v114 = vld [vmem:[%s3 + $0x48] sm:$0xff]
    %v115 = vld [vmem:[%s3 + $0x50] sm:$0xff]
    %v116 = vld [vmem:[%s3 + $0x58] sm:$0xff]
    %v118 = vsel %vm83, %v104, 0
    %120 = vmatprep.subr.mxu0 0.0
    %121 = vmatpush1.msra.mxu0 0.0
    %122 = vmatprep.subr.mxu0 0.0
    %123 = vmatpush1.msra.mxu0 0.0
    %124 = vmatprep.subr.mxu0 0.0
    %125 = vmatpush1.msra.mxu0 0.0
    %126 = vmatprep.subr.mxu0 0.0
    %127 = vmatpush1.msra.mxu0 0.0
    %128 = vmatprep.subr.mxu0 0.0
    %129 = vmatpush1.msra.mxu0 %v116
    %130 = vmatprep.subr.mxu0 0.0
    %131 = vmatpush1.msra.mxu0 %v115
    %132 = vmatprep.subr.mxu0 0.0
    %133 = vmatpush1.msra.mxu0 %v114
    %134 = vmatprep.subr.mxu0 0.0
    %135 = vmatpush1.msra.mxu0 %v113
    %136 = vmatprep.subr.mxu0 0.0
    %137 = vmatpush1.msra.mxu0 %v112
    %138 = vmatprep.subr.mxu0 0.0
    %139 = vmatpush1.msra.mxu0 %v111
    %140 = vmatprep.subr.mxu0 0.0
    %141 = vmatpush1.msra.mxu0 %v110
    %142 = vmatprep.subr.mxu0 0.0
    %143 = vmatpush1.msra.mxu0 %v109
    %144 = vmatprep.subr.mxu0 0.0
    %145 = vmatpush1.msra.mxu0 %v108
    %146 = vmatprep.subr.mxu0 0.0
    %147 = vmatpush1.msra.mxu0 %v107
    %148 = vmatprep.subr.mxu0 0.0
    %149 = vmatpush1.msra.mxu0 %v106
    %150 = vmatprep.subr.mxu0 0.0
    %151 = vmatpush1.msra.mxu0 %v105
    %152 = vmatprep.subr.mxu0 0.0
    %153 = vmatpush2.msra.mxu0 0.0
    %154 = vmatprep.subr.mxu0 0.0
    %155 = vmatpush2.msra.mxu0 0.0
    %156 = vmatprep.subr.mxu0 0.0
    %157 = vmatpush2.msra.mxu0 0.0
    %158 = vmatprep.subr.mxu0 0.0
    %159 = vmatpush2.msra.mxu0 0.0
    %160 = vmatprep.subr.mxu0 0.0
    %161 = vmatpush2.msra.mxu0 0.0
    %162 = vmatprep.subr.mxu0 0.0
    %163 = vmatpush2.msra.mxu0 0.0
    %164 = vmatprep.subr.mxu0 0.0
    %165 = vmatpush2.msra.mxu0 0.0
    %166 = vmatprep.subr.mxu0 0.0
    %167 = vmatpush2.msra.mxu0 0.0
    %168 = vmatprep.subr.mxu0 0.0
    %169 = vmatpush2.msra.mxu0 0.0
    %170 = vmatprep.subr.mxu0 0.0
    %171 = vmatpush2.msra.mxu0 0.0
    %172 = vmatprep.subr.mxu0 0.0
    %173 = vmatpush2.msra.mxu0 0.0
    %174 = vmatprep.subr.mxu0 0.0
    %175 = vmatpush2.msra.mxu0 0.0
    %176 = vmatprep.subr.mxu0 0.0
    %177 = vmatpush2.msra.mxu0 0.0
    %178 = vmatprep.subr.mxu0 0.0
    %179 = vmatpush2.msra.mxu0 0.0
    %180 = vmatprep.subr.mxu0 0.0
    %181 = vmatpush2.msra.mxu0 0.0
    %182 = vmatprep.subr.mxu0 0.0
    %183 = vmatpush2.msra.mxu0 0.0
    %184 = vmatprep.mubr.f32.mxu0 0.0
    %185 = vmatmul.mubr.f32.gmra.mxu0 %v118
    %v186 = vpop.f32.mrf.mxu0
    %v187 = vadd.f32 0.0, %v186
    %v188 = vpop.f32.mrf.mxu0
    %189 = vdwg.mxu0
    %v190 = vmul.f32 %v187, 0.00048828125
    %v191 = vld [vmem:[%s4] sm:$0x7]
    %vm192 = vcmask 23552
    %v194 = vsel %vm192, %v190, 0
    %vm196 = vcmask 1042432
    %v198 = vsel %vm196, %v191, 0
    %200 = vmatprep.subr.mxu0 0.0
    %201 = vmatpush1.msra.mxu0 0.0
    %202 = vmatprep.subr.mxu0 0.0
    %203 = vmatpush1.msra.mxu0 0.0
    %204 = vmatprep.subr.mxu0 0.0
    %205 = vmatpush1.msra.mxu0 0.0
    %206 = vmatprep.subr.mxu0 0.0
    %207 = vmatpush1.msra.mxu0 0.0
    %208 = vmatprep.subr.mxu0 0.0
    %209 = vmatpush1.msra.mxu0 0.0
    %210 = vmatprep.subr.mxu0 0.0
    %211 = vmatpush1.msra.mxu0 0.0
    %212 = vmatprep.subr.mxu0 0.0
    %213 = vmatpush1.msra.mxu0 0.0
    %214 = vmatprep.subr.mxu0 0.0
    %215 = vmatpush1.msra.mxu0 0.0
    %216 = vmatprep.subr.mxu0 0.0
    %217 = vmatpush1.msra.mxu0 0.0
    %218 = vmatprep.subr.mxu0 0.0
    %219 = vmatpush1.msra.mxu0 0.0
    %220 = vmatprep.subr.mxu0 0.0
    %221 = vmatpush1.msra.mxu0 0.0
    %222 = vmatprep.subr.mxu0 0.0
    %223 = vmatpush1.msra.mxu0 0.0
    %224 = vmatprep.subr.mxu0 0.0
    %225 = vmatpush1.msra.mxu0 0.0
    %226 = vmatprep.subr.mxu0 0.0
    %227 = vmatpush1.msra.mxu0 0.0
    %228 = vmatprep.subr.mxu0 0.0
    %229 = vmatpush1.msra.mxu0 0.0
    %230 = vmatprep.subr.mxu0 0.0
    %231 = vmatpush1.msra.mxu0 %v198
    %232 = vmatprep.subr.mxu0 0.0
    %233 = vmatpush2.msra.mxu0 0.0
    %234 = vmatprep.subr.mxu0 0.0
    %235 = vmatpush2.msra.mxu0 0.0
    %236 = vmatprep.subr.mxu0 0.0
    %237 = vmatpush2.msra.mxu0 0.0
    %238 = vmatprep.subr.mxu0 0.0
    %239 = vmatpush2.msra.mxu0 0.0
    %240 = vmatprep.subr.mxu0 0.0
    %241 = vmatpush2.msra.mxu0 0.0
    %242 = vmatprep.subr.mxu0 0.0
    %243 = vmatpush2.msra.mxu0 0.0
    %244 = vmatprep.subr.mxu0 0.0
    %245 = vmatpush2.msra.mxu0 0.0
    %246 = vmatprep.subr.mxu0 0.0
    %247 = vmatpush2.msra.mxu0 0.0
    %248 = vmatprep.subr.mxu0 0.0
    %249 = vmatpush2.msra.mxu0 0.0
    %250 = vmatprep.subr.mxu0 0.0
    %251 = vmatpush2.msra.mxu0 0.0
    %252 = vmatprep.subr.mxu0 0.0
    %253 = vmatpush2.msra.mxu0 0.0
    %254 = vmatprep.subr.mxu0 0.0
    %255 = vmatpush2.msra.mxu0 0.0
    %256 = vmatprep.subr.mxu0 0.0
    %257 = vmatpush2.msra.mxu0 0.0
    %258 = vmatprep.subr.mxu0 0.0
    %259 = vmatpush2.msra.mxu0 0.0
    %260 = vmatprep.subr.mxu0 0.0
    %261 = vmatpush2.msra.mxu0 0.0
    %262 = vmatprep.subr.mxu0 0.0
    %263 = vmatpush2.msra.mxu0 0.0
    %264 = vmatprep.mubr.f32.mxu0 0.0
    %265 = vmatmul.mubr.f32.gmra.mxu0 %v194
    %v266 = vpop.f32.mrf.mxu0
    %v267 = vadd.f32 0.0, %v266
    %v268 = vpop.f32.mrf.mxu0
    %269 = vdwg.mxu0
    %v270 = vlaneseq
    %v271 = vshrl.u32 %v270, 7
    %v272 = vsub.s32 0, %v271
    %v273 = vrot.slane %v267, %v272
    %v274 = vsub.f32 %v75, %v273
    %v275 = vsub.f32 %v76, %v273
    %v276 = vsub.f32 %v77, %v273
    %v277 = vsub.f32 %v78, %v273
    %v278 = vsub.f32 %v79, %v273
    %v279 = vsub.f32 %v80, %v273
    %v280 = vsub.f32 %v81, %v273
    %v281 = vsub.f32 %v82, %v273
    %v282 = vmul.f32 %v274, %v274
    %v283 = vmul.f32 %v275, %v275
    %v284 = vmul.f32 %v276, %v276
    %v285 = vmul.f32 %v277, %v277
    %v286 = vmul.f32 %v278, %v278
    %v287 = vmul.f32 %v279, %v279
    %v288 = vmul.f32 %v280, %v280
    %v289 = vmul.f32 %v281, %v281
    %v290 = vsel %vm83, %v282, 0.0
    %v291 = vsel %vm83, %v283, 0.0
    %v292 = vadd.f32 %v290, %v291
    %v293 = vsel %vm83, %v284, 0.0
    %v294 = vadd.f32 %v292, %v293
    %v295 = vsel %vm83, %v285, 0.0
    %v296 = vadd.f32 %v294, %v295
    %v297 = vsel %vm83, %v286, 0.0
    %v298 = vadd.f32 %v296, %v297
    %v299 = vsel %vm83, %v287, 0.0
    %v300 = vadd.f32 %v298, %v299
    %v301 = vsel %vm83, %v288, 0.0
    %v302 = vadd.f32 %v300, %v301
    %v303 = vsel %vm83, %v289, 0.0
    %v304 = vadd.f32 %v302, %v303
    %v305 = vrot.slane %v304, 4
    %v306 = vadd.f32 %v304, %v305
    %v307 = vrot.slane %v306, 2
    %v308 = vadd.f32 %v306, %v307
    %v309 = vrot.slane %v308, 1
    %v310 = vadd.f32 %v308, %v309
    %v312 = vsel %vm83, %v310, 0
    %314 = vmatprep.subr.mxu0 0.0
    %315 = vmatpush1.msra.mxu0 0.0
    %316 = vmatprep.subr.mxu0 0.0
    %317 = vmatpush1.msra.mxu0 0.0
    %318 = vmatprep.subr.mxu0 0.0
    %319 = vmatpush1.msra.mxu0 0.0
    %320 = vmatprep.subr.mxu0 0.0
    %321 = vmatpush1.msra.mxu0 0.0
    %322 = vmatprep.subr.mxu0 0.0
    %323 = vmatpush1.msra.mxu0 %v116
    %324 = vmatprep.subr.mxu0 0.0
    %325 = vmatpush1.msra.mxu0 %v115
    %326 = vmatprep.subr.mxu0 0.0
    %327 = vmatpush1.msra.mxu0 %v114
    %328 = vmatprep.subr.mxu0 0.0
    %329 = vmatpush1.msra.mxu0 %v113
    %330 = vmatprep.subr.mxu0 0.0
    %331 = vmatpush1.msra.mxu0 %v112
    %332 = vmatprep.subr.mxu0 0.0
    %333 = vmatpush1.msra.mxu0 %v111
    %334 = vmatprep.subr.mxu0 0.0
    %335 = vmatpush1.msra.mxu0 %v110
    %336 = vmatprep.subr.mxu0 0.0
    %337 = vmatpush1.msra.mxu0 %v109
    %338 = vmatprep.subr.mxu0 0.0
    %339 = vmatpush1.msra.mxu0 %v108
    %340 = vmatprep.subr.mxu0 0.0
    %341 = vmatpush1.msra.mxu0 %v107
    %342 = vmatprep.subr.mxu0 0.0
    %343 = vmatpush1.msra.mxu0 %v106
    %344 = vmatprep.subr.mxu0 0.0
    %345 = vmatpush1.msra.mxu0 %v105
    %346 = vmatprep.subr.mxu0 0.0
    %347 = vmatpush2.msra.mxu0 0.0
    %348 = vmatprep.subr.mxu0 0.0
    %349 = vmatpush2.msra.mxu0 0.0
    %350 = vmatprep.subr.mxu0 0.0
    %351 = vmatpush2.msra.mxu0 0.0
    %352 = vmatprep.subr.mxu0 0.0
    %353 = vmatpush2.msra.mxu0 0.0
    %354 = vmatprep.subr.mxu0 0.0
    %355 = vmatpush2.msra.mxu0 0.0
    %356 = vmatprep.subr.mxu0 0.0
    %357 = vmatpush2.msra.mxu0 0.0
    %358 = vmatprep.subr.mxu0 0.0
    %359 = vmatpush2.msra.mxu0 0.0
    %360 = vmatprep.subr.mxu0 0.0
    %361 = vmatpush2.msra.mxu0 0.0
    %362 = vmatprep.subr.mxu0 0.0
    %363 = vmatpush2.msra.mxu0 0.0
    %364 = vmatprep.subr.mxu0 0.0
    %365 = vmatpush2.msra.mxu0 0.0
    %366 = vmatprep.subr.mxu0 0.0
    %367 = vmatpush2.msra.mxu0 0.0
    %368 = vmatprep.subr.mxu0 0.0
    %369 = vmatpush2.msra.mxu0 0.0
    %370 = vmatprep.subr.mxu0 0.0
    %371 = vmatpush2.msra.mxu0 0.0
    %372 = vmatprep.subr.mxu0 0.0
    %373 = vmatpush2.msra.mxu0 0.0
    %374 = vmatprep.subr.mxu0 0.0
    %375 = vmatpush2.msra.mxu0 0.0
    %376 = vmatprep.subr.mxu0 0.0
    %377 = vmatpush2.msra.mxu0 0.0
    %378 = vmatprep.mubr.f32.mxu0 0.0
    %379 = vmatmul.mubr.f32.gmra.mxu0 %v312
    %v380 = vpop.f32.mrf.mxu0
    %v381 = vadd.f32 0.0, %v380
    %v382 = vpop.f32.mrf.mxu0
    %383 = vdwg.mxu0
    %v384 = vmul.f32 %v381, 0.00048828125
    %v385 = vld [vmem:[%s1] sm:$0x1]
    %v386 = vadd.f32 %v384, 1e-05
    %v387 = vrsqrt.pop %v386
    %v388 = vmul.f32 %v385, %v387
    %v390 = vsel %vm192, %v388, 0
    %392 = vmatprep.subr.mxu0 0.0
    %393 = vmatpush1.msra.mxu0 0.0
    %394 = vmatprep.subr.mxu0 0.0
    %395 = vmatpush1.msra.mxu0 0.0
    %396 = vmatprep.subr.mxu0 0.0
    %397 = vmatpush1.msra.mxu0 0.0
    %398 = vmatprep.subr.mxu0 0.0
    %399 = vmatpush1.msra.mxu0 0.0
    %400 = vmatprep.subr.mxu0 0.0
    %401 = vmatpush1.msra.mxu0 0.0
    %402 = vmatprep.subr.mxu0 0.0
    %403 = vmatpush1.msra.mxu0 0.0
    %404 = vmatprep.subr.mxu0 0.0
    %405 = vmatpush1.msra.mxu0 0.0
    %406 = vmatprep.subr.mxu0 0.0
    %407 = vmatpush1.msra.mxu0 0.0
    %408 = vmatprep.subr.mxu0 0.0
    %409 = vmatpush1.msra.mxu0 0.0
    %410 = vmatprep.subr.mxu0 0.0
    %411 = vmatpush1.msra.mxu0 0.0
    %412 = vmatprep.subr.mxu0 0.0
    %413 = vmatpush1.msra.mxu0 0.0
    %414 = vmatprep.subr.mxu0 0.0
    %415 = vmatpush1.msra.mxu0 0.0
    %416 = vmatprep.subr.mxu0 0.0
    %417 = vmatpush1.msra.mxu0 0.0
    %418 = vmatprep.subr.mxu0 0.0
    %419 = vmatpush1.msra.mxu0 0.0
    %420 = vmatprep.subr.mxu0 0.0
    %421 = vmatpush1.msra.mxu0 0.0
    %422 = vmatprep.subr.mxu0 0.0
    %423 = vmatpush1.msra.mxu0 %v198
    %424 = vmatprep.subr.mxu0 0.0
    %425 = vmatpush2.msra.mxu0 0.0
    %426 = vmatprep.subr.mxu0 0.0
    %427 = vmatpush2.msra.mxu0 0.0
    %428 = vmatprep.subr.mxu0 0.0
    %429 = vmatpush2.msra.mxu0 0.0
    %430 = vmatprep.subr.mxu0 0.0
    %431 = vmatpush2.msra.mxu0 0.0
    %432 = vmatprep.subr.mxu0 0.0
    %433 = vmatpush2.msra.mxu0 0.0
    %434 = vmatprep.subr.mxu0 0.0
    %435 = vmatpush2.msra.mxu0 0.0
    %436 = vmatprep.subr.mxu0 0.0
    %437 = vmatpush2.msra.mxu0 0.0
    %438 = vmatprep.subr.mxu0 0.0
    %439 = vmatpush2.msra.mxu0 0.0
    %440 = vmatprep.subr.mxu0 0.0
    %441 = vmatpush2.msra.mxu0 0.0
    %442 = vmatprep.subr.mxu0 0.0
    %443 = vmatpush2.msra.mxu0 0.0
    %444 = vmatprep.subr.mxu0 0.0
    %445 = vmatpush2.msra.mxu0 0.0
    %446 = vmatprep.subr.mxu0 0.0
    %447 = vmatpush2.msra.mxu0 0.0
    %448 = vmatprep.subr.mxu0 0.0
    %449 = vmatpush2.msra.mxu0 0.0
    %450 = vmatprep.subr.mxu0 0.0
    %451 = vmatpush2.msra.mxu0 0.0
    %452 = vmatprep.subr.mxu0 0.0
    %453 = vmatpush2.msra.mxu0 0.0
    %454 = vmatprep.subr.mxu0 0.0
    %455 = vmatpush2.msra.mxu0 0.0
    %456 = vmatprep.mubr.f32.mxu0 0.0
    %457 = vmatmul.mubr.f32.gmra.mxu0 %v390
    %v458 = vpop.f32.mrf.mxu0
    %v459 = vadd.f32 0.0, %v458
    %v460 = vpop.f32.mrf.mxu0
    %461 = vdwg.mxu0
    %v462 = vld [vmem:[%s2] sm:$0x1]
    %v464 = vsel %vm192, %v462, 0
    %466 = vmatprep.subr.mxu0 0.0
    %467 = vmatpush1.msra.mxu0 0.0
    %468 = vmatprep.subr.mxu0 0.0
    %469 = vmatpush1.msra.mxu0 0.0
    %470 = vmatprep.subr.mxu0 0.0
    %471 = vmatpush1.msra.mxu0 0.0
    %472 = vmatprep.subr.mxu0 0.0
    %473 = vmatpush1.msra.mxu0 0.0
    %474 = vmatprep.subr.mxu0 0.0
    %475 = vmatpush1.msra.mxu0 0.0
    %476 = vmatprep.subr.mxu0 0.0
    %477 = vmatpush1.msra.mxu0 0.0
    %478 = vmatprep.subr.mxu0 0.0
    %479 = vmatpush1.msra.mxu0 0.0
    %480 = vmatprep.subr.mxu0 0.0
    %481 = vmatpush1.msra.mxu0 0.0
    %482 = vmatprep.subr.mxu0 0.0
    %483 = vmatpush1.msra.mxu0 0.0
    %484 = vmatprep.subr.mxu0 0.0
    %485 = vmatpush1.msra.mxu0 0.0
    %486 = vmatprep.subr.mxu0 0.0
    %487 = vmatpush1.msra.mxu0 0.0
    %488 = vmatprep.subr.mxu0 0.0
    %489 = vmatpush1.msra.mxu0 0.0
    %490 = vmatprep.subr.mxu0 0.0
    %491 = vmatpush1.msra.mxu0 0.0
    %492 = vmatprep.subr.mxu0 0.0
    %493 = vmatpush1.msra.mxu0 0.0
    %494 = vmatprep.subr.mxu0 0.0
    %495 = vmatpush1.msra.mxu0 0.0
    %496 = vmatprep.subr.mxu0 0.0
    %497 = vmatpush1.msra.mxu0 %v198
    %498 = vmatprep.subr.mxu0 0.0
    %499 = vmatpush2.msra.mxu0 0.0
    %500 = vmatprep.subr.mxu0 0.0
    %501 = vmatpush2.msra.mxu0 0.0
    %502 = vmatprep.subr.mxu0 0.0
    %503 = vmatpush2.msra.mxu0 0.0
    %504 = vmatprep.subr.mxu0 0.0
    %505 = vmatpush2.msra.mxu0 0.0
    %506 = vmatprep.subr.mxu0 0.0
    %507 = vmatpush2.msra.mxu0 0.0
    %508 = vmatprep.subr.mxu0 0.0
    %509 = vmatpush2.msra.mxu0 0.0
    %510 = vmatprep.subr.mxu0 0.0
    %511 = vmatpush2.msra.mxu0 0.0
    %512 = vmatprep.subr.mxu0 0.0
    %513 = vmatpush2.msra.mxu0 0.0
    %514 = vmatprep.subr.mxu0 0.0
    %515 = vmatpush2.msra.mxu0 0.0
    %516 = vmatprep.subr.mxu0 0.0
    %517 = vmatpush2.msra.mxu0 0.0
    %518 = vmatprep.subr.mxu0 0.0
    %519 = vmatpush2.msra.mxu0 0.0
    %520 = vmatprep.subr.mxu0 0.0
    %521 = vmatpush2.msra.mxu0 0.0
    %522 = vmatprep.subr.mxu0 0.0
    %523 = vmatpush2.msra.mxu0 0.0
    %524 = vmatprep.subr.mxu0 0.0
    %525 = vmatpush2.msra.mxu0 0.0
    %526 = vmatprep.subr.mxu0 0.0
    %527 = vmatpush2.msra.mxu0 0.0
    %528 = vmatprep.subr.mxu0 0.0
    %529 = vmatpush2.msra.mxu0 0.0
    %530 = vmatprep.mubr.f32.mxu0 0.0
    %531 = vmatmul.mubr.f32.gmra.mxu0 %v464
    %v532 = vpop.f32.mrf.mxu0
    %v533 = vadd.f32 0.0, %v532
    %v534 = vpop.f32.mrf.mxu0
    %535 = vdwg.mxu0
    %v536 = vlaneseq
    %v537 = vshrl.u32 %v536, 7
    %v538 = vsub.s32 0, %v537
    %v539 = vrot.slane %v459, %v538
    %v540 = vmul.f32 %v274, %v539
    %v541 = vmul.f32 %v275, %v539
    %v542 = vmul.f32 %v276, %v539
    %v543 = vmul.f32 %v277, %v539
    %v544 = vmul.f32 %v278, %v539
    %v545 = vmul.f32 %v279, %v539
    %v546 = vmul.f32 %v280, %v539
    %v547 = vmul.f32 %v281, %v539
    %v548 = vlaneseq
    %v549 = vshrl.u32 %v548, 7
    %v550 = vsub.s32 0, %v549
    %v551 = vrot.slane %v533, %v550
    %v552 = vadd.f32 %v540, %v551
    %v553 = vadd.f32 %v541, %v551
    %v554 = vadd.f32 %v542, %v551
    %v555 = vadd.f32 %v543, %v551
    %v556 = vadd.f32 %v544, %v551
    %v557 = vadd.f32 %v545, %v551
    %v558 = vadd.f32 %v546, %v551
    %v559 = vadd.f32 %v547, %v551
    %560 = vst.msk [vmem:[#allocation2] sm:$0xff] %vm83, %v552
    %561 = vst.msk [vmem:[#allocation2 + $0x8] sm:$0xff] %vm83, %v553
    %562 = vst.msk [vmem:[#allocation2 + $0x10] sm:$0xff] %vm83, %v554
    %563 = vst.msk [vmem:[#allocation2 + $0x18] sm:$0xff] %vm83, %v555
    %564 = vst.msk [vmem:[#allocation2 + $0x20] sm:$0xff] %vm83, %v556
    %565 = vst.msk [vmem:[#allocation2 + $0x28] sm:$0xff] %vm83, %v557
    %566 = vst.msk [vmem:[#allocation2 + $0x30] sm:$0xff] %vm83, %v558
    %567 = vst.msk [vmem:[#allocation2 + $0x38] sm:$0xff] %vm83, %v559
    %v568 = vld [vmem:[#allocation2] sm:$0xff]
    %v569 = vld [vmem:[#allocation2 + $0x8] sm:$0xff]
    %v570 = vld [vmem:[#allocation2 + $0x10] sm:$0xff]
    %v571 = vld [vmem:[#allocation2 + $0x18] sm:$0xf]
    %v572 = vld [vmem:[%s5] sm:$0xff]
    %v573 = vld [vmem:[%s5 + $0x8] sm:$0xff]
    %v574 = vld [vmem:[%s5 + $0x10] sm:$0xff]
    %v575 = vld [vmem:[%s5 + $0x18] sm:$0xff]
    %v576 = vld [vmem:[%s5 + $0x20] sm:$0xff]
    %v577 = vld [vmem:[%s5 + $0x28] sm:$0xff]
    %v578 = vld [vmem:[%s5 + $0x30] sm:$0xff]
    %v579 = vld [vmem:[%s5 + $0x38] sm:$0xff]
    %v580 = vld [vmem:[%s5 + $0x40] sm:$0xff]
    %v581 = vld [vmem:[%s5 + $0x48] sm:$0xff]
    %v582 = vld [vmem:[%s5 + $0x50] sm:$0xff]
    %v583 = vld [vmem:[%s5 + $0x58] sm:$0xff]
    %v584 = vld [vmem:[%s5 + $0x60] sm:$0xff]
    %v585 = vld [vmem:[%s5 + $0x68] sm:$0xff]
    %v586 = vld [vmem:[%s5 + $0x70] sm:$0xff]
    %v587 = vld [vmem:[%s5 + $0x78] sm:$0xff]
    %v588 = vld [vmem:[%s5 + $0x80] sm:$0xff]
    %v589 = vld [vmem:[%s5 + $0x88] sm:$0xff]
    %v590 = vld [vmem:[%s5 + $0x90] sm:$0xff]
    %v591 = vld [vmem:[%s5 + $0x98] sm:$0xff]
    %v592 = vld [vmem:[%s5 + $0xa0] sm:$0xff]
    %v593 = vld [vmem:[%s5 + $0xa8] sm:$0xff]
    %v594 = vld [vmem:[%s5 + $0xb0] sm:$0xff]
    %v595 = vld [vmem:[%s5 + $0xb8] sm:$0xff]
    %v596 = vld [vmem:[#allocation2 + $0x1] sm:$0xff]
    %v597 = vld [vmem:[#allocation2 + $0x9] sm:$0xff]
    %v598 = vld [vmem:[#allocation2 + $0x11] sm:$0xff]
    %v599 = vld [vmem:[#allocation2 + $0x19] sm:$0xf]
    %s600 = scalar_lea.vmem %s5, 192
    %v601 = vld [vmem:[%s600] sm:$0xff]
    %v602 = vld [vmem:[%s600 + $0x8] sm:$0xff]
    %v603 = vld [vmem:[%s600 + $0x10] sm:$0xff]
    %v604 = vld [vmem:[%s600 + $0x18] sm:$0xff]
    %v605 = vld [vmem:[%s600 + $0x20] sm:$0xff]
    %v606 = vld [vmem:[%s600 + $0x28] sm:$0xff]
    %v607 = vld [vmem:[%s600 + $0x30] sm:$0xff]
    %v608 = vld [vmem:[%s600 + $0x38] sm:$0xff]
    %v609 = vld [vmem:[%s600 + $0x40] sm:$0xff]
    %v610 = vld [vmem:[%s600 + $0x48] sm:$0xff]
    %v611 = vld [vmem:[%s600 + $0x50] sm:$0xff]
    %v612 = vld [vmem:[%s600 + $0x58] sm:$0xff]
    %v613 = vld [vmem:[%s600 + $0x60] sm:$0xff]
    %v614 = vld [vmem:[%s600 + $0x68] sm:$0xff]
    %v615 = vld [vmem:[%s600 + $0x70] sm:$0xff]
    %v616 = vld [vmem:[%s600 + $0x78] sm:$0xff]
    %v617 = vld [vmem:[%s600 + $0x80] sm:$0xff]
    %v618 = vld [vmem:[%s600 + $0x88] sm:$0xff]
    %v619 = vld [vmem:[%s600 + $0x90] sm:$0xff]
    %v620 = vld [vmem:[%s600 + $0x98] sm:$0xff]
    %v621 = vld [vmem:[%s600 + $0xa0] sm:$0xff]
    %v622 = vld [vmem:[%s600 + $0xa8] sm:$0xff]
    %v623 = vld [vmem:[%s600 + $0xb0] sm:$0xff]
    %v624 = vld [vmem:[%s600 + $0xb8] sm:$0xff]
    %v626 = vsel %vm83, %v596, 0
    %v629 = vsel %vm83, %v597, 0
    %v632 = vsel %vm83, %v598, 0
    %v635 = vsel %vm83, %v599, 0
    %637 = vmatprep.subr.mxu0 0.0
    %638 = vmatpush1.msra.mxu0 0.0
    %639 = vmatprep.subr.mxu0 0.0
    %640 = vmatpush1.msra.mxu0 0.0
    %641 = vmatprep.subr.mxu0 0.0
    %642 = vmatpush1.msra.mxu0 0.0
    %643 = vmatprep.subr.mxu0 0.0
    %644 = vmatpush1.msra.mxu0 0.0
    %645 = vmatprep.subr.mxu0 %v624
    %646 = vmatpush1.msra.mxu0 %v623
    %647 = vmatprep.subr.mxu0 %v622
    %648 = vmatpush1.msra.mxu0 %v621
    %649 = vmatprep.subr.mxu0 %v620
    %650 = vmatpush1.msra.mxu0 %v619
    %651 = vmatprep.subr.mxu0 %v618
    %652 = vmatpush1.msra.mxu0 %v617
    %653 = vmatprep.subr.mxu0 %v616
    %654 = vmatpush1.msra.mxu0 %v615
    %655 = vmatprep.subr.mxu0 %v614
    %656 = vmatpush1.msra.mxu0 %v613
    %657 = vmatprep.subr.mxu0 %v612
    %658 = vmatpush1.msra.mxu0 %v611
    %659 = vmatprep.subr.mxu0 %v610
    %660 = vmatpush1.msra.mxu0 %v609
    %661 = vmatprep.subr.mxu0 %v608
    %662 = vmatpush1.msra.mxu0 %v607
    %663 = vmatprep.subr.mxu0 %v606
    %664 = vmatpush1.msra.mxu0 %v605
    %665 = vmatprep.subr.mxu0 %v604
    %666 = vmatpush1.msra.mxu0 %v603
    %667 = vmatprep.subr.mxu0 %v602
    %668 = vmatpush1.msra.mxu0 %v601
    %669 = vmatprep.subr.mxu0 0.0
    %670 = vmatpush2.msra.mxu0 0.0
    %671 = vmatprep.subr.mxu0 0.0
    %672 = vmatpush2.msra.mxu0 0.0
    %673 = vmatprep.subr.mxu0 0.0
    %674 = vmatpush2.msra.mxu0 0.0
    %675 = vmatprep.subr.mxu0 0.0
    %676 = vmatpush2.msra.mxu0 0.0
    %677 = vmatprep.subr.mxu0 0.0
    %678 = vmatpush2.msra.mxu0 0.0
    %679 = vmatprep.subr.mxu0 0.0
    %680 = vmatpush2.msra.mxu0 0.0
    %681 = vmatprep.subr.mxu0 0.0
    %682 = vmatpush2.msra.mxu0 0.0
    %683 = vmatprep.subr.mxu0 0.0
    %684 = vmatpush2.msra.mxu0 0.0
    %685 = vmatprep.subr.mxu0 0.0
    %686 = vmatpush2.msra.mxu0 0.0
    %687 = vmatprep.subr.mxu0 0.0
    %688 = vmatpush2.msra.mxu0 0.0
    %689 = vmatprep.subr.mxu0 0.0
    %690 = vmatpush2.msra.mxu0 0.0
    %691 = vmatprep.subr.mxu0 0.0
    %692 = vmatpush2.msra.mxu0 0.0
    %693 = vmatprep.subr.mxu0 0.0
    %694 = vmatpush2.msra.mxu0 0.0
    %695 = vmatprep.subr.mxu0 0.0
    %696 = vmatpush2.msra.mxu0 0.0
    %697 = vmatprep.subr.mxu0 0.0
    %698 = vmatpush2.msra.mxu0 0.0
    %699 = vmatprep.subr.mxu0 0.0
    %700 = vmatpush2.msra.mxu0 0.0
    %701 = vmatprep.mubr.f32.mxu0 0.0
    %702 = vmatmul.mubr.f32.gmra.mxu0 %v626
    %v703 = vpop.f32.mrf.mxu0
    %v704 = vadd.f32 0.0, %v703
    %v705 = vpop.f32.mrf.mxu0
    %v706 = vadd.f32 0.0, %v705
    %707 = vmatprep.mubr.f32.mxu0 0.0
    %708 = vmatmul.mubr.f32.gmra.mxu0 %v629
    %v709 = vpop.f32.mrf.mxu0
    %v710 = vadd.f32 0.0, %v709
    %v711 = vpop.f32.mrf.mxu0
    %v712 = vadd.f32 0.0, %v711
    %713 = vmatprep.mubr.f32.mxu0 0.0
    %714 = vmatmul.mubr.f32.gmra.mxu0 %v632
    %v715 = vpop.f32.mrf.mxu0
    %v716 = vadd.f32 0.0, %v715
    %v717 = vpop.f32.mrf.mxu0
    %v718 = vadd.f32 0.0, %v717
    %719 = vmatprep.mubr.f32.mxu0 0.0
    %720 = vmatmul.mubr.f32.gmra.mxu0 %v635
    %v721 = vpop.f32.mrf.mxu0
    %v722 = vadd.f32 0.0, %v721
    %v723 = vpop.f32.mrf.mxu0
    %v724 = vadd.f32 0.0, %v723
    %725 = vdwg.mxu0
    %v727 = vsel %vm83, %v568, 0
    %v730 = vsel %vm83, %v569, 0
    %v733 = vsel %vm83, %v570, 0
    %v736 = vsel %vm83, %v571, 0
    %738 = vmatprep.subr.mxu0 0.0
    %739 = vmatpush1.msra.mxu0 0.0
    %740 = vmatprep.subr.mxu0 0.0
    %741 = vmatpush1.msra.mxu0 0.0
    %742 = vmatprep.subr.mxu0 0.0
    %743 = vmatpush1.msra.mxu0 0.0
    %744 = vmatprep.subr.mxu0 0.0
    %745 = vmatpush1.msra.mxu0 0.0
    %746 = vmatprep.subr.mxu0 %v595
    %747 = vmatpush1.msra.mxu0 %v594
    %748 = vmatprep.subr.mxu0 %v593
    %749 = vmatpush1.msra.mxu0 %v592
    %750 = vmatprep.subr.mxu0 %v591
    %751 = vmatpush1.msra.mxu0 %v590
    %752 = vmatprep.subr.mxu0 %v589
    %753 = vmatpush1.msra.mxu0 %v588
    %754 = vmatprep.subr.mxu0 %v587
    %755 = vmatpush1.msra.mxu0 %v586
    %756 = vmatprep.subr.mxu0 %v585
    %757 = vmatpush1.msra.mxu0 %v584
    %758 = vmatprep.subr.mxu0 %v583
    %759 = vmatpush1.msra.mxu0 %v582
    %760 = vmatprep.subr.mxu0 %v581
    %761 = vmatpush1.msra.mxu0 %v580
    %762 = vmatprep.subr.mxu0 %v579
    %763 = vmatpush1.msra.mxu0 %v578
    %764 = vmatprep.subr.mxu0 %v577
    %765 = vmatpush1.msra.mxu0 %v576
    %766 = vmatprep.subr.mxu0 %v575
    %767 = vmatpush1.msra.mxu0 %v574
    %768 = vmatprep.subr.mxu0 %v573
    %769 = vmatpush1.msra.mxu0 %v572
    %770 = vmatprep.subr.mxu0 0.0
    %771 = vmatpush2.msra.mxu0 0.0
    %772 = vmatprep.subr.mxu0 0.0
    %773 = vmatpush2.msra.mxu0 0.0
    %774 = vmatprep.subr.mxu0 0.0
    %775 = vmatpush2.msra.mxu0 0.0
    %776 = vmatprep.subr.mxu0 0.0
    %777 = vmatpush2.msra.mxu0 0.0
    %778 = vmatprep.subr.mxu0 0.0
    %779 = vmatpush2.msra.mxu0 0.0
    %780 = vmatprep.subr.mxu0 0.0
    %781 = vmatpush2.msra.mxu0 0.0
    %782 = vmatprep.subr.mxu0 0.0
    %783 = vmatpush2.msra.mxu0 0.0
    %784 = vmatprep.subr.mxu0 0.0
    %785 = vmatpush2.msra.mxu0 0.0
    %786 = vmatprep.subr.mxu0 0.0
    %787 = vmatpush2.msra.mxu0 0.0
    %788 = vmatprep.subr.mxu0 0.0
    %789 = vmatpush2.msra.mxu0 0.0
    %790 = vmatprep.subr.mxu0 0.0
    %791 = vmatpush2.msra.mxu0 0.0
    %792 = vmatprep.subr.mxu0 0.0
    %793 = vmatpush2.msra.mxu0 0.0
    %794 = vmatprep.subr.mxu0 0.0
    %795 = vmatpush2.msra.mxu0 0.0
    %796 = vmatprep.subr.mxu0 0.0
    %797 = vmatpush2.msra.mxu0 0.0
    %798 = vmatprep.subr.mxu0 0.0
    %799 = vmatpush2.msra.mxu0 0.0
    %800 = vmatprep.subr.mxu0 0.0
    %801 = vmatpush2.msra.mxu0 0.0
    %802 = vmatprep.mubr.f32.mxu0 0.0
    %803 = vmatmul.mubr.f32.gmra.mxu0 %v727
    %v804 = vpop.f32.mrf.mxu0
    %v805 = vadd.f32 %v704, %v804
    %v806 = vpop.f32.mrf.mxu0
    %v807 = vadd.f32 %v706, %v806
    %808 = vmatprep.mubr.f32.mxu0 0.0
    %809 = vmatmul.mubr.f32.gmra.mxu0 %v730
    %v810 = vpop.f32.mrf.mxu0
    %v811 = vadd.f32 %v710, %v810
    %v812 = vpop.f32.mrf.mxu0
    %v813 = vadd.f32 %v712, %v812
    %814 = vmatprep.mubr.f32.mxu0 0.0
    %815 = vmatmul.mubr.f32.gmra.mxu0 %v733
    %v816 = vpop.f32.mrf.mxu0
    %v817 = vadd.f32 %v716, %v816
    %v818 = vpop.f32.mrf.mxu0
    %v819 = vadd.f32 %v718, %v818
    %820 = vmatprep.mubr.f32.mxu0 0.0
    %821 = vmatmul.mubr.f32.gmra.mxu0 %v736
    %v822 = vpop.f32.mrf.mxu0
    %v823 = vadd.f32 %v722, %v822
    %v824 = vpop.f32.mrf.mxu0
    %v825 = vadd.f32 %v724, %v824
    %826 = vdwg.mxu0
    %v827 = vld [vmem:[#allocation2 + $0x2] sm:$0xff]
    %v828 = vld [vmem:[#allocation2 + $0xa] sm:$0xff]
    %v829 = vld [vmem:[#allocation2 + $0x12] sm:$0xff]
    %v830 = vld [vmem:[#allocation2 + $0x1a] sm:$0xf]
    %s831 = scalar_lea.vmem %s5, 384
    %v832 = vld [vmem:[%s831] sm:$0xff]
    %v833 = vld [vmem:[%s831 + $0x8] sm:$0xff]
    %v834 = vld [vmem:[%s831 + $0x10] sm:$0xff]
    %v835 = vld [vmem:[%s831 + $0x18] sm:$0xff]
    %v836 = vld [vmem:[%s831 + $0x20] sm:$0xff]
    %v837 = vld [vmem:[%s831 + $0x28] sm:$0xff]
    %v838 = vld [vmem:[%s831 + $0x30] sm:$0xff]
    %v839 = vld [vmem:[%s831 + $0x38] sm:$0xff]
    %v840 = vld [vmem:[%s831 + $0x40] sm:$0xff]
    %v841 = vld [vmem:[%s831 + $0x48] sm:$0xff]
    %v842 = vld [vmem:[%s831 + $0x50] sm:$0xff]
    %v843 = vld [vmem:[%s831 + $0x58] sm:$0xff]
    %v844 = vld [vmem:[%s831 + $0x60] sm:$0xff]
    %v845 = vld [vmem:[%s831 + $0x68] sm:$0xff]
    %v846 = vld [vmem:[%s831 + $0x70] sm:$0xff]
    %v847 = vld [vmem:[%s831 + $0x78] sm:$0xff]
    %v848 = vld [vmem:[%s831 + $0x80] sm:$0xff]
    %v849 = vld [vmem:[%s831 + $0x88] sm:$0xff]
    %v850 = vld [vmem:[%s831 + $0x90] sm:$0xff]
    %v851 = vld [vmem:[%s831 + $0x98] sm:$0xff]
    %v852 = vld [vmem:[%s831 + $0xa0] sm:$0xff]
    %v853 = vld [vmem:[%s831 + $0xa8] sm:$0xff]
    %v854 = vld [vmem:[%s831 + $0xb0] sm:$0xff]
    %v855 = vld [vmem:[%s831 + $0xb8] sm:$0xff]
    %v857 = vsel %vm83, %v827, 0
    %v860 = vsel %vm83, %v828, 0
    %v863 = vsel %vm83, %v829, 0
    %v866 = vsel %vm83, %v830, 0
    %868 = vmatprep.subr.mxu0 0.0
    %869 = vmatpush1.msra.mxu0 0.0
    %870 = vmatprep.subr.mxu0 0.0
    %871 = vmatpush1.msra.mxu0 0.0
    %872 = vmatprep.subr.mxu0 0.0
    %873 = vmatpush1.msra.mxu0 0.0
    %874 = vmatprep.subr.mxu0 0.0
    %875 = vmatpush1.msra.mxu0 0.0
    %876 = vmatprep.subr.mxu0 %v855
    %877 = vmatpush1.msra.mxu0 %v854
    %878 = vmatprep.subr.mxu0 %v853
    %879 = vmatpush1.msra.mxu0 %v852
    %880 = vmatprep.subr.mxu0 %v851
    %881 = vmatpush1.msra.mxu0 %v850
    %882 = vmatprep.subr.mxu0 %v849
    %883 = vmatpush1.msra.mxu0 %v848
    %884 = vmatprep.subr.mxu0 %v847
    %885 = vmatpush1.msra.mxu0 %v846
    %886 = vmatprep.subr.mxu0 %v845
    %887 = vmatpush1.msra.mxu0 %v844
    %888 = vmatprep.subr.mxu0 %v843
    %889 = vmatpush1.msra.mxu0 %v842
    %890 = vmatprep.subr.mxu0 %v841
    %891 = vmatpush1.msra.mxu0 %v840
    %892 = vmatprep.subr.mxu0 %v839
    %893 = vmatpush1.msra.mxu0 %v838
    %894 = vmatprep.subr.mxu0 %v837
    %895 = vmatpush1.msra.mxu0 %v836
    %896 = vmatprep.subr.mxu0 %v835
    %897 = vmatpush1.msra.mxu0 %v834
    %898 = vmatprep.subr.mxu0 %v833
    %899 = vmatpush1.msra.mxu0 %v832
    %900 = vmatprep.subr.mxu0 0.0
    %901 = vmatpush2.msra.mxu0 0.0
    %902 = vmatprep.subr.mxu0 0.0
    %903 = vmatpush2.msra.mxu0 0.0
    %904 = vmatprep.subr.mxu0 0.0
    %905 = vmatpush2.msra.mxu0 0.0
    %906 = vmatprep.subr.mxu0 0.0
    %907 = vmatpush2.msra.mxu0 0.0
    %908 = vmatprep.subr.mxu0 0.0
    %909 = vmatpush2.msra.mxu0 0.0
    %910 = vmatprep.subr.mxu0 0.0
    %911 = vmatpush2.msra.mxu0 0.0
    %912 = vmatprep.subr.mxu0 0.0
    %913 = vmatpush2.msra.mxu0 0.0
    %914 = vmatprep.subr.mxu0 0.0
    %915 = vmatpush2.msra.mxu0 0.0
    %916 = vmatprep.subr.mxu0 0.0
    %917 = vmatpush2.msra.mxu0 0.0
    %918 = vmatprep.subr.mxu0 0.0
    %919 = vmatpush2.msra.mxu0 0.0
    %920 = vmatprep.subr.mxu0 0.0
    %921 = vmatpush2.msra.mxu0 0.0
    %922 = vmatprep.subr.mxu0 0.0
    %923 = vmatpush2.msra.mxu0 0.0
    %924 = vmatprep.subr.mxu0 0.0
    %925 = vmatpush2.msra.mxu0 0.0
    %926 = vmatprep.subr.mxu0 0.0
    %927 = vmatpush2.msra.mxu0 0.0
    %928 = vmatprep.subr.mxu0 0.0
    %929 = vmatpush2.msra.mxu0 0.0
    %930 = vmatprep.subr.mxu0 0.0
    %931 = vmatpush2.msra.mxu0 0.0
    %932 = vmatprep.mubr.f32.mxu0 0.0
    %933 = vmatmul.mubr.f32.gmra.mxu0 %v857
    %v934 = vpop.f32.mrf.mxu0
    %v935 = vadd.f32 0.0, %v934
    %v936 = vpop.f32.mrf.mxu0
    %v937 = vadd.f32 0.0, %v936
    %938 = vmatprep.mubr.f32.mxu0 0.0
    %939 = vmatmul.mubr.f32.gmra.mxu0 %v860
    %v940 = vpop.f32.mrf.mxu0
    %v941 = vadd.f32 0.0, %v940
    %v942 = vpop.f32.mrf.mxu0
    %v943 = vadd.f32 0.0, %v942
    %944 = vmatprep.mubr.f32.mxu0 0.0
    %945 = vmatmul.mubr.f32.gmra.mxu0 %v863
    %v946 = vpop.f32.mrf.mxu0
    %v947 = vadd.f32 0.0, %v946
    %v948 = vpop.f32.mrf.mxu0
    %v949 = vadd.f32 0.0, %v948
    %950 = vmatprep.mubr.f32.mxu0 0.0
    %951 = vmatmul.mubr.f32.gmra.mxu0 %v866
    %v952 = vpop.f32.mrf.mxu0
    %v953 = vadd.f32 0.0, %v952
    %v954 = vpop.f32.mrf.mxu0
    %v955 = vadd.f32 0.0, %v954
    %956 = vdwg.mxu0
    %v957 = vadd.f32 %v805, %v935
    %v958 = vadd.f32 %v807, %v937
    %v959 = vadd.f32 %v811, %v941
    %v960 = vadd.f32 %v813, %v943
    %v961 = vadd.f32 %v817, %v947
    %v962 = vadd.f32 %v819, %v949
    %v963 = vadd.f32 %v823, %v953
    %v964 = vadd.f32 %v825, %v955
    %v965 = vld [vmem:[#allocation2 + $0x3] sm:$0xff]
    %v966 = vld [vmem:[#allocation2 + $0xb] sm:$0xff]
    %v967 = vld [vmem:[#allocation2 + $0x13] sm:$0xff]
    %v968 = vld [vmem:[#allocation2 + $0x1b] sm:$0xf]
    %s969 = scalar_lea.vmem %s5, 576
    %v970 = vld [vmem:[%s969] sm:$0xff]
    %v971 = vld [vmem:[%s969 + $0x8] sm:$0xff]
    %v972 = vld [vmem:[%s969 + $0x10] sm:$0xff]
    %v973 = vld [vmem:[%s969 + $0x18] sm:$0xff]
    %v974 = vld [vmem:[%s969 + $0x20] sm:$0xff]
    %v975 = vld [vmem:[%s969 + $0x28] sm:$0xff]
    %v976 = vld [vmem:[%s969 + $0x30] sm:$0xff]
    %v977 = vld [vmem:[%s969 + $0x38] sm:$0xff]
    %v978 = vld [vmem:[%s969 + $0x40] sm:$0xff]
    %v979 = vld [vmem:[%s969 + $0x48] sm:$0xff]
    %v980 = vld [vmem:[%s969 + $0x50] sm:$0xff]
    %v981 = vld [vmem:[%s969 + $0x58] sm:$0xff]
    %v982 = vld [vmem:[%s969 + $0x60] sm:$0xff]
    %v983 = vld [vmem:[%s969 + $0x68] sm:$0xff]
    %v984 = vld [vmem:[%s969 + $0x70] sm:$0xff]
    %v985 = vld [vmem:[%s969 + $0x78] sm:$0xff]
    %v986 = vld [vmem:[%s969 + $0x80] sm:$0xff]
    %v987 = vld [vmem:[%s969 + $0x88] sm:$0xff]
    %v988 = vld [vmem:[%s969 + $0x90] sm:$0xff]
    %v989 = vld [vmem:[%s969 + $0x98] sm:$0xff]
    %v990 = vld [vmem:[%s969 + $0xa0] sm:$0xff]
    %v991 = vld [vmem:[%s969 + $0xa8] sm:$0xff]
    %v992 = vld [vmem:[%s969 + $0xb0] sm:$0xff]
    %v993 = vld [vmem:[%s969 + $0xb8] sm:$0xff]
    %v995 = vsel %vm83, %v965, 0
    %v998 = vsel %vm83, %v966, 0
    %v1001 = vsel %vm83, %v967, 0
    %v1004 = vsel %vm83, %v968, 0
    %1006 = vmatprep.subr.mxu0 0.0
    %1007 = vmatpush1.msra.mxu0 0.0
    %1008 = vmatprep.subr.mxu0 0.0
    %1009 = vmatpush1.msra.mxu0 0.0
    %1010 = vmatprep.subr.mxu0 0.0
    %1011 = vmatpush1.msra.mxu0 0.0
    %1012 = vmatprep.subr.mxu0 0.0
    %1013 = vmatpush1.msra.mxu0 0.0
    %1014 = vmatprep.subr.mxu0 %v993
    %1015 = vmatpush1.msra.mxu0 %v992
    %1016 = vmatprep.subr.mxu0 %v991
    %1017 = vmatpush1.msra.mxu0 %v990
    %1018 = vmatprep.subr.mxu0 %v989
    %1019 = vmatpush1.msra.mxu0 %v988
    %1020 = vmatprep.subr.mxu0 %v987
    %1021 = vmatpush1.msra.mxu0 %v986
    %1022 = vmatprep.subr.mxu0 %v985
    %1023 = vmatpush1.msra.mxu0 %v984
    %1024 = vmatprep.subr.mxu0 %v983
    %1025 = vmatpush1.msra.mxu0 %v982
    %1026 = vmatprep.subr.mxu0 %v981
    %1027 = vmatpush1.msra.mxu0 %v980
    %1028 = vmatprep.subr.mxu0 %v979
    %1029 = vmatpush1.msra.mxu0 %v978
    %1030 = vmatprep.subr.mxu0 %v977
    %1031 = vmatpush1.msra.mxu0 %v976
    %1032 = vmatprep.subr.mxu0 %v975
    %1033 = vmatpush1.msra.mxu0 %v974
    %1034 = vmatprep.subr.mxu0 %v973
    %1035 = vmatpush1.msra.mxu0 %v972
    %1036 = vmatprep.subr.mxu0 %v971
    %1037 = vmatpush1.msra.mxu0 %v970
    %1038 = vmatprep.subr.mxu0 0.0
    %1039 = vmatpush2.msra.mxu0 0.0
    %1040 = vmatprep.subr.mxu0 0.0
    %1041 = vmatpush2.msra.mxu0 0.0
    %1042 = vmatprep.subr.mxu0 0.0
    %1043 = vmatpush2.msra.mxu0 0.0
    %1044 = vmatprep.subr.mxu0 0.0
    %1045 = vmatpush2.msra.mxu0 0.0
    %1046 = vmatprep.subr.mxu0 0.0
    %1047 = vmatpush2.msra.mxu0 0.0
    %1048 = vmatprep.subr.mxu0 0.0
    %1049 = vmatpush2.msra.mxu0 0.0
    %1050 = vmatprep.subr.mxu0 0.0
    %1051 = vmatpush2.msra.mxu0 0.0
    %1052 = vmatprep.subr.mxu0 0.0
    %1053 = vmatpush2.msra.mxu0 0.0
    %1054 = vmatprep.subr.mxu0 0.0
    %1055 = vmatpush2.msra.mxu0 0.0
    %1056 = vmatprep.subr.mxu0 0.0
    %1057 = vmatpush2.msra.mxu0 0.0
    %1058 = vmatprep.subr.mxu0 0.0
    %1059 = vmatpush2.msra.mxu0 0.0
    %1060 = vmatprep.subr.mxu0 0.0
    %1061 = vmatpush2.msra.mxu0 0.0
    %1062 = vmatprep.subr.mxu0 0.0
    %1063 = vmatpush2.msra.mxu0 0.0
    %1064 = vmatprep.subr.mxu0 0.0
    %1065 = vmatpush2.msra.mxu0 0.0
    %1066 = vmatprep.subr.mxu0 0.0
    %1067 = vmatpush2.msra.mxu0 0.0
    %1068 = vmatprep.subr.mxu0 0.0
    %1069 = vmatpush2.msra.mxu0 0.0
    %1070 = vmatprep.mubr.f32.mxu0 0.0
    %1071 = vmatmul.mubr.f32.gmra.mxu0 %v995
    %v1072 = vpop.f32.mrf.mxu0
    %v1073 = vadd.f32 0.0, %v1072
    %v1074 = vpop.f32.mrf.mxu0
    %v1075 = vadd.f32 0.0, %v1074
    %1076 = vmatprep.mubr.f32.mxu0 0.0
    %1077 = vmatmul.mubr.f32.gmra.mxu0 %v998
    %v1078 = vpop.f32.mrf.mxu0
    %v1079 = vadd.f32 0.0, %v1078
    %v1080 = vpop.f32.mrf.mxu0
    %v1081 = vadd.f32 0.0, %v1080
    %1082 = vmatprep.mubr.f32.mxu0 0.0
    %1083 = vmatmul.mubr.f32.gmra.mxu0 %v1001
    %v1084 = vpop.f32.mrf.mxu0
    %v1085 = vadd.f32 0.0, %v1084
    %v1086 = vpop.f32.mrf.mxu0
    %v1087 = vadd.f32 0.0, %v1086
    %1088 = vmatprep.mubr.f32.mxu0 0.0
    %1089 = vmatmul.mubr.f32.gmra.mxu0 %v1004
    %v1090 = vpop.f32.mrf.mxu0
    %v1091 = vadd.f32 0.0, %v1090
    %v1092 = vpop.f32.mrf.mxu0
    %v1093 = vadd.f32 0.0, %v1092
    %1094 = vdwg.mxu0
    %v1095 = vadd.f32 %v957, %v1073
    %v1096 = vadd.f32 %v958, %v1075
    %v1097 = vadd.f32 %v959, %v1079
    %v1098 = vadd.f32 %v960, %v1081
    %v1099 = vadd.f32 %v961, %v1085
    %v1100 = vadd.f32 %v962, %v1087
    %v1101 = vadd.f32 %v963, %v1091
    %v1102 = vadd.f32 %v964, %v1093
    %v1103 = vld [vmem:[#allocation2 + $0x4] sm:$0xff]
    %v1104 = vld [vmem:[#allocation2 + $0xc] sm:$0xff]
    %v1105 = vld [vmem:[#allocation2 + $0x14] sm:$0xff]
    %v1106 = vld [vmem:[#allocation2 + $0x1c] sm:$0xf]
    %s1107 = scalar_lea.vmem %s5, 768
    %v1108 = vld [vmem:[%s1107] sm:$0xff]
    %v1109 = vld [vmem:[%s1107 + $0x8] sm:$0xff]
    %v1110 = vld [vmem:[%s1107 + $0x10] sm:$0xff]
    %v1111 = vld [vmem:[%s1107 + $0x18] sm:$0xff]
    %v1112 = vld [vmem:[%s1107 + $0x20] sm:$0xff]
    %v1113 = vld [vmem:[%s1107 + $0x28] sm:$0xff]
    %v1114 = vld [vmem:[%s1107 + $0x30] sm:$0xff]
    %v1115 = vld [vmem:[%s1107 + $0x38] sm:$0xff]
    %v1116 = vld [vmem:[%s1107 + $0x40] sm:$0xff]
    %v1117 = vld [vmem:[%s1107 + $0x48] sm:$0xff]
    %v1118 = vld [vmem:[%s1107 + $0x50] sm:$0xff]
    %v1119 = vld [vmem:[%s1107 + $0x58] sm:$0xff]
    %v1120 = vld [vmem:[%s1107 + $0x60] sm:$0xff]
    %v1121 = vld [vmem:[%s1107 + $0x68] sm:$0xff]
    %v1122 = vld [vmem:[%s1107 + $0x70] sm:$0xff]
    %v1123 = vld [vmem:[%s1107 + $0x78] sm:$0xff]
    %v1124 = vld [vmem:[%s1107 + $0x80] sm:$0xff]
    %v1125 = vld [vmem:[%s1107 + $0x88] sm:$0xff]
    %v1126 = vld [vmem:[%s1107 + $0x90] sm:$0xff]
    %v1127 = vld [vmem:[%s1107 + $0x98] sm:$0xff]
    %v1128 = vld [vmem:[%s1107 + $0xa0] sm:$0xff]
    %v1129 = vld [vmem:[%s1107 + $0xa8] sm:$0xff]
    %v1130 = vld [vmem:[%s1107 + $0xb0] sm:$0xff]
    %v1131 = vld [vmem:[%s1107 + $0xb8] sm:$0xff]
    %v1133 = vsel %vm83, %v1103, 0
    %v1136 = vsel %vm83, %v1104, 0
    %v1139 = vsel %vm83, %v1105, 0
    %v1142 = vsel %vm83, %v1106, 0
    %1144 = vmatprep.subr.mxu0 0.0
    %1145 = vmatpush1.msra.mxu0 0.0
    %1146 = vmatprep.subr.mxu0 0.0
    %1147 = vmatpush1.msra.mxu0 0.0
    %1148 = vmatprep.subr.mxu0 0.0
    %1149 = vmatpush1.msra.mxu0 0.0
    %1150 = vmatprep.subr.mxu0 0.0
    %1151 = vmatpush1.msra.mxu0 0.0
    %1152 = vmatprep.subr.mxu0 %v1131
    %1153 = vmatpush1.msra.mxu0 %v1130
    %1154 = vmatprep.subr.mxu0 %v1129
    %1155 = vmatpush1.msra.mxu0 %v1128
    %1156 = vmatprep.subr.mxu0 %v1127
    %1157 = vmatpush1.msra.mxu0 %v1126
    %1158 = vmatprep.subr.mxu0 %v1125
    %1159 = vmatpush1.msra.mxu0 %v1124
    %1160 = vmatprep.subr.mxu0 %v1123
    %1161 = vmatpush1.msra.mxu0 %v1122
    %1162 = vmatprep.subr.mxu0 %v1121
    %1163 = vmatpush1.msra.mxu0 %v1120
    %1164 = vmatprep.subr.mxu0 %v1119
    %1165 = vmatpush1.msra.mxu0 %v1118
    %1166 = vmatprep.subr.mxu0 %v1117
    %1167 = vmatpush1.msra.mxu0 %v1116
    %1168 = vmatprep.subr.mxu0 %v1115
    %1169 = vmatpush1.msra.mxu0 %v1114
    %1170 = vmatprep.subr.mxu0 %v1113
    %1171 = vmatpush1.msra.mxu0 %v1112
    %1172 = vmatprep.subr.mxu0 %v1111
    %1173 = vmatpush1.msra.mxu0 %v1110
    %1174 = vmatprep.subr.mxu0 %v1109
    %1175 = vmatpush1.msra.mxu0 %v1108
    %1176 = vmatprep.subr.mxu0 0.0
    %1177 = vmatpush2.msra.mxu0 0.0
    %1178 = vmatprep.subr.mxu0 0.0
    %1179 = vmatpush2.msra.mxu0 0.0
    %1180 = vmatprep.subr.mxu0 0.0
    %1181 = vmatpush2.msra.mxu0 0.0
    %1182 = vmatprep.subr.mxu0 0.0
    %1183 = vmatpush2.msra.mxu0 0.0
    %1184 = vmatprep.subr.mxu0 0.0
    %1185 = vmatpush2.msra.mxu0 0.0
    %1186 = vmatprep.subr.mxu0 0.0
    %1187 = vmatpush2.msra.mxu0 0.0
    %1188 = vmatprep.subr.mxu0 0.0
    %1189 = vmatpush2.msra.mxu0 0.0
    %1190 = vmatprep.subr.mxu0 0.0
    %1191 = vmatpush2.msra.mxu0 0.0
    %1192 = vmatprep.subr.mxu0 0.0
    %1193 = vmatpush2.msra.mxu0 0.0
    %1194 = vmatprep.subr.mxu0 0.0
    %1195 = vmatpush2.msra.mxu0 0.0
    %1196 = vmatprep.subr.mxu0 0.0
    %1197 = vmatpush2.msra.mxu0 0.0
    %1198 = vmatprep.subr.mxu0 0.0
    %1199 = vmatpush2.msra.mxu0 0.0
    %1200 = vmatprep.subr.mxu0 0.0
    %1201 = vmatpush2.msra.mxu0 0.0
    %1202 = vmatprep.subr.mxu0 0.0
    %1203 = vmatpush2.msra.mxu0 0.0
    %1204 = vmatprep.subr.mxu0 0.0
    %1205 = vmatpush2.msra.mxu0 0.0
    %1206 = vmatprep.subr.mxu0 0.0
    %1207 = vmatpush2.msra.mxu0 0.0
    %1208 = vmatprep.mubr.f32.mxu0 0.0
    %1209 = vmatmul.mubr.f32.gmra.mxu0 %v1133
    %v1210 = vpop.f32.mrf.mxu0
    %v1211 = vadd.f32 0.0, %v1210
    %v1212 = vpop.f32.mrf.mxu0
    %v1213 = vadd.f32 0.0, %v1212
    %1214 = vmatprep.mubr.f32.mxu0 0.0
    %1215 = vmatmul.mubr.f32.gmra.mxu0 %v1136
    %v1216 = vpop.f32.mrf.mxu0
    %v1217 = vadd.f32 0.0, %v1216
    %v1218 = vpop.f32.mrf.mxu0
    %v1219 = vadd.f32 0.0, %v1218
    %1220 = vmatprep.mubr.f32.mxu0 0.0
    %1221 = vmatmul.mubr.f32.gmra.mxu0 %v1139
    %v1222 = vpop.f32.mrf.mxu0
    %v1223 = vadd.f32 0.0, %v1222
    %v1224 = vpop.f32.mrf.mxu0
    %v1225 = vadd.f32 0.0, %v1224
    %1226 = vmatprep.mubr.f32.mxu0 0.0
    %1227 = vmatmul.mubr.f32.gmra.mxu0 %v1142
    %v1228 = vpop.f32.mrf.mxu0
    %v1229 = vadd.f32 0.0, %v1228
    %v1230 = vpop.f32.mrf.mxu0
    %v1231 = vadd.f32 0.0, %v1230
    %1232 = vdwg.mxu0
    %v1233 = vadd.f32 %v1095, %v1211
    %v1234 = vadd.f32 %v1096, %v1213
    %v1235 = vadd.f32 %v1097, %v1217
    %v1236 = vadd.f32 %v1098, %v1219
    %v1237 = vadd.f32 %v1099, %v1223
    %v1238 = vadd.f32 %v1100, %v1225
    %v1239 = vadd.f32 %v1101, %v1229
    %v1240 = vadd.f32 %v1102, %v1231
    %v1241 = vld [vmem:[%s6] sm:$0x3]
    %v1243 = vlaneseq
    %v1244 = vshrl.u32 %v1243, 7
    %v1245 = vsub.s32 0, %v1244
    %v1246 = vrot.slane %v1241, %v1245
    %v1247 = vlaneseq
    %v1248 = vshrl.u32 %v1247, 7
    %v1249 = vsub.s32 1, %v1248
    %v1250 = vrot.slane %v1241, %v1249
    %v1253 = vadd.f32 %v1233, %v1246
    %v1254 = vadd.f32 %v1234, %v1250
    %v1255 = vadd.f32 %v1235, %v1246
    %v1256 = vadd.f32 %v1236, %v1250
    %v1257 = vadd.f32 %v1237, %v1246
    %v1258 = vadd.f32 %v1238, %v1250
    %v1259 = vadd.f32 %v1239, %v1246
    %v1260 = vadd.f32 %v1240, %v1250
    %v1261 = vmax.f32 %v1253, 0.0
    %v1262 = vmax.f32 %v1254, 0.0
    %v1263 = vmax.f32 %v1255, 0.0
    %v1264 = vmax.f32 %v1256, 0.0
    %v1265 = vmax.f32 %v1257, 0.0
    %v1266 = vmax.f32 %v1258, 0.0
    %v1267 = vmax.f32 %v1259, 0.0
    %v1268 = vmax.f32 %v1260, 0.0
    %v1269 = vld [vmem:[%s7] sm:$0xff]
    %v1270 = vld [vmem:[%s7 + $0x8] sm:$0x3f]
    %vm1271 = vcmask 228352
    %v1273 = vsel %vm1271, %v1269, 0
    %v1276 = vsel %vm1271, %v1270, 0
    %vm1278 = vcmask 1043456
    %v1280 = vsel %vm1278, %v1267, 0
    %v1283 = vsel %vm1278, %v1268, 0
    %1285 = vmatprep.subr.mxu0 0.0
    %1286 = vmatpush1.msra.mxu0 0.0
    %1287 = vmatprep.subr.mxu0 0.0
    %1288 = vmatpush1.msra.mxu0 0.0
    %1289 = vmatprep.subr.mxu0 0.0
    %1290 = vmatpush1.msra.mxu0 0.0
    %1291 = vmatprep.subr.mxu0 0.0
    %1292 = vmatpush1.msra.mxu0 0.0
    %1293 = vmatprep.subr.mxu0 0.0
    %1294 = vmatpush1.msra.mxu0 0.0
    %1295 = vmatprep.subr.mxu0 0.0
    %1296 = vmatpush1.msra.mxu0 0.0
    %1297 = vmatprep.subr.mxu0 0.0
    %1298 = vmatpush1.msra.mxu0 0.0
    %1299 = vmatprep.subr.mxu0 0.0
    %1300 = vmatpush1.msra.mxu0 0.0
    %1301 = vmatprep.subr.mxu0 0.0
    %1302 = vmatpush1.msra.mxu0 0.0
    %1303 = vmatprep.subr.mxu0 0.0
    %1304 = vmatpush1.msra.mxu0 0.0
    %1305 = vmatprep.subr.mxu0 0.0
    %1306 = vmatpush1.msra.mxu0 0.0
    %1307 = vmatprep.subr.mxu0 0.0
    %1308 = vmatpush1.msra.mxu0 0.0
    %1309 = vmatprep.subr.mxu0 %v1283
    %1310 = vmatpush1.msra.mxu0 %v1280
    %1311 = vmatprep.subr.mxu0 %v1266
    %1312 = vmatpush1.msra.mxu0 %v1265
    %1313 = vmatprep.subr.mxu0 %v1264
    %1314 = vmatpush1.msra.mxu0 %v1263
    %1315 = vmatprep.subr.mxu0 %v1262
    %1316 = vmatpush1.msra.mxu0 %v1261
    %1317 = vmatprep.subr.mxu0 0.0
    %1318 = vmatpush2.msra.mxu0 0.0
    %1319 = vmatprep.subr.mxu0 0.0
    %1320 = vmatpush2.msra.mxu0 0.0
    %1321 = vmatprep.subr.mxu0 0.0
    %1322 = vmatpush2.msra.mxu0 0.0
    %1323 = vmatprep.subr.mxu0 0.0
    %1324 = vmatpush2.msra.mxu0 0.0
    %1325 = vmatprep.subr.mxu0 0.0
    %1326 = vmatpush2.msra.mxu0 0.0
    %1327 = vmatprep.subr.mxu0 0.0
    %1328 = vmatpush2.msra.mxu0 0.0
    %1329 = vmatprep.subr.mxu0 0.0
    %1330 = vmatpush2.msra.mxu0 0.0
    %1331 = vmatprep.subr.mxu0 0.0
    %1332 = vmatpush2.msra.mxu0 0.0
    %1333 = vmatprep.subr.mxu0 0.0
    %1334 = vmatpush2.msra.mxu0 0.0
    %1335 = vmatprep.subr.mxu0 0.0
    %1336 = vmatpush2.msra.mxu0 0.0
    %1337 = vmatprep.subr.mxu0 0.0
    %1338 = vmatpush2.msra.mxu0 0.0
    %1339 = vmatprep.subr.mxu0 0.0
    %1340 = vmatpush2.msra.mxu0 0.0
    %1341 = vmatprep.subr.mxu0 0.0
    %1342 = vmatpush2.msra.mxu0 0.0
    %1343 = vmatprep.subr.mxu0 0.0
    %1344 = vmatpush2.msra.mxu0 0.0
    %1345 = vmatprep.subr.mxu0 0.0
    %1346 = vmatpush2.msra.mxu0 0.0
    %1347 = vmatprep.subr.mxu0 0.0
    %1348 = vmatpush2.msra.mxu0 0.0
    %1349 = vmatprep.mubr.f32.mxu0 0.0
    %1350 = vmatmul.mubr.f32.gmra.mxu0 %v1273
    %v1351 = vpop.f32.mrf.mxu0
    %v1352 = vadd.f32 0.0, %v1351
    %v1353 = vpop.f32.mrf.mxu0
    %v1354 = vadd.f32 0.0, %v1353
    %1355 = vmatprep.mubr.f32.mxu0 0.0
    %1356 = vmatmul.mubr.f32.gmra.mxu0 %v1276
    %v1357 = vpop.f32.mrf.mxu0
    %v1358 = vadd.f32 0.0, %v1357
    %v1359 = vpop.f32.mrf.mxu0
    %v1360 = vadd.f32 0.0, %v1359
    %1361 = vdwg.mxu0
    %s1362 = scalar_lea.vmem %s7, 16
    %v1363 = vld [vmem:[%s1362] sm:$0xff]
    %v1364 = vld [vmem:[%s1362 + $0x8] sm:$0x3f]
    %v1366 = vsel %vm1271, %v1363, 0
    %v1369 = vsel %vm1271, %v1364, 0
    %1371 = vmatprep.subr.mxu0 0.0
    %1372 = vmatpush1.msra.mxu0 0.0
    %1373 = vmatprep.subr.mxu0 0.0
    %1374 = vmatpush1.msra.mxu0 0.0
    %1375 = vmatprep.subr.mxu0 0.0
    %1376 = vmatpush1.msra.mxu0 0.0
    %1377 = vmatprep.subr.mxu0 0.0
    %1378 = vmatpush1.msra.mxu0 0.0
    %1379 = vmatprep.subr.mxu0 0.0
    %1380 = vmatpush1.msra.mxu0 0.0
    %1381 = vmatprep.subr.mxu0 0.0
    %1382 = vmatpush1.msra.mxu0 0.0
    %1383 = vmatprep.subr.mxu0 0.0
    %1384 = vmatpush1.msra.mxu0 0.0
    %1385 = vmatprep.subr.mxu0 0.0
    %1386 = vmatpush1.msra.mxu0 0.0
    %1387 = vmatprep.subr.mxu0 0.0
    %1388 = vmatpush1.msra.mxu0 0.0
    %1389 = vmatprep.subr.mxu0 0.0
    %1390 = vmatpush1.msra.mxu0 0.0
    %1391 = vmatprep.subr.mxu0 0.0
    %1392 = vmatpush1.msra.mxu0 0.0
    %1393 = vmatprep.subr.mxu0 0.0
    %1394 = vmatpush1.msra.mxu0 0.0
    %1395 = vmatprep.subr.mxu0 %v1283
    %1396 = vmatpush1.msra.mxu0 %v1280
    %1397 = vmatprep.subr.mxu0 %v1266
    %1398 = vmatpush1.msra.mxu0 %v1265
    %1399 = vmatprep.subr.mxu0 %v1264
    %1400 = vmatpush1.msra.mxu0 %v1263
    %1401 = vmatprep.subr.mxu0 %v1262
    %1402 = vmatpush1.msra.mxu0 %v1261
    %1403 = vmatprep.subr.mxu0 0.0
    %1404 = vmatpush2.msra.mxu0 0.0
    %1405 = vmatprep.subr.mxu0 0.0
    %1406 = vmatpush2.msra.mxu0 0.0
    %1407 = vmatprep.subr.mxu0 0.0
    %1408 = vmatpush2.msra.mxu0 0.0
    %1409 = vmatprep.subr.mxu0 0.0
    %1410 = vmatpush2.msra.mxu0 0.0
    %1411 = vmatprep.subr.mxu0 0.0
    %1412 = vmatpush2.msra.mxu0 0.0
    %1413 = vmatprep.subr.mxu0 0.0
    %1414 = vmatpush2.msra.mxu0 0.0
    %1415 = vmatprep.subr.mxu0 0.0
    %1416 = vmatpush2.msra.mxu0 0.0
    %1417 = vmatprep.subr.mxu0 0.0
    %1418 = vmatpush2.msra.mxu0 0.0
    %1419 = vmatprep.subr.mxu0 0.0
    %1420 = vmatpush2.msra.mxu0 0.0
    %1421 = vmatprep.subr.mxu0 0.0
    %1422 = vmatpush2.msra.mxu0 0.0
    %1423 = vmatprep.subr.mxu0 0.0
    %1424 = vmatpush2.msra.mxu0 0.0
    %1425 = vmatprep.subr.mxu0 0.0
    %1426 = vmatpush2.msra.mxu0 0.0
    %1427 = vmatprep.subr.mxu0 0.0
    %1428 = vmatpush2.msra.mxu0 0.0
    %1429 = vmatprep.subr.mxu0 0.0
    %1430 = vmatpush2.msra.mxu0 0.0
    %1431 = vmatprep.subr.mxu0 0.0
    %1432 = vmatpush2.msra.mxu0 0.0
    %1433 = vmatprep.subr.mxu0 0.0
    %1434 = vmatpush2.msra.mxu0 0.0
    %1435 = vmatprep.mubr.f32.mxu0 0.0
    %1436 = vmatmul.mubr.f32.gmra.mxu0 %v1366
    %v1437 = vpop.f32.mrf.mxu0
    %v1438 = vadd.f32 0.0, %v1437
    %v1439 = vpop.f32.mrf.mxu0
    %v1440 = vadd.f32 0.0, %v1439
    %1441 = vmatprep.mubr.f32.mxu0 0.0
    %1442 = vmatmul.mubr.f32.gmra.mxu0 %v1369
    %v1443 = vpop.f32.mrf.mxu0
    %v1444 = vadd.f32 0.0, %v1443
    %v1445 = vpop.f32.mrf.mxu0
    %v1446 = vadd.f32 0.0, %v1445
    %1447 = vdwg.mxu0
    %v1448 = vmax.f32 %v1352, %v1438
    %v1449 = vmax.f32 %v1354, %v1440
    %v1450 = vmax.f32 %v1358, %v1444
    %v1451 = vmax.f32 %v1360, %v1446
    %v1452 = vld [vmem:[%s8] sm:$0xff]
    %v1453 = vld [vmem:[%s8 + $0x8] sm:$0xff]
    %v1454 = vld [vmem:[%s8 + $0x10] sm:$0xff]
    %v1455 = vld [vmem:[%s8 + $0x18] sm:$0xff]
    %v1456 = vld [vmem:[%s8 + $0x20] sm:$0xff]
    %v1457 = vld [vmem:[%s8 + $0x28] sm:$0xff]
    %v1458 = vld [vmem:[%s8 + $0x30] sm:$0xff]
    %v1459 = vld [vmem:[%s8 + $0x38] sm:$0xff]
    %v1460 = vld [vmem:[%s8 + $0x40] sm:$0xff]
    %v1461 = vld [vmem:[%s8 + $0x48] sm:$0xff]
    %v1462 = vld [vmem:[%s8 + $0x50] sm:$0xff]
    %v1463 = vld [vmem:[%s8 + $0x58] sm:$0xff]
    %v1464 = vld [vmem:[%s8 + $0x60] sm:$0xff]
    %v1465 = vld [vmem:[%s8 + $0x68] sm:$0xff]
    %v1466 = vld [vmem:[%s8 + $0x70] sm:$0xff]
    %v1467 = vld [vmem:[%s8 + $0x78] sm:$0xff]
    %v1468 = vld [vmem:[%s8 + $0x80] sm:$0xff]
    %v1469 = vld [vmem:[%s8 + $0x88] sm:$0xff]
    %v1470 = vld [vmem:[%s8 + $0x90] sm:$0xff]
    %v1471 = vld [vmem:[%s8 + $0x98] sm:$0xff]
    %v1472 = vld [vmem:[%s8 + $0xa0] sm:$0xff]
    %v1473 = vld [vmem:[%s8 + $0xa8] sm:$0xff]
    %v1474 = vld [vmem:[%s8 + $0xb0] sm:$0xff]
    %v1475 = vld [vmem:[%s8 + $0xb8] sm:$0xff]
    %v1476 = vld [vmem:[%s8 + $0xc0] sm:$0xff]
    %v1477 = vld [vmem:[%s8 + $0xc8] sm:$0xff]
    %v1478 = vld [vmem:[%s8 + $0xd0] sm:$0xff]
    %v1479 = vld [vmem:[%s8 + $0xd8] sm:$0xff]
    %v1481 = vsel %vm83, %v1449, 0
    %v1484 = vsel %vm83, %v1451, 0
    %1486 = vmatprep.subr.mxu0 0.0
    %1487 = vmatpush1.msra.mxu0 %v1467
    %1488 = vmatprep.subr.mxu0 0.0
    %1489 = vmatpush1.msra.mxu0 %v1466
    %1490 = vmatprep.subr.mxu0 0.0
    %1491 = vmatpush1.msra.mxu0 %v1465
    %1492 = vmatprep.subr.mxu0 0.0
    %1493 = vmatpush1.msra.mxu0 %v1464
    %1494 = vmatprep.subr.mxu0 0.0
    %1495 = vmatpush1.msra.mxu0 %v1463
    %1496 = vmatprep.subr.mxu0 0.0
    %1497 = vmatpush1.msra.mxu0 %v1462
    %1498 = vmatprep.subr.mxu0 0.0
    %1499 = vmatpush1.msra.mxu0 %v1461
    %1500 = vmatprep.subr.mxu0 0.0
    %1501 = vmatpush1.msra.mxu0 %v1460
    %1502 = vmatprep.subr.mxu0 0.0
    %1503 = vmatpush1.msra.mxu0 %v1459
    %1504 = vmatprep.subr.mxu0 0.0
    %1505 = vmatpush1.msra.mxu0 %v1458
    %1506 = vmatprep.subr.mxu0 0.0
    %1507 = vmatpush1.msra.mxu0 %v1457
    %1508 = vmatprep.subr.mxu0 0.0
    %1509 = vmatpush1.msra.mxu0 %v1456
    %1510 = vmatprep.subr.mxu0 0.0
    %1511 = vmatpush1.msra.mxu0 %v1455
    %1512 = vmatprep.subr.mxu0 0.0
    %1513 = vmatpush1.msra.mxu0 %v1454
    %1514 = vmatprep.subr.mxu0 0.0
    %1515 = vmatpush1.msra.mxu0 %v1453
    %1516 = vmatprep.subr.mxu0 0.0
    %1517 = vmatpush1.msra.mxu0 %v1452
    %1518 = vmatprep.subr.mxu0 0.0
    %1519 = vmatpush2.msra.mxu0 0.0
    %1520 = vmatprep.subr.mxu0 0.0
    %1521 = vmatpush2.msra.mxu0 0.0
    %1522 = vmatprep.subr.mxu0 0.0
    %1523 = vmatpush2.msra.mxu0 0.0
    %1524 = vmatprep.subr.mxu0 0.0
    %1525 = vmatpush2.msra.mxu0 0.0
    %1526 = vmatprep.subr.mxu0 0.0
    %1527 = vmatpush2.msra.mxu0 %v1479
    %1528 = vmatprep.subr.mxu0 0.0
    %1529 = vmatpush2.msra.mxu0 %v1478
    %1530 = vmatprep.subr.mxu0 0.0
    %1531 = vmatpush2.msra.mxu0 %v1477
    %1532 = vmatprep.subr.mxu0 0.0
    %1533 = vmatpush2.msra.mxu0 %v1476
    %1534 = vmatprep.subr.mxu0 0.0
    %1535 = vmatpush2.msra.mxu0 %v1475
    %1536 = vmatprep.subr.mxu0 0.0
    %1537 = vmatpush2.msra.mxu0 %v1474
    %1538 = vmatprep.subr.mxu0 0.0
    %1539 = vmatpush2.msra.mxu0 %v1473
    %1540 = vmatprep.subr.mxu0 0.0
    %1541 = vmatpush2.msra.mxu0 %v1472
    %1542 = vmatprep.subr.mxu0 0.0
    %1543 = vmatpush2.msra.mxu0 %v1471
    %1544 = vmatprep.subr.mxu0 0.0
    %1545 = vmatpush2.msra.mxu0 %v1470
    %1546 = vmatprep.subr.mxu0 0.0
    %1547 = vmatpush2.msra.mxu0 %v1469
    %1548 = vmatprep.subr.mxu0 0.0
    %1549 = vmatpush2.msra.mxu0 %v1468
    %1550 = vmatprep.mubr.f32.mxu0 %v1481
    %1551 = vmatmul.mubr.f32.gmra.mxu0 %v1448
    %v1552 = vpop.f32.mrf.mxu0
    %v1553 = vadd.f32 0.0, %v1552
    %v1554 = vpop.f32.mrf.mxu0
    %1555 = vmatprep.mubr.f32.mxu0 %v1484
    %1556 = vmatmul.mubr.f32.gmra.mxu0 %v1450
    %v1557 = vpop.f32.mrf.mxu0
    %v1558 = vadd.f32 0.0, %v1557
    %v1559 = vpop.f32.mrf.mxu0
    %1560 = vdwg.mxu0
    %s1561 = scalar_lea.vmem %s8, 224
    %v1562 = vld [vmem:[%s1561] sm:$0xff]
    %v1563 = vld [vmem:[%s1561 + $0x8] sm:$0xff]
    %v1564 = vld [vmem:[%s1561 + $0x10] sm:$0xff]
    %v1565 = vld [vmem:[%s1561 + $0x18] sm:$0xff]
    %v1566 = vld [vmem:[%s1561 + $0x20] sm:$0xff]
    %v1567 = vld [vmem:[%s1561 + $0x28] sm:$0xff]
    %v1568 = vld [vmem:[%s1561 + $0x30] sm:$0xff]
    %v1569 = vld [vmem:[%s1561 + $0x38] sm:$0xff]
    %v1570 = vld [vmem:[%s1561 + $0x40] sm:$0xff]
    %v1571 = vld [vmem:[%s1561 + $0x48] sm:$0xff]
    %v1572 = vld [vmem:[%s1561 + $0x50] sm:$0xff]
    %v1573 = vld [vmem:[%s1561 + $0x58] sm:$0xff]
    %v1574 = vld [vmem:[%s1561 + $0x60] sm:$0xff]
    %v1575 = vld [vmem:[%s1561 + $0x68] sm:$0xff]
    %v1576 = vld [vmem:[%s1561 + $0x70] sm:$0xff]
    %v1577 = vld [vmem:[%s1561 + $0x78] sm:$0xff]
    %v1578 = vld [vmem:[%s1561 + $0x80] sm:$0xff]
    %v1579 = vld [vmem:[%s1561 + $0x88] sm:$0xff]
    %v1580 = vld [vmem:[%s1561 + $0x90] sm:$0xff]
    %v1581 = vld [vmem:[%s1561 + $0x98] sm:$0xff]
    %v1582 = vld [vmem:[%s1561 + $0xa0] sm:$0xff]
    %v1583 = vld [vmem:[%s1561 + $0xa8] sm:$0xff]
    %v1584 = vld [vmem:[%s1561 + $0xb0] sm:$0xff]
    %v1585 = vld [vmem:[%s1561 + $0xb8] sm:$0xff]
    %v1586 = vld [vmem:[%s1561 + $0xc0] sm:$0xff]
    %v1587 = vld [vmem:[%s1561 + $0xc8] sm:$0xff]
    %v1588 = vld [vmem:[%s1561 + $0xd0] sm:$0xff]
    %v1589 = vld [vmem:[%s1561 + $0xd8] sm:$0xff]
    %1590 = vmatprep.subr.mxu0 0.0
    %1591 = vmatpush1.msra.mxu0 %v1577
    %1592 = vmatprep.subr.mxu0 0.0
    %1593 = vmatpush1.msra.mxu0 %v1576
    %1594 = vmatprep.subr.mxu0 0.0
    %1595 = vmatpush1.msra.mxu0 %v1575
    %1596 = vmatprep.subr.mxu0 0.0
    %1597 = vmatpush1.msra.mxu0 %v1574
    %1598 = vmatprep.subr.mxu0 0.0
    %1599 = vmatpush1.msra.mxu0 %v1573
    %1600 = vmatprep.subr.mxu0 0.0
    %1601 = vmatpush1.msra.mxu0 %v1572
    %1602 = vmatprep.subr.mxu0 0.0
    %1603 = vmatpush1.msra.mxu0 %v1571
    %1604 = vmatprep.subr.mxu0 0.0
    %1605 = vmatpush1.msra.mxu0 %v1570
    %1606 = vmatprep.subr.mxu0 0.0
    %1607 = vmatpush1.msra.mxu0 %v1569
    %1608 = vmatprep.subr.mxu0 0.0
    %1609 = vmatpush1.msra.mxu0 %v1568
    %1610 = vmatprep.subr.mxu0 0.0
    %1611 = vmatpush1.msra.mxu0 %v1567
    %1612 = vmatprep.subr.mxu0 0.0
    %1613 = vmatpush1.msra.mxu0 %v1566
    %1614 = vmatprep.subr.mxu0 0.0
    %1615 = vmatpush1.msra.mxu0 %v1565
    %1616 = vmatprep.subr.mxu0 0.0
    %1617 = vmatpush1.msra.mxu0 %v1564
    %1618 = vmatprep.subr.mxu0 0.0
    %1619 = vmatpush1.msra.mxu0 %v1563
    %1620 = vmatprep.subr.mxu0 0.0
    %1621 = vmatpush1.msra.mxu0 %v1562
    %1622 = vmatprep.subr.mxu0 0.0
    %1623 = vmatpush2.msra.mxu0 0.0
    %1624 = vmatprep.subr.mxu0 0.0
    %1625 = vmatpush2.msra.mxu0 0.0
    %1626 = vmatprep.subr.mxu0 0.0
    %1627 = vmatpush2.msra.mxu0 0.0
    %1628 = vmatprep.subr.mxu0 0.0
    %1629 = vmatpush2.msra.mxu0 0.0
    %1630 = vmatprep.subr.mxu0 0.0
    %1631 = vmatpush2.msra.mxu0 %v1589
    %1632 = vmatprep.subr.mxu0 0.0
    %1633 = vmatpush2.msra.mxu0 %v1588
    %1634 = vmatprep.subr.mxu0 0.0
    %1635 = vmatpush2.msra.mxu0 %v1587
    %1636 = vmatprep.subr.mxu0 0.0
    %1637 = vmatpush2.msra.mxu0 %v1586
    %1638 = vmatprep.subr.mxu0 0.0
    %1639 = vmatpush2.msra.mxu0 %v1585
    %1640 = vmatprep.subr.mxu0 0.0
    %1641 = vmatpush2.msra.mxu0 %v1584
    %1642 = vmatprep.subr.mxu0 0.0
    %1643 = vmatpush2.msra.mxu0 %v1583
    %1644 = vmatprep.subr.mxu0 0.0
    %1645 = vmatpush2.msra.mxu0 %v1582
    %1646 = vmatprep.subr.mxu0 0.0
    %1647 = vmatpush2.msra.mxu0 %v1581
    %1648 = vmatprep.subr.mxu0 0.0
    %1649 = vmatpush2.msra.mxu0 %v1580
    %1650 = vmatprep.subr.mxu0 0.0
    %1651 = vmatpush2.msra.mxu0 %v1579
    %1652 = vmatprep.subr.mxu0 0.0
    %1653 = vmatpush2.msra.mxu0 %v1578
    %1654 = vmatprep.mubr.f32.mxu0 %v1481
    %1655 = vmatmul.mubr.f32.gmra.mxu0 %v1448
    %v1656 = vpop.f32.mrf.mxu0
    %v1657 = vadd.f32 0.0, %v1656
    %v1658 = vpop.f32.mrf.mxu0
    %1659 = vmatprep.mubr.f32.mxu0 %v1484
    %1660 = vmatmul.mubr.f32.gmra.mxu0 %v1450
    %v1661 = vpop.f32.mrf.mxu0
    %v1662 = vadd.f32 0.0, %v1661
    %v1663 = vpop.f32.mrf.mxu0
    %1664 = vdwg.mxu0
    %v1665 = vmax.f32 %v1553, %v1657
    %v1666 = vmax.f32 %v1558, %v1662
    %v1667 = vld [vmem:[#allocation2 + $0x20] sm:$0xff]
    %v1668 = vld [vmem:[#allocation2 + $0x28] sm:$0xff]
    %v1669 = vld [vmem:[#allocation2 + $0x30] sm:$0xff]
    %v1670 = vld [vmem:[#allocation2 + $0x38] sm:$0xf]
    %v1671 = vld [vmem:[#allocation2 + $0x21] sm:$0xff]
    %v1672 = vld [vmem:[#allocation2 + $0x29] sm:$0xff]
    %v1673 = vld [vmem:[#allocation2 + $0x31] sm:$0xff]
    %v1674 = vld [vmem:[#allocation2 + $0x39] sm:$0xf]
    %v1676 = vsel %vm83, %v1671, 0
    %v1679 = vsel %vm83, %v1672, 0
    %v1682 = vsel %vm83, %v1673, 0
    %v1685 = vsel %vm83, %v1674, 0
    %1687 = vmatprep.subr.mxu0 0.0
    %1688 = vmatpush1.msra.mxu0 0.0
    %1689 = vmatprep.subr.mxu0 0.0
    %1690 = vmatpush1.msra.mxu0 0.0
    %1691 = vmatprep.subr.mxu0 0.0
    %1692 = vmatpush1.msra.mxu0 0.0
    %1693 = vmatprep.subr.mxu0 0.0
    %1694 = vmatpush1.msra.mxu0 0.0
    %1695 = vmatprep.subr.mxu0 %v624
    %1696 = vmatpush1.msra.mxu0 %v623
    %1697 = vmatprep.subr.mxu0 %v622
    %1698 = vmatpush1.msra.mxu0 %v621
    %1699 = vmatprep.subr.mxu0 %v620
    %1700 = vmatpush1.msra.mxu0 %v619
    %1701 = vmatprep.subr.mxu0 %v618
    %1702 = vmatpush1.msra.mxu0 %v617
    %1703 = vmatprep.subr.mxu0 %v616
    %1704 = vmatpush1.msra.mxu0 %v615
    %1705 = vmatprep.subr.mxu0 %v614
    %1706 = vmatpush1.msra.mxu0 %v613
    %1707 = vmatprep.subr.mxu0 %v612
    %1708 = vmatpush1.msra.mxu0 %v611
    %1709 = vmatprep.subr.mxu0 %v610
    %1710 = vmatpush1.msra.mxu0 %v609
    %1711 = vmatprep.subr.mxu0 %v608
    %1712 = vmatpush1.msra.mxu0 %v607
    %1713 = vmatprep.subr.mxu0 %v606
    %1714 = vmatpush1.msra.mxu0 %v605
    %1715 = vmatprep.subr.mxu0 %v604
    %1716 = vmatpush1.msra.mxu0 %v603
    %1717 = vmatprep.subr.mxu0 %v602
    %1718 = vmatpush1.msra.mxu0 %v601
    %1719 = vmatprep.subr.mxu0 0.0
    %1720 = vmatpush2.msra.mxu0 0.0
    %1721 = vmatprep.subr.mxu0 0.0
    %1722 = vmatpush2.msra.mxu0 0.0
    %1723 = vmatprep.subr.mxu0 0.0
    %1724 = vmatpush2.msra.mxu0 0.0
    %1725 = vmatprep.subr.mxu0 0.0
    %1726 = vmatpush2.msra.mxu0 0.0
    %1727 = vmatprep.subr.mxu0 0.0
    %1728 = vmatpush2.msra.mxu0 0.0
    %1729 = vmatprep.subr.mxu0 0.0
    %1730 = vmatpush2.msra.mxu0 0.0
    %1731 = vmatprep.subr.mxu0 0.0
    %1732 = vmatpush2.msra.mxu0 0.0
    %1733 = vmatprep.subr.mxu0 0.0
    %1734 = vmatpush2.msra.mxu0 0.0
    %1735 = vmatprep.subr.mxu0 0.0
    %1736 = vmatpush2.msra.mxu0 0.0
    %1737 = vmatprep.subr.mxu0 0.0
    %1738 = vmatpush2.msra.mxu0 0.0
    %1739 = vmatprep.subr.mxu0 0.0
    %1740 = vmatpush2.msra.mxu0 0.0
    %1741 = vmatprep.subr.mxu0 0.0
    %1742 = vmatpush2.msra.mxu0 0.0
    %1743 = vmatprep.subr.mxu0 0.0
    %1744 = vmatpush2.msra.mxu0 0.0
    %1745 = vmatprep.subr.mxu0 0.0
    %1746 = vmatpush2.msra.mxu0 0.0
    %1747 = vmatprep.subr.mxu0 0.0
    %1748 = vmatpush2.msra.mxu0 0.0
    %1749 = vmatprep.subr.mxu0 0.0
    %1750 = vmatpush2.msra.mxu0 0.0
    %1751 = vmatprep.mubr.f32.mxu0 0.0
    %1752 = vmatmul.mubr.f32.gmra.mxu0 %v1676
    %v1753 = vpop.f32.mrf.mxu0
    %v1754 = vadd.f32 0.0, %v1753
    %v1755 = vpop.f32.mrf.mxu0
    %v1756 = vadd.f32 0.0, %v1755
    %1757 = vmatprep.mubr.f32.mxu0 0.0
    %1758 = vmatmul.mubr.f32.gmra.mxu0 %v1679
    %v1759 = vpop.f32.mrf.mxu0
    %v1760 = vadd.f32 0.0, %v1759
    %v1761 = vpop.f32.mrf.mxu0
    %v1762 = vadd.f32 0.0, %v1761
    %1763 = vmatprep.mubr.f32.mxu0 0.0
    %1764 = vmatmul.mubr.f32.gmra.mxu0 %v1682
    %v1765 = vpop.f32.mrf.mxu0
    %v1766 = vadd.f32 0.0, %v1765
    %v1767 = vpop.f32.mrf.mxu0
    %v1768 = vadd.f32 0.0, %v1767
    %1769 = vmatprep.mubr.f32.mxu0 0.0
    %1770 = vmatmul.mubr.f32.gmra.mxu0 %v1685
    %v1771 = vpop.f32.mrf.mxu0
    %v1772 = vadd.f32 0.0, %v1771
    %v1773 = vpop.f32.mrf.mxu0
    %v1774 = vadd.f32 0.0, %v1773
    %1775 = vdwg.mxu0
    %v1777 = vsel %vm83, %v1667, 0
    %v1780 = vsel %vm83, %v1668, 0
    %v1783 = vsel %vm83, %v1669, 0
    %v1786 = vsel %vm83, %v1670, 0
    %1788 = vmatprep.subr.mxu0 0.0
    %1789 = vmatpush1.msra.mxu0 0.0
    %1790 = vmatprep.subr.mxu0 0.0
    %1791 = vmatpush1.msra.mxu0 0.0
    %1792 = vmatprep.subr.mxu0 0.0
    %1793 = vmatpush1.msra.mxu0 0.0
    %1794 = vmatprep.subr.mxu0 0.0
    %1795 = vmatpush1.msra.mxu0 0.0
    %1796 = vmatprep.subr.mxu0 %v595
    %1797 = vmatpush1.msra.mxu0 %v594
    %1798 = vmatprep.subr.mxu0 %v593
    %1799 = vmatpush1.msra.mxu0 %v592
    %1800 = vmatprep.subr.mxu0 %v591
    %1801 = vmatpush1.msra.mxu0 %v590
    %1802 = vmatprep.subr.mxu0 %v589
    %1803 = vmatpush1.msra.mxu0 %v588
    %1804 = vmatprep.subr.mxu0 %v587
    %1805 = vmatpush1.msra.mxu0 %v586
    %1806 = vmatprep.subr.mxu0 %v585
    %1807 = vmatpush1.msra.mxu0 %v584
    %1808 = vmatprep.subr.mxu0 %v583
    %1809 = vmatpush1.msra.mxu0 %v582
    %1810 = vmatprep.subr.mxu0 %v581
    %1811 = vmatpush1.msra.mxu0 %v580
    %1812 = vmatprep.subr.mxu0 %v579
    %1813 = vmatpush1.msra.mxu0 %v578
    %1814 = vmatprep.subr.mxu0 %v577
    %1815 = vmatpush1.msra.mxu0 %v576
    %1816 = vmatprep.subr.mxu0 %v575
    %1817 = vmatpush1.msra.mxu0 %v574
    %1818 = vmatprep.subr.mxu0 %v573
    %1819 = vmatpush1.msra.mxu0 %v572
    %1820 = vmatprep.subr.mxu0 0.0
    %1821 = vmatpush2.msra.mxu0 0.0
    %1822 = vmatprep.subr.mxu0 0.0
    %1823 = vmatpush2.msra.mxu0 0.0
    %1824 = vmatprep.subr.mxu0 0.0
    %1825 = vmatpush2.msra.mxu0 0.0
    %1826 = vmatprep.subr.mxu0 0.0
    %1827 = vmatpush2.msra.mxu0 0.0
    %1828 = vmatprep.subr.mxu0 0.0
    %1829 = vmatpush2.msra.mxu0 0.0
    %1830 = vmatprep.subr.mxu0 0.0
    %1831 = vmatpush2.msra.mxu0 0.0
    %1832 = vmatprep.subr.mxu0 0.0
    %1833 = vmatpush2.msra.mxu0 0.0
    %1834 = vmatprep.subr.mxu0 0.0
    %1835 = vmatpush2.msra.mxu0 0.0
    %1836 = vmatprep.subr.mxu0 0.0
    %1837 = vmatpush2.msra.mxu0 0.0
    %1838 = vmatprep.subr.mxu0 0.0
    %1839 = vmatpush2.msra.mxu0 0.0
    %1840 = vmatprep.subr.mxu0 0.0
    %1841 = vmatpush2.msra.mxu0 0.0
    %1842 = vmatprep.subr.mxu0 0.0
    %1843 = vmatpush2.msra.mxu0 0.0
    %1844 = vmatprep.subr.mxu0 0.0
    %1845 = vmatpush2.msra.mxu0 0.0
    %1846 = vmatprep.subr.mxu0 0.0
    %1847 = vmatpush2.msra.mxu0 0.0
    %1848 = vmatprep.subr.mxu0 0.0
    %1849 = vmatpush2.msra.mxu0 0.0
    %1850 = vmatprep.subr.mxu0 0.0
    %1851 = vmatpush2.msra.mxu0 0.0
    %1852 = vmatprep.mubr.f32.mxu0 0.0
    %1853 = vmatmul.mubr.f32.gmra.mxu0 %v1777
    %v1854 = vpop.f32.mrf.mxu0
    %v1855 = vadd.f32 %v1754, %v1854
    %v1856 = vpop.f32.mrf.mxu0
    %v1857 = vadd.f32 %v1756, %v1856
    %1858 = vmatprep.mubr.f32.mxu0 0.0
    %1859 = vmatmul.mubr.f32.gmra.mxu0 %v1780
    %v1860 = vpop.f32.mrf.mxu0
    %v1861 = vadd.f32 %v1760, %v1860
    %v1862 = vpop.f32.mrf.mxu0
    %v1863 = vadd.f32 %v1762, %v1862
    %1864 = vmatprep.mubr.f32.mxu0 0.0
    %1865 = vmatmul.mubr.f32.gmra.mxu0 %v1783
    %v1866 = vpop.f32.mrf.mxu0
    %v1867 = vadd.f32 %v1766, %v1866
    %v1868 = vpop.f32.mrf.mxu0
    %v1869 = vadd.f32 %v1768, %v1868
    %1870 = vmatprep.mubr.f32.mxu0 0.0
    %1871 = vmatmul.mubr.f32.gmra.mxu0 %v1786
    %v1872 = vpop.f32.mrf.mxu0
    %v1873 = vadd.f32 %v1772, %v1872
    %v1874 = vpop.f32.mrf.mxu0
    %v1875 = vadd.f32 %v1774, %v1874
    %1876 = vdwg.mxu0
    %v1877 = vld [vmem:[#allocation2 + $0x22] sm:$0xff]
    %v1878 = vld [vmem:[#allocation2 + $0x2a] sm:$0xff]
    %v1879 = vld [vmem:[#allocation2 + $0x32] sm:$0xff]
    %v1880 = vld [vmem:[#allocation2 + $0x3a] sm:$0xf]
    %v1882 = vsel %vm83, %v1877, 0
    %v1885 = vsel %vm83, %v1878, 0
    %v1888 = vsel %vm83, %v1879, 0
    %v1891 = vsel %vm83, %v1880, 0
    %1893 = vmatprep.subr.mxu0 0.0
    %1894 = vmatpush1.msra.mxu0 0.0
    %1895 = vmatprep.subr.mxu0 0.0
    %1896 = vmatpush1.msra.mxu0 0.0
    %1897 = vmatprep.subr.mxu0 0.0
    %1898 = vmatpush1.msra.mxu0 0.0
    %1899 = vmatprep.subr.mxu0 0.0
    %1900 = vmatpush1.msra.mxu0 0.0
    %1901 = vmatprep.subr.mxu0 %v855
    %1902 = vmatpush1.msra.mxu0 %v854
    %1903 = vmatprep.subr.mxu0 %v853
    %1904 = vmatpush1.msra.mxu0 %v852
    %1905 = vmatprep.subr.mxu0 %v851
    %1906 = vmatpush1.msra.mxu0 %v850
    %1907 = vmatprep.subr.mxu0 %v849
    %1908 = vmatpush1.msra.mxu0 %v848
    %1909 = vmatprep.subr.mxu0 %v847
    %1910 = vmatpush1.msra.mxu0 %v846
    %1911 = vmatprep.subr.mxu0 %v845
    %1912 = vmatpush1.msra.mxu0 %v844
    %1913 = vmatprep.subr.mxu0 %v843
    %1914 = vmatpush1.msra.mxu0 %v842
    %1915 = vmatprep.subr.mxu0 %v841
    %1916 = vmatpush1.msra.mxu0 %v840
    %1917 = vmatprep.subr.mxu0 %v839
    %1918 = vmatpush1.msra.mxu0 %v838
    %1919 = vmatprep.subr.mxu0 %v837
    %1920 = vmatpush1.msra.mxu0 %v836
    %1921 = vmatprep.subr.mxu0 %v835
    %1922 = vmatpush1.msra.mxu0 %v834
    %1923 = vmatprep.subr.mxu0 %v833
    %1924 = vmatpush1.msra.mxu0 %v832
    %1925 = vmatprep.subr.mxu0 0.0
    %1926 = vmatpush2.msra.mxu0 0.0
    %1927 = vmatprep.subr.mxu0 0.0
    %1928 = vmatpush2.msra.mxu0 0.0
    %1929 = vmatprep.subr.mxu0 0.0
    %1930 = vmatpush2.msra.mxu0 0.0
    %1931 = vmatprep.subr.mxu0 0.0
    %1932 = vmatpush2.msra.mxu0 0.0
    %1933 = vmatprep.subr.mxu0 0.0
    %1934 = vmatpush2.msra.mxu0 0.0
    %1935 = vmatprep.subr.mxu0 0.0
    %1936 = vmatpush2.msra.mxu0 0.0
    %1937 = vmatprep.subr.mxu0 0.0
    %1938 = vmatpush2.msra.mxu0 0.0
    %1939 = vmatprep.subr.mxu0 0.0
    %1940 = vmatpush2.msra.mxu0 0.0
    %1941 = vmatprep.subr.mxu0 0.0
    %1942 = vmatpush2.msra.mxu0 0.0
    %1943 = vmatprep.subr.mxu0 0.0
    %1944 = vmatpush2.msra.mxu0 0.0
    %1945 = vmatprep.subr.mxu0 0.0
    %1946 = vmatpush2.msra.mxu0 0.0
    %1947 = vmatprep.subr.mxu0 0.0
    %1948 = vmatpush2.msra.mxu0 0.0
    %1949 = vmatprep.subr.mxu0 0.0
    %1950 = vmatpush2.msra.mxu0 0.0
    %1951 = vmatprep.subr.mxu0 0.0
    %1952 = vmatpush2.msra.mxu0 0.0
    %1953 = vmatprep.subr.mxu0 0.0
    %1954 = vmatpush2.msra.mxu0 0.0
    %1955 = vmatprep.subr.mxu0 0.0
    %1956 = vmatpush2.msra.mxu0 0.0
    %1957 = vmatprep.mubr.f32.mxu0 0.0
    %1958 = vmatmul.mubr.f32.gmra.mxu0 %v1882
    %v1959 = vpop.f32.mrf.mxu0
    %v1960 = vadd.f32 0.0, %v1959
    %v1961 = vpop.f32.mrf.mxu0
    %v1962 = vadd.f32 0.0, %v1961
    %1963 = vmatprep.mubr.f32.mxu0 0.0
    %1964 = vmatmul.mubr.f32.gmra.mxu0 %v1885
    %v1965 = vpop.f32.mrf.mxu0
    %v1966 = vadd.f32 0.0, %v1965
    %v1967 = vpop.f32.mrf.mxu0
    %v1968 = vadd.f32 0.0, %v1967
    %1969 = vmatprep.mubr.f32.mxu0 0.0
    %1970 = vmatmul.mubr.f32.gmra.mxu0 %v1888
    %v1971 = vpop.f32.mrf.mxu0
    %v1972 = vadd.f32 0.0, %v1971
    %v1973 = vpop.f32.mrf.mxu0
    %v1974 = vadd.f32 0.0, %v1973
    %1975 = vmatprep.mubr.f32.mxu0 0.0
    %1976 = vmatmul.mubr.f32.gmra.mxu0 %v1891
    %v1977 = vpop.f32.mrf.mxu0
    %v1978 = vadd.f32 0.0, %v1977
    %v1979 = vpop.f32.mrf.mxu0
    %v1980 = vadd.f32 0.0, %v1979
    %1981 = vdwg.mxu0
    %v1982 = vadd.f32 %v1855, %v1960
    %v1983 = vadd.f32 %v1857, %v1962
    %v1984 = vadd.f32 %v1861, %v1966
    %v1985 = vadd.f32 %v1863, %v1968
    %v1986 = vadd.f32 %v1867, %v1972
    %v1987 = vadd.f32 %v1869, %v1974
    %v1988 = vadd.f32 %v1873, %v1978
    %v1989 = vadd.f32 %v1875, %v1980
    %v1990 = vld [vmem:[#allocation2 + $0x23] sm:$0xff]
    %v1991 = vld [vmem:[#allocation2 + $0x2b] sm:$0xff]
    %v1992 = vld [vmem:[#allocation2 + $0x33] sm:$0xff]
    %v1993 = vld [vmem:[#allocation2 + $0x3b] sm:$0xf]
    %v1995 = vsel %vm83, %v1990, 0
    %v1998 = vsel %vm83, %v1991, 0
    %v2001 = vsel %vm83, %v1992, 0
    %v2004 = vsel %vm83, %v1993, 0
    %2006 = vmatprep.subr.mxu0 0.0
    %2007 = vmatpush1.msra.mxu0 0.0
    %2008 = vmatprep.subr.mxu0 0.0
    %2009 = vmatpush1.msra.mxu0 0.0
    %2010 = vmatprep.subr.mxu0 0.0
    %2011 = vmatpush1.msra.mxu0 0.0
    %2012 = vmatprep.subr.mxu0 0.0
    %2013 = vmatpush1.msra.mxu0 0.0
    %2014 = vmatprep.subr.mxu0 %v993
    %2015 = vmatpush1.msra.mxu0 %v992
    %2016 = vmatprep.subr.mxu0 %v991
    %2017 = vmatpush1.msra.mxu0 %v990
    %2018 = vmatprep.subr.mxu0 %v989
    %2019 = vmatpush1.msra.mxu0 %v988
    %2020 = vmatprep.subr.mxu0 %v987
    %2021 = vmatpush1.msra.mxu0 %v986
    %2022 = vmatprep.subr.mxu0 %v985
    %2023 = vmatpush1.msra.mxu0 %v984
    %2024 = vmatprep.subr.mxu0 %v983
    %2025 = vmatpush1.msra.mxu0 %v982
    %2026 = vmatprep.subr.mxu0 %v981
    %2027 = vmatpush1.msra.mxu0 %v980
    %2028 = vmatprep.subr.mxu0 %v979
    %2029 = vmatpush1.msra.mxu0 %v978
    %2030 = vmatprep.subr.mxu0 %v977
    %2031 = vmatpush1.msra.mxu0 %v976
    %2032 = vmatprep.subr.mxu0 %v975
    %2033 = vmatpush1.msra.mxu0 %v974
    %2034 = vmatprep.subr.mxu0 %v973
    %2035 = vmatpush1.msra.mxu0 %v972
    %2036 = vmatprep.subr.mxu0 %v971
    %2037 = vmatpush1.msra.mxu0 %v970
    %2038 = vmatprep.subr.mxu0 0.0
    %2039 = vmatpush2.msra.mxu0 0.0
    %2040 = vmatprep.subr.mxu0 0.0
    %2041 = vmatpush2.msra.mxu0 0.0
    %2042 = vmatprep.subr.mxu0 0.0
    %2043 = vmatpush2.msra.mxu0 0.0
    %2044 = vmatprep.subr.mxu0 0.0
    %2045 = vmatpush2.msra.mxu0 0.0
    %2046 = vmatprep.subr.mxu0 0.0
    %2047 = vmatpush2.msra.mxu0 0.0
    %2048 = vmatprep.subr.mxu0 0.0
    %2049 = vmatpush2.msra.mxu0 0.0
    %2050 = vmatprep.subr.mxu0 0.0
    %2051 = vmatpush2.msra.mxu0 0.0
    %2052 = vmatprep.subr.mxu0 0.0
    %2053 = vmatpush2.msra.mxu0 0.0
    %2054 = vmatprep.subr.mxu0 0.0
    %2055 = vmatpush2.msra.mxu0 0.0
    %2056 = vmatprep.subr.mxu0 0.0
    %2057 = vmatpush2.msra.mxu0 0.0
    %2058 = vmatprep.subr.mxu0 0.0
    %2059 = vmatpush2.msra.mxu0 0.0
    %2060 = vmatprep.subr.mxu0 0.0
    %2061 = vmatpush2.msra.mxu0 0.0
    %2062 = vmatprep.subr.mxu0 0.0
    %2063 = vmatpush2.msra.mxu0 0.0
    %2064 = vmatprep.subr.mxu0 0.0
    %2065 = vmatpush2.msra.mxu0 0.0
    %2066 = vmatprep.subr.mxu0 0.0
    %2067 = vmatpush2.msra.mxu0 0.0
    %2068 = vmatprep.subr.mxu0 0.0
    %2069 = vmatpush2.msra.mxu0 0.0
    %2070 = vmatprep.mubr.f32.mxu0 0.0
    %2071 = vmatmul.mubr.f32.gmra.mxu0 %v1995
    %v2072 = vpop.f32.mrf.mxu0
    %v2073 = vadd.f32 0.0, %v2072
    %v2074 = vpop.f32.mrf.mxu0
    %v2075 = vadd.f32 0.0, %v2074
    %2076 = vmatprep.mubr.f32.mxu0 0.0
    %2077 = vmatmul.mubr.f32.gmra.mxu0 %v1998
    %v2078 = vpop.f32.mrf.mxu0
    %v2079 = vadd.f32 0.0, %v2078
    %v2080 = vpop.f32.mrf.mxu0
    %v2081 = vadd.f32 0.0, %v2080
    %2082 = vmatprep.mubr.f32.mxu0 0.0
    %2083 = vmatmul.mubr.f32.gmra.mxu0 %v2001
    %v2084 = vpop.f32.mrf.mxu0
    %v2085 = vadd.f32 0.0, %v2084
    %v2086 = vpop.f32.mrf.mxu0
    %v2087 = vadd.f32 0.0, %v2086
    %2088 = vmatprep.mubr.f32.mxu0 0.0
    %2089 = vmatmul.mubr.f32.gmra.mxu0 %v2004
    %v2090 = vpop.f32.mrf.mxu0
    %v2091 = vadd.f32 0.0, %v2090
    %v2092 = vpop.f32.mrf.mxu0
    %v2093 = vadd.f32 0.0, %v2092
    %2094 = vdwg.mxu0
    %v2095 = vadd.f32 %v1982, %v2073
    %v2096 = vadd.f32 %v1983, %v2075
    %v2097 = vadd.f32 %v1984, %v2079
    %v2098 = vadd.f32 %v1985, %v2081
    %v2099 = vadd.f32 %v1986, %v2085
    %v2100 = vadd.f32 %v1987, %v2087
    %v2101 = vadd.f32 %v1988, %v2091
    %v2102 = vadd.f32 %v1989, %v2093
    %v2103 = vld [vmem:[#allocation2 + $0x24] sm:$0xff]
    %v2104 = vld [vmem:[#allocation2 + $0x2c] sm:$0xff]
    %v2105 = vld [vmem:[#allocation2 + $0x34] sm:$0xff]
    %v2106 = vld [vmem:[#allocation2 + $0x3c] sm:$0xf]
    %v2108 = vsel %vm83, %v2103, 0
    %v2111 = vsel %vm83, %v2104, 0
    %v2114 = vsel %vm83, %v2105, 0
    %v2117 = vsel %vm83, %v2106, 0
    %2119 = vmatprep.subr.mxu0 0.0
    %2120 = vmatpush1.msra.mxu0 0.0
    %2121 = vmatprep.subr.mxu0 0.0
    %2122 = vmatpush1.msra.mxu0 0.0
    %2123 = vmatprep.subr.mxu0 0.0
    %2124 = vmatpush1.msra.mxu0 0.0
    %2125 = vmatprep.subr.mxu0 0.0
    %2126 = vmatpush1.msra.mxu0 0.0
    %2127 = vmatprep.subr.mxu0 %v1131
    %2128 = vmatpush1.msra.mxu0 %v1130
    %2129 = vmatprep.subr.mxu0 %v1129
    %2130 = vmatpush1.msra.mxu0 %v1128
    %2131 = vmatprep.subr.mxu0 %v1127
    %2132 = vmatpush1.msra.mxu0 %v1126
    %2133 = vmatprep.subr.mxu0 %v1125
    %2134 = vmatpush1.msra.mxu0 %v1124
    %2135 = vmatprep.subr.mxu0 %v1123
    %2136 = vmatpush1.msra.mxu0 %v1122
    %2137 = vmatprep.subr.mxu0 %v1121
    %2138 = vmatpush1.msra.mxu0 %v1120
    %2139 = vmatprep.subr.mxu0 %v1119
    %2140 = vmatpush1.msra.mxu0 %v1118
    %2141 = vmatprep.subr.mxu0 %v1117
    %2142 = vmatpush1.msra.mxu0 %v1116
    %2143 = vmatprep.subr.mxu0 %v1115
    %2144 = vmatpush1.msra.mxu0 %v1114
    %2145 = vmatprep.subr.mxu0 %v1113
    %2146 = vmatpush1.msra.mxu0 %v1112
    %2147 = vmatprep.subr.mxu0 %v1111
    %2148 = vmatpush1.msra.mxu0 %v1110
    %2149 = vmatprep.subr.mxu0 %v1109
    %2150 = vmatpush1.msra.mxu0 %v1108
    %2151 = vmatprep.subr.mxu0 0.0
    %2152 = vmatpush2.msra.mxu0 0.0
    %2153 = vmatprep.subr.mxu0 0.0
    %2154 = vmatpush2.msra.mxu0 0.0
    %2155 = vmatprep.subr.mxu0 0.0
    %2156 = vmatpush2.msra.mxu0 0.0
    %2157 = vmatprep.subr.mxu0 0.0
    %2158 = vmatpush2.msra.mxu0 0.0
    %2159 = vmatprep.subr.mxu0 0.0
    %2160 = vmatpush2.msra.mxu0 0.0
    %2161 = vmatprep.subr.mxu0 0.0
    %2162 = vmatpush2.msra.mxu0 0.0
    %2163 = vmatprep.subr.mxu0 0.0
    %2164 = vmatpush2.msra.mxu0 0.0
    %2165 = vmatprep.subr.mxu0 0.0
    %2166 = vmatpush2.msra.mxu0 0.0
    %2167 = vmatprep.subr.mxu0 0.0
    %2168 = vmatpush2.msra.mxu0 0.0
    %2169 = vmatprep.subr.mxu0 0.0
    %2170 = vmatpush2.msra.mxu0 0.0
    %2171 = vmatprep.subr.mxu0 0.0
    %2172 = vmatpush2.msra.mxu0 0.0
    %2173 = vmatprep.subr.mxu0 0.0
    %2174 = vmatpush2.msra.mxu0 0.0
    %2175 = vmatprep.subr.mxu0 0.0
    %2176 = vmatpush2.msra.mxu0 0.0
    %2177 = vmatprep.subr.mxu0 0.0
    %2178 = vmatpush2.msra.mxu0 0.0
    %2179 = vmatprep.subr.mxu0 0.0
    %2180 = vmatpush2.msra.mxu0 0.0
    %2181 = vmatprep.subr.mxu0 0.0
    %2182 = vmatpush2.msra.mxu0 0.0
    %2183 = vmatprep.mubr.f32.mxu0 0.0
    %2184 = vmatmul.mubr.f32.gmra.mxu0 %v2108
    %v2185 = vpop.f32.mrf.mxu0
    %v2186 = vadd.f32 0.0, %v2185
    %v2187 = vpop.f32.mrf.mxu0
    %v2188 = vadd.f32 0.0, %v2187
    %2189 = vmatprep.mubr.f32.mxu0 0.0
    %2190 = vmatmul.mubr.f32.gmra.mxu0 %v2111
    %v2191 = vpop.f32.mrf.mxu0
    %v2192 = vadd.f32 0.0, %v2191
    %v2193 = vpop.f32.mrf.mxu0
    %v2194 = vadd.f32 0.0, %v2193
    %2195 = vmatprep.mubr.f32.mxu0 0.0
    %2196 = vmatmul.mubr.f32.gmra.mxu0 %v2114
    %v2197 = vpop.f32.mrf.mxu0
    %v2198 = vadd.f32 0.0, %v2197
    %v2199 = vpop.f32.mrf.mxu0
    %v2200 = vadd.f32 0.0, %v2199
    %2201 = vmatprep.mubr.f32.mxu0 0.0
    %2202 = vmatmul.mubr.f32.gmra.mxu0 %v2117
    %v2203 = vpop.f32.mrf.mxu0
    %v2204 = vadd.f32 0.0, %v2203
    %v2205 = vpop.f32.mrf.mxu0
    %v2206 = vadd.f32 0.0, %v2205
    %2207 = vdwg.mxu0
    %v2208 = vadd.f32 %v2095, %v2186
    %v2209 = vadd.f32 %v2096, %v2188
    %v2210 = vadd.f32 %v2097, %v2192
    %v2211 = vadd.f32 %v2098, %v2194
    %v2212 = vadd.f32 %v2099, %v2198
    %v2213 = vadd.f32 %v2100, %v2200
    %v2214 = vadd.f32 %v2101, %v2204
    %v2215 = vadd.f32 %v2102, %v2206
    %v2216 = vadd.f32 %v2208, %v1246
    %v2217 = vadd.f32 %v2209, %v1250
    %v2218 = vadd.f32 %v2210, %v1246
    %v2219 = vadd.f32 %v2211, %v1250
    %v2220 = vadd.f32 %v2212, %v1246
    %v2221 = vadd.f32 %v2213, %v1250
    %v2222 = vadd.f32 %v2214, %v1246
    %v2223 = vadd.f32 %v2215, %v1250
    %v2224 = vmax.f32 %v2216, 0.0
    %v2225 = vmax.f32 %v2217, 0.0
    %v2226 = vmax.f32 %v2218, 0.0
    %v2227 = vmax.f32 %v2219, 0.0
    %v2228 = vmax.f32 %v2220, 0.0
    %v2229 = vmax.f32 %v2221, 0.0
    %v2230 = vmax.f32 %v2222, 0.0
    %v2231 = vmax.f32 %v2223, 0.0
    %v2233 = vsel %vm1278, %v2230, 0
    %v2236 = vsel %vm1278, %v2231, 0
    %2238 = vmatprep.subr.mxu0 0.0
    %2239 = vmatpush1.msra.mxu0 0.0
    %2240 = vmatprep.subr.mxu0 0.0
    %2241 = vmatpush1.msra.mxu0 0.0
    %2242 = vmatprep.subr.mxu0 0.0
    %2243 = vmatpush1.msra.mxu0 0.0
    %2244 = vmatprep.subr.mxu0 0.0
    %2245 = vmatpush1.msra.mxu0 0.0
    %2246 = vmatprep.subr.mxu0 0.0
    %2247 = vmatpush1.msra.mxu0 0.0
    %2248 = vmatprep.subr.mxu0 0.0
    %2249 = vmatpush1.msra.mxu0 0.0
    %2250 = vmatprep.subr.mxu0 0.0
    %2251 = vmatpush1.msra.mxu0 0.0
    %2252 = vmatprep.subr.mxu0 0.0
    %2253 = vmatpush1.msra.mxu0 0.0
    %2254 = vmatprep.subr.mxu0 0.0
    %2255 = vmatpush1.msra.mxu0 0.0
    %2256 = vmatprep.subr.mxu0 0.0
    %2257 = vmatpush1.msra.mxu0 0.0
    %2258 = vmatprep.subr.mxu0 0.0
    %2259 = vmatpush1.msra.mxu0 0.0
    %2260 = vmatprep.subr.mxu0 0.0
    %2261 = vmatpush1.msra.mxu0 0.0
    %2262 = vmatprep.subr.mxu0 %v2236
    %2263 = vmatpush1.msra.mxu0 %v2233
    %2264 = vmatprep.subr.mxu0 %v2229
    %2265 = vmatpush1.msra.mxu0 %v2228
    %2266 = vmatprep.subr.mxu0 %v2227
    %2267 = vmatpush1.msra.mxu0 %v2226
    %2268 = vmatprep.subr.mxu0 %v2225
    %2269 = vmatpush1.msra.mxu0 %v2224
    %2270 = vmatprep.subr.mxu0 0.0
    %2271 = vmatpush2.msra.mxu0 0.0
    %2272 = vmatprep.subr.mxu0 0.0
    %2273 = vmatpush2.msra.mxu0 0.0
    %2274 = vmatprep.subr.mxu0 0.0
    %2275 = vmatpush2.msra.mxu0 0.0
    %2276 = vmatprep.subr.mxu0 0.0
    %2277 = vmatpush2.msra.mxu0 0.0
    %2278 = vmatprep.subr.mxu0 0.0
    %2279 = vmatpush2.msra.mxu0 0.0
    %2280 = vmatprep.subr.mxu0 0.0
    %2281 = vmatpush2.msra.mxu0 0.0
    %2282 = vmatprep.subr.mxu0 0.0
    %2283 = vmatpush2.msra.mxu0 0.0
    %2284 = vmatprep.subr.mxu0 0.0
    %2285 = vmatpush2.msra.mxu0 0.0
    %2286 = vmatprep.subr.mxu0 0.0
    %2287 = vmatpush2.msra.mxu0 0.0
    %2288 = vmatprep.subr.mxu0 0.0
    %2289 = vmatpush2.msra.mxu0 0.0
    %2290 = vmatprep.subr.mxu0 0.0
    %2291 = vmatpush2.msra.mxu0 0.0
    %2292 = vmatprep.subr.mxu0 0.0
    %2293 = vmatpush2.msra.mxu0 0.0
    %2294 = vmatprep.subr.mxu0 0.0
    %2295 = vmatpush2.msra.mxu0 0.0
    %2296 = vmatprep.subr.mxu0 0.0
    %2297 = vmatpush2.msra.mxu0 0.0
    %2298 = vmatprep.subr.mxu0 0.0
    %2299 = vmatpush2.msra.mxu0 0.0
    %2300 = vmatprep.subr.mxu0 0.0
    %2301 = vmatpush2.msra.mxu0 0.0
    %2302 = vmatprep.mubr.f32.mxu0 0.0
    %2303 = vmatmul.mubr.f32.gmra.mxu0 %v1273
    %v2304 = vpop.f32.mrf.mxu0
    %v2305 = vadd.f32 0.0, %v2304
    %v2306 = vpop.f32.mrf.mxu0
    %v2307 = vadd.f32 0.0, %v2306
    %2308 = vmatprep.mubr.f32.mxu0 0.0
    %2309 = vmatmul.mubr.f32.gmra.mxu0 %v1276
    %v2310 = vpop.f32.mrf.mxu0
    %v2311 = vadd.f32 0.0, %v2310
    %v2312 = vpop.f32.mrf.mxu0
    %v2313 = vadd.f32 0.0, %v2312
    %2314 = vdwg.mxu0
    %2315 = vmatprep.subr.mxu0 0.0
    %2316 = vmatpush1.msra.mxu0 0.0
    %2317 = vmatprep.subr.mxu0 0.0
    %2318 = vmatpush1.msra.mxu0 0.0
    %2319 = vmatprep.subr.mxu0 0.0
    %2320 = vmatpush1.msra.mxu0 0.0
    %2321 = vmatprep.subr.mxu0 0.0
    %2322 = vmatpush1.msra.mxu0 0.0
    %2323 = vmatprep.subr.mxu0 0.0
    %2324 = vmatpush1.msra.mxu0 0.0
    %2325 = vmatprep.subr.mxu0 0.0
    %2326 = vmatpush1.msra.mxu0 0.0
    %2327 = vmatprep.subr.mxu0 0.0
    %2328 = vmatpush1.msra.mxu0 0.0
    %2329 = vmatprep.subr.mxu0 0.0
    %2330 = vmatpush1.msra.mxu0 0.0
    %2331 = vmatprep.subr.mxu0 0.0
    %2332 = vmatpush1.msra.mxu0 0.0
    %2333 = vmatprep.subr.mxu0 0.0
    %2334 = vmatpush1.msra.mxu0 0.0
    %2335 = vmatprep.subr.mxu0 0.0
    %2336 = vmatpush1.msra.mxu0 0.0
    %2337 = vmatprep.subr.mxu0 0.0
    %2338 = vmatpush1.msra.mxu0 0.0
    %2339 = vmatprep.subr.mxu0 %v2236
    %2340 = vmatpush1.msra.mxu0 %v2233
    %2341 = vmatprep.subr.mxu0 %v2229
    %2342 = vmatpush1.msra.mxu0 %v2228
    %2343 = vmatprep.subr.mxu0 %v2227
    %2344 = vmatpush1.msra.mxu0 %v2226
    %2345 = vmatprep.subr.mxu0 %v2225
    %2346 = vmatpush1.msra.mxu0 %v2224
    %2347 = vmatprep.subr.mxu0 0.0
    %2348 = vmatpush2.msra.mxu0 0.0
    %2349 = vmatprep.subr.mxu0 0.0
    %2350 = vmatpush2.msra.mxu0 0.0
    %2351 = vmatprep.subr.mxu0 0.0
    %2352 = vmatpush2.msra.mxu0 0.0
    %2353 = vmatprep.subr.mxu0 0.0
    %2354 = vmatpush2.msra.mxu0 0.0
    %2355 = vmatprep.subr.mxu0 0.0
    %2356 = vmatpush2.msra.mxu0 0.0
    %2357 = vmatprep.subr.mxu0 0.0
    %2358 = vmatpush2.msra.mxu0 0.0
    %2359 = vmatprep.subr.mxu0 0.0
    %2360 = vmatpush2.msra.mxu0 0.0
    %2361 = vmatprep.subr.mxu0 0.0
    %2362 = vmatpush2.msra.mxu0 0.0
    %2363 = vmatprep.subr.mxu0 0.0
    %2364 = vmatpush2.msra.mxu0 0.0
    %2365 = vmatprep.subr.mxu0 0.0
    %2366 = vmatpush2.msra.mxu0 0.0
    %2367 = vmatprep.subr.mxu0 0.0
    %2368 = vmatpush2.msra.mxu0 0.0
    %2369 = vmatprep.subr.mxu0 0.0
    %2370 = vmatpush2.msra.mxu0 0.0
    %2371 = vmatprep.subr.mxu0 0.0
    %2372 = vmatpush2.msra.mxu0 0.0
    %2373 = vmatprep.subr.mxu0 0.0
    %2374 = vmatpush2.msra.mxu0 0.0
    %2375 = vmatprep.subr.mxu0 0.0
    %2376 = vmatpush2.msra.mxu0 0.0
    %2377 = vmatprep.subr.mxu0 0.0
    %2378 = vmatpush2.msra.mxu0 0.0
    %2379 = vmatprep.mubr.f32.mxu0 0.0
    %2380 = vmatmul.mubr.f32.gmra.mxu0 %v1366
    %v2381 = vpop.f32.mrf.mxu0
    %v2382 = vadd.f32 0.0, %v2381
    %v2383 = vpop.f32.mrf.mxu0
    %v2384 = vadd.f32 0.0, %v2383
    %2385 = vmatprep.mubr.f32.mxu0 0.0
    %2386 = vmatmul.mubr.f32.gmra.mxu0 %v1369
    %v2387 = vpop.f32.mrf.mxu0
    %v2388 = vadd.f32 0.0, %v2387
    %v2389 = vpop.f32.mrf.mxu0
    %v2390 = vadd.f32 0.0, %v2389
    %2391 = vdwg.mxu0
    %v2392 = vmax.f32 %v2305, %v2382
    %v2393 = vmax.f32 %v2307, %v2384
    %v2394 = vmax.f32 %v2311, %v2388
    %v2395 = vmax.f32 %v2313, %v2390
    %v2397 = vsel %vm83, %v2393, 0
    %v2400 = vsel %vm83, %v2395, 0
    %2402 = vmatprep.subr.mxu0 0.0
    %2403 = vmatpush1.msra.mxu0 %v1467
    %2404 = vmatprep.subr.mxu0 0.0
    %2405 = vmatpush1.msra.mxu0 %v1466
    %2406 = vmatprep.subr.mxu0 0.0
    %2407 = vmatpush1.msra.mxu0 %v1465
    %2408 = vmatprep.subr.mxu0 0.0
    %2409 = vmatpush1.msra.mxu0 %v1464
    %2410 = vmatprep.subr.mxu0 0.0
    %2411 = vmatpush1.msra.mxu0 %v1463
    %2412 = vmatprep.subr.mxu0 0.0
    %2413 = vmatpush1.msra.mxu0 %v1462
    %2414 = vmatprep.subr.mxu0 0.0
    %2415 = vmatpush1.msra.mxu0 %v1461
    %2416 = vmatprep.subr.mxu0 0.0
    %2417 = vmatpush1.msra.mxu0 %v1460
    %2418 = vmatprep.subr.mxu0 0.0
    %2419 = vmatpush1.msra.mxu0 %v1459
    %2420 = vmatprep.subr.mxu0 0.0
    %2421 = vmatpush1.msra.mxu0 %v1458
    %2422 = vmatprep.subr.mxu0 0.0
    %2423 = vmatpush1.msra.mxu0 %v1457
    %2424 = vmatprep.subr.mxu0 0.0
    %2425 = vmatpush1.msra.mxu0 %v1456
    %2426 = vmatprep.subr.mxu0 0.0
    %2427 = vmatpush1.msra.mxu0 %v1455
    %2428 = vmatprep.subr.mxu0 0.0
    %2429 = vmatpush1.msra.mxu0 %v1454
    %2430 = vmatprep.subr.mxu0 0.0
    %2431 = vmatpush1.msra.mxu0 %v1453
    %2432 = vmatprep.subr.mxu0 0.0
    %2433 = vmatpush1.msra.mxu0 %v1452
    %2434 = vmatprep.subr.mxu0 0.0
    %2435 = vmatpush2.msra.mxu0 0.0
    %2436 = vmatprep.subr.mxu0 0.0
    %2437 = vmatpush2.msra.mxu0 0.0
    %2438 = vmatprep.subr.mxu0 0.0
    %2439 = vmatpush2.msra.mxu0 0.0
    %2440 = vmatprep.subr.mxu0 0.0
    %2441 = vmatpush2.msra.mxu0 0.0
    %2442 = vmatprep.subr.mxu0 0.0
    %2443 = vmatpush2.msra.mxu0 %v1479
    %2444 = vmatprep.subr.mxu0 0.0
    %2445 = vmatpush2.msra.mxu0 %v1478
    %2446 = vmatprep.subr.mxu0 0.0
    %2447 = vmatpush2.msra.mxu0 %v1477
    %2448 = vmatprep.subr.mxu0 0.0
    %2449 = vmatpush2.msra.mxu0 %v1476
    %2450 = vmatprep.subr.mxu0 0.0
    %2451 = vmatpush2.msra.mxu0 %v1475
    %2452 = vmatprep.subr.mxu0 0.0
    %2453 = vmatpush2.msra.mxu0 %v1474
    %2454 = vmatprep.subr.mxu0 0.0
    %2455 = vmatpush2.msra.mxu0 %v1473
    %2456 = vmatprep.subr.mxu0 0.0
    %2457 = vmatpush2.msra.mxu0 %v1472
    %2458 = vmatprep.subr.mxu0 0.0
    %2459 = vmatpush2.msra.mxu0 %v1471
    %2460 = vmatprep.subr.mxu0 0.0
    %2461 = vmatpush2.msra.mxu0 %v1470
    %2462 = vmatprep.subr.mxu0 0.0
    %2463 = vmatpush2.msra.mxu0 %v1469
    %2464 = vmatprep.subr.mxu0 0.0
    %2465 = vmatpush2.msra.mxu0 %v1468
    %2466 = vmatprep.mubr.f32.mxu0 %v2397
    %2467 = vmatmul.mubr.f32.gmra.mxu0 %v2392
    %v2468 = vpop.f32.mrf.mxu0
    %v2469 = vadd.f32 0.0, %v2468
    %v2470 = vpop.f32.mrf.mxu0
    %2471 = vmatprep.mubr.f32.mxu0 %v2400
    %2472 = vmatmul.mubr.f32.gmra.mxu0 %v2394
    %v2473 = vpop.f32.mrf.mxu0
    %v2474 = vadd.f32 0.0, %v2473
    %v2475 = vpop.f32.mrf.mxu0
    %2476 = vdwg.mxu0
    %2477 = vmatprep.subr.mxu0 0.0
    %2478 = vmatpush1.msra.mxu0 %v1577
    %2479 = vmatprep.subr.mxu0 0.0
    %2480 = vmatpush1.msra.mxu0 %v1576
    %2481 = vmatprep.subr.mxu0 0.0
    %2482 = vmatpush1.msra.mxu0 %v1575
    %2483 = vmatprep.subr.mxu0 0.0
    %2484 = vmatpush1.msra.mxu0 %v1574
    %2485 = vmatprep.subr.mxu0 0.0
    %2486 = vmatpush1.msra.mxu0 %v1573
    %2487 = vmatprep.subr.mxu0 0.0
    %2488 = vmatpush1.msra.mxu0 %v1572
    %2489 = vmatprep.subr.mxu0 0.0
    %2490 = vmatpush1.msra.mxu0 %v1571
    %2491 = vmatprep.subr.mxu0 0.0
    %2492 = vmatpush1.msra.mxu0 %v1570
    %2493 = vmatprep.subr.mxu0 0.0
    %2494 = vmatpush1.msra.mxu0 %v1569
    %2495 = vmatprep.subr.mxu0 0.0
    %2496 = vmatpush1.msra.mxu0 %v1568
    %2497 = vmatprep.subr.mxu0 0.0
    %2498 = vmatpush1.msra.mxu0 %v1567
    %2499 = vmatprep.subr.mxu0 0.0
    %2500 = vmatpush1.msra.mxu0 %v1566
    %2501 = vmatprep.subr.mxu0 0.0
    %2502 = vmatpush1.msra.mxu0 %v1565
    %2503 = vmatprep.subr.mxu0 0.0
    %2504 = vmatpush1.msra.mxu0 %v1564
    %2505 = vmatprep.subr.mxu0 0.0
    %2506 = vmatpush1.msra.mxu0 %v1563
    %2507 = vmatprep.subr.mxu0 0.0
    %2508 = vmatpush1.msra.mxu0 %v1562
    %2509 = vmatprep.subr.mxu0 0.0
    %2510 = vmatpush2.msra.mxu0 0.0
    %2511 = vmatprep.subr.mxu0 0.0
    %2512 = vmatpush2.msra.mxu0 0.0
    %2513 = vmatprep.subr.mxu0 0.0
    %2514 = vmatpush2.msra.mxu0 0.0
    %2515 = vmatprep.subr.mxu0 0.0
    %2516 = vmatpush2.msra.mxu0 0.0
    %2517 = vmatprep.subr.mxu0 0.0
    %2518 = vmatpush2.msra.mxu0 %v1589
    %2519 = vmatprep.subr.mxu0 0.0
    %2520 = vmatpush2.msra.mxu0 %v1588
    %2521 = vmatprep.subr.mxu0 0.0
    %2522 = vmatpush2.msra.mxu0 %v1587
    %2523 = vmatprep.subr.mxu0 0.0
    %2524 = vmatpush2.msra.mxu0 %v1586
    %2525 = vmatprep.subr.mxu0 0.0
    %2526 = vmatpush2.msra.mxu0 %v1585
    %2527 = vmatprep.subr.mxu0 0.0
    %2528 = vmatpush2.msra.mxu0 %v1584
    %2529 = vmatprep.subr.mxu0 0.0
    %2530 = vmatpush2.msra.mxu0 %v1583
    %2531 = vmatprep.subr.mxu0 0.0
    %2532 = vmatpush2.msra.mxu0 %v1582
    %2533 = vmatprep.subr.mxu0 0.0
    %2534 = vmatpush2.msra.mxu0 %v1581
    %2535 = vmatprep.subr.mxu0 0.0
    %2536 = vmatpush2.msra.mxu0 %v1580
    %2537 = vmatprep.subr.mxu0 0.0
    %2538 = vmatpush2.msra.mxu0 %v1579
    %2539 = vmatprep.subr.mxu0 0.0
    %2540 = vmatpush2.msra.mxu0 %v1578
    %2541 = vmatprep.mubr.f32.mxu0 %v2397
    %2542 = vmatmul.mubr.f32.gmra.mxu0 %v2392
    %v2543 = vpop.f32.mrf.mxu0
    %v2544 = vadd.f32 0.0, %v2543
    %v2545 = vpop.f32.mrf.mxu0
    %2546 = vmatprep.mubr.f32.mxu0 %v2400
    %2547 = vmatmul.mubr.f32.gmra.mxu0 %v2394
    %v2548 = vpop.f32.mrf.mxu0
    %v2549 = vadd.f32 0.0, %v2548
    %v2550 = vpop.f32.mrf.mxu0
    %2551 = vdwg.mxu0
    %v2552 = vmax.f32 %v2469, %v2544
    %v2553 = vmax.f32 %v2474, %v2549
    %vm2554 = vcmask 916480
    %v2555 = vsel %vm2554, %v1665, 0.0
    %vm2556 = vcmask 914432
    %v2557 = vsel %vm2556, %v1666, 0.0
    %v2558 = vadd.f32 %v2555, %v2557
    %v2559 = vrot.slane %v2558, 4
    %v2560 = vadd.f32 %v2558, %v2559
    %v2561 = vrot.slane %v2560, 2
    %v2562 = vadd.f32 %v2560, %v2561
    %v2563 = vrot.slane %v2562, 1
    %v2564 = vadd.f32 %v2562, %v2563
    %v2565 = vsel %vm2554, %v2552, 0.0
    %v2566 = vsel %vm2556, %v2553, 0.0
    %v2567 = vadd.f32 %v2565, %v2566
    %v2568 = vrot.slane %v2567, 4
    %v2569 = vadd.f32 %v2567, %v2568
    %v2570 = vrot.slane %v2569, 2
    %v2571 = vadd.f32 %v2569, %v2570
    %v2572 = vrot.slane %v2571, 1
    %v2573 = vadd.f32 %v2571, %v2572
    %v2574 = vadd.f32 %v2564, %v2573
    %v2575 = vld [vmem:[%s11] sm:$0xff]
    %v2576 = vld [vmem:[%s11 + $0x8] sm:$0xff]
    %v2577 = vld [vmem:[%s11 + $0x10] sm:$0xff]
    %v2578 = vld [vmem:[%s11 + $0x18] sm:$0xff]
    %v2579 = vld [vmem:[%s11 + $0x20] sm:$0xff]
    %v2580 = vld [vmem:[%s11 + $0x28] sm:$0xff]
    %v2581 = vld [vmem:[%s11 + $0x30] sm:$0xff]
    %v2582 = vld [vmem:[%s11 + $0x38] sm:$0xff]
    %v2583 = vld [vmem:[%s11 + $0x40] sm:$0xff]
    %v2584 = vld [vmem:[%s11 + $0x48] sm:$0xff]
    %v2585 = vld [vmem:[%s11 + $0x50] sm:$0xff]
    %v2586 = vld [vmem:[%s11 + $0x58] sm:$0xff]
    %v2587 = vld [vmem:[%s11 + $0x60] sm:$0xff]
    %v2588 = vld [vmem:[%s11 + $0x68] sm:$0xff]
    %v2590 = vsel %vm2554, %v2574, 0
    %2592 = vmatprep.subr.mxu0 0.0
    %2593 = vmatpush1.msra.mxu0 0.0
    %2594 = vmatprep.subr.mxu0 0.0
    %2595 = vmatpush1.msra.mxu0 0.0
    %2596 = vmatprep.subr.mxu0 0.0
    %2597 = vmatpush1.msra.mxu0 %v2588
    %2598 = vmatprep.subr.mxu0 0.0
    %2599 = vmatpush1.msra.mxu0 %v2587
    %2600 = vmatprep.subr.mxu0 0.0
    %2601 = vmatpush1.msra.mxu0 %v2586
    %2602 = vmatprep.subr.mxu0 0.0
    %2603 = vmatpush1.msra.mxu0 %v2585
    %2604 = vmatprep.subr.mxu0 0.0
    %2605 = vmatpush1.msra.mxu0 %v2584
    %2606 = vmatprep.subr.mxu0 0.0
    %2607 = vmatpush1.msra.mxu0 %v2583
    %2608 = vmatprep.subr.mxu0 0.0
    %2609 = vmatpush1.msra.mxu0 %v2582
    %2610 = vmatprep.subr.mxu0 0.0
    %2611 = vmatpush1.msra.mxu0 %v2581
    %2612 = vmatprep.subr.mxu0 0.0
    %2613 = vmatpush1.msra.mxu0 %v2580
    %2614 = vmatprep.subr.mxu0 0.0
    %2615 = vmatpush1.msra.mxu0 %v2579
    %2616 = vmatprep.subr.mxu0 0.0
    %2617 = vmatpush1.msra.mxu0 %v2578
    %2618 = vmatprep.subr.mxu0 0.0
    %2619 = vmatpush1.msra.mxu0 %v2577
    %2620 = vmatprep.subr.mxu0 0.0
    %2621 = vmatpush1.msra.mxu0 %v2576
    %2622 = vmatprep.subr.mxu0 0.0
    %2623 = vmatpush1.msra.mxu0 %v2575
    %2624 = vmatprep.subr.mxu0 0.0
    %2625 = vmatpush2.msra.mxu0 0.0
    %2626 = vmatprep.subr.mxu0 0.0
    %2627 = vmatpush2.msra.mxu0 0.0
    %2628 = vmatprep.subr.mxu0 0.0
    %2629 = vmatpush2.msra.mxu0 0.0
    %2630 = vmatprep.subr.mxu0 0.0
    %2631 = vmatpush2.msra.mxu0 0.0
    %2632 = vmatprep.subr.mxu0 0.0
    %2633 = vmatpush2.msra.mxu0 0.0
    %2634 = vmatprep.subr.mxu0 0.0
    %2635 = vmatpush2.msra.mxu0 0.0
    %2636 = vmatprep.subr.mxu0 0.0
    %2637 = vmatpush2.msra.mxu0 0.0
    %2638 = vmatprep.subr.mxu0 0.0
    %2639 = vmatpush2.msra.mxu0 0.0
    %2640 = vmatprep.subr.mxu0 0.0
    %2641 = vmatpush2.msra.mxu0 0.0
    %2642 = vmatprep.subr.mxu0 0.0
    %2643 = vmatpush2.msra.mxu0 0.0
    %2644 = vmatprep.subr.mxu0 0.0
    %2645 = vmatpush2.msra.mxu0 0.0
    %2646 = vmatprep.subr.mxu0 0.0
    %2647 = vmatpush2.msra.mxu0 0.0
    %2648 = vmatprep.subr.mxu0 0.0
    %2649 = vmatpush2.msra.mxu0 0.0
    %2650 = vmatprep.subr.mxu0 0.0
    %2651 = vmatpush2.msra.mxu0 0.0
    %2652 = vmatprep.subr.mxu0 0.0
    %2653 = vmatpush2.msra.mxu0 0.0
    %2654 = vmatprep.subr.mxu0 0.0
    %2655 = vmatpush2.msra.mxu0 0.0
    %2656 = vmatprep.mubr.f32.mxu0 0.0
    %2657 = vmatmul.mubr.f32.gmra.mxu0 %v2590
    %v2658 = vpop.f32.mrf.mxu0
    %v2659 = vadd.f32 0.0, %v2658
    %v2660 = vpop.f32.mrf.mxu0
    %2661 = vdwg.mxu0
    %v2662 = vmul.f32 %v2659, 0.0025510204
    %v2663 = vld [vmem:[%s12] sm:$0xff]
    %vm2664 = vcmask 64512
    %v2666 = vsel %vm2664, %v2662, 0
    %2668 = vmatprep.subr.mxu0 0.0
    %2669 = vmatpush1.msra.mxu0 0.0
    %2670 = vmatprep.subr.mxu0 0.0
    %2671 = vmatpush1.msra.mxu0 0.0
    %2672 = vmatprep.subr.mxu0 0.0
    %2673 = vmatpush1.msra.mxu0 0.0
    %2674 = vmatprep.subr.mxu0 0.0
    %2675 = vmatpush1.msra.mxu0 0.0
    %2676 = vmatprep.subr.mxu0 0.0
    %2677 = vmatpush1.msra.mxu0 0.0
    %2678 = vmatprep.subr.mxu0 0.0
    %2679 = vmatpush1.msra.mxu0 0.0
    %2680 = vmatprep.subr.mxu0 0.0
    %2681 = vmatpush1.msra.mxu0 0.0
    %2682 = vmatprep.subr.mxu0 0.0
    %2683 = vmatpush1.msra.mxu0 0.0
    %2684 = vmatprep.subr.mxu0 0.0
    %2685 = vmatpush1.msra.mxu0 0.0
    %2686 = vmatprep.subr.mxu0 0.0
    %2687 = vmatpush1.msra.mxu0 0.0
    %2688 = vmatprep.subr.mxu0 0.0
    %2689 = vmatpush1.msra.mxu0 0.0
    %2690 = vmatprep.subr.mxu0 0.0
    %2691 = vmatpush1.msra.mxu0 0.0
    %2692 = vmatprep.subr.mxu0 0.0
    %2693 = vmatpush1.msra.mxu0 0.0
    %2694 = vmatprep.subr.mxu0 0.0
    %2695 = vmatpush1.msra.mxu0 0.0
    %2696 = vmatprep.subr.mxu0 0.0
    %2697 = vmatpush1.msra.mxu0 0.0
    %2698 = vmatprep.subr.mxu0 0.0
    %2699 = vmatpush1.msra.mxu0 %v2663
    %2700 = vmatprep.subr.mxu0 0.0
    %2701 = vmatpush2.msra.mxu0 0.0
    %2702 = vmatprep.subr.mxu0 0.0
    %2703 = vmatpush2.msra.mxu0 0.0
    %2704 = vmatprep.subr.mxu0 0.0
    %2705 = vmatpush2.msra.mxu0 0.0
    %2706 = vmatprep.subr.mxu0 0.0
    %2707 = vmatpush2.msra.mxu0 0.0
    %2708 = vmatprep.subr.mxu0 0.0
    %2709 = vmatpush2.msra.mxu0 0.0
    %2710 = vmatprep.subr.mxu0 0.0
    %2711 = vmatpush2.msra.mxu0 0.0
    %2712 = vmatprep.subr.mxu0 0.0
    %2713 = vmatpush2.msra.mxu0 0.0
    %2714 = vmatprep.subr.mxu0 0.0
    %2715 = vmatpush2.msra.mxu0 0.0
    %2716 = vmatprep.subr.mxu0 0.0
    %2717 = vmatpush2.msra.mxu0 0.0
    %2718 = vmatprep.subr.mxu0 0.0
    %2719 = vmatpush2.msra.mxu0 0.0
    %2720 = vmatprep.subr.mxu0 0.0
    %2721 = vmatpush2.msra.mxu0 0.0
    %2722 = vmatprep.subr.mxu0 0.0
    %2723 = vmatpush2.msra.mxu0 0.0
    %2724 = vmatprep.subr.mxu0 0.0
    %2725 = vmatpush2.msra.mxu0 0.0
    %2726 = vmatprep.subr.mxu0 0.0
    %2727 = vmatpush2.msra.mxu0 0.0
    %2728 = vmatprep.subr.mxu0 0.0
    %2729 = vmatpush2.msra.mxu0 0.0
    %2730 = vmatprep.subr.mxu0 0.0
    %2731 = vmatpush2.msra.mxu0 0.0
    %2732 = vmatprep.mubr.f32.mxu0 0.0
    %2733 = vmatmul.mubr.f32.gmra.mxu0 %v2666
    %v2734 = vpop.f32.mrf.mxu0
    %v2735 = vadd.f32 0.0, %v2734
    %v2736 = vpop.f32.mrf.mxu0
    %2737 = vdwg.mxu0
    %v2738 = vlaneseq
    %v2739 = vshrl.u32 %v2738, 7
    %v2740 = vsub.s32 0, %v2739
    %v2741 = vrot.slane %v2735, %v2740
    %v2742 = vsub.f32 %v1665, %v2741
    %v2743 = vsub.f32 %v1666, %v2741
    %v2744 = vsub.f32 %v2552, %v2741
    %v2745 = vsub.f32 %v2553, %v2741
    %v2746 = vmul.f32 %v2742, %v2742
    %v2747 = vmul.f32 %v2743, %v2743
    %v2748 = vsel %vm2554, %v2746, 0.0
    %v2749 = vsel %vm2556, %v2747, 0.0
    %v2750 = vadd.f32 %v2748, %v2749
    %v2751 = vrot.slane %v2750, 4
    %v2752 = vadd.f32 %v2750, %v2751
    %v2753 = vrot.slane %v2752, 2
    %v2754 = vadd.f32 %v2752, %v2753
    %v2755 = vrot.slane %v2754, 1
    %v2756 = vadd.f32 %v2754, %v2755
    %v2757 = vmul.f32 %v2744, %v2744
    %v2758 = vmul.f32 %v2745, %v2745
    %v2759 = vsel %vm2554, %v2757, 0.0
    %v2760 = vsel %vm2556, %v2758, 0.0
    %v2761 = vadd.f32 %v2759, %v2760
    %v2762 = vrot.slane %v2761, 4
    %v2763 = vadd.f32 %v2761, %v2762
    %v2764 = vrot.slane %v2763, 2
    %v2765 = vadd.f32 %v2763, %v2764
    %v2766 = vrot.slane %v2765, 1
    %v2767 = vadd.f32 %v2765, %v2766
    %v2768 = vadd.f32 %v2756, %v2767
    %v2770 = vsel %vm2554, %v2768, 0
    %2772 = vmatprep.subr.mxu0 0.0
    %2773 = vmatpush1.msra.mxu0 0.0
    %2774 = vmatprep.subr.mxu0 0.0
    %2775 = vmatpush1.msra.mxu0 0.0
    %2776 = vmatprep.subr.mxu0 0.0
    %2777 = vmatpush1.msra.mxu0 %v2588
    %2778 = vmatprep.subr.mxu0 0.0
    %2779 = vmatpush1.msra.mxu0 %v2587
    %2780 = vmatprep.subr.mxu0 0.0
    %2781 = vmatpush1.msra.mxu0 %v2586
    %2782 = vmatprep.subr.mxu0 0.0
    %2783 = vmatpush1.msra.mxu0 %v2585
    %2784 = vmatprep.subr.mxu0 0.0
    %2785 = vmatpush1.msra.mxu0 %v2584
    %2786 = vmatprep.subr.mxu0 0.0
    %2787 = vmatpush1.msra.mxu0 %v2583
    %2788 = vmatprep.subr.mxu0 0.0
    %2789 = vmatpush1.msra.mxu0 %v2582
    %2790 = vmatprep.subr.mxu0 0.0
    %2791 = vmatpush1.msra.mxu0 %v2581
    %2792 = vmatprep.subr.mxu0 0.0
    %2793 = vmatpush1.msra.mxu0 %v2580
    %2794 = vmatprep.subr.mxu0 0.0
    %2795 = vmatpush1.msra.mxu0 %v2579
    %2796 = vmatprep.subr.mxu0 0.0
    %2797 = vmatpush1.msra.mxu0 %v2578
    %2798 = vmatprep.subr.mxu0 0.0
    %2799 = vmatpush1.msra.mxu0 %v2577
    %2800 = vmatprep.subr.mxu0 0.0
    %2801 = vmatpush1.msra.mxu0 %v2576
    %2802 = vmatprep.subr.mxu0 0.0
    %2803 = vmatpush1.msra.mxu0 %v2575
    %2804 = vmatprep.subr.mxu0 0.0
    %2805 = vmatpush2.msra.mxu0 0.0
    %2806 = vmatprep.subr.mxu0 0.0
    %2807 = vmatpush2.msra.mxu0 0.0
    %2808 = vmatprep.subr.mxu0 0.0
    %2809 = vmatpush2.msra.mxu0 0.0
    %2810 = vmatprep.subr.mxu0 0.0
    %2811 = vmatpush2.msra.mxu0 0.0
    %2812 = vmatprep.subr.mxu0 0.0
    %2813 = vmatpush2.msra.mxu0 0.0
    %2814 = vmatprep.subr.mxu0 0.0
    %2815 = vmatpush2.msra.mxu0 0.0
    %2816 = vmatprep.subr.mxu0 0.0
    %2817 = vmatpush2.msra.mxu0 0.0
    %2818 = vmatprep.subr.mxu0 0.0
    %2819 = vmatpush2.msra.mxu0 0.0
    %2820 = vmatprep.subr.mxu0 0.0
    %2821 = vmatpush2.msra.mxu0 0.0
    %2822 = vmatprep.subr.mxu0 0.0
    %2823 = vmatpush2.msra.mxu0 0.0
    %2824 = vmatprep.subr.mxu0 0.0
    %2825 = vmatpush2.msra.mxu0 0.0
    %2826 = vmatprep.subr.mxu0 0.0
    %2827 = vmatpush2.msra.mxu0 0.0
    %2828 = vmatprep.subr.mxu0 0.0
    %2829 = vmatpush2.msra.mxu0 0.0
    %2830 = vmatprep.subr.mxu0 0.0
    %2831 = vmatpush2.msra.mxu0 0.0
    %2832 = vmatprep.subr.mxu0 0.0
    %2833 = vmatpush2.msra.mxu0 0.0
    %2834 = vmatprep.subr.mxu0 0.0
    %2835 = vmatpush2.msra.mxu0 0.0
    %2836 = vmatprep.mubr.f32.mxu0 0.0
    %2837 = vmatmul.mubr.f32.gmra.mxu0 %v2770
    %v2838 = vpop.f32.mrf.mxu0
    %v2839 = vadd.f32 0.0, %v2838
    %v2840 = vpop.f32.mrf.mxu0
    %2841 = vdwg.mxu0
    %v2842 = vmul.f32 %v2839, 0.0025510204
    %v2843 = vld [vmem:[%s9] sm:$0x1]
    %v2844 = vadd.f32 %v2842, 1e-05
    %v2845 = vrsqrt.pop %v2844
    %v2846 = vmul.f32 %v2843, %v2845
    %v2848 = vsel %vm2664, %v2846, 0
    %2850 = vmatprep.subr.mxu0 0.0
    %2851 = vmatpush1.msra.mxu0 0.0
    %2852 = vmatprep.subr.mxu0 0.0
    %2853 = vmatpush1.msra.mxu0 0.0
    %2854 = vmatprep.subr.mxu0 0.0
    %2855 = vmatpush1.msra.mxu0 0.0
    %2856 = vmatprep.subr.mxu0 0.0
    %2857 = vmatpush1.msra.mxu0 0.0
    %2858 = vmatprep.subr.mxu0 0.0
    %2859 = vmatpush1.msra.mxu0 0.0
    %2860 = vmatprep.subr.mxu0 0.0
    %2861 = vmatpush1.msra.mxu0 0.0
    %2862 = vmatprep.subr.mxu0 0.0
    %2863 = vmatpush1.msra.mxu0 0.0
    %2864 = vmatprep.subr.mxu0 0.0
    %2865 = vmatpush1.msra.mxu0 0.0
    %2866 = vmatprep.subr.mxu0 0.0
    %2867 = vmatpush1.msra.mxu0 0.0
    %2868 = vmatprep.subr.mxu0 0.0
    %2869 = vmatpush1.msra.mxu0 0.0
    %2870 = vmatprep.subr.mxu0 0.0
    %2871 = vmatpush1.msra.mxu0 0.0
    %2872 = vmatprep.subr.mxu0 0.0
    %2873 = vmatpush1.msra.mxu0 0.0
    %2874 = vmatprep.subr.mxu0 0.0
    %2875 = vmatpush1.msra.mxu0 0.0
    %2876 = vmatprep.subr.mxu0 0.0
    %2877 = vmatpush1.msra.mxu0 0.0
    %2878 = vmatprep.subr.mxu0 0.0
    %2879 = vmatpush1.msra.mxu0 0.0
    %2880 = vmatprep.subr.mxu0 0.0
    %2881 = vmatpush1.msra.mxu0 %v2663
    %2882 = vmatprep.subr.mxu0 0.0
    %2883 = vmatpush2.msra.mxu0 0.0
    %2884 = vmatprep.subr.mxu0 0.0
    %2885 = vmatpush2.msra.mxu0 0.0
    %2886 = vmatprep.subr.mxu0 0.0
    %2887 = vmatpush2.msra.mxu0 0.0
    %2888 = vmatprep.subr.mxu0 0.0
    %2889 = vmatpush2.msra.mxu0 0.0
    %2890 = vmatprep.subr.mxu0 0.0
    %2891 = vmatpush2.msra.mxu0 0.0
    %2892 = vmatprep.subr.mxu0 0.0
    %2893 = vmatpush2.msra.mxu0 0.0
    %2894 = vmatprep.subr.mxu0 0.0
    %2895 = vmatpush2.msra.mxu0 0.0
    %2896 = vmatprep.subr.mxu0 0.0
    %2897 = vmatpush2.msra.mxu0 0.0
    %2898 = vmatprep.subr.mxu0 0.0
    %2899 = vmatpush2.msra.mxu0 0.0
    %2900 = vmatprep.subr.mxu0 0.0
    %2901 = vmatpush2.msra.mxu0 0.0
    %2902 = vmatprep.subr.mxu0 0.0
    %2903 = vmatpush2.msra.mxu0 0.0
    %2904 = vmatprep.subr.mxu0 0.0
    %2905 = vmatpush2.msra.mxu0 0.0
    %2906 = vmatprep.subr.mxu0 0.0
    %2907 = vmatpush2.msra.mxu0 0.0
    %2908 = vmatprep.subr.mxu0 0.0
    %2909 = vmatpush2.msra.mxu0 0.0
    %2910 = vmatprep.subr.mxu0 0.0
    %2911 = vmatpush2.msra.mxu0 0.0
    %2912 = vmatprep.subr.mxu0 0.0
    %2913 = vmatpush2.msra.mxu0 0.0
    %2914 = vmatprep.mubr.f32.mxu0 0.0
    %2915 = vmatmul.mubr.f32.gmra.mxu0 %v2848
    %v2916 = vpop.f32.mrf.mxu0
    %v2917 = vadd.f32 0.0, %v2916
    %v2918 = vpop.f32.mrf.mxu0
    %2919 = vdwg.mxu0
    %v2920 = vld [vmem:[%s10] sm:$0x1]
    %v2922 = vsel %vm2664, %v2920, 0
    %2924 = vmatprep.subr.mxu0 0.0
    %2925 = vmatpush1.msra.mxu0 0.0
    %2926 = vmatprep.subr.mxu0 0.0
    %2927 = vmatpush1.msra.mxu0 0.0
    %2928 = vmatprep.subr.mxu0 0.0
    %2929 = vmatpush1.msra.mxu0 0.0
    %2930 = vmatprep.subr.mxu0 0.0
    %2931 = vmatpush1.msra.mxu0 0.0
    %2932 = vmatprep.subr.mxu0 0.0
    %2933 = vmatpush1.msra.mxu0 0.0
    %2934 = vmatprep.subr.mxu0 0.0
    %2935 = vmatpush1.msra.mxu0 0.0
    %2936 = vmatprep.subr.mxu0 0.0
    %2937 = vmatpush1.msra.mxu0 0.0
    %2938 = vmatprep.subr.mxu0 0.0
    %2939 = vmatpush1.msra.mxu0 0.0
    %2940 = vmatprep.subr.mxu0 0.0
    %2941 = vmatpush1.msra.mxu0 0.0
    %2942 = vmatprep.subr.mxu0 0.0
    %2943 = vmatpush1.msra.mxu0 0.0
    %2944 = vmatprep.subr.mxu0 0.0
    %2945 = vmatpush1.msra.mxu0 0.0
    %2946 = vmatprep.subr.mxu0 0.0
    %2947 = vmatpush1.msra.mxu0 0.0
    %2948 = vmatprep.subr.mxu0 0.0
    %2949 = vmatpush1.msra.mxu0 0.0
    %2950 = vmatprep.subr.mxu0 0.0
    %2951 = vmatpush1.msra.mxu0 0.0
    %2952 = vmatprep.subr.mxu0 0.0
    %2953 = vmatpush1.msra.mxu0 0.0
    %2954 = vmatprep.subr.mxu0 0.0
    %2955 = vmatpush1.msra.mxu0 %v2663
    %2956 = vmatprep.subr.mxu0 0.0
    %2957 = vmatpush2.msra.mxu0 0.0
    %2958 = vmatprep.subr.mxu0 0.0
    %2959 = vmatpush2.msra.mxu0 0.0
    %2960 = vmatprep.subr.mxu0 0.0
    %2961 = vmatpush2.msra.mxu0 0.0
    %2962 = vmatprep.subr.mxu0 0.0
    %2963 = vmatpush2.msra.mxu0 0.0
    %2964 = vmatprep.subr.mxu0 0.0
    %2965 = vmatpush2.msra.mxu0 0.0
    %2966 = vmatprep.subr.mxu0 0.0
    %2967 = vmatpush2.msra.mxu0 0.0
    %2968 = vmatprep.subr.mxu0 0.0
    %2969 = vmatpush2.msra.mxu0 0.0
    %2970 = vmatprep.subr.mxu0 0.0
    %2971 = vmatpush2.msra.mxu0 0.0
    %2972 = vmatprep.subr.mxu0 0.0
    %2973 = vmatpush2.msra.mxu0 0.0
    %2974 = vmatprep.subr.mxu0 0.0
    %2975 = vmatpush2.msra.mxu0 0.0
    %2976 = vmatprep.subr.mxu0 0.0
    %2977 = vmatpush2.msra.mxu0 0.0
    %2978 = vmatprep.subr.mxu0 0.0
    %2979 = vmatpush2.msra.mxu0 0.0
    %2980 = vmatprep.subr.mxu0 0.0
    %2981 = vmatpush2.msra.mxu0 0.0
    %2982 = vmatprep.subr.mxu0 0.0
    %2983 = vmatpush2.msra.mxu0 0.0
    %2984 = vmatprep.subr.mxu0 0.0
    %2985 = vmatpush2.msra.mxu0 0.0
    %2986 = vmatprep.subr.mxu0 0.0
    %2987 = vmatpush2.msra.mxu0 0.0
    %2988 = vmatprep.mubr.f32.mxu0 0.0
    %2989 = vmatmul.mubr.f32.gmra.mxu0 %v2922
    %v2990 = vpop.f32.mrf.mxu0
    %v2991 = vadd.f32 0.0, %v2990
    %v2992 = vpop.f32.mrf.mxu0
    %2993 = vdwg.mxu0
    %v2994 = vlaneseq
    %v2995 = vshrl.u32 %v2994, 7
    %v2996 = vsub.s32 0, %v2995
    %v2997 = vrot.slane %v2917, %v2996
    %v2998 = vmul.f32 %v2742, %v2997
    %v2999 = vmul.f32 %v2743, %v2997
    %v3000 = vlaneseq
    %v3001 = vshrl.u32 %v3000, 7
    %v3002 = vsub.s32 0, %v3001
    %v3003 = vrot.slane %v2991, %v3002
    %v3004 = vadd.f32 %v2998, %v3003
    %v3005 = vadd.f32 %v2999, %v3003
    %3006 = vst.msk [vmem:[#allocation3] sm:$0xff] %vm2554, %v3004
    %3007 = vst.msk [vmem:[#allocation3 + $0x8] sm:$0x3f] %vm2556, %v3005
    %v3008 = vmul.f32 %v2744, %v2997
    %v3009 = vmul.f32 %v2745, %v2997
    %v3010 = vadd.f32 %v3008, %v3003
    %v3011 = vadd.f32 %v3009, %v3003
    %3012 = vst.msk [vmem:[#allocation3 + $0xe] sm:$0xff] %vm2554, %v3010
    %3013 = vst.msk [vmem:[#allocation3 + $0x16] sm:$0x3f] %vm2556, %v3011
    %v3014 = vld [vmem:[#allocation3] sm:$0xff]
    %v3015 = vld [vmem:[#allocation3 + $0x8] sm:$0x3]
    %v3016 = vld [vmem:[%s13] sm:$0xff]
    %v3017 = vld [vmem:[%s13 + $0x8] sm:$0xff]
    %v3018 = vld [vmem:[%s13 + $0x10] sm:$0xff]
    %v3019 = vld [vmem:[%s13 + $0x18] sm:$0xff]
    %v3020 = vld [vmem:[%s13 + $0x20] sm:$0xff]
    %v3021 = vld [vmem:[%s13 + $0x28] sm:$0xff]
    %v3022 = vld [vmem:[%s13 + $0x30] sm:$0xff]
    %v3023 = vld [vmem:[%s13 + $0x38] sm:$0xff]
    %v3024 = vld [vmem:[%s13 + $0x40] sm:$0xff]
    %v3025 = vld [vmem:[%s13 + $0x48] sm:$0xff]
    %v3026 = vld [vmem:[%s13 + $0x50] sm:$0xff]
    %v3027 = vld [vmem:[%s13 + $0x58] sm:$0xff]
    %v3028 = vld [vmem:[%s13 + $0x60] sm:$0xff]
    %v3029 = vld [vmem:[%s13 + $0x68] sm:$0xff]
    %v3030 = vld [vmem:[%s13 + $0x70] sm:$0xff]
    %v3031 = vld [vmem:[%s13 + $0x78] sm:$0xff]
    %v3032 = vld [vmem:[%s13 + $0x80] sm:$0xff]
    %v3033 = vld [vmem:[%s13 + $0x88] sm:$0xff]
    %v3034 = vld [vmem:[%s13 + $0x90] sm:$0xff]
    %v3035 = vld [vmem:[%s13 + $0x98] sm:$0xff]
    %v3036 = vld [vmem:[%s13 + $0xa0] sm:$0xff]
    %v3037 = vld [vmem:[%s13 + $0xa8] sm:$0xff]
    %v3038 = vld [vmem:[%s13 + $0xb0] sm:$0xff]
    %v3039 = vld [vmem:[%s13 + $0xb8] sm:$0xff]
    %v3040 = vld [vmem:[%s13 + $0xc0] sm:$0xff]
    %v3041 = vld [vmem:[%s13 + $0xc8] sm:$0xff]
    %v3042 = vld [vmem:[%s13 + $0xd0] sm:$0xff]
    %v3043 = vld [vmem:[%s13 + $0xd8] sm:$0xff]
    %v3044 = vld [vmem:[#allocation3 + $0x1] sm:$0xff]
    %v3045 = vld [vmem:[#allocation3 + $0x9] sm:$0x3]
    %s3046 = scalar_lea.vmem %s13, 224
    %v3047 = vld [vmem:[%s3046] sm:$0xff]
    %v3048 = vld [vmem:[%s3046 + $0x8] sm:$0xff]
    %v3049 = vld [vmem:[%s3046 + $0x10] sm:$0xff]
    %v3050 = vld [vmem:[%s3046 + $0x18] sm:$0xff]
    %v3051 = vld [vmem:[%s3046 + $0x20] sm:$0xff]
    %v3052 = vld [vmem:[%s3046 + $0x28] sm:$0xff]
    %v3053 = vld [vmem:[%s3046 + $0x30] sm:$0xff]
    %v3054 = vld [vmem:[%s3046 + $0x38] sm:$0xff]
    %v3055 = vld [vmem:[%s3046 + $0x40] sm:$0xff]
    %v3056 = vld [vmem:[%s3046 + $0x48] sm:$0xff]
    %v3057 = vld [vmem:[%s3046 + $0x50] sm:$0xff]
    %v3058 = vld [vmem:[%s3046 + $0x58] sm:$0xff]
    %v3059 = vld [vmem:[%s3046 + $0x60] sm:$0xff]
    %v3060 = vld [vmem:[%s3046 + $0x68] sm:$0xff]
    %v3061 = vld [vmem:[%s3046 + $0x70] sm:$0xff]
    %v3062 = vld [vmem:[%s3046 + $0x78] sm:$0xff]
    %v3063 = vld [vmem:[%s3046 + $0x80] sm:$0xff]
    %v3064 = vld [vmem:[%s3046 + $0x88] sm:$0xff]
    %v3065 = vld [vmem:[%s3046 + $0x90] sm:$0xff]
    %v3066 = vld [vmem:[%s3046 + $0x98] sm:$0xff]
    %v3067 = vld [vmem:[%s3046 + $0xa0] sm:$0xff]
    %v3068 = vld [vmem:[%s3046 + $0xa8] sm:$0xff]
    %v3069 = vld [vmem:[%s3046 + $0xb0] sm:$0xff]
    %v3070 = vld [vmem:[%s3046 + $0xb8] sm:$0xff]
    %v3071 = vld [vmem:[%s3046 + $0xc0] sm:$0xff]
    %v3072 = vld [vmem:[%s3046 + $0xc8] sm:$0xff]
    %v3073 = vld [vmem:[%s3046 + $0xd0] sm:$0xff]
    %v3074 = vld [vmem:[%s3046 + $0xd8] sm:$0xff]
    %v3076 = vsel %vm2554, %v3044, 0
    %v3079 = vsel %vm2554, %v3045, 0
    %3081 = vmatprep.subr.mxu0 0.0
    %3082 = vmatpush1.msra.mxu0 0.0
    %3083 = vmatprep.subr.mxu0 0.0
    %3084 = vmatpush1.msra.mxu0 0.0
    %3085 = vmatprep.subr.mxu0 %v3074
    %3086 = vmatpush1.msra.mxu0 %v3073
    %3087 = vmatprep.subr.mxu0 %v3072
    %3088 = vmatpush1.msra.mxu0 %v3071
    %3089 = vmatprep.subr.mxu0 %v3070
    %3090 = vmatpush1.msra.mxu0 %v3069
    %3091 = vmatprep.subr.mxu0 %v3068
    %3092 = vmatpush1.msra.mxu0 %v3067
    %3093 = vmatprep.subr.mxu0 %v3066
    %3094 = vmatpush1.msra.mxu0 %v3065
    %3095 = vmatprep.subr.mxu0 %v3064
    %3096 = vmatpush1.msra.mxu0 %v3063
    %3097 = vmatprep.subr.mxu0 %v3062
    %3098 = vmatpush1.msra.mxu0 %v3061
    %3099 = vmatprep.subr.mxu0 %v3060
    %3100 = vmatpush1.msra.mxu0 %v3059
    %3101 = vmatprep.subr.mxu0 %v3058
    %3102 = vmatpush1.msra.mxu0 %v3057
    %3103 = vmatprep.subr.mxu0 %v3056
    %3104 = vmatpush1.msra.mxu0 %v3055
    %3105 = vmatprep.subr.mxu0 %v3054
    %3106 = vmatpush1.msra.mxu0 %v3053
    %3107 = vmatprep.subr.mxu0 %v3052
    %3108 = vmatpush1.msra.mxu0 %v3051
    %3109 = vmatprep.subr.mxu0 %v3050
    %3110 = vmatpush1.msra.mxu0 %v3049
    %3111 = vmatprep.subr.mxu0 %v3048
    %3112 = vmatpush1.msra.mxu0 %v3047
    %3113 = vmatprep.subr.mxu0 0.0
    %3114 = vmatpush2.msra.mxu0 0.0
    %3115 = vmatprep.subr.mxu0 0.0
    %3116 = vmatpush2.msra.mxu0 0.0
    %3117 = vmatprep.subr.mxu0 0.0
    %3118 = vmatpush2.msra.mxu0 0.0
    %3119 = vmatprep.subr.mxu0 0.0
    %3120 = vmatpush2.msra.mxu0 0.0
    %3121 = vmatprep.subr.mxu0 0.0
    %3122 = vmatpush2.msra.mxu0 0.0
    %3123 = vmatprep.subr.mxu0 0.0
    %3124 = vmatpush2.msra.mxu0 0.0
    %3125 = vmatprep.subr.mxu0 0.0
    %3126 = vmatpush2.msra.mxu0 0.0
    %3127 = vmatprep.subr.mxu0 0.0
    %3128 = vmatpush2.msra.mxu0 0.0
    %3129 = vmatprep.subr.mxu0 0.0
    %3130 = vmatpush2.msra.mxu0 0.0
    %3131 = vmatprep.subr.mxu0 0.0
    %3132 = vmatpush2.msra.mxu0 0.0
    %3133 = vmatprep.subr.mxu0 0.0
    %3134 = vmatpush2.msra.mxu0 0.0
    %3135 = vmatprep.subr.mxu0 0.0
    %3136 = vmatpush2.msra.mxu0 0.0
    %3137 = vmatprep.subr.mxu0 0.0
    %3138 = vmatpush2.msra.mxu0 0.0
    %3139 = vmatprep.subr.mxu0 0.0
    %3140 = vmatpush2.msra.mxu0 0.0
    %3141 = vmatprep.subr.mxu0 0.0
    %3142 = vmatpush2.msra.mxu0 0.0
    %3143 = vmatprep.subr.mxu0 0.0
    %3144 = vmatpush2.msra.mxu0 0.0
    %3145 = vmatprep.mubr.f32.mxu0 0.0
    %3146 = vmatmul.mubr.f32.gmra.mxu0 %v3076
    %v3147 = vpop.f32.mrf.mxu0
    %v3148 = vadd.f32 0.0, %v3147
    %v3149 = vpop.f32.mrf.mxu0
    %v3150 = vadd.f32 0.0, %v3149
    %3151 = vmatprep.mubr.f32.mxu0 0.0
    %3152 = vmatmul.mubr.f32.gmra.mxu0 %v3079
    %v3153 = vpop.f32.mrf.mxu0
    %v3154 = vadd.f32 0.0, %v3153
    %v3155 = vpop.f32.mrf.mxu0
    %v3156 = vadd.f32 0.0, %v3155
    %3157 = vdwg.mxu0
    %v3159 = vsel %vm2554, %v3014, 0
    %v3162 = vsel %vm2554, %v3015, 0
    %3164 = vmatprep.subr.mxu0 0.0
    %3165 = vmatpush1.msra.mxu0 0.0
    %3166 = vmatprep.subr.mxu0 0.0
    %3167 = vmatpush1.msra.mxu0 0.0
    %3168 = vmatprep.subr.mxu0 %v3043
    %3169 = vmatpush1.msra.mxu0 %v3042
    %3170 = vmatprep.subr.mxu0 %v3041
    %3171 = vmatpush1.msra.mxu0 %v3040
    %3172 = vmatprep.subr.mxu0 %v3039
    %3173 = vmatpush1.msra.mxu0 %v3038
    %3174 = vmatprep.subr.mxu0 %v3037
    %3175 = vmatpush1.msra.mxu0 %v3036
    %3176 = vmatprep.subr.mxu0 %v3035
    %3177 = vmatpush1.msra.mxu0 %v3034
    %3178 = vmatprep.subr.mxu0 %v3033
    %3179 = vmatpush1.msra.mxu0 %v3032
    %3180 = vmatprep.subr.mxu0 %v3031
    %3181 = vmatpush1.msra.mxu0 %v3030
    %3182 = vmatprep.subr.mxu0 %v3029
    %3183 = vmatpush1.msra.mxu0 %v3028
    %3184 = vmatprep.subr.mxu0 %v3027
    %3185 = vmatpush1.msra.mxu0 %v3026
    %3186 = vmatprep.subr.mxu0 %v3025
    %3187 = vmatpush1.msra.mxu0 %v3024
    %3188 = vmatprep.subr.mxu0 %v3023
    %3189 = vmatpush1.msra.mxu0 %v3022
    %3190 = vmatprep.subr.mxu0 %v3021
    %3191 = vmatpush1.msra.mxu0 %v3020
    %3192 = vmatprep.subr.mxu0 %v3019
    %3193 = vmatpush1.msra.mxu0 %v3018
    %3194 = vmatprep.subr.mxu0 %v3017
    %3195 = vmatpush1.msra.mxu0 %v3016
    %3196 = vmatprep.subr.mxu0 0.0
    %3197 = vmatpush2.msra.mxu0 0.0
    %3198 = vmatprep.subr.mxu0 0.0
    %3199 = vmatpush2.msra.mxu0 0.0
    %3200 = vmatprep.subr.mxu0 0.0
    %3201 = vmatpush2.msra.mxu0 0.0
    %3202 = vmatprep.subr.mxu0 0.0
    %3203 = vmatpush2.msra.mxu0 0.0
    %3204 = vmatprep.subr.mxu0 0.0
    %3205 = vmatpush2.msra.mxu0 0.0
    %3206 = vmatprep.subr.mxu0 0.0
    %3207 = vmatpush2.msra.mxu0 0.0
    %3208 = vmatprep.subr.mxu0 0.0
    %3209 = vmatpush2.msra.mxu0 0.0
    %3210 = vmatprep.subr.mxu0 0.0
    %3211 = vmatpush2.msra.mxu0 0.0
    %3212 = vmatprep.subr.mxu0 0.0
    %3213 = vmatpush2.msra.mxu0 0.0
    %3214 = vmatprep.subr.mxu0 0.0
    %3215 = vmatpush2.msra.mxu0 0.0
    %3216 = vmatprep.subr.mxu0 0.0
    %3217 = vmatpush2.msra.mxu0 0.0
    %3218 = vmatprep.subr.mxu0 0.0
    %3219 = vmatpush2.msra.mxu0 0.0
    %3220 = vmatprep.subr.mxu0 0.0
    %3221 = vmatpush2.msra.mxu0 0.0
    %3222 = vmatprep.subr.mxu0 0.0
    %3223 = vmatpush2.msra.mxu0 0.0
    %3224 = vmatprep.subr.mxu0 0.0
    %3225 = vmatpush2.msra.mxu0 0.0
    %3226 = vmatprep.subr.mxu0 0.0
    %3227 = vmatpush2.msra.mxu0 0.0
    %3228 = vmatprep.mubr.f32.mxu0 0.0
    %3229 = vmatmul.mubr.f32.gmra.mxu0 %v3159
    %v3230 = vpop.f32.mrf.mxu0
    %v3231 = vadd.f32 %v3148, %v3230
    %v3232 = vpop.f32.mrf.mxu0
    %v3233 = vadd.f32 %v3150, %v3232
    %3234 = vmatprep.mubr.f32.mxu0 0.0
    %3235 = vmatmul.mubr.f32.gmra.mxu0 %v3162
    %v3236 = vpop.f32.mrf.mxu0
    %v3237 = vadd.f32 %v3154, %v3236
    %v3238 = vpop.f32.mrf.mxu0
    %v3239 = vadd.f32 %v3156, %v3238
    %3240 = vdwg.mxu0
    %v3241 = vld [vmem:[#allocation3 + $0x2] sm:$0xff]
    %v3242 = vld [vmem:[#allocation3 + $0xa] sm:$0x3]
    %s3243 = scalar_lea.vmem %s13, 448
    %v3244 = vld [vmem:[%s3243] sm:$0xff]
    %v3245 = vld [vmem:[%s3243 + $0x8] sm:$0xff]
    %v3246 = vld [vmem:[%s3243 + $0x10] sm:$0xff]
    %v3247 = vld [vmem:[%s3243 + $0x18] sm:$0xff]
    %v3248 = vld [vmem:[%s3243 + $0x20] sm:$0xff]
    %v3249 = vld [vmem:[%s3243 + $0x28] sm:$0xff]
    %v3250 = vld [vmem:[%s3243 + $0x30] sm:$0xff]
    %v3251 = vld [vmem:[%s3243 + $0x38] sm:$0xff]
    %v3252 = vld [vmem:[%s3243 + $0x40] sm:$0xff]
    %v3253 = vld [vmem:[%s3243 + $0x48] sm:$0xff]
    %v3254 = vld [vmem:[%s3243 + $0x50] sm:$0xff]
    %v3255 = vld [vmem:[%s3243 + $0x58] sm:$0xff]
    %v3256 = vld [vmem:[%s3243 + $0x60] sm:$0xff]
    %v3257 = vld [vmem:[%s3243 + $0x68] sm:$0xff]
    %v3258 = vld [vmem:[%s3243 + $0x70] sm:$0xff]
    %v3259 = vld [vmem:[%s3243 + $0x78] sm:$0xff]
    %v3260 = vld [vmem:[%s3243 + $0x80] sm:$0xff]
    %v3261 = vld [vmem:[%s3243 + $0x88] sm:$0xff]
    %v3262 = vld [vmem:[%s3243 + $0x90] sm:$0xff]
    %v3263 = vld [vmem:[%s3243 + $0x98] sm:$0xff]
    %v3264 = vld [vmem:[%s3243 + $0xa0] sm:$0xff]
    %v3265 = vld [vmem:[%s3243 + $0xa8] sm:$0xff]
    %v3266 = vld [vmem:[%s3243 + $0xb0] sm:$0xff]
    %v3267 = vld [vmem:[%s3243 + $0xb8] sm:$0xff]
    %v3268 = vld [vmem:[%s3243 + $0xc0] sm:$0xff]
    %v3269 = vld [vmem:[%s3243 + $0xc8] sm:$0xff]
    %v3270 = vld [vmem:[%s3243 + $0xd0] sm:$0xff]
    %v3271 = vld [vmem:[%s3243 + $0xd8] sm:$0xff]
    %v3273 = vsel %vm2554, %v3241, 0
    %v3276 = vsel %vm2554, %v3242, 0
    %3278 = vmatprep.subr.mxu0 0.0
    %3279 = vmatpush1.msra.mxu0 0.0
    %3280 = vmatprep.subr.mxu0 0.0
    %3281 = vmatpush1.msra.mxu0 0.0
    %3282 = vmatprep.subr.mxu0 %v3271
    %3283 = vmatpush1.msra.mxu0 %v3270
    %3284 = vmatprep.subr.mxu0 %v3269
    %3285 = vmatpush1.msra.mxu0 %v3268
    %3286 = vmatprep.subr.mxu0 %v3267
    %3287 = vmatpush1.msra.mxu0 %v3266
    %3288 = vmatprep.subr.mxu0 %v3265
    %3289 = vmatpush1.msra.mxu0 %v3264
    %3290 = vmatprep.subr.mxu0 %v3263
    %3291 = vmatpush1.msra.mxu0 %v3262
    %3292 = vmatprep.subr.mxu0 %v3261
    %3293 = vmatpush1.msra.mxu0 %v3260
    %3294 = vmatprep.subr.mxu0 %v3259
    %3295 = vmatpush1.msra.mxu0 %v3258
    %3296 = vmatprep.subr.mxu0 %v3257
    %3297 = vmatpush1.msra.mxu0 %v3256
    %3298 = vmatprep.subr.mxu0 %v3255
    %3299 = vmatpush1.msra.mxu0 %v3254
    %3300 = vmatprep.subr.mxu0 %v3253
    %3301 = vmatpush1.msra.mxu0 %v3252
    %3302 = vmatprep.subr.mxu0 %v3251
    %3303 = vmatpush1.msra.mxu0 %v3250
    %3304 = vmatprep.subr.mxu0 %v3249
    %3305 = vmatpush1.msra.mxu0 %v3248
    %3306 = vmatprep.subr.mxu0 %v3247
    %3307 = vmatpush1.msra.mxu0 %v3246
    %3308 = vmatprep.subr.mxu0 %v3245
    %3309 = vmatpush1.msra.mxu0 %v3244
    %3310 = vmatprep.subr.mxu0 0.0
    %3311 = vmatpush2.msra.mxu0 0.0
    %3312 = vmatprep.subr.mxu0 0.0
    %3313 = vmatpush2.msra.mxu0 0.0
    %3314 = vmatprep.subr.mxu0 0.0
    %3315 = vmatpush2.msra.mxu0 0.0
    %3316 = vmatprep.subr.mxu0 0.0
    %3317 = vmatpush2.msra.mxu0 0.0
    %3318 = vmatprep.subr.mxu0 0.0
    %3319 = vmatpush2.msra.mxu0 0.0
    %3320 = vmatprep.subr.mxu0 0.0
    %3321 = vmatpush2.msra.mxu0 0.0
    %3322 = vmatprep.subr.mxu0 0.0
    %3323 = vmatpush2.msra.mxu0 0.0
    %3324 = vmatprep.subr.mxu0 0.0
    %3325 = vmatpush2.msra.mxu0 0.0
    %3326 = vmatprep.subr.mxu0 0.0
    %3327 = vmatpush2.msra.mxu0 0.0
    %3328 = vmatprep.subr.mxu0 0.0
    %3329 = vmatpush2.msra.mxu0 0.0
    %3330 = vmatprep.subr.mxu0 0.0
    %3331 = vmatpush2.msra.mxu0 0.0
    %3332 = vmatprep.subr.mxu0 0.0
    %3333 = vmatpush2.msra.mxu0 0.0
    %3334 = vmatprep.subr.mxu0 0.0
    %3335 = vmatpush2.msra.mxu0 0.0
    %3336 = vmatprep.subr.mxu0 0.0
    %3337 = vmatpush2.msra.mxu0 0.0
    %3338 = vmatprep.subr.mxu0 0.0
    %3339 = vmatpush2.msra.mxu0 0.0
    %3340 = vmatprep.subr.mxu0 0.0
    %3341 = vmatpush2.msra.mxu0 0.0
    %3342 = vmatprep.mubr.f32.mxu0 0.0
    %3343 = vmatmul.mubr.f32.gmra.mxu0 %v3273
    %v3344 = vpop.f32.mrf.mxu0
    %v3345 = vadd.f32 0.0, %v3344
    %v3346 = vpop.f32.mrf.mxu0
    %v3347 = vadd.f32 0.0, %v3346
    %3348 = vmatprep.mubr.f32.mxu0 0.0
    %3349 = vmatmul.mubr.f32.gmra.mxu0 %v3276
    %v3350 = vpop.f32.mrf.mxu0
    %v3351 = vadd.f32 0.0, %v3350
    %v3352 = vpop.f32.mrf.mxu0
    %v3353 = vadd.f32 0.0, %v3352
    %3354 = vdwg.mxu0
    %v3355 = vadd.f32 %v3231, %v3345
    %v3356 = vadd.f32 %v3233, %v3347
    %v3357 = vadd.f32 %v3237, %v3351
    %v3358 = vadd.f32 %v3239, %v3353
    %v3359 = vld [vmem:[#allocation3 + $0x3] sm:$0xff]
    %v3360 = vld [vmem:[#allocation3 + $0xb] sm:$0x3]
    %s3361 = scalar_lea.vmem %s13, 672
    %v3362 = vld [vmem:[%s3361] sm:$0xff]
    %v3363 = vld [vmem:[%s3361 + $0x8] sm:$0xff]
    %v3364 = vld [vmem:[%s3361 + $0x10] sm:$0xff]
    %v3365 = vld [vmem:[%s3361 + $0x18] sm:$0xff]
    %v3366 = vld [vmem:[%s3361 + $0x20] sm:$0xff]
    %v3367 = vld [vmem:[%s3361 + $0x28] sm:$0xff]
    %v3368 = vld [vmem:[%s3361 + $0x30] sm:$0xff]
    %v3369 = vld [vmem:[%s3361 + $0x38] sm:$0xff]
    %v3370 = vld [vmem:[%s3361 + $0x40] sm:$0xff]
    %v3371 = vld [vmem:[%s3361 + $0x48] sm:$0xff]
    %v3372 = vld [vmem:[%s3361 + $0x50] sm:$0xff]
    %v3373 = vld [vmem:[%s3361 + $0x58] sm:$0xff]
    %v3374 = vld [vmem:[%s3361 + $0x60] sm:$0xff]
    %v3375 = vld [vmem:[%s3361 + $0x68] sm:$0xff]
    %v3376 = vld [vmem:[%s3361 + $0x70] sm:$0xff]
    %v3377 = vld [vmem:[%s3361 + $0x78] sm:$0xff]
    %v3378 = vld [vmem:[%s3361 + $0x80] sm:$0xff]
    %v3379 = vld [vmem:[%s3361 + $0x88] sm:$0xff]
    %v3380 = vld [vmem:[%s3361 + $0x90] sm:$0xff]
    %v3381 = vld [vmem:[%s3361 + $0x98] sm:$0xff]
    %v3382 = vld [vmem:[%s3361 + $0xa0] sm:$0xff]
    %v3383 = vld [vmem:[%s3361 + $0xa8] sm:$0xff]
    %v3384 = vld [vmem:[%s3361 + $0xb0] sm:$0xff]
    %v3385 = vld [vmem:[%s3361 + $0xb8] sm:$0xff]
    %v3386 = vld [vmem:[%s3361 + $0xc0] sm:$0xff]
    %v3387 = vld [vmem:[%s3361 + $0xc8] sm:$0xff]
    %v3388 = vld [vmem:[%s3361 + $0xd0] sm:$0xff]
    %v3389 = vld [vmem:[%s3361 + $0xd8] sm:$0xff]
    %v3391 = vsel %vm2554, %v3359, 0
    %v3394 = vsel %vm2554, %v3360, 0
    %3396 = vmatprep.subr.mxu0 0.0
    %3397 = vmatpush1.msra.mxu0 0.0
    %3398 = vmatprep.subr.mxu0 0.0
    %3399 = vmatpush1.msra.mxu0 0.0
    %3400 = vmatprep.subr.mxu0 %v3389
    %3401 = vmatpush1.msra.mxu0 %v3388
    %3402 = vmatprep.subr.mxu0 %v3387
    %3403 = vmatpush1.msra.mxu0 %v3386
    %3404 = vmatprep.subr.mxu0 %v3385
    %3405 = vmatpush1.msra.mxu0 %v3384
    %3406 = vmatprep.subr.mxu0 %v3383
    %3407 = vmatpush1.msra.mxu0 %v3382
    %3408 = vmatprep.subr.mxu0 %v3381
    %3409 = vmatpush1.msra.mxu0 %v3380
    %3410 = vmatprep.subr.mxu0 %v3379
    %3411 = vmatpush1.msra.mxu0 %v3378
    %3412 = vmatprep.subr.mxu0 %v3377
    %3413 = vmatpush1.msra.mxu0 %v3376
    %3414 = vmatprep.subr.mxu0 %v3375
    %3415 = vmatpush1.msra.mxu0 %v3374
    %3416 = vmatprep.subr.mxu0 %v3373
    %3417 = vmatpush1.msra.mxu0 %v3372
    %3418 = vmatprep.subr.mxu0 %v3371
    %3419 = vmatpush1.msra.mxu0 %v3370
    %3420 = vmatprep.subr.mxu0 %v3369
    %3421 = vmatpush1.msra.mxu0 %v3368
    %3422 = vmatprep.subr.mxu0 %v3367
    %3423 = vmatpush1.msra.mxu0 %v3366
    %3424 = vmatprep.subr.mxu0 %v3365
    %3425 = vmatpush1.msra.mxu0 %v3364
    %3426 = vmatprep.subr.mxu0 %v3363
    %3427 = vmatpush1.msra.mxu0 %v3362
    %3428 = vmatprep.subr.mxu0 0.0
    %3429 = vmatpush2.msra.mxu0 0.0
    %3430 = vmatprep.subr.mxu0 0.0
    %3431 = vmatpush2.msra.mxu0 0.0
    %3432 = vmatprep.subr.mxu0 0.0
    %3433 = vmatpush2.msra.mxu0 0.0
    %3434 = vmatprep.subr.mxu0 0.0
    %3435 = vmatpush2.msra.mxu0 0.0
    %3436 = vmatprep.subr.mxu0 0.0
    %3437 = vmatpush2.msra.mxu0 0.0
    %3438 = vmatprep.subr.mxu0 0.0
    %3439 = vmatpush2.msra.mxu0 0.0
    %3440 = vmatprep.subr.mxu0 0.0
    %3441 = vmatpush2.msra.mxu0 0.0
    %3442 = vmatprep.subr.mxu0 0.0
    %3443 = vmatpush2.msra.mxu0 0.0
    %3444 = vmatprep.subr.mxu0 0.0
    %3445 = vmatpush2.msra.mxu0 0.0
    %3446 = vmatprep.subr.mxu0 0.0
    %3447 = vmatpush2.msra.mxu0 0.0
    %3448 = vmatprep.subr.mxu0 0.0
    %3449 = vmatpush2.msra.mxu0 0.0
    %3450 = vmatprep.subr.mxu0 0.0
    %3451 = vmatpush2.msra.mxu0 0.0
    %3452 = vmatprep.subr.mxu0 0.0
    %3453 = vmatpush2.msra.mxu0 0.0
    %3454 = vmatprep.subr.mxu0 0.0
    %3455 = vmatpush2.msra.mxu0 0.0
    %3456 = vmatprep.subr.mxu0 0.0
    %3457 = vmatpush2.msra.mxu0 0.0
    %3458 = vmatprep.subr.mxu0 0.0
    %3459 = vmatpush2.msra.mxu0 0.0
    %3460 = vmatprep.mubr.f32.mxu0 0.0
    %3461 = vmatmul.mubr.f32.gmra.mxu0 %v3391
    %v3462 = vpop.f32.mrf.mxu0
    %v3463 = vadd.f32 0.0, %v3462
    %v3464 = vpop.f32.mrf.mxu0
    %v3465 = vadd.f32 0.0, %v3464
    %3466 = vmatprep.mubr.f32.mxu0 0.0
    %3467 = vmatmul.mubr.f32.gmra.mxu0 %v3394
    %v3468 = vpop.f32.mrf.mxu0
    %v3469 = vadd.f32 0.0, %v3468
    %v3470 = vpop.f32.mrf.mxu0
    %v3471 = vadd.f32 0.0, %v3470
    %3472 = vdwg.mxu0
    %v3473 = vadd.f32 %v3355, %v3463
    %v3474 = vadd.f32 %v3356, %v3465
    %v3475 = vadd.f32 %v3357, %v3469
    %v3476 = vadd.f32 %v3358, %v3471
    %v3477 = vld [vmem:[#allocation3 + $0x4] sm:$0xff]
    %v3478 = vld [vmem:[#allocation3 + $0xc] sm:$0x3]
    %s3479 = scalar_lea.vmem %s13, 896
    %v3480 = vld [vmem:[%s3479] sm:$0xff]
    %v3481 = vld [vmem:[%s3479 + $0x8] sm:$0xff]
    %v3482 = vld [vmem:[%s3479 + $0x10] sm:$0xff]
    %v3483 = vld [vmem:[%s3479 + $0x18] sm:$0xff]
    %v3484 = vld [vmem:[%s3479 + $0x20] sm:$0xff]
    %v3485 = vld [vmem:[%s3479 + $0x28] sm:$0xff]
    %v3486 = vld [vmem:[%s3479 + $0x30] sm:$0xff]
    %v3487 = vld [vmem:[%s3479 + $0x38] sm:$0xff]
    %v3488 = vld [vmem:[%s3479 + $0x40] sm:$0xff]
    %v3489 = vld [vmem:[%s3479 + $0x48] sm:$0xff]
    %v3490 = vld [vmem:[%s3479 + $0x50] sm:$0xff]
    %v3491 = vld [vmem:[%s3479 + $0x58] sm:$0xff]
    %v3492 = vld [vmem:[%s3479 + $0x60] sm:$0xff]
    %v3493 = vld [vmem:[%s3479 + $0x68] sm:$0xff]
    %v3494 = vld [vmem:[%s3479 + $0x70] sm:$0xff]
    %v3495 = vld [vmem:[%s3479 + $0x78] sm:$0xff]
    %v3496 = vld [vmem:[%s3479 + $0x80] sm:$0xff]
    %v3497 = vld [vmem:[%s3479 + $0x88] sm:$0xff]
    %v3498 = vld [vmem:[%s3479 + $0x90] sm:$0xff]
    %v3499 = vld [vmem:[%s3479 + $0x98] sm:$0xff]
    %v3500 = vld [vmem:[%s3479 + $0xa0] sm:$0xff]
    %v3501 = vld [vmem:[%s3479 + $0xa8] sm:$0xff]
    %v3502 = vld [vmem:[%s3479 + $0xb0] sm:$0xff]
    %v3503 = vld [vmem:[%s3479 + $0xb8] sm:$0xff]
    %v3504 = vld [vmem:[%s3479 + $0xc0] sm:$0xff]
    %v3505 = vld [vmem:[%s3479 + $0xc8] sm:$0xff]
    %v3506 = vld [vmem:[%s3479 + $0xd0] sm:$0xff]
    %v3507 = vld [vmem:[%s3479 + $0xd8] sm:$0xff]
    %v3509 = vsel %vm2554, %v3477, 0
    %v3512 = vsel %vm2554, %v3478, 0
    %3514 = vmatprep.subr.mxu0 0.0
    %3515 = vmatpush1.msra.mxu0 0.0
    %3516 = vmatprep.subr.mxu0 0.0
    %3517 = vmatpush1.msra.mxu0 0.0
    %3518 = vmatprep.subr.mxu0 %v3507
    %3519 = vmatpush1.msra.mxu0 %v3506
    %3520 = vmatprep.subr.mxu0 %v3505
    %3521 = vmatpush1.msra.mxu0 %v3504
    %3522 = vmatprep.subr.mxu0 %v3503
    %3523 = vmatpush1.msra.mxu0 %v3502
    %3524 = vmatprep.subr.mxu0 %v3501
    %3525 = vmatpush1.msra.mxu0 %v3500
    %3526 = vmatprep.subr.mxu0 %v3499
    %3527 = vmatpush1.msra.mxu0 %v3498
    %3528 = vmatprep.subr.mxu0 %v3497
    %3529 = vmatpush1.msra.mxu0 %v3496
    %3530 = vmatprep.subr.mxu0 %v3495
    %3531 = vmatpush1.msra.mxu0 %v3494
    %3532 = vmatprep.subr.mxu0 %v3493
    %3533 = vmatpush1.msra.mxu0 %v3492
    %3534 = vmatprep.subr.mxu0 %v3491
    %3535 = vmatpush1.msra.mxu0 %v3490
    %3536 = vmatprep.subr.mxu0 %v3489
    %3537 = vmatpush1.msra.mxu0 %v3488
    %3538 = vmatprep.subr.mxu0 %v3487
    %3539 = vmatpush1.msra.mxu0 %v3486
    %3540 = vmatprep.subr.mxu0 %v3485
    %3541 = vmatpush1.msra.mxu0 %v3484
    %3542 = vmatprep.subr.mxu0 %v3483
    %3543 = vmatpush1.msra.mxu0 %v3482
    %3544 = vmatprep.subr.mxu0 %v3481
    %3545 = vmatpush1.msra.mxu0 %v3480
    %3546 = vmatprep.subr.mxu0 0.0
    %3547 = vmatpush2.msra.mxu0 0.0
    %3548 = vmatprep.subr.mxu0 0.0
    %3549 = vmatpush2.msra.mxu0 0.0
    %3550 = vmatprep.subr.mxu0 0.0
    %3551 = vmatpush2.msra.mxu0 0.0
    %3552 = vmatprep.subr.mxu0 0.0
    %3553 = vmatpush2.msra.mxu0 0.0
    %3554 = vmatprep.subr.mxu0 0.0
    %3555 = vmatpush2.msra.mxu0 0.0
    %3556 = vmatprep.subr.mxu0 0.0
    %3557 = vmatpush2.msra.mxu0 0.0
    %3558 = vmatprep.subr.mxu0 0.0
    %3559 = vmatpush2.msra.mxu0 0.0
    %3560 = vmatprep.subr.mxu0 0.0
    %3561 = vmatpush2.msra.mxu0 0.0
    %3562 = vmatprep.subr.mxu0 0.0
    %3563 = vmatpush2.msra.mxu0 0.0
    %3564 = vmatprep.subr.mxu0 0.0
    %3565 = vmatpush2.msra.mxu0 0.0
    %3566 = vmatprep.subr.mxu0 0.0
    %3567 = vmatpush2.msra.mxu0 0.0
    %3568 = vmatprep.subr.mxu0 0.0
    %3569 = vmatpush2.msra.mxu0 0.0
    %3570 = vmatprep.subr.mxu0 0.0
    %3571 = vmatpush2.msra.mxu0 0.0
    %3572 = vmatprep.subr.mxu0 0.0
    %3573 = vmatpush2.msra.mxu0 0.0
    %3574 = vmatprep.subr.mxu0 0.0
    %3575 = vmatpush2.msra.mxu0 0.0
    %3576 = vmatprep.subr.mxu0 0.0
    %3577 = vmatpush2.msra.mxu0 0.0
    %3578 = vmatprep.mubr.f32.mxu0 0.0
    %3579 = vmatmul.mubr.f32.gmra.mxu0 %v3509
    %v3580 = vpop.f32.mrf.mxu0
    %v3581 = vadd.f32 0.0, %v3580
    %v3582 = vpop.f32.mrf.mxu0
    %v3583 = vadd.f32 0.0, %v3582
    %3584 = vmatprep.mubr.f32.mxu0 0.0
    %3585 = vmatmul.mubr.f32.gmra.mxu0 %v3512
    %v3586 = vpop.f32.mrf.mxu0
    %v3587 = vadd.f32 0.0, %v3586
    %v3588 = vpop.f32.mrf.mxu0
    %v3589 = vadd.f32 0.0, %v3588
    %3590 = vdwg.mxu0
    %v3591 = vadd.f32 %v3473, %v3581
    %v3592 = vadd.f32 %v3474, %v3583
    %v3593 = vadd.f32 %v3475, %v3587
    %v3594 = vadd.f32 %v3476, %v3589
    %v3595 = vld [vmem:[%s14] sm:$0x3]
    %v3597 = vlaneseq
    %v3598 = vshrl.u32 %v3597, 7
    %v3599 = vsub.s32 0, %v3598
    %v3600 = vrot.slane %v3595, %v3599
    %v3601 = vlaneseq
    %v3602 = vshrl.u32 %v3601, 7
    %v3603 = vsub.s32 1, %v3602
    %v3604 = vrot.slane %v3595, %v3603
    %v3607 = vadd.f32 %v3591, %v3600
    %v3608 = vadd.f32 %v3592, %v3604
    %v3609 = vadd.f32 %v3593, %v3600
    %v3610 = vadd.f32 %v3594, %v3604
    %v3611 = vmax.f32 %v3607, 0.0
    %v3612 = vmax.f32 %v3608, 0.0
    %v3613 = vmax.f32 %v3609, 0.0
    %v3614 = vmax.f32 %v3610, 0.0
    %v3615 = vld [vmem:[%s15] sm:$0x1f]
    %vm3616 = vcmask 80896
    %v3618 = vsel %vm3616, %v3615, 0
    %vm3620 = vcmask 1041408
    %v3622 = vsel %vm3620, %v3613, 0
    %v3625 = vsel %vm3620, %v3614, 0
    %3627 = vmatprep.subr.mxu0 0.0
    %3628 = vmatpush1.msra.mxu0 0.0
    %3629 = vmatprep.subr.mxu0 0.0
    %3630 = vmatpush1.msra.mxu0 0.0
    %3631 = vmatprep.subr.mxu0 0.0
    %3632 = vmatpush1.msra.mxu0 0.0
    %3633 = vmatprep.subr.mxu0 0.0
    %3634 = vmatpush1.msra.mxu0 0.0
    %3635 = vmatprep.subr.mxu0 0.0
    %3636 = vmatpush1.msra.mxu0 0.0
    %3637 = vmatprep.subr.mxu0 0.0
    %3638 = vmatpush1.msra.mxu0 0.0
    %3639 = vmatprep.subr.mxu0 0.0
    %3640 = vmatpush1.msra.mxu0 0.0
    %3641 = vmatprep.subr.mxu0 0.0
    %3642 = vmatpush1.msra.mxu0 0.0
    %3643 = vmatprep.subr.mxu0 0.0
    %3644 = vmatpush1.msra.mxu0 0.0
    %3645 = vmatprep.subr.mxu0 0.0
    %3646 = vmatpush1.msra.mxu0 0.0
    %3647 = vmatprep.subr.mxu0 0.0
    %3648 = vmatpush1.msra.mxu0 0.0
    %3649 = vmatprep.subr.mxu0 0.0
    %3650 = vmatpush1.msra.mxu0 0.0
    %3651 = vmatprep.subr.mxu0 0.0
    %3652 = vmatpush1.msra.mxu0 0.0
    %3653 = vmatprep.subr.mxu0 0.0
    %3654 = vmatpush1.msra.mxu0 0.0
    %3655 = vmatprep.subr.mxu0 %v3625
    %3656 = vmatpush1.msra.mxu0 %v3622
    %3657 = vmatprep.subr.mxu0 %v3612
    %3658 = vmatpush1.msra.mxu0 %v3611
    %3659 = vmatprep.subr.mxu0 0.0
    %3660 = vmatpush2.msra.mxu0 0.0
    %3661 = vmatprep.subr.mxu0 0.0
    %3662 = vmatpush2.msra.mxu0 0.0
    %3663 = vmatprep.subr.mxu0 0.0
    %3664 = vmatpush2.msra.mxu0 0.0
    %3665 = vmatprep.subr.mxu0 0.0
    %3666 = vmatpush2.msra.mxu0 0.0
    %3667 = vmatprep.subr.mxu0 0.0
    %3668 = vmatpush2.msra.mxu0 0.0
    %3669 = vmatprep.subr.mxu0 0.0
    %3670 = vmatpush2.msra.mxu0 0.0
    %3671 = vmatprep.subr.mxu0 0.0
    %3672 = vmatpush2.msra.mxu0 0.0
    %3673 = vmatprep.subr.mxu0 0.0
    %3674 = vmatpush2.msra.mxu0 0.0
    %3675 = vmatprep.subr.mxu0 0.0
    %3676 = vmatpush2.msra.mxu0 0.0
    %3677 = vmatprep.subr.mxu0 0.0
    %3678 = vmatpush2.msra.mxu0 0.0
    %3679 = vmatprep.subr.mxu0 0.0
    %3680 = vmatpush2.msra.mxu0 0.0
    %3681 = vmatprep.subr.mxu0 0.0
    %3682 = vmatpush2.msra.mxu0 0.0
    %3683 = vmatprep.subr.mxu0 0.0
    %3684 = vmatpush2.msra.mxu0 0.0
    %3685 = vmatprep.subr.mxu0 0.0
    %3686 = vmatpush2.msra.mxu0 0.0
    %3687 = vmatprep.subr.mxu0 0.0
    %3688 = vmatpush2.msra.mxu0 0.0
    %3689 = vmatprep.subr.mxu0 0.0
    %3690 = vmatpush2.msra.mxu0 0.0
    %3691 = vmatprep.mubr.f32.mxu0 0.0
    %3692 = vmatmul.mubr.f32.gmra.mxu0 %v3618
    %v3693 = vpop.f32.mrf.mxu0
    %v3694 = vadd.f32 0.0, %v3693
    %v3695 = vpop.f32.mrf.mxu0
    %v3696 = vadd.f32 0.0, %v3695
    %3697 = vdwg.mxu0
    %s3698 = scalar_lea.vmem %s15, 8
    %v3699 = vld [vmem:[%s3698] sm:$0x1f]
    %v3701 = vsel %vm3616, %v3699, 0
    %3703 = vmatprep.subr.mxu0 0.0
    %3704 = vmatpush1.msra.mxu0 0.0
    %3705 = vmatprep.subr.mxu0 0.0
    %3706 = vmatpush1.msra.mxu0 0.0
    %3707 = vmatprep.subr.mxu0 0.0
    %3708 = vmatpush1.msra.mxu0 0.0
    %3709 = vmatprep.subr.mxu0 0.0
    %3710 = vmatpush1.msra.mxu0 0.0
    %3711 = vmatprep.subr.mxu0 0.0
    %3712 = vmatpush1.msra.mxu0 0.0
    %3713 = vmatprep.subr.mxu0 0.0
    %3714 = vmatpush1.msra.mxu0 0.0
    %3715 = vmatprep.subr.mxu0 0.0
    %3716 = vmatpush1.msra.mxu0 0.0
    %3717 = vmatprep.subr.mxu0 0.0
    %3718 = vmatpush1.msra.mxu0 0.0
    %3719 = vmatprep.subr.mxu0 0.0
    %3720 = vmatpush1.msra.mxu0 0.0
    %3721 = vmatprep.subr.mxu0 0.0
    %3722 = vmatpush1.msra.mxu0 0.0
    %3723 = vmatprep.subr.mxu0 0.0
    %3724 = vmatpush1.msra.mxu0 0.0
    %3725 = vmatprep.subr.mxu0 0.0
    %3726 = vmatpush1.msra.mxu0 0.0
    %3727 = vmatprep.subr.mxu0 0.0
    %3728 = vmatpush1.msra.mxu0 0.0
    %3729 = vmatprep.subr.mxu0 0.0
    %3730 = vmatpush1.msra.mxu0 0.0
    %3731 = vmatprep.subr.mxu0 %v3625
    %3732 = vmatpush1.msra.mxu0 %v3622
    %3733 = vmatprep.subr.mxu0 %v3612
    %3734 = vmatpush1.msra.mxu0 %v3611
    %3735 = vmatprep.subr.mxu0 0.0
    %3736 = vmatpush2.msra.mxu0 0.0
    %3737 = vmatprep.subr.mxu0 0.0
    %3738 = vmatpush2.msra.mxu0 0.0
    %3739 = vmatprep.subr.mxu0 0.0
    %3740 = vmatpush2.msra.mxu0 0.0
    %3741 = vmatprep.subr.mxu0 0.0
    %3742 = vmatpush2.msra.mxu0 0.0
    %3743 = vmatprep.subr.mxu0 0.0
    %3744 = vmatpush2.msra.mxu0 0.0
    %3745 = vmatprep.subr.mxu0 0.0
    %3746 = vmatpush2.msra.mxu0 0.0
    %3747 = vmatprep.subr.mxu0 0.0
    %3748 = vmatpush2.msra.mxu0 0.0
    %3749 = vmatprep.subr.mxu0 0.0
    %3750 = vmatpush2.msra.mxu0 0.0
    %3751 = vmatprep.subr.mxu0 0.0
    %3752 = vmatpush2.msra.mxu0 0.0
    %3753 = vmatprep.subr.mxu0 0.0
    %3754 = vmatpush2.msra.mxu0 0.0
    %3755 = vmatprep.subr.mxu0 0.0
    %3756 = vmatpush2.msra.mxu0 0.0
    %3757 = vmatprep.subr.mxu0 0.0
    %3758 = vmatpush2.msra.mxu0 0.0
    %3759 = vmatprep.subr.mxu0 0.0
    %3760 = vmatpush2.msra.mxu0 0.0
    %3761 = vmatprep.subr.mxu0 0.0
    %3762 = vmatpush2.msra.mxu0 0.0
    %3763 = vmatprep.subr.mxu0 0.0
    %3764 = vmatpush2.msra.mxu0 0.0
    %3765 = vmatprep.subr.mxu0 0.0
    %3766 = vmatpush2.msra.mxu0 0.0
    %3767 = vmatprep.mubr.f32.mxu0 0.0
    %3768 = vmatmul.mubr.f32.gmra.mxu0 %v3701
    %v3769 = vpop.f32.mrf.mxu0
    %v3770 = vadd.f32 0.0, %v3769
    %v3771 = vpop.f32.mrf.mxu0
    %v3772 = vadd.f32 0.0, %v3771
    %3773 = vdwg.mxu0
    %v3774 = vmax.f32 %v3694, %v3770
    %v3775 = vmax.f32 %v3696, %v3772
    %v3776 = vld [vmem:[%s16] sm:$0xff]
    %v3777 = vld [vmem:[%s16 + $0x8] sm:$0xff]
    %v3778 = vld [vmem:[%s16 + $0x10] sm:$0xff]
    %v3779 = vld [vmem:[%s16 + $0x18] sm:$0xff]
    %v3780 = vld [vmem:[%s16 + $0x20] sm:$0xff]
    %v3781 = vld [vmem:[%s16 + $0x28] sm:$0xff]
    %v3782 = vld [vmem:[%s16 + $0x30] sm:$0xff]
    %v3783 = vld [vmem:[%s16 + $0x38] sm:$0xff]
    %v3784 = vld [vmem:[%s16 + $0x40] sm:$0xff]
    %v3785 = vld [vmem:[%s16 + $0x48] sm:$0xff]
    %v3786 = vld [vmem:[%s16 + $0x50] sm:$0xff]
    %v3787 = vld [vmem:[%s16 + $0x58] sm:$0xff]
    %v3788 = vld [vmem:[%s16 + $0x60] sm:$0xff]
    %v3789 = vld [vmem:[%s16 + $0x68] sm:$0xff]
    %v3790 = vld [vmem:[%s16 + $0x70] sm:$0xff]
    %v3791 = vld [vmem:[%s16 + $0x78] sm:$0xff]
    %v3792 = vld [vmem:[%s16 + $0x80] sm:$0xff]
    %v3793 = vld [vmem:[%s16 + $0x88] sm:$0xff]
    %v3794 = vld [vmem:[%s16 + $0x90] sm:$0xff]
    %v3795 = vld [vmem:[%s16 + $0x98] sm:$0xff]
    %vm3796 = vcmask 261120
    %v3798 = vsel %vm3796, %v3775, 0
    %3800 = vmatprep.subr.mxu0 0.0
    %3801 = vmatpush1.msra.mxu0 %v3791
    %3802 = vmatprep.subr.mxu0 0.0
    %3803 = vmatpush1.msra.mxu0 %v3790
    %3804 = vmatprep.subr.mxu0 0.0
    %3805 = vmatpush1.msra.mxu0 %v3789
    %3806 = vmatprep.subr.mxu0 0.0
    %3807 = vmatpush1.msra.mxu0 %v3788
    %3808 = vmatprep.subr.mxu0 0.0
    %3809 = vmatpush1.msra.mxu0 %v3787
    %3810 = vmatprep.subr.mxu0 0.0
    %3811 = vmatpush1.msra.mxu0 %v3786
    %3812 = vmatprep.subr.mxu0 0.0
    %3813 = vmatpush1.msra.mxu0 %v3785
    %3814 = vmatprep.subr.mxu0 0.0
    %3815 = vmatpush1.msra.mxu0 %v3784
    %3816 = vmatprep.subr.mxu0 0.0
    %3817 = vmatpush1.msra.mxu0 %v3783
    %3818 = vmatprep.subr.mxu0 0.0
    %3819 = vmatpush1.msra.mxu0 %v3782
    %3820 = vmatprep.subr.mxu0 0.0
    %3821 = vmatpush1.msra.mxu0 %v3781
    %3822 = vmatprep.subr.mxu0 0.0
    %3823 = vmatpush1.msra.mxu0 %v3780
    %3824 = vmatprep.subr.mxu0 0.0
    %3825 = vmatpush1.msra.mxu0 %v3779
    %3826 = vmatprep.subr.mxu0 0.0
    %3827 = vmatpush1.msra.mxu0 %v3778
    %3828 = vmatprep.subr.mxu0 0.0
    %3829 = vmatpush1.msra.mxu0 %v3777
    %3830 = vmatprep.subr.mxu0 0.0
    %3831 = vmatpush1.msra.mxu0 %v3776
    %3832 = vmatprep.subr.mxu0 0.0
    %3833 = vmatpush2.msra.mxu0 0.0
    %3834 = vmatprep.subr.mxu0 0.0
    %3835 = vmatpush2.msra.mxu0 0.0
    %3836 = vmatprep.subr.mxu0 0.0
    %3837 = vmatpush2.msra.mxu0 0.0
    %3838 = vmatprep.subr.mxu0 0.0
    %3839 = vmatpush2.msra.mxu0 0.0
    %3840 = vmatprep.subr.mxu0 0.0
    %3841 = vmatpush2.msra.mxu0 0.0
    %3842 = vmatprep.subr.mxu0 0.0
    %3843 = vmatpush2.msra.mxu0 0.0
    %3844 = vmatprep.subr.mxu0 0.0
    %3845 = vmatpush2.msra.mxu0 0.0
    %3846 = vmatprep.subr.mxu0 0.0
    %3847 = vmatpush2.msra.mxu0 0.0
    %3848 = vmatprep.subr.mxu0 0.0
    %3849 = vmatpush2.msra.mxu0 0.0
    %3850 = vmatprep.subr.mxu0 0.0
    %3851 = vmatpush2.msra.mxu0 0.0
    %3852 = vmatprep.subr.mxu0 0.0
    %3853 = vmatpush2.msra.mxu0 0.0
    %3854 = vmatprep.subr.mxu0 0.0
    %3855 = vmatpush2.msra.mxu0 0.0
    %3856 = vmatprep.subr.mxu0 0.0
    %3857 = vmatpush2.msra.mxu0 %v3795
    %3858 = vmatprep.subr.mxu0 0.0
    %3859 = vmatpush2.msra.mxu0 %v3794
    %3860 = vmatprep.subr.mxu0 0.0
    %3861 = vmatpush2.msra.mxu0 %v3793
    %3862 = vmatprep.subr.mxu0 0.0
    %3863 = vmatpush2.msra.mxu0 %v3792
    %3864 = vmatprep.mubr.f32.mxu0 %v3798
    %3865 = vmatmul.mubr.f32.gmra.mxu0 %v3774
    %v3866 = vpop.f32.mrf.mxu0
    %v3867 = vadd.f32 0.0, %v3866
    %v3868 = vpop.f32.mrf.mxu0
    %3869 = vdwg.mxu0
    %s3870 = scalar_lea.vmem %s16, 160
    %v3871 = vld [vmem:[%s3870] sm:$0xff]
    %v3872 = vld [vmem:[%s3870 + $0x8] sm:$0xff]
    %v3873 = vld [vmem:[%s3870 + $0x10] sm:$0xff]
    %v3874 = vld [vmem:[%s3870 + $0x18] sm:$0xff]
    %v3875 = vld [vmem:[%s3870 + $0x20] sm:$0xff]
    %v3876 = vld [vmem:[%s3870 + $0x28] sm:$0xff]
    %v3877 = vld [vmem:[%s3870 + $0x30] sm:$0xff]
    %v3878 = vld [vmem:[%s3870 + $0x38] sm:$0xff]
    %v3879 = vld [vmem:[%s3870 + $0x40] sm:$0xff]
    %v3880 = vld [vmem:[%s3870 + $0x48] sm:$0xff]
    %v3881 = vld [vmem:[%s3870 + $0x50] sm:$0xff]
    %v3882 = vld [vmem:[%s3870 + $0x58] sm:$0xff]
    %v3883 = vld [vmem:[%s3870 + $0x60] sm:$0xff]
    %v3884 = vld [vmem:[%s3870 + $0x68] sm:$0xff]
    %v3885 = vld [vmem:[%s3870 + $0x70] sm:$0xff]
    %v3886 = vld [vmem:[%s3870 + $0x78] sm:$0xff]
    %v3887 = vld [vmem:[%s3870 + $0x80] sm:$0xff]
    %v3888 = vld [vmem:[%s3870 + $0x88] sm:$0xff]
    %v3889 = vld [vmem:[%s3870 + $0x90] sm:$0xff]
    %v3890 = vld [vmem:[%s3870 + $0x98] sm:$0xff]
    %3891 = vmatprep.subr.mxu0 0.0
    %3892 = vmatpush1.msra.mxu0 %v3886
    %3893 = vmatprep.subr.mxu0 0.0
    %3894 = vmatpush1.msra.mxu0 %v3885
    %3895 = vmatprep.subr.mxu0 0.0
    %3896 = vmatpush1.msra.mxu0 %v3884
    %3897 = vmatprep.subr.mxu0 0.0
    %3898 = vmatpush1.msra.mxu0 %v3883
    %3899 = vmatprep.subr.mxu0 0.0
    %3900 = vmatpush1.msra.mxu0 %v3882
    %3901 = vmatprep.subr.mxu0 0.0
    %3902 = vmatpush1.msra.mxu0 %v3881
    %3903 = vmatprep.subr.mxu0 0.0
    %3904 = vmatpush1.msra.mxu0 %v3880
    %3905 = vmatprep.subr.mxu0 0.0
    %3906 = vmatpush1.msra.mxu0 %v3879
    %3907 = vmatprep.subr.mxu0 0.0
    %3908 = vmatpush1.msra.mxu0 %v3878
    %3909 = vmatprep.subr.mxu0 0.0
    %3910 = vmatpush1.msra.mxu0 %v3877
    %3911 = vmatprep.subr.mxu0 0.0
    %3912 = vmatpush1.msra.mxu0 %v3876
    %3913 = vmatprep.subr.mxu0 0.0
    %3914 = vmatpush1.msra.mxu0 %v3875
    %3915 = vmatprep.subr.mxu0 0.0
    %3916 = vmatpush1.msra.mxu0 %v3874
    %3917 = vmatprep.subr.mxu0 0.0
    %3918 = vmatpush1.msra.mxu0 %v3873
    %3919 = vmatprep.subr.mxu0 0.0
    %3920 = vmatpush1.msra.mxu0 %v3872
    %3921 = vmatprep.subr.mxu0 0.0
    %3922 = vmatpush1.msra.mxu0 %v3871
    %3923 = vmatprep.subr.mxu0 0.0
    %3924 = vmatpush2.msra.mxu0 0.0
    %3925 = vmatprep.subr.mxu0 0.0
    %3926 = vmatpush2.msra.mxu0 0.0
    %3927 = vmatprep.subr.mxu0 0.0
    %3928 = vmatpush2.msra.mxu0 0.0
    %3929 = vmatprep.subr.mxu0 0.0
    %3930 = vmatpush2.msra.mxu0 0.0
    %3931 = vmatprep.subr.mxu0 0.0
    %3932 = vmatpush2.msra.mxu0 0.0
    %3933 = vmatprep.subr.mxu0 0.0
    %3934 = vmatpush2.msra.mxu0 0.0
    %3935 = vmatprep.subr.mxu0 0.0
    %3936 = vmatpush2.msra.mxu0 0.0
    %3937 = vmatprep.subr.mxu0 0.0
    %3938 = vmatpush2.msra.mxu0 0.0
    %3939 = vmatprep.subr.mxu0 0.0
    %3940 = vmatpush2.msra.mxu0 0.0
    %3941 = vmatprep.subr.mxu0 0.0
    %3942 = vmatpush2.msra.mxu0 0.0
    %3943 = vmatprep.subr.mxu0 0.0
    %3944 = vmatpush2.msra.mxu0 0.0
    %3945 = vmatprep.subr.mxu0 0.0
    %3946 = vmatpush2.msra.mxu0 0.0
    %3947 = vmatprep.subr.mxu0 0.0
    %3948 = vmatpush2.msra.mxu0 %v3890
    %3949 = vmatprep.subr.mxu0 0.0
    %3950 = vmatpush2.msra.mxu0 %v3889
    %3951 = vmatprep.subr.mxu0 0.0
    %3952 = vmatpush2.msra.mxu0 %v3888
    %3953 = vmatprep.subr.mxu0 0.0
    %3954 = vmatpush2.msra.mxu0 %v3887
    %3955 = vmatprep.mubr.f32.mxu0 %v3798
    %3956 = vmatmul.mubr.f32.gmra.mxu0 %v3774
    %v3957 = vpop.f32.mrf.mxu0
    %v3958 = vadd.f32 0.0, %v3957
    %v3959 = vpop.f32.mrf.mxu0
    %3960 = vdwg.mxu0
    %v3961 = vmax.f32 %v3867, %v3958
    %vm3962 = vcmask 651264
    %3963 = vst.msk [vmem:[#allocation4] sm:$0x1f] %vm3962, %v3961
    %v3964 = vld [vmem:[#allocation3 + $0xe] sm:$0xff]
    %v3965 = vld [vmem:[#allocation3 + $0x16] sm:$0x3]
    %v3966 = vld [vmem:[%s13] sm:$0xff]
    %v3967 = vld [vmem:[%s13 + $0x8] sm:$0xff]
    %v3968 = vld [vmem:[%s13 + $0x10] sm:$0xff]
    %v3969 = vld [vmem:[%s13 + $0x18] sm:$0xff]
    %v3970 = vld [vmem:[%s13 + $0x20] sm:$0xff]
    %v3971 = vld [vmem:[%s13 + $0x28] sm:$0xff]
    %v3972 = vld [vmem:[%s13 + $0x30] sm:$0xff]
    %v3973 = vld [vmem:[%s13 + $0x38] sm:$0xff]
    %v3974 = vld [vmem:[%s13 + $0x40] sm:$0xff]
    %v3975 = vld [vmem:[%s13 + $0x48] sm:$0xff]
    %v3976 = vld [vmem:[%s13 + $0x50] sm:$0xff]
    %v3977 = vld [vmem:[%s13 + $0x58] sm:$0xff]
    %v3978 = vld [vmem:[%s13 + $0x60] sm:$0xff]
    %v3979 = vld [vmem:[%s13 + $0x68] sm:$0xff]
    %v3980 = vld [vmem:[%s13 + $0x70] sm:$0xff]
    %v3981 = vld [vmem:[%s13 + $0x78] sm:$0xff]
    %v3982 = vld [vmem:[%s13 + $0x80] sm:$0xff]
    %v3983 = vld [vmem:[%s13 + $0x88] sm:$0xff]
    %v3984 = vld [vmem:[%s13 + $0x90] sm:$0xff]
    %v3985 = vld [vmem:[%s13 + $0x98] sm:$0xff]
    %v3986 = vld [vmem:[%s13 + $0xa0] sm:$0xff]
    %v3987 = vld [vmem:[%s13 + $0xa8] sm:$0xff]
    %v3988 = vld [vmem:[%s13 + $0xb0] sm:$0xff]
    %v3989 = vld [vmem:[%s13 + $0xb8] sm:$0xff]
    %v3990 = vld [vmem:[%s13 + $0xc0] sm:$0xff]
    %v3991 = vld [vmem:[%s13 + $0xc8] sm:$0xff]
    %v3992 = vld [vmem:[%s13 + $0xd0] sm:$0xff]
    %v3993 = vld [vmem:[%s13 + $0xd8] sm:$0xff]
    %v3994 = vld [vmem:[#allocation3 + $0xf] sm:$0xff]
    %v3995 = vld [vmem:[#allocation3 + $0x17] sm:$0x3]
    %v3996 = vld [vmem:[%s3046] sm:$0xff]
    %v3997 = vld [vmem:[%s3046 + $0x8] sm:$0xff]
    %v3998 = vld [vmem:[%s3046 + $0x10] sm:$0xff]
    %v3999 = vld [vmem:[%s3046 + $0x18] sm:$0xff]
    %v4000 = vld [vmem:[%s3046 + $0x20] sm:$0xff]
    %v4001 = vld [vmem:[%s3046 + $0x28] sm:$0xff]
    %v4002 = vld [vmem:[%s3046 + $0x30] sm:$0xff]
    %v4003 = vld [vmem:[%s3046 + $0x38] sm:$0xff]
    %v4004 = vld [vmem:[%s3046 + $0x40] sm:$0xff]
    %v4005 = vld [vmem:[%s3046 + $0x48] sm:$0xff]
    %v4006 = vld [vmem:[%s3046 + $0x50] sm:$0xff]
    %v4007 = vld [vmem:[%s3046 + $0x58] sm:$0xff]
    %v4008 = vld [vmem:[%s3046 + $0x60] sm:$0xff]
    %v4009 = vld [vmem:[%s3046 + $0x68] sm:$0xff]
    %v4010 = vld [vmem:[%s3046 + $0x70] sm:$0xff]
    %v4011 = vld [vmem:[%s3046 + $0x78] sm:$0xff]
    %v4012 = vld [vmem:[%s3046 + $0x80] sm:$0xff]
    %v4013 = vld [vmem:[%s3046 + $0x88] sm:$0xff]
    %v4014 = vld [vmem:[%s3046 + $0x90] sm:$0xff]
    %v4015 = vld [vmem:[%s3046 + $0x98] sm:$0xff]
    %v4016 = vld [vmem:[%s3046 + $0xa0] sm:$0xff]
    %v4017 = vld [vmem:[%s3046 + $0xa8] sm:$0xff]
    %v4018 = vld [vmem:[%s3046 + $0xb0] sm:$0xff]
    %v4019 = vld [vmem:[%s3046 + $0xb8] sm:$0xff]
    %v4020 = vld [vmem:[%s3046 + $0xc0] sm:$0xff]
    %v4021 = vld [vmem:[%s3046 + $0xc8] sm:$0xff]
    %v4022 = vld [vmem:[%s3046 + $0xd0] sm:$0xff]
    %v4023 = vld [vmem:[%s3046 + $0xd8] sm:$0xff]
    %v4025 = vsel %vm2554, %v3994, 0
    %v4028 = vsel %vm2554, %v3995, 0
    %4030 = vmatprep.subr.mxu0 0.0
    %4031 = vmatpush1.msra.mxu0 0.0
    %4032 = vmatprep.subr.mxu0 0.0
    %4033 = vmatpush1.msra.mxu0 0.0
    %4034 = vmatprep.subr.mxu0 %v4023
    %4035 = vmatpush1.msra.mxu0 %v4022
    %4036 = vmatprep.subr.mxu0 %v4021
    %4037 = vmatpush1.msra.mxu0 %v4020
    %4038 = vmatprep.subr.mxu0 %v4019
    %4039 = vmatpush1.msra.mxu0 %v4018
    %4040 = vmatprep.subr.mxu0 %v4017
    %4041 = vmatpush1.msra.mxu0 %v4016
    %4042 = vmatprep.subr.mxu0 %v4015
    %4043 = vmatpush1.msra.mxu0 %v4014
    %4044 = vmatprep.subr.mxu0 %v4013
    %4045 = vmatpush1.msra.mxu0 %v4012
    %4046 = vmatprep.subr.mxu0 %v4011
    %4047 = vmatpush1.msra.mxu0 %v4010
    %4048 = vmatprep.subr.mxu0 %v4009
    %4049 = vmatpush1.msra.mxu0 %v4008
    %4050 = vmatprep.subr.mxu0 %v4007
    %4051 = vmatpush1.msra.mxu0 %v4006
    %4052 = vmatprep.subr.mxu0 %v4005
    %4053 = vmatpush1.msra.mxu0 %v4004
    %4054 = vmatprep.subr.mxu0 %v4003
    %4055 = vmatpush1.msra.mxu0 %v4002
    %4056 = vmatprep.subr.mxu0 %v4001
    %4057 = vmatpush1.msra.mxu0 %v4000
    %4058 = vmatprep.subr.mxu0 %v3999
    %4059 = vmatpush1.msra.mxu0 %v3998
    %4060 = vmatprep.subr.mxu0 %v3997
    %4061 = vmatpush1.msra.mxu0 %v3996
    %4062 = vmatprep.subr.mxu0 0.0
    %4063 = vmatpush2.msra.mxu0 0.0
    %4064 = vmatprep.subr.mxu0 0.0
    %4065 = vmatpush2.msra.mxu0 0.0
    %4066 = vmatprep.subr.mxu0 0.0
    %4067 = vmatpush2.msra.mxu0 0.0
    %4068 = vmatprep.subr.mxu0 0.0
    %4069 = vmatpush2.msra.mxu0 0.0
    %4070 = vmatprep.subr.mxu0 0.0
    %4071 = vmatpush2.msra.mxu0 0.0
    %4072 = vmatprep.subr.mxu0 0.0
    %4073 = vmatpush2.msra.mxu0 0.0
    %4074 = vmatprep.subr.mxu0 0.0
    %4075 = vmatpush2.msra.mxu0 0.0
    %4076 = vmatprep.subr.mxu0 0.0
    %4077 = vmatpush2.msra.mxu0 0.0
    %4078 = vmatprep.subr.mxu0 0.0
    %4079 = vmatpush2.msra.mxu0 0.0
    %4080 = vmatprep.subr.mxu0 0.0
    %4081 = vmatpush2.msra.mxu0 0.0
    %4082 = vmatprep.subr.mxu0 0.0
    %4083 = vmatpush2.msra.mxu0 0.0
    %4084 = vmatprep.subr.mxu0 0.0
    %4085 = vmatpush2.msra.mxu0 0.0
    %4086 = vmatprep.subr.mxu0 0.0
    %4087 = vmatpush2.msra.mxu0 0.0
    %4088 = vmatprep.subr.mxu0 0.0
    %4089 = vmatpush2.msra.mxu0 0.0
    %4090 = vmatprep.subr.mxu0 0.0
    %4091 = vmatpush2.msra.mxu0 0.0
    %4092 = vmatprep.subr.mxu0 0.0
    %4093 = vmatpush2.msra.mxu0 0.0
    %4094 = vmatprep.mubr.f32.mxu0 0.0
    %4095 = vmatmul.mubr.f32.gmra.mxu0 %v4025
    %v4096 = vpop.f32.mrf.mxu0
    %v4097 = vadd.f32 0.0, %v4096
    %v4098 = vpop.f32.mrf.mxu0
    %v4099 = vadd.f32 0.0, %v4098
    %4100 = vmatprep.mubr.f32.mxu0 0.0
    %4101 = vmatmul.mubr.f32.gmra.mxu0 %v4028
    %v4102 = vpop.f32.mrf.mxu0
    %v4103 = vadd.f32 0.0, %v4102
    %v4104 = vpop.f32.mrf.mxu0
    %v4105 = vadd.f32 0.0, %v4104
    %4106 = vdwg.mxu0
    %v4108 = vsel %vm2554, %v3964, 0
    %v4111 = vsel %vm2554, %v3965, 0
    %4113 = vmatprep.subr.mxu0 0.0
    %4114 = vmatpush1.msra.mxu0 0.0
    %4115 = vmatprep.subr.mxu0 0.0
    %4116 = vmatpush1.msra.mxu0 0.0
    %4117 = vmatprep.subr.mxu0 %v3993
    %4118 = vmatpush1.msra.mxu0 %v3992
    %4119 = vmatprep.subr.mxu0 %v3991
    %4120 = vmatpush1.msra.mxu0 %v3990
    %4121 = vmatprep.subr.mxu0 %v3989
    %4122 = vmatpush1.msra.mxu0 %v3988
    %4123 = vmatprep.subr.mxu0 %v3987
    %4124 = vmatpush1.msra.mxu0 %v3986
    %4125 = vmatprep.subr.mxu0 %v3985
    %4126 = vmatpush1.msra.mxu0 %v3984
    %4127 = vmatprep.subr.mxu0 %v3983
    %4128 = vmatpush1.msra.mxu0 %v3982
    %4129 = vmatprep.subr.mxu0 %v3981
    %4130 = vmatpush1.msra.mxu0 %v3980
    %4131 = vmatprep.subr.mxu0 %v3979
    %4132 = vmatpush1.msra.mxu0 %v3978
    %4133 = vmatprep.subr.mxu0 %v3977
    %4134 = vmatpush1.msra.mxu0 %v3976
    %4135 = vmatprep.subr.mxu0 %v3975
    %4136 = vmatpush1.msra.mxu0 %v3974
    %4137 = vmatprep.subr.mxu0 %v3973
    %4138 = vmatpush1.msra.mxu0 %v3972
    %4139 = vmatprep.subr.mxu0 %v3971
    %4140 = vmatpush1.msra.mxu0 %v3970
    %4141 = vmatprep.subr.mxu0 %v3969
    %4142 = vmatpush1.msra.mxu0 %v3968
    %4143 = vmatprep.subr.mxu0 %v3967
    %4144 = vmatpush1.msra.mxu0 %v3966
    %4145 = vmatprep.subr.mxu0 0.0
    %4146 = vmatpush2.msra.mxu0 0.0
    %4147 = vmatprep.subr.mxu0 0.0
    %4148 = vmatpush2.msra.mxu0 0.0
    %4149 = vmatprep.subr.mxu0 0.0
    %4150 = vmatpush2.msra.mxu0 0.0
    %4151 = vmatprep.subr.mxu0 0.0
    %4152 = vmatpush2.msra.mxu0 0.0
    %4153 = vmatprep.subr.mxu0 0.0
    %4154 = vmatpush2.msra.mxu0 0.0
    %4155 = vmatprep.subr.mxu0 0.0
    %4156 = vmatpush2.msra.mxu0 0.0
    %4157 = vmatprep.subr.mxu0 0.0
    %4158 = vmatpush2.msra.mxu0 0.0
    %4159 = vmatprep.subr.mxu0 0.0
    %4160 = vmatpush2.msra.mxu0 0.0
    %4161 = vmatprep.subr.mxu0 0.0
    %4162 = vmatpush2.msra.mxu0 0.0
    %4163 = vmatprep.subr.mxu0 0.0
    %4164 = vmatpush2.msra.mxu0 0.0
    %4165 = vmatprep.subr.mxu0 0.0
    %4166 = vmatpush2.msra.mxu0 0.0
    %4167 = vmatprep.subr.mxu0 0.0
    %4168 = vmatpush2.msra.mxu0 0.0
    %4169 = vmatprep.subr.mxu0 0.0
    %4170 = vmatpush2.msra.mxu0 0.0
    %4171 = vmatprep.subr.mxu0 0.0
    %4172 = vmatpush2.msra.mxu0 0.0
    %4173 = vmatprep.subr.mxu0 0.0
    %4174 = vmatpush2.msra.mxu0 0.0
    %4175 = vmatprep.subr.mxu0 0.0
    %4176 = vmatpush2.msra.mxu0 0.0
    %4177 = vmatprep.mubr.f32.mxu0 0.0
    %4178 = vmatmul.mubr.f32.gmra.mxu0 %v4108
    %v4179 = vpop.f32.mrf.mxu0
    %v4180 = vadd.f32 %v4097, %v4179
    %v4181 = vpop.f32.mrf.mxu0
    %v4182 = vadd.f32 %v4099, %v4181
    %4183 = vmatprep.mubr.f32.mxu0 0.0
    %4184 = vmatmul.mubr.f32.gmra.mxu0 %v4111
    %v4185 = vpop.f32.mrf.mxu0
    %v4186 = vadd.f32 %v4103, %v4185
    %v4187 = vpop.f32.mrf.mxu0
    %v4188 = vadd.f32 %v4105, %v4187
    %4189 = vdwg.mxu0
    %v4190 = vld [vmem:[#allocation3 + $0x10] sm:$0xff]
    %v4191 = vld [vmem:[#allocation3 + $0x18] sm:$0x3]
    %v4192 = vld [vmem:[%s3243] sm:$0xff]
    %v4193 = vld [vmem:[%s3243 + $0x8] sm:$0xff]
    %v4194 = vld [vmem:[%s3243 + $0x10] sm:$0xff]
    %v4195 = vld [vmem:[%s3243 + $0x18] sm:$0xff]
    %v4196 = vld [vmem:[%s3243 + $0x20] sm:$0xff]
    %v4197 = vld [vmem:[%s3243 + $0x28] sm:$0xff]
    %v4198 = vld [vmem:[%s3243 + $0x30] sm:$0xff]
    %v4199 = vld [vmem:[%s3243 + $0x38] sm:$0xff]
    %v4200 = vld [vmem:[%s3243 + $0x40] sm:$0xff]
    %v4201 = vld [vmem:[%s3243 + $0x48] sm:$0xff]
    %v4202 = vld [vmem:[%s3243 + $0x50] sm:$0xff]
    %v4203 = vld [vmem:[%s3243 + $0x58] sm:$0xff]
    %v4204 = vld [vmem:[%s3243 + $0x60] sm:$0xff]
    %v4205 = vld [vmem:[%s3243 + $0x68] sm:$0xff]
    %v4206 = vld [vmem:[%s3243 + $0x70] sm:$0xff]
    %v4207 = vld [vmem:[%s3243 + $0x78] sm:$0xff]
    %v4208 = vld [vmem:[%s3243 + $0x80] sm:$0xff]
    %v4209 = vld [vmem:[%s3243 + $0x88] sm:$0xff]
    %v4210 = vld [vmem:[%s3243 + $0x90] sm:$0xff]
    %v4211 = vld [vmem:[%s3243 + $0x98] sm:$0xff]
    %v4212 = vld [vmem:[%s3243 + $0xa0] sm:$0xff]
    %v4213 = vld [vmem:[%s3243 + $0xa8] sm:$0xff]
    %v4214 = vld [vmem:[%s3243 + $0xb0] sm:$0xff]
    %v4215 = vld [vmem:[%s3243 + $0xb8] sm:$0xff]
    %v4216 = vld [vmem:[%s3243 + $0xc0] sm:$0xff]
    %v4217 = vld [vmem:[%s3243 + $0xc8] sm:$0xff]
    %v4218 = vld [vmem:[%s3243 + $0xd0] sm:$0xff]
    %v4219 = vld [vmem:[%s3243 + $0xd8] sm:$0xff]
    %v4221 = vsel %vm2554, %v4190, 0
    %v4224 = vsel %vm2554, %v4191, 0
    %4226 = vmatprep.subr.mxu0 0.0
    %4227 = vmatpush1.msra.mxu0 0.0
    %4228 = vmatprep.subr.mxu0 0.0
    %4229 = vmatpush1.msra.mxu0 0.0
    %4230 = vmatprep.subr.mxu0 %v4219
    %4231 = vmatpush1.msra.mxu0 %v4218
    %4232 = vmatprep.subr.mxu0 %v4217
    %4233 = vmatpush1.msra.mxu0 %v4216
    %4234 = vmatprep.subr.mxu0 %v4215
    %4235 = vmatpush1.msra.mxu0 %v4214
    %4236 = vmatprep.subr.mxu0 %v4213
    %4237 = vmatpush1.msra.mxu0 %v4212
    %4238 = vmatprep.subr.mxu0 %v4211
    %4239 = vmatpush1.msra.mxu0 %v4210
    %4240 = vmatprep.subr.mxu0 %v4209
    %4241 = vmatpush1.msra.mxu0 %v4208
    %4242 = vmatprep.subr.mxu0 %v4207
    %4243 = vmatpush1.msra.mxu0 %v4206
    %4244 = vmatprep.subr.mxu0 %v4205
    %4245 = vmatpush1.msra.mxu0 %v4204
    %4246 = vmatprep.subr.mxu0 %v4203
    %4247 = vmatpush1.msra.mxu0 %v4202
    %4248 = vmatprep.subr.mxu0 %v4201
    %4249 = vmatpush1.msra.mxu0 %v4200
    %4250 = vmatprep.subr.mxu0 %v4199
    %4251 = vmatpush1.msra.mxu0 %v4198
    %4252 = vmatprep.subr.mxu0 %v4197
    %4253 = vmatpush1.msra.mxu0 %v4196
    %4254 = vmatprep.subr.mxu0 %v4195
    %4255 = vmatpush1.msra.mxu0 %v4194
    %4256 = vmatprep.subr.mxu0 %v4193
    %4257 = vmatpush1.msra.mxu0 %v4192
    %4258 = vmatprep.subr.mxu0 0.0
    %4259 = vmatpush2.msra.mxu0 0.0
    %4260 = vmatprep.subr.mxu0 0.0
    %4261 = vmatpush2.msra.mxu0 0.0
    %4262 = vmatprep.subr.mxu0 0.0
    %4263 = vmatpush2.msra.mxu0 0.0
    %4264 = vmatprep.subr.mxu0 0.0
    %4265 = vmatpush2.msra.mxu0 0.0
    %4266 = vmatprep.subr.mxu0 0.0
    %4267 = vmatpush2.msra.mxu0 0.0
    %4268 = vmatprep.subr.mxu0 0.0
    %4269 = vmatpush2.msra.mxu0 0.0
    %4270 = vmatprep.subr.mxu0 0.0
    %4271 = vmatpush2.msra.mxu0 0.0
    %4272 = vmatprep.subr.mxu0 0.0
    %4273 = vmatpush2.msra.mxu0 0.0
    %4274 = vmatprep.subr.mxu0 0.0
    %4275 = vmatpush2.msra.mxu0 0.0
    %4276 = vmatprep.subr.mxu0 0.0
    %4277 = vmatpush2.msra.mxu0 0.0
    %4278 = vmatprep.subr.mxu0 0.0
    %4279 = vmatpush2.msra.mxu0 0.0
    %4280 = vmatprep.subr.mxu0 0.0
    %4281 = vmatpush2.msra.mxu0 0.0
    %4282 = vmatprep.subr.mxu0 0.0
    %4283 = vmatpush2.msra.mxu0 0.0
    %4284 = vmatprep.subr.mxu0 0.0
    %4285 = vmatpush2.msra.mxu0 0.0
    %4286 = vmatprep.subr.mxu0 0.0
    %4287 = vmatpush2.msra.mxu0 0.0
    %4288 = vmatprep.subr.mxu0 0.0
    %4289 = vmatpush2.msra.mxu0 0.0
    %4290 = vmatprep.mubr.f32.mxu0 0.0
    %4291 = vmatmul.mubr.f32.gmra.mxu0 %v4221
    %v4292 = vpop.f32.mrf.mxu0
    %v4293 = vadd.f32 0.0, %v4292
    %v4294 = vpop.f32.mrf.mxu0
    %v4295 = vadd.f32 0.0, %v4294
    %4296 = vmatprep.mubr.f32.mxu0 0.0
    %4297 = vmatmul.mubr.f32.gmra.mxu0 %v4224
    %v4298 = vpop.f32.mrf.mxu0
    %v4299 = vadd.f32 0.0, %v4298
    %v4300 = vpop.f32.mrf.mxu0
    %v4301 = vadd.f32 0.0, %v4300
    %4302 = vdwg.mxu0
    %v4303 = vadd.f32 %v4180, %v4293
    %v4304 = vadd.f32 %v4182, %v4295
    %v4305 = vadd.f32 %v4186, %v4299
    %v4306 = vadd.f32 %v4188, %v4301
    %v4307 = vld [vmem:[#allocation3 + $0x11] sm:$0xff]
    %v4308 = vld [vmem:[#allocation3 + $0x19] sm:$0x3]
    %v4309 = vld [vmem:[%s3361] sm:$0xff]
    %v4310 = vld [vmem:[%s3361 + $0x8] sm:$0xff]
    %v4311 = vld [vmem:[%s3361 + $0x10] sm:$0xff]
    %v4312 = vld [vmem:[%s3361 + $0x18] sm:$0xff]
    %v4313 = vld [vmem:[%s3361 + $0x20] sm:$0xff]
    %v4314 = vld [vmem:[%s3361 + $0x28] sm:$0xff]
    %v4315 = vld [vmem:[%s3361 + $0x30] sm:$0xff]
    %v4316 = vld [vmem:[%s3361 + $0x38] sm:$0xff]
    %v4317 = vld [vmem:[%s3361 + $0x40] sm:$0xff]
    %v4318 = vld [vmem:[%s3361 + $0x48] sm:$0xff]
    %v4319 = vld [vmem:[%s3361 + $0x50] sm:$0xff]
    %v4320 = vld [vmem:[%s3361 + $0x58] sm:$0xff]
    %v4321 = vld [vmem:[%s3361 + $0x60] sm:$0xff]
    %v4322 = vld [vmem:[%s3361 + $0x68] sm:$0xff]
    %v4323 = vld [vmem:[%s3361 + $0x70] sm:$0xff]
    %v4324 = vld [vmem:[%s3361 + $0x78] sm:$0xff]
    %v4325 = vld [vmem:[%s3361 + $0x80] sm:$0xff]
    %v4326 = vld [vmem:[%s3361 + $0x88] sm:$0xff]
    %v4327 = vld [vmem:[%s3361 + $0x90] sm:$0xff]
    %v4328 = vld [vmem:[%s3361 + $0x98] sm:$0xff]
    %v4329 = vld [vmem:[%s3361 + $0xa0] sm:$0xff]
    %v4330 = vld [vmem:[%s3361 + $0xa8] sm:$0xff]
    %v4331 = vld [vmem:[%s3361 + $0xb0] sm:$0xff]
    %v4332 = vld [vmem:[%s3361 + $0xb8] sm:$0xff]
    %v4333 = vld [vmem:[%s3361 + $0xc0] sm:$0xff]
    %v4334 = vld [vmem:[%s3361 + $0xc8] sm:$0xff]
    %v4335 = vld [vmem:[%s3361 + $0xd0] sm:$0xff]
    %v4336 = vld [vmem:[%s3361 + $0xd8] sm:$0xff]
    %v4338 = vsel %vm2554, %v4307, 0
    %v4341 = vsel %vm2554, %v4308, 0
    %4343 = vmatprep.subr.mxu0 0.0
    %4344 = vmatpush1.msra.mxu0 0.0
    %4345 = vmatprep.subr.mxu0 0.0
    %4346 = vmatpush1.msra.mxu0 0.0
    %4347 = vmatprep.subr.mxu0 %v4336
    %4348 = vmatpush1.msra.mxu0 %v4335
    %4349 = vmatprep.subr.mxu0 %v4334
    %4350 = vmatpush1.msra.mxu0 %v4333
    %4351 = vmatprep.subr.mxu0 %v4332
    %4352 = vmatpush1.msra.mxu0 %v4331
    %4353 = vmatprep.subr.mxu0 %v4330
    %4354 = vmatpush1.msra.mxu0 %v4329
    %4355 = vmatprep.subr.mxu0 %v4328
    %4356 = vmatpush1.msra.mxu0 %v4327
    %4357 = vmatprep.subr.mxu0 %v4326
    %4358 = vmatpush1.msra.mxu0 %v4325
    %4359 = vmatprep.subr.mxu0 %v4324
    %4360 = vmatpush1.msra.mxu0 %v4323
    %4361 = vmatprep.subr.mxu0 %v4322
    %4362 = vmatpush1.msra.mxu0 %v4321
    %4363 = vmatprep.subr.mxu0 %v4320
    %4364 = vmatpush1.msra.mxu0 %v4319
    %4365 = vmatprep.subr.mxu0 %v4318
    %4366 = vmatpush1.msra.mxu0 %v4317
    %4367 = vmatprep.subr.mxu0 %v4316
    %4368 = vmatpush1.msra.mxu0 %v4315
    %4369 = vmatprep.subr.mxu0 %v4314
    %4370 = vmatpush1.msra.mxu0 %v4313
    %4371 = vmatprep.subr.mxu0 %v4312
    %4372 = vmatpush1.msra.mxu0 %v4311
    %4373 = vmatprep.subr.mxu0 %v4310
    %4374 = vmatpush1.msra.mxu0 %v4309
    %4375 = vmatprep.subr.mxu0 0.0
    %4376 = vmatpush2.msra.mxu0 0.0
    %4377 = vmatprep.subr.mxu0 0.0
    %4378 = vmatpush2.msra.mxu0 0.0
    %4379 = vmatprep.subr.mxu0 0.0
    %4380 = vmatpush2.msra.mxu0 0.0
    %4381 = vmatprep.subr.mxu0 0.0
    %4382 = vmatpush2.msra.mxu0 0.0
    %4383 = vmatprep.subr.mxu0 0.0
    %4384 = vmatpush2.msra.mxu0 0.0
    %4385 = vmatprep.subr.mxu0 0.0
    %4386 = vmatpush2.msra.mxu0 0.0
    %4387 = vmatprep.subr.mxu0 0.0
    %4388 = vmatpush2.msra.mxu0 0.0
    %4389 = vmatprep.subr.mxu0 0.0
    %4390 = vmatpush2.msra.mxu0 0.0
    %4391 = vmatprep.subr.mxu0 0.0
    %4392 = vmatpush2.msra.mxu0 0.0
    %4393 = vmatprep.subr.mxu0 0.0
    %4394 = vmatpush2.msra.mxu0 0.0
    %4395 = vmatprep.subr.mxu0 0.0
    %4396 = vmatpush2.msra.mxu0 0.0
    %4397 = vmatprep.subr.mxu0 0.0
    %4398 = vmatpush2.msra.mxu0 0.0
    %4399 = vmatprep.subr.mxu0 0.0
    %4400 = vmatpush2.msra.mxu0 0.0
    %4401 = vmatprep.subr.mxu0 0.0
    %4402 = vmatpush2.msra.mxu0 0.0
    %4403 = vmatprep.subr.mxu0 0.0
    %4404 = vmatpush2.msra.mxu0 0.0
    %4405 = vmatprep.subr.mxu0 0.0
    %4406 = vmatpush2.msra.mxu0 0.0
    %4407 = vmatprep.mubr.f32.mxu0 0.0
    %4408 = vmatmul.mubr.f32.gmra.mxu0 %v4338
    %v4409 = vpop.f32.mrf.mxu0
    %v4410 = vadd.f32 0.0, %v4409
    %v4411 = vpop.f32.mrf.mxu0
    %v4412 = vadd.f32 0.0, %v4411
    %4413 = vmatprep.mubr.f32.mxu0 0.0
    %4414 = vmatmul.mubr.f32.gmra.mxu0 %v4341
    %v4415 = vpop.f32.mrf.mxu0
    %v4416 = vadd.f32 0.0, %v4415
    %v4417 = vpop.f32.mrf.mxu0
    %v4418 = vadd.f32 0.0, %v4417
    %4419 = vdwg.mxu0
    %v4420 = vadd.f32 %v4303, %v4410
    %v4421 = vadd.f32 %v4304, %v4412
    %v4422 = vadd.f32 %v4305, %v4416
    %v4423 = vadd.f32 %v4306, %v4418
    %v4424 = vld [vmem:[#allocation3 + $0x12] sm:$0xff]
    %v4425 = vld [vmem:[#allocation3 + $0x1a] sm:$0x3]
    %v4426 = vld [vmem:[%s3479] sm:$0xff]
    %v4427 = vld [vmem:[%s3479 + $0x8] sm:$0xff]
    %v4428 = vld [vmem:[%s3479 + $0x10] sm:$0xff]
    %v4429 = vld [vmem:[%s3479 + $0x18] sm:$0xff]
    %v4430 = vld [vmem:[%s3479 + $0x20] sm:$0xff]
    %v4431 = vld [vmem:[%s3479 + $0x28] sm:$0xff]
    %v4432 = vld [vmem:[%s3479 + $0x30] sm:$0xff]
    %v4433 = vld [vmem:[%s3479 + $0x38] sm:$0xff]
    %v4434 = vld [vmem:[%s3479 + $0x40] sm:$0xff]
    %v4435 = vld [vmem:[%s3479 + $0x48] sm:$0xff]
    %v4436 = vld [vmem:[%s3479 + $0x50] sm:$0xff]
    %v4437 = vld [vmem:[%s3479 + $0x58] sm:$0xff]
    %v4438 = vld [vmem:[%s3479 + $0x60] sm:$0xff]
    %v4439 = vld [vmem:[%s3479 + $0x68] sm:$0xff]
    %v4440 = vld [vmem:[%s3479 + $0x70] sm:$0xff]
    %v4441 = vld [vmem:[%s3479 + $0x78] sm:$0xff]
    %v4442 = vld [vmem:[%s3479 + $0x80] sm:$0xff]
    %v4443 = vld [vmem:[%s3479 + $0x88] sm:$0xff]
    %v4444 = vld [vmem:[%s3479 + $0x90] sm:$0xff]
    %v4445 = vld [vmem:[%s3479 + $0x98] sm:$0xff]
    %v4446 = vld [vmem:[%s3479 + $0xa0] sm:$0xff]
    %v4447 = vld [vmem:[%s3479 + $0xa8] sm:$0xff]
    %v4448 = vld [vmem:[%s3479 + $0xb0] sm:$0xff]
    %v4449 = vld [vmem:[%s3479 + $0xb8] sm:$0xff]
    %v4450 = vld [vmem:[%s3479 + $0xc0] sm:$0xff]
    %v4451 = vld [vmem:[%s3479 + $0xc8] sm:$0xff]
    %v4452 = vld [vmem:[%s3479 + $0xd0] sm:$0xff]
    %v4453 = vld [vmem:[%s3479 + $0xd8] sm:$0xff]
    %v4455 = vsel %vm2554, %v4424, 0
    %v4458 = vsel %vm2554, %v4425, 0
    %4460 = vmatprep.subr.mxu0 0.0
    %4461 = vmatpush1.msra.mxu0 0.0
    %4462 = vmatprep.subr.mxu0 0.0
    %4463 = vmatpush1.msra.mxu0 0.0
    %4464 = vmatprep.subr.mxu0 %v4453
    %4465 = vmatpush1.msra.mxu0 %v4452
    %4466 = vmatprep.subr.mxu0 %v4451
    %4467 = vmatpush1.msra.mxu0 %v4450
    %4468 = vmatprep.subr.mxu0 %v4449
    %4469 = vmatpush1.msra.mxu0 %v4448
    %4470 = vmatprep.subr.mxu0 %v4447
    %4471 = vmatpush1.msra.mxu0 %v4446
    %4472 = vmatprep.subr.mxu0 %v4445
    %4473 = vmatpush1.msra.mxu0 %v4444
    %4474 = vmatprep.subr.mxu0 %v4443
    %4475 = vmatpush1.msra.mxu0 %v4442
    %4476 = vmatprep.subr.mxu0 %v4441
    %4477 = vmatpush1.msra.mxu0 %v4440
    %4478 = vmatprep.subr.mxu0 %v4439
    %4479 = vmatpush1.msra.mxu0 %v4438
    %4480 = vmatprep.subr.mxu0 %v4437
    %4481 = vmatpush1.msra.mxu0 %v4436
    %4482 = vmatprep.subr.mxu0 %v4435
    %4483 = vmatpush1.msra.mxu0 %v4434
    %4484 = vmatprep.subr.mxu0 %v4433
    %4485 = vmatpush1.msra.mxu0 %v4432
    %4486 = vmatprep.subr.mxu0 %v4431
    %4487 = vmatpush1.msra.mxu0 %v4430
    %4488 = vmatprep.subr.mxu0 %v4429
    %4489 = vmatpush1.msra.mxu0 %v4428
    %4490 = vmatprep.subr.mxu0 %v4427
    %4491 = vmatpush1.msra.mxu0 %v4426
    %4492 = vmatprep.subr.mxu0 0.0
    %4493 = vmatpush2.msra.mxu0 0.0
    %4494 = vmatprep.subr.mxu0 0.0
    %4495 = vmatpush2.msra.mxu0 0.0
    %4496 = vmatprep.subr.mxu0 0.0
    %4497 = vmatpush2.msra.mxu0 0.0
    %4498 = vmatprep.subr.mxu0 0.0
    %4499 = vmatpush2.msra.mxu0 0.0
    %4500 = vmatprep.subr.mxu0 0.0
    %4501 = vmatpush2.msra.mxu0 0.0
    %4502 = vmatprep.subr.mxu0 0.0
    %4503 = vmatpush2.msra.mxu0 0.0
    %4504 = vmatprep.subr.mxu0 0.0
    %4505 = vmatpush2.msra.mxu0 0.0
    %4506 = vmatprep.subr.mxu0 0.0
    %4507 = vmatpush2.msra.mxu0 0.0
    %4508 = vmatprep.subr.mxu0 0.0
    %4509 = vmatpush2.msra.mxu0 0.0
    %4510 = vmatprep.subr.mxu0 0.0
    %4511 = vmatpush2.msra.mxu0 0.0
    %4512 = vmatprep.subr.mxu0 0.0
    %4513 = vmatpush2.msra.mxu0 0.0
    %4514 = vmatprep.subr.mxu0 0.0
    %4515 = vmatpush2.msra.mxu0 0.0
    %4516 = vmatprep.subr.mxu0 0.0
    %4517 = vmatpush2.msra.mxu0 0.0
    %4518 = vmatprep.subr.mxu0 0.0
    %4519 = vmatpush2.msra.mxu0 0.0
    %4520 = vmatprep.subr.mxu0 0.0
    %4521 = vmatpush2.msra.mxu0 0.0
    %4522 = vmatprep.subr.mxu0 0.0
    %4523 = vmatpush2.msra.mxu0 0.0
    %4524 = vmatprep.mubr.f32.mxu0 0.0
    %4525 = vmatmul.mubr.f32.gmra.mxu0 %v4455
    %v4526 = vpop.f32.mrf.mxu0
    %v4527 = vadd.f32 0.0, %v4526
    %v4528 = vpop.f32.mrf.mxu0
    %v4529 = vadd.f32 0.0, %v4528
    %4530 = vmatprep.mubr.f32.mxu0 0.0
    %4531 = vmatmul.mubr.f32.gmra.mxu0 %v4458
    %v4532 = vpop.f32.mrf.mxu0
    %v4533 = vadd.f32 0.0, %v4532
    %v4534 = vpop.f32.mrf.mxu0
    %v4535 = vadd.f32 0.0, %v4534
    %4536 = vdwg.mxu0
    %v4537 = vadd.f32 %v4420, %v4527
    %v4538 = vadd.f32 %v4421, %v4529
    %v4539 = vadd.f32 %v4422, %v4533
    %v4540 = vadd.f32 %v4423, %v4535
    %v4541 = vld [vmem:[%s14] sm:$0x3]
    %v4543 = vlaneseq
    %v4544 = vshrl.u32 %v4543, 7
    %v4545 = vsub.s32 0, %v4544
    %v4546 = vrot.slane %v4541, %v4545
    %v4547 = vlaneseq
    %v4548 = vshrl.u32 %v4547, 7
    %v4549 = vsub.s32 1, %v4548
    %v4550 = vrot.slane %v4541, %v4549
    %v4553 = vadd.f32 %v4537, %v4546
    %v4554 = vadd.f32 %v4538, %v4550
    %v4555 = vadd.f32 %v4539, %v4546
    %v4556 = vadd.f32 %v4540, %v4550
    %v4557 = vmax.f32 %v4553, 0.0
    %v4558 = vmax.f32 %v4554, 0.0
    %v4559 = vmax.f32 %v4555, 0.0
    %v4560 = vmax.f32 %v4556, 0.0
    %v4561 = vld [vmem:[%s15] sm:$0x1f]
    %v4563 = vsel %vm3616, %v4561, 0
    %v4566 = vsel %vm3620, %v4559, 0
    %v4569 = vsel %vm3620, %v4560, 0
    %4571 = vmatprep.subr.mxu0 0.0
    %4572 = vmatpush1.msra.mxu0 0.0
    %4573 = vmatprep.subr.mxu0 0.0
    %4574 = vmatpush1.msra.mxu0 0.0
    %4575 = vmatprep.subr.mxu0 0.0
    %4576 = vmatpush1.msra.mxu0 0.0
    %4577 = vmatprep.subr.mxu0 0.0
    %4578 = vmatpush1.msra.mxu0 0.0
    %4579 = vmatprep.subr.mxu0 0.0
    %4580 = vmatpush1.msra.mxu0 0.0
    %4581 = vmatprep.subr.mxu0 0.0
    %4582 = vmatpush1.msra.mxu0 0.0
    %4583 = vmatprep.subr.mxu0 0.0
    %4584 = vmatpush1.msra.mxu0 0.0
    %4585 = vmatprep.subr.mxu0 0.0
    %4586 = vmatpush1.msra.mxu0 0.0
    %4587 = vmatprep.subr.mxu0 0.0
    %4588 = vmatpush1.msra.mxu0 0.0
    %4589 = vmatprep.subr.mxu0 0.0
    %4590 = vmatpush1.msra.mxu0 0.0
    %4591 = vmatprep.subr.mxu0 0.0
    %4592 = vmatpush1.msra.mxu0 0.0
    %4593 = vmatprep.subr.mxu0 0.0
    %4594 = vmatpush1.msra.mxu0 0.0
    %4595 = vmatprep.subr.mxu0 0.0
    %4596 = vmatpush1.msra.mxu0 0.0
    %4597 = vmatprep.subr.mxu0 0.0
    %4598 = vmatpush1.msra.mxu0 0.0
    %4599 = vmatprep.subr.mxu0 %v4569
    %4600 = vmatpush1.msra.mxu0 %v4566
    %4601 = vmatprep.subr.mxu0 %v4558
    %4602 = vmatpush1.msra.mxu0 %v4557
    %4603 = vmatprep.subr.mxu0 0.0
    %4604 = vmatpush2.msra.mxu0 0.0
    %4605 = vmatprep.subr.mxu0 0.0
    %4606 = vmatpush2.msra.mxu0 0.0
    %4607 = vmatprep.subr.mxu0 0.0
    %4608 = vmatpush2.msra.mxu0 0.0
    %4609 = vmatprep.subr.mxu0 0.0
    %4610 = vmatpush2.msra.mxu0 0.0
    %4611 = vmatprep.subr.mxu0 0.0
    %4612 = vmatpush2.msra.mxu0 0.0
    %4613 = vmatprep.subr.mxu0 0.0
    %4614 = vmatpush2.msra.mxu0 0.0
    %4615 = vmatprep.subr.mxu0 0.0
    %4616 = vmatpush2.msra.mxu0 0.0
    %4617 = vmatprep.subr.mxu0 0.0
    %4618 = vmatpush2.msra.mxu0 0.0
    %4619 = vmatprep.subr.mxu0 0.0
    %4620 = vmatpush2.msra.mxu0 0.0
    %4621 = vmatprep.subr.mxu0 0.0
    %4622 = vmatpush2.msra.mxu0 0.0
    %4623 = vmatprep.subr.mxu0 0.0
    %4624 = vmatpush2.msra.mxu0 0.0
    %4625 = vmatprep.subr.mxu0 0.0
    %4626 = vmatpush2.msra.mxu0 0.0
    %4627 = vmatprep.subr.mxu0 0.0
    %4628 = vmatpush2.msra.mxu0 0.0
    %4629 = vmatprep.subr.mxu0 0.0
    %4630 = vmatpush2.msra.mxu0 0.0
    %4631 = vmatprep.subr.mxu0 0.0
    %4632 = vmatpush2.msra.mxu0 0.0
    %4633 = vmatprep.subr.mxu0 0.0
    %4634 = vmatpush2.msra.mxu0 0.0
    %4635 = vmatprep.mubr.f32.mxu0 0.0
    %4636 = vmatmul.mubr.f32.gmra.mxu0 %v4563
    %v4637 = vpop.f32.mrf.mxu0
    %v4638 = vadd.f32 0.0, %v4637
    %v4639 = vpop.f32.mrf.mxu0
    %v4640 = vadd.f32 0.0, %v4639
    %4641 = vdwg.mxu0
    %v4642 = vld [vmem:[%s3698] sm:$0x1f]
    %v4644 = vsel %vm3616, %v4642, 0
    %4646 = vmatprep.subr.mxu0 0.0
    %4647 = vmatpush1.msra.mxu0 0.0
    %4648 = vmatprep.subr.mxu0 0.0
    %4649 = vmatpush1.msra.mxu0 0.0
    %4650 = vmatprep.subr.mxu0 0.0
    %4651 = vmatpush1.msra.mxu0 0.0
    %4652 = vmatprep.subr.mxu0 0.0
    %4653 = vmatpush1.msra.mxu0 0.0
    %4654 = vmatprep.subr.mxu0 0.0
    %4655 = vmatpush1.msra.mxu0 0.0
    %4656 = vmatprep.subr.mxu0 0.0
    %4657 = vmatpush1.msra.mxu0 0.0
    %4658 = vmatprep.subr.mxu0 0.0
    %4659 = vmatpush1.msra.mxu0 0.0
    %4660 = vmatprep.subr.mxu0 0.0
    %4661 = vmatpush1.msra.mxu0 0.0
    %4662 = vmatprep.subr.mxu0 0.0
    %4663 = vmatpush1.msra.mxu0 0.0
    %4664 = vmatprep.subr.mxu0 0.0
    %4665 = vmatpush1.msra.mxu0 0.0
    %4666 = vmatprep.subr.mxu0 0.0
    %4667 = vmatpush1.msra.mxu0 0.0
    %4668 = vmatprep.subr.mxu0 0.0
    %4669 = vmatpush1.msra.mxu0 0.0
    %4670 = vmatprep.subr.mxu0 0.0
    %4671 = vmatpush1.msra.mxu0 0.0
    %4672 = vmatprep.subr.mxu0 0.0
    %4673 = vmatpush1.msra.mxu0 0.0
    %4674 = vmatprep.subr.mxu0 %v4569
    %4675 = vmatpush1.msra.mxu0 %v4566
    %4676 = vmatprep.subr.mxu0 %v4558
    %4677 = vmatpush1.msra.mxu0 %v4557
    %4678 = vmatprep.subr.mxu0 0.0
    %4679 = vmatpush2.msra.mxu0 0.0
    %4680 = vmatprep.subr.mxu0 0.0
    %4681 = vmatpush2.msra.mxu0 0.0
    %4682 = vmatprep.subr.mxu0 0.0
    %4683 = vmatpush2.msra.mxu0 0.0
    %4684 = vmatprep.subr.mxu0 0.0
    %4685 = vmatpush2.msra.mxu0 0.0
    %4686 = vmatprep.subr.mxu0 0.0
    %4687 = vmatpush2.msra.mxu0 0.0
    %4688 = vmatprep.subr.mxu0 0.0
    %4689 = vmatpush2.msra.mxu0 0.0
    %4690 = vmatprep.subr.mxu0 0.0
    %4691 = vmatpush2.msra.mxu0 0.0
    %4692 = vmatprep.subr.mxu0 0.0
    %4693 = vmatpush2.msra.mxu0 0.0
    %4694 = vmatprep.subr.mxu0 0.0
    %4695 = vmatpush2.msra.mxu0 0.0
    %4696 = vmatprep.subr.mxu0 0.0
    %4697 = vmatpush2.msra.mxu0 0.0
    %4698 = vmatprep.subr.mxu0 0.0
    %4699 = vmatpush2.msra.mxu0 0.0
    %4700 = vmatprep.subr.mxu0 0.0
    %4701 = vmatpush2.msra.mxu0 0.0
    %4702 = vmatprep.subr.mxu0 0.0
    %4703 = vmatpush2.msra.mxu0 0.0
    %4704 = vmatprep.subr.mxu0 0.0
    %4705 = vmatpush2.msra.mxu0 0.0
    %4706 = vmatprep.subr.mxu0 0.0
    %4707 = vmatpush2.msra.mxu0 0.0
    %4708 = vmatprep.subr.mxu0 0.0
    %4709 = vmatpush2.msra.mxu0 0.0
    %4710 = vmatprep.mubr.f32.mxu0 0.0
    %4711 = vmatmul.mubr.f32.gmra.mxu0 %v4644
    %v4712 = vpop.f32.mrf.mxu0
    %v4713 = vadd.f32 0.0, %v4712
    %v4714 = vpop.f32.mrf.mxu0
    %v4715 = vadd.f32 0.0, %v4714
    %4716 = vdwg.mxu0
    %v4717 = vmax.f32 %v4638, %v4713
    %v4718 = vmax.f32 %v4640, %v4715
    %v4719 = vld [vmem:[%s16] sm:$0xff]
    %v4720 = vld [vmem:[%s16 + $0x8] sm:$0xff]
    %v4721 = vld [vmem:[%s16 + $0x10] sm:$0xff]
    %v4722 = vld [vmem:[%s16 + $0x18] sm:$0xff]
    %v4723 = vld [vmem:[%s16 + $0x20] sm:$0xff]
    %v4724 = vld [vmem:[%s16 + $0x28] sm:$0xff]
    %v4725 = vld [vmem:[%s16 + $0x30] sm:$0xff]
    %v4726 = vld [vmem:[%s16 + $0x38] sm:$0xff]
    %v4727 = vld [vmem:[%s16 + $0x40] sm:$0xff]
    %v4728 = vld [vmem:[%s16 + $0x48] sm:$0xff]
    %v4729 = vld [vmem:[%s16 + $0x50] sm:$0xff]
    %v4730 = vld [vmem:[%s16 + $0x58] sm:$0xff]
    %v4731 = vld [vmem:[%s16 + $0x60] sm:$0xff]
    %v4732 = vld [vmem:[%s16 + $0x68] sm:$0xff]
    %v4733 = vld [vmem:[%s16 + $0x70] sm:$0xff]
    %v4734 = vld [vmem:[%s16 + $0x78] sm:$0xff]
    %v4735 = vld [vmem:[%s16 + $0x80] sm:$0xff]
    %v4736 = vld [vmem:[%s16 + $0x88] sm:$0xff]
    %v4737 = vld [vmem:[%s16 + $0x90] sm:$0xff]
    %v4738 = vld [vmem:[%s16 + $0x98] sm:$0xff]
    %v4740 = vsel %vm3796, %v4718, 0
    %4742 = vmatprep.subr.mxu0 0.0
    %4743 = vmatpush1.msra.mxu0 %v4734
    %4744 = vmatprep.subr.mxu0 0.0
    %4745 = vmatpush1.msra.mxu0 %v4733
    %4746 = vmatprep.subr.mxu0 0.0
    %4747 = vmatpush1.msra.mxu0 %v4732
    %4748 = vmatprep.subr.mxu0 0.0
    %4749 = vmatpush1.msra.mxu0 %v4731
    %4750 = vmatprep.subr.mxu0 0.0
    %4751 = vmatpush1.msra.mxu0 %v4730
    %4752 = vmatprep.subr.mxu0 0.0
    %4753 = vmatpush1.msra.mxu0 %v4729
    %4754 = vmatprep.subr.mxu0 0.0
    %4755 = vmatpush1.msra.mxu0 %v4728
    %4756 = vmatprep.subr.mxu0 0.0
    %4757 = vmatpush1.msra.mxu0 %v4727
    %4758 = vmatprep.subr.mxu0 0.0
    %4759 = vmatpush1.msra.mxu0 %v4726
    %4760 = vmatprep.subr.mxu0 0.0
    %4761 = vmatpush1.msra.mxu0 %v4725
    %4762 = vmatprep.subr.mxu0 0.0
    %4763 = vmatpush1.msra.mxu0 %v4724
    %4764 = vmatprep.subr.mxu0 0.0
    %4765 = vmatpush1.msra.mxu0 %v4723
    %4766 = vmatprep.subr.mxu0 0.0
    %4767 = vmatpush1.msra.mxu0 %v4722
    %4768 = vmatprep.subr.mxu0 0.0
    %4769 = vmatpush1.msra.mxu0 %v4721
    %4770 = vmatprep.subr.mxu0 0.0
    %4771 = vmatpush1.msra.mxu0 %v4720
    %4772 = vmatprep.subr.mxu0 0.0
    %4773 = vmatpush1.msra.mxu0 %v4719
    %4774 = vmatprep.subr.mxu0 0.0
    %4775 = vmatpush2.msra.mxu0 0.0
    %4776 = vmatprep.subr.mxu0 0.0
    %4777 = vmatpush2.msra.mxu0 0.0
    %4778 = vmatprep.subr.mxu0 0.0
    %4779 = vmatpush2.msra.mxu0 0.0
    %4780 = vmatprep.subr.mxu0 0.0
    %4781 = vmatpush2.msra.mxu0 0.0
    %4782 = vmatprep.subr.mxu0 0.0
    %4783 = vmatpush2.msra.mxu0 0.0
    %4784 = vmatprep.subr.mxu0 0.0
    %4785 = vmatpush2.msra.mxu0 0.0
    %4786 = vmatprep.subr.mxu0 0.0
    %4787 = vmatpush2.msra.mxu0 0.0
    %4788 = vmatprep.subr.mxu0 0.0
    %4789 = vmatpush2.msra.mxu0 0.0
    %4790 = vmatprep.subr.mxu0 0.0
    %4791 = vmatpush2.msra.mxu0 0.0
    %4792 = vmatprep.subr.mxu0 0.0
    %4793 = vmatpush2.msra.mxu0 0.0
    %4794 = vmatprep.subr.mxu0 0.0
    %4795 = vmatpush2.msra.mxu0 0.0
    %4796 = vmatprep.subr.mxu0 0.0
    %4797 = vmatpush2.msra.mxu0 0.0
    %4798 = vmatprep.subr.mxu0 0.0
    %4799 = vmatpush2.msra.mxu0 %v4738
    %4800 = vmatprep.subr.mxu0 0.0
    %4801 = vmatpush2.msra.mxu0 %v4737
    %4802 = vmatprep.subr.mxu0 0.0
    %4803 = vmatpush2.msra.mxu0 %v4736
    %4804 = vmatprep.subr.mxu0 0.0
    %4805 = vmatpush2.msra.mxu0 %v4735
    %4806 = vmatprep.mubr.f32.mxu0 %v4740
    %4807 = vmatmul.mubr.f32.gmra.mxu0 %v4717
    %v4808 = vpop.f32.mrf.mxu0
    %v4809 = vadd.f32 0.0, %v4808
    %v4810 = vpop.f32.mrf.mxu0
    %4811 = vdwg.mxu0
    %v4812 = vld [vmem:[%s3870] sm:$0xff]
    %v4813 = vld [vmem:[%s3870 + $0x8] sm:$0xff]
    %v4814 = vld [vmem:[%s3870 + $0x10] sm:$0xff]
    %v4815 = vld [vmem:[%s3870 + $0x18] sm:$0xff]
    %v4816 = vld [vmem:[%s3870 + $0x20] sm:$0xff]
    %v4817 = vld [vmem:[%s3870 + $0x28] sm:$0xff]
    %v4818 = vld [vmem:[%s3870 + $0x30] sm:$0xff]
    %v4819 = vld [vmem:[%s3870 + $0x38] sm:$0xff]
    %v4820 = vld [vmem:[%s3870 + $0x40] sm:$0xff]
    %v4821 = vld [vmem:[%s3870 + $0x48] sm:$0xff]
    %v4822 = vld [vmem:[%s3870 + $0x50] sm:$0xff]
    %v4823 = vld [vmem:[%s3870 + $0x58] sm:$0xff]
    %v4824 = vld [vmem:[%s3870 + $0x60] sm:$0xff]
    %v4825 = vld [vmem:[%s3870 + $0x68] sm:$0xff]
    %v4826 = vld [vmem:[%s3870 + $0x70] sm:$0xff]
    %v4827 = vld [vmem:[%s3870 + $0x78] sm:$0xff]
    %v4828 = vld [vmem:[%s3870 + $0x80] sm:$0xff]
    %v4829 = vld [vmem:[%s3870 + $0x88] sm:$0xff]
    %v4830 = vld [vmem:[%s3870 + $0x90] sm:$0xff]
    %v4831 = vld [vmem:[%s3870 + $0x98] sm:$0xff]
    %4832 = vmatprep.subr.mxu0 0.0
    %4833 = vmatpush1.msra.mxu0 %v4827
    %4834 = vmatprep.subr.mxu0 0.0
    %4835 = vmatpush1.msra.mxu0 %v4826
    %4836 = vmatprep.subr.mxu0 0.0
    %4837 = vmatpush1.msra.mxu0 %v4825
    %4838 = vmatprep.subr.mxu0 0.0
    %4839 = vmatpush1.msra.mxu0 %v4824
    %4840 = vmatprep.subr.mxu0 0.0
    %4841 = vmatpush1.msra.mxu0 %v4823
    %4842 = vmatprep.subr.mxu0 0.0
    %4843 = vmatpush1.msra.mxu0 %v4822
    %4844 = vmatprep.subr.mxu0 0.0
    %4845 = vmatpush1.msra.mxu0 %v4821
    %4846 = vmatprep.subr.mxu0 0.0
    %4847 = vmatpush1.msra.mxu0 %v4820
    %4848 = vmatprep.subr.mxu0 0.0
    %4849 = vmatpush1.msra.mxu0 %v4819
    %4850 = vmatprep.subr.mxu0 0.0
    %4851 = vmatpush1.msra.mxu0 %v4818
    %4852 = vmatprep.subr.mxu0 0.0
    %4853 = vmatpush1.msra.mxu0 %v4817
    %4854 = vmatprep.subr.mxu0 0.0
    %4855 = vmatpush1.msra.mxu0 %v4816
    %4856 = vmatprep.subr.mxu0 0.0
    %4857 = vmatpush1.msra.mxu0 %v4815
    %4858 = vmatprep.subr.mxu0 0.0
    %4859 = vmatpush1.msra.mxu0 %v4814
    %4860 = vmatprep.subr.mxu0 0.0
    %4861 = vmatpush1.msra.mxu0 %v4813
    %4862 = vmatprep.subr.mxu0 0.0
    %4863 = vmatpush1.msra.mxu0 %v4812
    %4864 = vmatprep.subr.mxu0 0.0
    %4865 = vmatpush2.msra.mxu0 0.0
    %4866 = vmatprep.subr.mxu0 0.0
    %4867 = vmatpush2.msra.mxu0 0.0
    %4868 = vmatprep.subr.mxu0 0.0
    %4869 = vmatpush2.msra.mxu0 0.0
    %4870 = vmatprep.subr.mxu0 0.0
    %4871 = vmatpush2.msra.mxu0 0.0
    %4872 = vmatprep.subr.mxu0 0.0
    %4873 = vmatpush2.msra.mxu0 0.0
    %4874 = vmatprep.subr.mxu0 0.0
    %4875 = vmatpush2.msra.mxu0 0.0
    %4876 = vmatprep.subr.mxu0 0.0
    %4877 = vmatpush2.msra.mxu0 0.0
    %4878 = vmatprep.subr.mxu0 0.0
    %4879 = vmatpush2.msra.mxu0 0.0
    %4880 = vmatprep.subr.mxu0 0.0
    %4881 = vmatpush2.msra.mxu0 0.0
    %4882 = vmatprep.subr.mxu0 0.0
    %4883 = vmatpush2.msra.mxu0 0.0
    %4884 = vmatprep.subr.mxu0 0.0
    %4885 = vmatpush2.msra.mxu0 0.0
    %4886 = vmatprep.subr.mxu0 0.0
    %4887 = vmatpush2.msra.mxu0 0.0
    %4888 = vmatprep.subr.mxu0 0.0
    %4889 = vmatpush2.msra.mxu0 %v4831
    %4890 = vmatprep.subr.mxu0 0.0
    %4891 = vmatpush2.msra.mxu0 %v4830
    %4892 = vmatprep.subr.mxu0 0.0
    %4893 = vmatpush2.msra.mxu0 %v4829
    %4894 = vmatprep.subr.mxu0 0.0
    %4895 = vmatpush2.msra.mxu0 %v4828
    %4896 = vmatprep.mubr.f32.mxu0 %v4740
    %4897 = vmatmul.mubr.f32.gmra.mxu0 %v4717
    %v4898 = vpop.f32.mrf.mxu0
    %v4899 = vadd.f32 0.0, %v4898
    %v4900 = vpop.f32.mrf.mxu0
    %4901 = vdwg.mxu0
    %v4902 = vmax.f32 %v4809, %v4899
    %4903 = vst.msk [vmem:[#allocation4 + $0x5] sm:$0x1f] %vm3962, %v4902
    %v4904 = vld [vmem:[#allocation4] sm:$0x1]
    %v4905 = vld [vmem:[%s17] sm:$0xff]
    %v4906 = vld [vmem:[%s17 + $0x8] sm:$0xff]
    %v4907 = vld [vmem:[%s17 + $0x10] sm:$0xff]
    %v4908 = vld [vmem:[%s17 + $0x18] sm:$0xff]
    %v4909 = vld [vmem:[%s17 + $0x20] sm:$0xff]
    %v4910 = vld [vmem:[%s17 + $0x28] sm:$0xff]
    %v4911 = vld [vmem:[%s17 + $0x30] sm:$0xff]
    %v4912 = vld [vmem:[%s17 + $0x38] sm:$0xff]
    %v4913 = vld [vmem:[%s17 + $0x40] sm:$0xff]
    %v4914 = vld [vmem:[%s17 + $0x48] sm:$0xff]
    %v4915 = vld [vmem:[#allocation4 + $0x1] sm:$0x1]
    %s4916 = scalar_lea.vmem %s17, 80
    %v4917 = vld [vmem:[%s4916] sm:$0xff]
    %v4918 = vld [vmem:[%s4916 + $0x8] sm:$0xff]
    %v4919 = vld [vmem:[%s4916 + $0x10] sm:$0xff]
    %v4920 = vld [vmem:[%s4916 + $0x18] sm:$0xff]
    %v4921 = vld [vmem:[%s4916 + $0x20] sm:$0xff]
    %v4922 = vld [vmem:[%s4916 + $0x28] sm:$0xff]
    %v4923 = vld [vmem:[%s4916 + $0x30] sm:$0xff]
    %v4924 = vld [vmem:[%s4916 + $0x38] sm:$0xff]
    %v4925 = vld [vmem:[%s4916 + $0x40] sm:$0xff]
    %v4926 = vld [vmem:[%s4916 + $0x48] sm:$0xff]
    %vm4927 = vcmask 654336
    %v4929 = vsel %vm4927, %v4915, 0
    %4931 = vmatprep.subr.mxu0 0.0
    %4932 = vmatpush1.msra.mxu0 0.0
    %4933 = vmatprep.subr.mxu0 0.0
    %4934 = vmatpush1.msra.mxu0 0.0
    %4935 = vmatprep.subr.mxu0 0.0
    %4936 = vmatpush1.msra.mxu0 0.0
    %4937 = vmatprep.subr.mxu0 0.0
    %4938 = vmatpush1.msra.mxu0 0.0
    %4939 = vmatprep.subr.mxu0 0.0
    %4940 = vmatpush1.msra.mxu0 0.0
    %4941 = vmatprep.subr.mxu0 0.0
    %4942 = vmatpush1.msra.mxu0 0.0
    %4943 = vmatprep.subr.mxu0 0.0
    %4944 = vmatpush1.msra.mxu0 %v4926
    %4945 = vmatprep.subr.mxu0 0.0
    %4946 = vmatpush1.msra.mxu0 %v4925
    %4947 = vmatprep.subr.mxu0 0.0
    %4948 = vmatpush1.msra.mxu0 %v4924
    %4949 = vmatprep.subr.mxu0 0.0
    %4950 = vmatpush1.msra.mxu0 %v4923
    %4951 = vmatprep.subr.mxu0 0.0
    %4952 = vmatpush1.msra.mxu0 %v4922
    %4953 = vmatprep.subr.mxu0 0.0
    %4954 = vmatpush1.msra.mxu0 %v4921
    %4955 = vmatprep.subr.mxu0 0.0
    %4956 = vmatpush1.msra.mxu0 %v4920
    %4957 = vmatprep.subr.mxu0 0.0
    %4958 = vmatpush1.msra.mxu0 %v4919
    %4959 = vmatprep.subr.mxu0 0.0
    %4960 = vmatpush1.msra.mxu0 %v4918
    %4961 = vmatprep.subr.mxu0 0.0
    %4962 = vmatpush1.msra.mxu0 %v4917
    %4963 = vmatprep.subr.mxu0 0.0
    %4964 = vmatpush2.msra.mxu0 0.0
    %4965 = vmatprep.subr.mxu0 0.0
    %4966 = vmatpush2.msra.mxu0 0.0
    %4967 = vmatprep.subr.mxu0 0.0
    %4968 = vmatpush2.msra.mxu0 0.0
    %4969 = vmatprep.subr.mxu0 0.0
    %4970 = vmatpush2.msra.mxu0 0.0
    %4971 = vmatprep.subr.mxu0 0.0
    %4972 = vmatpush2.msra.mxu0 0.0
    %4973 = vmatprep.subr.mxu0 0.0
    %4974 = vmatpush2.msra.mxu0 0.0
    %4975 = vmatprep.subr.mxu0 0.0
    %4976 = vmatpush2.msra.mxu0 0.0
    %4977 = vmatprep.subr.mxu0 0.0
    %4978 = vmatpush2.msra.mxu0 0.0
    %4979 = vmatprep.subr.mxu0 0.0
    %4980 = vmatpush2.msra.mxu0 0.0
    %4981 = vmatprep.subr.mxu0 0.0
    %4982 = vmatpush2.msra.mxu0 0.0
    %4983 = vmatprep.subr.mxu0 0.0
    %4984 = vmatpush2.msra.mxu0 0.0
    %4985 = vmatprep.subr.mxu0 0.0
    %4986 = vmatpush2.msra.mxu0 0.0
    %4987 = vmatprep.subr.mxu0 0.0
    %4988 = vmatpush2.msra.mxu0 0.0
    %4989 = vmatprep.subr.mxu0 0.0
    %4990 = vmatpush2.msra.mxu0 0.0
    %4991 = vmatprep.subr.mxu0 0.0
    %4992 = vmatpush2.msra.mxu0 0.0
    %4993 = vmatprep.subr.mxu0 0.0
    %4994 = vmatpush2.msra.mxu0 0.0
    %4995 = vmatprep.mubr.f32.mxu0 0.0
    %4996 = vmatmul.mubr.f32.gmra.mxu0 %v4929
    %v4997 = vpop.f32.mrf.mxu0
    %v4998 = vadd.f32 0.0, %v4997
    %v4999 = vpop.f32.mrf.mxu0
    %5000 = vdwg.mxu0
    %v5002 = vsel %vm4927, %v4904, 0
    %5004 = vmatprep.subr.mxu0 0.0
    %5005 = vmatpush1.msra.mxu0 0.0
    %5006 = vmatprep.subr.mxu0 0.0
    %5007 = vmatpush1.msra.mxu0 0.0
    %5008 = vmatprep.subr.mxu0 0.0
    %5009 = vmatpush1.msra.mxu0 0.0
    %5010 = vmatprep.subr.mxu0 0.0
    %5011 = vmatpush1.msra.mxu0 0.0
    %5012 = vmatprep.subr.mxu0 0.0
    %5013 = vmatpush1.msra.mxu0 0.0
    %5014 = vmatprep.subr.mxu0 0.0
    %5015 = vmatpush1.msra.mxu0 0.0
    %5016 = vmatprep.subr.mxu0 0.0
    %5017 = vmatpush1.msra.mxu0 %v4914
    %5018 = vmatprep.subr.mxu0 0.0
    %5019 = vmatpush1.msra.mxu0 %v4913
    %5020 = vmatprep.subr.mxu0 0.0
    %5021 = vmatpush1.msra.mxu0 %v4912
    %5022 = vmatprep.subr.mxu0 0.0
    %5023 = vmatpush1.msra.mxu0 %v4911
    %5024 = vmatprep.subr.mxu0 0.0
    %5025 = vmatpush1.msra.mxu0 %v4910
    %5026 = vmatprep.subr.mxu0 0.0
    %5027 = vmatpush1.msra.mxu0 %v4909
    %5028 = vmatprep.subr.mxu0 0.0
    %5029 = vmatpush1.msra.mxu0 %v4908
    %5030 = vmatprep.subr.mxu0 0.0
    %5031 = vmatpush1.msra.mxu0 %v4907
    %5032 = vmatprep.subr.mxu0 0.0
    %5033 = vmatpush1.msra.mxu0 %v4906
    %5034 = vmatprep.subr.mxu0 0.0
    %5035 = vmatpush1.msra.mxu0 %v4905
    %5036 = vmatprep.subr.mxu0 0.0
    %5037 = vmatpush2.msra.mxu0 0.0
    %5038 = vmatprep.subr.mxu0 0.0
    %5039 = vmatpush2.msra.mxu0 0.0
    %5040 = vmatprep.subr.mxu0 0.0
    %5041 = vmatpush2.msra.mxu0 0.0
    %5042 = vmatprep.subr.mxu0 0.0
    %5043 = vmatpush2.msra.mxu0 0.0
    %5044 = vmatprep.subr.mxu0 0.0
    %5045 = vmatpush2.msra.mxu0 0.0
    %5046 = vmatprep.subr.mxu0 0.0
    %5047 = vmatpush2.msra.mxu0 0.0
    %5048 = vmatprep.subr.mxu0 0.0
    %5049 = vmatpush2.msra.mxu0 0.0
    %5050 = vmatprep.subr.mxu0 0.0
    %5051 = vmatpush2.msra.mxu0 0.0
    %5052 = vmatprep.subr.mxu0 0.0
    %5053 = vmatpush2.msra.mxu0 0.0
    %5054 = vmatprep.subr.mxu0 0.0
    %5055 = vmatpush2.msra.mxu0 0.0
    %5056 = vmatprep.subr.mxu0 0.0
    %5057 = vmatpush2.msra.mxu0 0.0
    %5058 = vmatprep.subr.mxu0 0.0
    %5059 = vmatpush2.msra.mxu0 0.0
    %5060 = vmatprep.subr.mxu0 0.0
    %5061 = vmatpush2.msra.mxu0 0.0
    %5062 = vmatprep.subr.mxu0 0.0
    %5063 = vmatpush2.msra.mxu0 0.0
    %5064 = vmatprep.subr.mxu0 0.0
    %5065 = vmatpush2.msra.mxu0 0.0
    %5066 = vmatprep.subr.mxu0 0.0
    %5067 = vmatpush2.msra.mxu0 0.0
    %5068 = vmatprep.mubr.f32.mxu0 0.0
    %5069 = vmatmul.mubr.f32.gmra.mxu0 %v5002
    %v5070 = vpop.f32.mrf.mxu0
    %v5071 = vadd.f32 %v4998, %v5070
    %v5072 = vpop.f32.mrf.mxu0
    %5073 = vdwg.mxu0
    %v5074 = vld [vmem:[#allocation4 + $0x2] sm:$0x1]
    %s5075 = scalar_lea.vmem %s17, 160
    %v5076 = vld [vmem:[%s5075] sm:$0xff]
    %v5077 = vld [vmem:[%s5075 + $0x8] sm:$0xff]
    %v5078 = vld [vmem:[%s5075 + $0x10] sm:$0xff]
    %v5079 = vld [vmem:[%s5075 + $0x18] sm:$0xff]
    %v5080 = vld [vmem:[%s5075 + $0x20] sm:$0xff]
    %v5081 = vld [vmem:[%s5075 + $0x28] sm:$0xff]
    %v5082 = vld [vmem:[%s5075 + $0x30] sm:$0xff]
    %v5083 = vld [vmem:[%s5075 + $0x38] sm:$0xff]
    %v5084 = vld [vmem:[%s5075 + $0x40] sm:$0xff]
    %v5085 = vld [vmem:[%s5075 + $0x48] sm:$0xff]
    %v5087 = vsel %vm4927, %v5074, 0
    %5089 = vmatprep.subr.mxu0 0.0
    %5090 = vmatpush1.msra.mxu0 0.0
    %5091 = vmatprep.subr.mxu0 0.0
    %5092 = vmatpush1.msra.mxu0 0.0
    %5093 = vmatprep.subr.mxu0 0.0
    %5094 = vmatpush1.msra.mxu0 0.0
    %5095 = vmatprep.subr.mxu0 0.0
    %5096 = vmatpush1.msra.mxu0 0.0
    %5097 = vmatprep.subr.mxu0 0.0
    %5098 = vmatpush1.msra.mxu0 0.0
    %5099 = vmatprep.subr.mxu0 0.0
    %5100 = vmatpush1.msra.mxu0 0.0
    %5101 = vmatprep.subr.mxu0 0.0
    %5102 = vmatpush1.msra.mxu0 %v5085
    %5103 = vmatprep.subr.mxu0 0.0
    %5104 = vmatpush1.msra.mxu0 %v5084
    %5105 = vmatprep.subr.mxu0 0.0
    %5106 = vmatpush1.msra.mxu0 %v5083
    %5107 = vmatprep.subr.mxu0 0.0
    %5108 = vmatpush1.msra.mxu0 %v5082
    %5109 = vmatprep.subr.mxu0 0.0
    %5110 = vmatpush1.msra.mxu0 %v5081
    %5111 = vmatprep.subr.mxu0 0.0
    %5112 = vmatpush1.msra.mxu0 %v5080
    %5113 = vmatprep.subr.mxu0 0.0
    %5114 = vmatpush1.msra.mxu0 %v5079
    %5115 = vmatprep.subr.mxu0 0.0
    %5116 = vmatpush1.msra.mxu0 %v5078
    %5117 = vmatprep.subr.mxu0 0.0
    %5118 = vmatpush1.msra.mxu0 %v5077
    %5119 = vmatprep.subr.mxu0 0.0
    %5120 = vmatpush1.msra.mxu0 %v5076
    %5121 = vmatprep.subr.mxu0 0.0
    %5122 = vmatpush2.msra.mxu0 0.0
    %5123 = vmatprep.subr.mxu0 0.0
    %5124 = vmatpush2.msra.mxu0 0.0
    %5125 = vmatprep.subr.mxu0 0.0
    %5126 = vmatpush2.msra.mxu0 0.0
    %5127 = vmatprep.subr.mxu0 0.0
    %5128 = vmatpush2.msra.mxu0 0.0
    %5129 = vmatprep.subr.mxu0 0.0
    %5130 = vmatpush2.msra.mxu0 0.0
    %5131 = vmatprep.subr.mxu0 0.0
    %5132 = vmatpush2.msra.mxu0 0.0
    %5133 = vmatprep.subr.mxu0 0.0
    %5134 = vmatpush2.msra.mxu0 0.0
    %5135 = vmatprep.subr.mxu0 0.0
    %5136 = vmatpush2.msra.mxu0 0.0
    %5137 = vmatprep.subr.mxu0 0.0
    %5138 = vmatpush2.msra.mxu0 0.0
    %5139 = vmatprep.subr.mxu0 0.0
    %5140 = vmatpush2.msra.mxu0 0.0
    %5141 = vmatprep.subr.mxu0 0.0
    %5142 = vmatpush2.msra.mxu0 0.0
    %5143 = vmatprep.subr.mxu0 0.0
    %5144 = vmatpush2.msra.mxu0 0.0
    %5145 = vmatprep.subr.mxu0 0.0
    %5146 = vmatpush2.msra.mxu0 0.0
    %5147 = vmatprep.subr.mxu0 0.0
    %5148 = vmatpush2.msra.mxu0 0.0
    %5149 = vmatprep.subr.mxu0 0.0
    %5150 = vmatpush2.msra.mxu0 0.0
    %5151 = vmatprep.subr.mxu0 0.0
    %5152 = vmatpush2.msra.mxu0 0.0
    %5153 = vmatprep.mubr.f32.mxu0 0.0
    %5154 = vmatmul.mubr.f32.gmra.mxu0 %v5087
    %v5155 = vpop.f32.mrf.mxu0
    %v5156 = vadd.f32 0.0, %v5155
    %v5157 = vpop.f32.mrf.mxu0
    %5158 = vdwg.mxu0
    %v5159 = vadd.f32 %v5071, %v5156
    %v5160 = vld [vmem:[#allocation4 + $0x3] sm:$0x1]
    %s5161 = scalar_lea.vmem %s17, 240
    %v5162 = vld [vmem:[%s5161] sm:$0xff]
    %v5163 = vld [vmem:[%s5161 + $0x8] sm:$0xff]
    %v5164 = vld [vmem:[%s5161 + $0x10] sm:$0xff]
    %v5165 = vld [vmem:[%s5161 + $0x18] sm:$0xff]
    %v5166 = vld [vmem:[%s5161 + $0x20] sm:$0xff]
    %v5167 = vld [vmem:[%s5161 + $0x28] sm:$0xff]
    %v5168 = vld [vmem:[%s5161 + $0x30] sm:$0xff]
    %v5169 = vld [vmem:[%s5161 + $0x38] sm:$0xff]
    %v5170 = vld [vmem:[%s5161 + $0x40] sm:$0xff]
    %v5171 = vld [vmem:[%s5161 + $0x48] sm:$0xff]
    %v5173 = vsel %vm4927, %v5160, 0
    %5175 = vmatprep.subr.mxu0 0.0
    %5176 = vmatpush1.msra.mxu0 0.0
    %5177 = vmatprep.subr.mxu0 0.0
    %5178 = vmatpush1.msra.mxu0 0.0
    %5179 = vmatprep.subr.mxu0 0.0
    %5180 = vmatpush1.msra.mxu0 0.0
    %5181 = vmatprep.subr.mxu0 0.0
    %5182 = vmatpush1.msra.mxu0 0.0
    %5183 = vmatprep.subr.mxu0 0.0
    %5184 = vmatpush1.msra.mxu0 0.0
    %5185 = vmatprep.subr.mxu0 0.0
    %5186 = vmatpush1.msra.mxu0 0.0
    %5187 = vmatprep.subr.mxu0 0.0
    %5188 = vmatpush1.msra.mxu0 %v5171
    %5189 = vmatprep.subr.mxu0 0.0
    %5190 = vmatpush1.msra.mxu0 %v5170
    %5191 = vmatprep.subr.mxu0 0.0
    %5192 = vmatpush1.msra.mxu0 %v5169
    %5193 = vmatprep.subr.mxu0 0.0
    %5194 = vmatpush1.msra.mxu0 %v5168
    %5195 = vmatprep.subr.mxu0 0.0
    %5196 = vmatpush1.msra.mxu0 %v5167
    %5197 = vmatprep.subr.mxu0 0.0
    %5198 = vmatpush1.msra.mxu0 %v5166
    %5199 = vmatprep.subr.mxu0 0.0
    %5200 = vmatpush1.msra.mxu0 %v5165
    %5201 = vmatprep.subr.mxu0 0.0
    %5202 = vmatpush1.msra.mxu0 %v5164
    %5203 = vmatprep.subr.mxu0 0.0
    %5204 = vmatpush1.msra.mxu0 %v5163
    %5205 = vmatprep.subr.mxu0 0.0
    %5206 = vmatpush1.msra.mxu0 %v5162
    %5207 = vmatprep.subr.mxu0 0.0
    %5208 = vmatpush2.msra.mxu0 0.0
    %5209 = vmatprep.subr.mxu0 0.0
    %5210 = vmatpush2.msra.mxu0 0.0
    %5211 = vmatprep.subr.mxu0 0.0
    %5212 = vmatpush2.msra.mxu0 0.0
    %5213 = vmatprep.subr.mxu0 0.0
    %5214 = vmatpush2.msra.mxu0 0.0
    %5215 = vmatprep.subr.mxu0 0.0
    %5216 = vmatpush2.msra.mxu0 0.0
    %5217 = vmatprep.subr.mxu0 0.0
    %5218 = vmatpush2.msra.mxu0 0.0
    %5219 = vmatprep.subr.mxu0 0.0
    %5220 = vmatpush2.msra.mxu0 0.0
    %5221 = vmatprep.subr.mxu0 0.0
    %5222 = vmatpush2.msra.mxu0 0.0
    %5223 = vmatprep.subr.mxu0 0.0
    %5224 = vmatpush2.msra.mxu0 0.0
    %5225 = vmatprep.subr.mxu0 0.0
    %5226 = vmatpush2.msra.mxu0 0.0
    %5227 = vmatprep.subr.mxu0 0.0
    %5228 = vmatpush2.msra.mxu0 0.0
    %5229 = vmatprep.subr.mxu0 0.0
    %5230 = vmatpush2.msra.mxu0 0.0
    %5231 = vmatprep.subr.mxu0 0.0
    %5232 = vmatpush2.msra.mxu0 0.0
    %5233 = vmatprep.subr.mxu0 0.0
    %5234 = vmatpush2.msra.mxu0 0.0
    %5235 = vmatprep.subr.mxu0 0.0
    %5236 = vmatpush2.msra.mxu0 0.0
    %5237 = vmatprep.subr.mxu0 0.0
    %5238 = vmatpush2.msra.mxu0 0.0
    %5239 = vmatprep.mubr.f32.mxu0 0.0
    %5240 = vmatmul.mubr.f32.gmra.mxu0 %v5173
    %v5241 = vpop.f32.mrf.mxu0
    %v5242 = vadd.f32 0.0, %v5241
    %v5243 = vpop.f32.mrf.mxu0
    %5244 = vdwg.mxu0
    %v5245 = vadd.f32 %v5159, %v5242
    %v5246 = vld [vmem:[#allocation4 + $0x4] sm:$0x1]
    %s5247 = scalar_lea.vmem %s17, 320
    %v5248 = vld [vmem:[%s5247] sm:$0xff]
    %v5249 = vld [vmem:[%s5247 + $0x8] sm:$0xff]
    %v5250 = vld [vmem:[%s5247 + $0x10] sm:$0xff]
    %v5251 = vld [vmem:[%s5247 + $0x18] sm:$0xff]
    %v5252 = vld [vmem:[%s5247 + $0x20] sm:$0xff]
    %v5253 = vld [vmem:[%s5247 + $0x28] sm:$0xff]
    %v5254 = vld [vmem:[%s5247 + $0x30] sm:$0xff]
    %v5255 = vld [vmem:[%s5247 + $0x38] sm:$0xff]
    %v5256 = vld [vmem:[%s5247 + $0x40] sm:$0xff]
    %v5257 = vld [vmem:[%s5247 + $0x48] sm:$0xff]
    %v5259 = vsel %vm4927, %v5246, 0
    %5261 = vmatprep.subr.mxu0 0.0
    %5262 = vmatpush1.msra.mxu0 0.0
    %5263 = vmatprep.subr.mxu0 0.0
    %5264 = vmatpush1.msra.mxu0 0.0
    %5265 = vmatprep.subr.mxu0 0.0
    %5266 = vmatpush1.msra.mxu0 0.0
    %5267 = vmatprep.subr.mxu0 0.0
    %5268 = vmatpush1.msra.mxu0 0.0
    %5269 = vmatprep.subr.mxu0 0.0
    %5270 = vmatpush1.msra.mxu0 0.0
    %5271 = vmatprep.subr.mxu0 0.0
    %5272 = vmatpush1.msra.mxu0 0.0
    %5273 = vmatprep.subr.mxu0 0.0
    %5274 = vmatpush1.msra.mxu0 %v5257
    %5275 = vmatprep.subr.mxu0 0.0
    %5276 = vmatpush1.msra.mxu0 %v5256
    %5277 = vmatprep.subr.mxu0 0.0
    %5278 = vmatpush1.msra.mxu0 %v5255
    %5279 = vmatprep.subr.mxu0 0.0
    %5280 = vmatpush1.msra.mxu0 %v5254
    %5281 = vmatprep.subr.mxu0 0.0
    %5282 = vmatpush1.msra.mxu0 %v5253
    %5283 = vmatprep.subr.mxu0 0.0
    %5284 = vmatpush1.msra.mxu0 %v5252
    %5285 = vmatprep.subr.mxu0 0.0
    %5286 = vmatpush1.msra.mxu0 %v5251
    %5287 = vmatprep.subr.mxu0 0.0
    %5288 = vmatpush1.msra.mxu0 %v5250
    %5289 = vmatprep.subr.mxu0 0.0
    %5290 = vmatpush1.msra.mxu0 %v5249
    %5291 = vmatprep.subr.mxu0 0.0
    %5292 = vmatpush1.msra.mxu0 %v5248
    %5293 = vmatprep.subr.mxu0 0.0
    %5294 = vmatpush2.msra.mxu0 0.0
    %5295 = vmatprep.subr.mxu0 0.0
    %5296 = vmatpush2.msra.mxu0 0.0
    %5297 = vmatprep.subr.mxu0 0.0
    %5298 = vmatpush2.msra.mxu0 0.0
    %5299 = vmatprep.subr.mxu0 0.0
    %5300 = vmatpush2.msra.mxu0 0.0
    %5301 = vmatprep.subr.mxu0 0.0
    %5302 = vmatpush2.msra.mxu0 0.0
    %5303 = vmatprep.subr.mxu0 0.0
    %5304 = vmatpush2.msra.mxu0 0.0
    %5305 = vmatprep.subr.mxu0 0.0
    %5306 = vmatpush2.msra.mxu0 0.0
    %5307 = vmatprep.subr.mxu0 0.0
    %5308 = vmatpush2.msra.mxu0 0.0
    %5309 = vmatprep.subr.mxu0 0.0
    %5310 = vmatpush2.msra.mxu0 0.0
    %5311 = vmatprep.subr.mxu0 0.0
    %5312 = vmatpush2.msra.mxu0 0.0
    %5313 = vmatprep.subr.mxu0 0.0
    %5314 = vmatpush2.msra.mxu0 0.0
    %5315 = vmatprep.subr.mxu0 0.0
    %5316 = vmatpush2.msra.mxu0 0.0
    %5317 = vmatprep.subr.mxu0 0.0
    %5318 = vmatpush2.msra.mxu0 0.0
    %5319 = vmatprep.subr.mxu0 0.0
    %5320 = vmatpush2.msra.mxu0 0.0
    %5321 = vmatprep.subr.mxu0 0.0
    %5322 = vmatpush2.msra.mxu0 0.0
    %5323 = vmatprep.subr.mxu0 0.0
    %5324 = vmatpush2.msra.mxu0 0.0
    %5325 = vmatprep.mubr.f32.mxu0 0.0
    %5326 = vmatmul.mubr.f32.gmra.mxu0 %v5259
    %v5327 = vpop.f32.mrf.mxu0
    %v5328 = vadd.f32 0.0, %v5327
    %v5329 = vpop.f32.mrf.mxu0
    %5330 = vdwg.mxu0
    %v5331 = vadd.f32 %v5245, %v5328
    %v5332 = vld [vmem:[%s18] sm:$0x1]
    %v5333 = vadd.f32 %v5331, %v5332
    %v5334 = vmax.f32 %v5333, 0.0
    %v5335 = vld [vmem:[%s19] sm:$0xff]
    %v5336 = vld [vmem:[%s19 + $0x8] sm:$0xff]
    %v5337 = vld [vmem:[%s19 + $0x10] sm:$0xff]
    %v5338 = vld [vmem:[%s19 + $0x18] sm:$0xff]
    %v5339 = vld [vmem:[%s19 + $0x20] sm:$0xff]
    %v5340 = vld [vmem:[%s19 + $0x28] sm:$0xff]
    %v5341 = vld [vmem:[%s19 + $0x30] sm:$0xff]
    %v5342 = vld [vmem:[%s19 + $0x38] sm:$0xff]
    %v5343 = vld [vmem:[%s19 + $0x40] sm:$0xff]
    %v5344 = vld [vmem:[%s19 + $0x48] sm:$0xff]
    %v5345 = vld [vmem:[%s19 + $0x50] sm:$0xff]
    %v5346 = vld [vmem:[%s19 + $0x58] sm:$0xff]
    %v5347 = vld [vmem:[%s19 + $0x60] sm:$0xff]
    %v5348 = vld [vmem:[%s19 + $0x68] sm:$0xff]
    %v5349 = vld [vmem:[%s19 + $0x70] sm:$0xff]
    %v5350 = vld [vmem:[%s20] sm:$0x1]
    %vm5351 = vcmask 982016
    %v5353 = vsel %vm5351, %v5334, 0
    %5355 = vmatprep.subr.mxu0 0.0
    %5356 = vmatpush1.msra.mxu0 0.0
    %5357 = vmatprep.subr.mxu0 0.0
    %5358 = vmatpush1.msra.mxu0 %v5349
    %5359 = vmatprep.subr.mxu0 0.0
    %5360 = vmatpush1.msra.mxu0 %v5348
    %5361 = vmatprep.subr.mxu0 0.0
    %5362 = vmatpush1.msra.mxu0 %v5347
    %5363 = vmatprep.subr.mxu0 0.0
    %5364 = vmatpush1.msra.mxu0 %v5346
    %5365 = vmatprep.subr.mxu0 0.0
    %5366 = vmatpush1.msra.mxu0 %v5345
    %5367 = vmatprep.subr.mxu0 0.0
    %5368 = vmatpush1.msra.mxu0 %v5344
    %5369 = vmatprep.subr.mxu0 0.0
    %5370 = vmatpush1.msra.mxu0 %v5343
    %5371 = vmatprep.subr.mxu0 0.0
    %5372 = vmatpush1.msra.mxu0 %v5342
    %5373 = vmatprep.subr.mxu0 0.0
    %5374 = vmatpush1.msra.mxu0 %v5341
    %5375 = vmatprep.subr.mxu0 0.0
    %5376 = vmatpush1.msra.mxu0 %v5340
    %5377 = vmatprep.subr.mxu0 0.0
    %5378 = vmatpush1.msra.mxu0 %v5339
    %5379 = vmatprep.subr.mxu0 0.0
    %5380 = vmatpush1.msra.mxu0 %v5338
    %5381 = vmatprep.subr.mxu0 0.0
    %5382 = vmatpush1.msra.mxu0 %v5337
    %5383 = vmatprep.subr.mxu0 0.0
    %5384 = vmatpush1.msra.mxu0 %v5336
    %5385 = vmatprep.subr.mxu0 0.0
    %5386 = vmatpush1.msra.mxu0 %v5335
    %5387 = vmatprep.subr.mxu0 0.0
    %5388 = vmatpush2.msra.mxu0 0.0
    %5389 = vmatprep.subr.mxu0 0.0
    %5390 = vmatpush2.msra.mxu0 0.0
    %5391 = vmatprep.subr.mxu0 0.0
    %5392 = vmatpush2.msra.mxu0 0.0
    %5393 = vmatprep.subr.mxu0 0.0
    %5394 = vmatpush2.msra.mxu0 0.0
    %5395 = vmatprep.subr.mxu0 0.0
    %5396 = vmatpush2.msra.mxu0 0.0
    %5397 = vmatprep.subr.mxu0 0.0
    %5398 = vmatpush2.msra.mxu0 0.0
    %5399 = vmatprep.subr.mxu0 0.0
    %5400 = vmatpush2.msra.mxu0 0.0
    %5401 = vmatprep.subr.mxu0 0.0
    %5402 = vmatpush2.msra.mxu0 0.0
    %5403 = vmatprep.subr.mxu0 0.0
    %5404 = vmatpush2.msra.mxu0 0.0
    %5405 = vmatprep.subr.mxu0 0.0
    %5406 = vmatpush2.msra.mxu0 0.0
    %5407 = vmatprep.subr.mxu0 0.0
    %5408 = vmatpush2.msra.mxu0 0.0
    %5409 = vmatprep.subr.mxu0 0.0
    %5410 = vmatpush2.msra.mxu0 0.0
    %5411 = vmatprep.subr.mxu0 0.0
    %5412 = vmatpush2.msra.mxu0 0.0
    %5413 = vmatprep.subr.mxu0 0.0
    %5414 = vmatpush2.msra.mxu0 0.0
    %5415 = vmatprep.subr.mxu0 0.0
    %5416 = vmatpush2.msra.mxu0 0.0
    %5417 = vmatprep.subr.mxu0 0.0
    %5418 = vmatpush2.msra.mxu0 0.0
    %5419 = vmatprep.mubr.f32.mxu0 0.0
    %5420 = vmatmul.mubr.f32.gmra.mxu0 %v5353
    %v5421 = vpop.f32.mrf.mxu0
    %v5422 = vadd.f32 %v5350, %v5421
    %v5423 = vpop.f32.mrf.mxu0
    %5424 = vdwg.mxu0
    %v5425 = vmax.f32 %v5422, 0.0
    %v5426 = vld [vmem:[%s21] sm:$0xff]
    %v5427 = vld [vmem:[%s21 + $0x8] sm:$0xff]
    %v5428 = vld [vmem:[%s21 + $0x10] sm:$0xff]
    %v5429 = vld [vmem:[%s21 + $0x18] sm:$0xff]
    %v5430 = vld [vmem:[%s21 + $0x20] sm:$0xff]
    %v5431 = vld [vmem:[%s21 + $0x28] sm:$0xff]
    %v5432 = vld [vmem:[%s21 + $0x30] sm:$0xff]
    %v5433 = vld [vmem:[%s21 + $0x38] sm:$0xff]
    %v5434 = vld [vmem:[%s21 + $0x40] sm:$0xff]
    %v5435 = vld [vmem:[%s21 + $0x48] sm:$0xff]
    %v5436 = vld [vmem:[%s21 + $0x50] sm:$0xf]
    %v5437 = vld [vmem:[%s22] sm:$0x1]
    %vm5438 = vcmask 687104
    %v5440 = vsel %vm5438, %v5425, 0
    %v5443 = vsel %vm1278, %v5436, 0
    %5445 = vmatprep.subr.mxu0 0.0
    %5446 = vmatpush1.msra.mxu0 0.0
    %5447 = vmatprep.subr.mxu0 0.0
    %5448 = vmatpush1.msra.mxu0 0.0
    %5449 = vmatprep.subr.mxu0 0.0
    %5450 = vmatpush1.msra.mxu0 0.0
    %5451 = vmatprep.subr.mxu0 0.0
    %5452 = vmatpush1.msra.mxu0 0.0
    %5453 = vmatprep.subr.mxu0 0.0
    %5454 = vmatpush1.msra.mxu0 0.0
    %5455 = vmatprep.subr.mxu0 0.0
    %5456 = vmatpush1.msra.mxu0 %v5443
    %5457 = vmatprep.subr.mxu0 0.0
    %5458 = vmatpush1.msra.mxu0 %v5435
    %5459 = vmatprep.subr.mxu0 0.0
    %5460 = vmatpush1.msra.mxu0 %v5434
    %5461 = vmatprep.subr.mxu0 0.0
    %5462 = vmatpush1.msra.mxu0 %v5433
    %5463 = vmatprep.subr.mxu0 0.0
    %5464 = vmatpush1.msra.mxu0 %v5432
    %5465 = vmatprep.subr.mxu0 0.0
    %5466 = vmatpush1.msra.mxu0 %v5431
    %5467 = vmatprep.subr.mxu0 0.0
    %5468 = vmatpush1.msra.mxu0 %v5430
    %5469 = vmatprep.subr.mxu0 0.0
    %5470 = vmatpush1.msra.mxu0 %v5429
    %5471 = vmatprep.subr.mxu0 0.0
    %5472 = vmatpush1.msra.mxu0 %v5428
    %5473 = vmatprep.subr.mxu0 0.0
    %5474 = vmatpush1.msra.mxu0 %v5427
    %5475 = vmatprep.subr.mxu0 0.0
    %5476 = vmatpush1.msra.mxu0 %v5426
    %5477 = vmatprep.subr.mxu0 0.0
    %5478 = vmatpush2.msra.mxu0 0.0
    %5479 = vmatprep.subr.mxu0 0.0
    %5480 = vmatpush2.msra.mxu0 0.0
    %5481 = vmatprep.subr.mxu0 0.0
    %5482 = vmatpush2.msra.mxu0 0.0
    %5483 = vmatprep.subr.mxu0 0.0
    %5484 = vmatpush2.msra.mxu0 0.0
    %5485 = vmatprep.subr.mxu0 0.0
    %5486 = vmatpush2.msra.mxu0 0.0
    %5487 = vmatprep.subr.mxu0 0.0
    %5488 = vmatpush2.msra.mxu0 0.0
    %5489 = vmatprep.subr.mxu0 0.0
    %5490 = vmatpush2.msra.mxu0 0.0
    %5491 = vmatprep.subr.mxu0 0.0
    %5492 = vmatpush2.msra.mxu0 0.0
    %5493 = vmatprep.subr.mxu0 0.0
    %5494 = vmatpush2.msra.mxu0 0.0
    %5495 = vmatprep.subr.mxu0 0.0
    %5496 = vmatpush2.msra.mxu0 0.0
    %5497 = vmatprep.subr.mxu0 0.0
    %5498 = vmatpush2.msra.mxu0 0.0
    %5499 = vmatprep.subr.mxu0 0.0
    %5500 = vmatpush2.msra.mxu0 0.0
    %5501 = vmatprep.subr.mxu0 0.0
    %5502 = vmatpush2.msra.mxu0 0.0
    %5503 = vmatprep.subr.mxu0 0.0
    %5504 = vmatpush2.msra.mxu0 0.0
    %5505 = vmatprep.subr.mxu0 0.0
    %5506 = vmatpush2.msra.mxu0 0.0
    %5507 = vmatprep.subr.mxu0 0.0
    %5508 = vmatpush2.msra.mxu0 0.0
    %5509 = vmatprep.mubr.f32.mxu0 0.0
    %5510 = vmatmul.mubr.f32.gmra.mxu0 %v5440
    %v5511 = vpop.f32.mrf.mxu0
    %v5512 = vadd.f32 %v5437, %v5511
    %v5513 = vpop.f32.mrf.mxu0
    %5514 = vdwg.mxu0
    %vm5515 = vcmask 73728
    %v5516 = vsel %vm5515, %v5512, -inf
    %5517 = vmax.xlane.f32.xlu0 %v5516
    %v5518 = vpop.xlane.xlu0 %5517
    %v5519 = vsub.f32 %v5512, %v5518
    %v5520 = vmul.f32 %v5519, 1.442695
    %v5521 = vpow.pop %v5520
    %v5522 = vsel %vm5515, %v5521, 0.0
    %5523 = vadd.xlane.f32.xlu0 %v5522
    %v5524 = vpop.xlane.xlu0 %5523
    %v5525 = vrcp.pop %v5524
    %v5526 = vmul.f32 %v5521, %v5525
    %5527 = vst.msk [vmem:[#allocation5] sm:$0x1] %vm5515, %v5526
    %v5528 = vld [vmem:[#allocation4 + $0x5] sm:$0x1]
    %v5529 = vld [vmem:[%s17] sm:$0xff]
    %v5530 = vld [vmem:[%s17 + $0x8] sm:$0xff]
    %v5531 = vld [vmem:[%s17 + $0x10] sm:$0xff]
    %v5532 = vld [vmem:[%s17 + $0x18] sm:$0xff]
    %v5533 = vld [vmem:[%s17 + $0x20] sm:$0xff]
    %v5534 = vld [vmem:[%s17 + $0x28] sm:$0xff]
    %v5535 = vld [vmem:[%s17 + $0x30] sm:$0xff]
    %v5536 = vld [vmem:[%s17 + $0x38] sm:$0xff]
    %v5537 = vld [vmem:[%s17 + $0x40] sm:$0xff]
    %v5538 = vld [vmem:[%s17 + $0x48] sm:$0xff]
    %v5539 = vld [vmem:[#allocation4 + $0x6] sm:$0x1]
    %v5540 = vld [vmem:[%s4916] sm:$0xff]
    %v5541 = vld [vmem:[%s4916 + $0x8] sm:$0xff]
    %v5542 = vld [vmem:[%s4916 + $0x10] sm:$0xff]
    %v5543 = vld [vmem:[%s4916 + $0x18] sm:$0xff]
    %v5544 = vld [vmem:[%s4916 + $0x20] sm:$0xff]
    %v5545 = vld [vmem:[%s4916 + $0x28] sm:$0xff]
    %v5546 = vld [vmem:[%s4916 + $0x30] sm:$0xff]
    %v5547 = vld [vmem:[%s4916 + $0x38] sm:$0xff]
    %v5548 = vld [vmem:[%s4916 + $0x40] sm:$0xff]
    %v5549 = vld [vmem:[%s4916 + $0x48] sm:$0xff]
    %v5551 = vsel %vm4927, %v5539, 0
    %5553 = vmatprep.subr.mxu0 0.0
    %5554 = vmatpush1.msra.mxu0 0.0
    %5555 = vmatprep.subr.mxu0 0.0
    %5556 = vmatpush1.msra.mxu0 0.0
    %5557 = vmatprep.subr.mxu0 0.0
    %5558 = vmatpush1.msra.mxu0 0.0
    %5559 = vmatprep.subr.mxu0 0.0
    %5560 = vmatpush1.msra.mxu0 0.0
    %5561 = vmatprep.subr.mxu0 0.0
    %5562 = vmatpush1.msra.mxu0 0.0
    %5563 = vmatprep.subr.mxu0 0.0
    %5564 = vmatpush1.msra.mxu0 0.0
    %5565 = vmatprep.subr.mxu0 0.0
    %5566 = vmatpush1.msra.mxu0 %v5549
    %5567 = vmatprep.subr.mxu0 0.0
    %5568 = vmatpush1.msra.mxu0 %v5548
    %5569 = vmatprep.subr.mxu0 0.0
    %5570 = vmatpush1.msra.mxu0 %v5547
    %5571 = vmatprep.subr.mxu0 0.0
    %5572 = vmatpush1.msra.mxu0 %v5546
    %5573 = vmatprep.subr.mxu0 0.0
    %5574 = vmatpush1.msra.mxu0 %v5545
    %5575 = vmatprep.subr.mxu0 0.0
    %5576 = vmatpush1.msra.mxu0 %v5544
    %5577 = vmatprep.subr.mxu0 0.0
    %5578 = vmatpush1.msra.mxu0 %v5543
    %5579 = vmatprep.subr.mxu0 0.0
    %5580 = vmatpush1.msra.mxu0 %v5542
    %5581 = vmatprep.subr.mxu0 0.0
    %5582 = vmatpush1.msra.mxu0 %v5541
    %5583 = vmatprep.subr.mxu0 0.0
    %5584 = vmatpush1.msra.mxu0 %v5540
    %5585 = vmatprep.subr.mxu0 0.0
    %5586 = vmatpush2.msra.mxu0 0.0
    %5587 = vmatprep.subr.mxu0 0.0
    %5588 = vmatpush2.msra.mxu0 0.0
    %5589 = vmatprep.subr.mxu0 0.0
    %5590 = vmatpush2.msra.mxu0 0.0
    %5591 = vmatprep.subr.mxu0 0.0
    %5592 = vmatpush2.msra.mxu0 0.0
    %5593 = vmatprep.subr.mxu0 0.0
    %5594 = vmatpush2.msra.mxu0 0.0
    %5595 = vmatprep.subr.mxu0 0.0
    %5596 = vmatpush2.msra.mxu0 0.0
    %5597 = vmatprep.subr.mxu0 0.0
    %5598 = vmatpush2.msra.mxu0 0.0
    %5599 = vmatprep.subr.mxu0 0.0
    %5600 = vmatpush2.msra.mxu0 0.0
    %5601 = vmatprep.subr.mxu0 0.0
    %5602 = vmatpush2.msra.mxu0 0.0
    %5603 = vmatprep.subr.mxu0 0.0
    %5604 = vmatpush2.msra.mxu0 0.0
    %5605 = vmatprep.subr.mxu0 0.0
    %5606 = vmatpush2.msra.mxu0 0.0
    %5607 = vmatprep.subr.mxu0 0.0
    %5608 = vmatpush2.msra.mxu0 0.0
    %5609 = vmatprep.subr.mxu0 0.0
    %5610 = vmatpush2.msra.mxu0 0.0
    %5611 = vmatprep.subr.mxu0 0.0
    %5612 = vmatpush2.msra.mxu0 0.0
    %5613 = vmatprep.subr.mxu0 0.0
    %5614 = vmatpush2.msra.mxu0 0.0
    %5615 = vmatprep.subr.mxu0 0.0
    %5616 = vmatpush2.msra.mxu0 0.0
    %5617 = vmatprep.mubr.f32.mxu0 0.0
    %5618 = vmatmul.mubr.f32.gmra.mxu0 %v5551
    %v5619 = vpop.f32.mrf.mxu0
    %v5620 = vadd.f32 0.0, %v5619
    %v5621 = vpop.f32.mrf.mxu0
    %5622 = vdwg.mxu0
    %v5624 = vsel %vm4927, %v5528, 0
    %5626 = vmatprep.subr.mxu0 0.0
    %5627 = vmatpush1.msra.mxu0 0.0
    %5628 = vmatprep.subr.mxu0 0.0
    %5629 = vmatpush1.msra.mxu0 0.0
    %5630 = vmatprep.subr.mxu0 0.0
    %5631 = vmatpush1.msra.mxu0 0.0
    %5632 = vmatprep.subr.mxu0 0.0
    %5633 = vmatpush1.msra.mxu0 0.0
    %5634 = vmatprep.subr.mxu0 0.0
    %5635 = vmatpush1.msra.mxu0 0.0
    %5636 = vmatprep.subr.mxu0 0.0
    %5637 = vmatpush1.msra.mxu0 0.0
    %5638 = vmatprep.subr.mxu0 0.0
    %5639 = vmatpush1.msra.mxu0 %v5538
    %5640 = vmatprep.subr.mxu0 0.0
    %5641 = vmatpush1.msra.mxu0 %v5537
    %5642 = vmatprep.subr.mxu0 0.0
    %5643 = vmatpush1.msra.mxu0 %v5536
    %5644 = vmatprep.subr.mxu0 0.0
    %5645 = vmatpush1.msra.mxu0 %v5535
    %5646 = vmatprep.subr.mxu0 0.0
    %5647 = vmatpush1.msra.mxu0 %v5534
    %5648 = vmatprep.subr.mxu0 0.0
    %5649 = vmatpush1.msra.mxu0 %v5533
    %5650 = vmatprep.subr.mxu0 0.0
    %5651 = vmatpush1.msra.mxu0 %v5532
    %5652 = vmatprep.subr.mxu0 0.0
    %5653 = vmatpush1.msra.mxu0 %v5531
    %5654 = vmatprep.subr.mxu0 0.0
    %5655 = vmatpush1.msra.mxu0 %v5530
    %5656 = vmatprep.subr.mxu0 0.0
    %5657 = vmatpush1.msra.mxu0 %v5529
    %5658 = vmatprep.subr.mxu0 0.0
    %5659 = vmatpush2.msra.mxu0 0.0
    %5660 = vmatprep.subr.mxu0 0.0
    %5661 = vmatpush2.msra.mxu0 0.0
    %5662 = vmatprep.subr.mxu0 0.0
    %5663 = vmatpush2.msra.mxu0 0.0
    %5664 = vmatprep.subr.mxu0 0.0
    %5665 = vmatpush2.msra.mxu0 0.0
    %5666 = vmatprep.subr.mxu0 0.0
    %5667 = vmatpush2.msra.mxu0 0.0
    %5668 = vmatprep.subr.mxu0 0.0
    %5669 = vmatpush2.msra.mxu0 0.0
    %5670 = vmatprep.subr.mxu0 0.0
    %5671 = vmatpush2.msra.mxu0 0.0
    %5672 = vmatprep.subr.mxu0 0.0
    %5673 = vmatpush2.msra.mxu0 0.0
    %5674 = vmatprep.subr.mxu0 0.0
    %5675 = vmatpush2.msra.mxu0 0.0
    %5676 = vmatprep.subr.mxu0 0.0
    %5677 = vmatpush2.msra.mxu0 0.0
    %5678 = vmatprep.subr.mxu0 0.0
    %5679 = vmatpush2.msra.mxu0 0.0
    %5680 = vmatprep.subr.mxu0 0.0
    %5681 = vmatpush2.msra.mxu0 0.0
    %5682 = vmatprep.subr.mxu0 0.0
    %5683 = vmatpush2.msra.mxu0 0.0
    %5684 = vmatprep.subr.mxu0 0.0
    %5685 = vmatpush2.msra.mxu0 0.0
    %5686 = vmatprep.subr.mxu0 0.0
    %5687 = vmatpush2.msra.mxu0 0.0
    %5688 = vmatprep.subr.mxu0 0.0
    %5689 = vmatpush2.msra.mxu0 0.0
    %5690 = vmatprep.mubr.f32.mxu0 0.0
    %5691 = vmatmul.mubr.f32.gmra.mxu0 %v5624
    %v5692 = vpop.f32.mrf.mxu0
    %v5693 = vadd.f32 %v5620, %v5692
    %v5694 = vpop.f32.mrf.mxu0
    %5695 = vdwg.mxu0
    %v5696 = vld [vmem:[#allocation4 + $0x7] sm:$0x1]
    %v5697 = vld [vmem:[%s5075] sm:$0xff]
    %v5698 = vld [vmem:[%s5075 + $0x8] sm:$0xff]
    %v5699 = vld [vmem:[%s5075 + $0x10] sm:$0xff]
    %v5700 = vld [vmem:[%s5075 + $0x18] sm:$0xff]
    %v5701 = vld [vmem:[%s5075 + $0x20] sm:$0xff]
    %v5702 = vld [vmem:[%s5075 + $0x28] sm:$0xff]
    %v5703 = vld [vmem:[%s5075 + $0x30] sm:$0xff]
    %v5704 = vld [vmem:[%s5075 + $0x38] sm:$0xff]
    %v5705 = vld [vmem:[%s5075 + $0x40] sm:$0xff]
    %v5706 = vld [vmem:[%s5075 + $0x48] sm:$0xff]
    %v5708 = vsel %vm4927, %v5696, 0
    %5710 = vmatprep.subr.mxu0 0.0
    %5711 = vmatpush1.msra.mxu0 0.0
    %5712 = vmatprep.subr.mxu0 0.0
    %5713 = vmatpush1.msra.mxu0 0.0
    %5714 = vmatprep.subr.mxu0 0.0
    %5715 = vmatpush1.msra.mxu0 0.0
    %5716 = vmatprep.subr.mxu0 0.0
    %5717 = vmatpush1.msra.mxu0 0.0
    %5718 = vmatprep.subr.mxu0 0.0
    %5719 = vmatpush1.msra.mxu0 0.0
    %5720 = vmatprep.subr.mxu0 0.0
    %5721 = vmatpush1.msra.mxu0 0.0
    %5722 = vmatprep.subr.mxu0 0.0
    %5723 = vmatpush1.msra.mxu0 %v5706
    %5724 = vmatprep.subr.mxu0 0.0
    %5725 = vmatpush1.msra.mxu0 %v5705
    %5726 = vmatprep.subr.mxu0 0.0
    %5727 = vmatpush1.msra.mxu0 %v5704
    %5728 = vmatprep.subr.mxu0 0.0
    %5729 = vmatpush1.msra.mxu0 %v5703
    %5730 = vmatprep.subr.mxu0 0.0
    %5731 = vmatpush1.msra.mxu0 %v5702
    %5732 = vmatprep.subr.mxu0 0.0
    %5733 = vmatpush1.msra.mxu0 %v5701
    %5734 = vmatprep.subr.mxu0 0.0
    %5735 = vmatpush1.msra.mxu0 %v5700
    %5736 = vmatprep.subr.mxu0 0.0
    %5737 = vmatpush1.msra.mxu0 %v5699
    %5738 = vmatprep.subr.mxu0 0.0
    %5739 = vmatpush1.msra.mxu0 %v5698
    %5740 = vmatprep.subr.mxu0 0.0
    %5741 = vmatpush1.msra.mxu0 %v5697
    %5742 = vmatprep.subr.mxu0 0.0
    %5743 = vmatpush2.msra.mxu0 0.0
    %5744 = vmatprep.subr.mxu0 0.0
    %5745 = vmatpush2.msra.mxu0 0.0
    %5746 = vmatprep.subr.mxu0 0.0
    %5747 = vmatpush2.msra.mxu0 0.0
    %5748 = vmatprep.subr.mxu0 0.0
    %5749 = vmatpush2.msra.mxu0 0.0
    %5750 = vmatprep.subr.mxu0 0.0
    %5751 = vmatpush2.msra.mxu0 0.0
    %5752 = vmatprep.subr.mxu0 0.0
    %5753 = vmatpush2.msra.mxu0 0.0
    %5754 = vmatprep.subr.mxu0 0.0
    %5755 = vmatpush2.msra.mxu0 0.0
    %5756 = vmatprep.subr.mxu0 0.0
    %5757 = vmatpush2.msra.mxu0 0.0
    %5758 = vmatprep.subr.mxu0 0.0
    %5759 = vmatpush2.msra.mxu0 0.0
    %5760 = vmatprep.subr.mxu0 0.0
    %5761 = vmatpush2.msra.mxu0 0.0
    %5762 = vmatprep.subr.mxu0 0.0
    %5763 = vmatpush2.msra.mxu0 0.0
    %5764 = vmatprep.subr.mxu0 0.0
    %5765 = vmatpush2.msra.mxu0 0.0
    %5766 = vmatprep.subr.mxu0 0.0
    %5767 = vmatpush2.msra.mxu0 0.0
    %5768 = vmatprep.subr.mxu0 0.0
    %5769 = vmatpush2.msra.mxu0 0.0
    %5770 = vmatprep.subr.mxu0 0.0
    %5771 = vmatpush2.msra.mxu0 0.0
    %5772 = vmatprep.subr.mxu0 0.0
    %5773 = vmatpush2.msra.mxu0 0.0
    %5774 = vmatprep.mubr.f32.mxu0 0.0
    %5775 = vmatmul.mubr.f32.gmra.mxu0 %v5708
    %v5776 = vpop.f32.mrf.mxu0
    %v5777 = vadd.f32 0.0, %v5776
    %v5778 = vpop.f32.mrf.mxu0
    %5779 = vdwg.mxu0
    %v5780 = vadd.f32 %v5693, %v5777
    %v5781 = vld [vmem:[#allocation4 + $0x8] sm:$0x1]
    %v5782 = vld [vmem:[%s5161] sm:$0xff]
    %v5783 = vld [vmem:[%s5161 + $0x8] sm:$0xff]
    %v5784 = vld [vmem:[%s5161 + $0x10] sm:$0xff]
    %v5785 = vld [vmem:[%s5161 + $0x18] sm:$0xff]
    %v5786 = vld [vmem:[%s5161 + $0x20] sm:$0xff]
    %v5787 = vld [vmem:[%s5161 + $0x28] sm:$0xff]
    %v5788 = vld [vmem:[%s5161 + $0x30] sm:$0xff]
    %v5789 = vld [vmem:[%s5161 + $0x38] sm:$0xff]
    %v5790 = vld [vmem:[%s5161 + $0x40] sm:$0xff]
    %v5791 = vld [vmem:[%s5161 + $0x48] sm:$0xff]
    %v5793 = vsel %vm4927, %v5781, 0
    %5795 = vmatprep.subr.mxu0 0.0
    %5796 = vmatpush1.msra.mxu0 0.0
    %5797 = vmatprep.subr.mxu0 0.0
    %5798 = vmatpush1.msra.mxu0 0.0
    %5799 = vmatprep.subr.mxu0 0.0
    %5800 = vmatpush1.msra.mxu0 0.0
    %5801 = vmatprep.subr.mxu0 0.0
    %5802 = vmatpush1.msra.mxu0 0.0
    %5803 = vmatprep.subr.mxu0 0.0
    %5804 = vmatpush1.msra.mxu0 0.0
    %5805 = vmatprep.subr.mxu0 0.0
    %5806 = vmatpush1.msra.mxu0 0.0
    %5807 = vmatprep.subr.mxu0 0.0
    %5808 = vmatpush1.msra.mxu0 %v5791
    %5809 = vmatprep.subr.mxu0 0.0
    %5810 = vmatpush1.msra.mxu0 %v5790
    %5811 = vmatprep.subr.mxu0 0.0
    %5812 = vmatpush1.msra.mxu0 %v5789
    %5813 = vmatprep.subr.mxu0 0.0
    %5814 = vmatpush1.msra.mxu0 %v5788
    %5815 = vmatprep.subr.mxu0 0.0
    %5816 = vmatpush1.msra.mxu0 %v5787
    %5817 = vmatprep.subr.mxu0 0.0
    %5818 = vmatpush1.msra.mxu0 %v5786
    %5819 = vmatprep.subr.mxu0 0.0
    %5820 = vmatpush1.msra.mxu0 %v5785
    %5821 = vmatprep.subr.mxu0 0.0
    %5822 = vmatpush1.msra.mxu0 %v5784
    %5823 = vmatprep.subr.mxu0 0.0
    %5824 = vmatpush1.msra.mxu0 %v5783
    %5825 = vmatprep.subr.mxu0 0.0
    %5826 = vmatpush1.msra.mxu0 %v5782
    %5827 = vmatprep.subr.mxu0 0.0
    %5828 = vmatpush2.msra.mxu0 0.0
    %5829 = vmatprep.subr.mxu0 0.0
    %5830 = vmatpush2.msra.mxu0 0.0
    %5831 = vmatprep.subr.mxu0 0.0
    %5832 = vmatpush2.msra.mxu0 0.0
    %5833 = vmatprep.subr.mxu0 0.0
    %5834 = vmatpush2.msra.mxu0 0.0
    %5835 = vmatprep.subr.mxu0 0.0
    %5836 = vmatpush2.msra.mxu0 0.0
    %5837 = vmatprep.subr.mxu0 0.0
    %5838 = vmatpush2.msra.mxu0 0.0
    %5839 = vmatprep.subr.mxu0 0.0
    %5840 = vmatpush2.msra.mxu0 0.0
    %5841 = vmatprep.subr.mxu0 0.0
    %5842 = vmatpush2.msra.mxu0 0.0
    %5843 = vmatprep.subr.mxu0 0.0
    %5844 = vmatpush2.msra.mxu0 0.0
    %5845 = vmatprep.subr.mxu0 0.0
    %5846 = vmatpush2.msra.mxu0 0.0
    %5847 = vmatprep.subr.mxu0 0.0
    %5848 = vmatpush2.msra.mxu0 0.0
    %5849 = vmatprep.subr.mxu0 0.0
    %5850 = vmatpush2.msra.mxu0 0.0
    %5851 = vmatprep.subr.mxu0 0.0
    %5852 = vmatpush2.msra.mxu0 0.0
    %5853 = vmatprep.subr.mxu0 0.0
    %5854 = vmatpush2.msra.mxu0 0.0
    %5855 = vmatprep.subr.mxu0 0.0
    %5856 = vmatpush2.msra.mxu0 0.0
    %5857 = vmatprep.subr.mxu0 0.0
    %5858 = vmatpush2.msra.mxu0 0.0
    %5859 = vmatprep.mubr.f32.mxu0 0.0
    %5860 = vmatmul.mubr.f32.gmra.mxu0 %v5793
    %v5861 = vpop.f32.mrf.mxu0
    %v5862 = vadd.f32 0.0, %v5861
    %v5863 = vpop.f32.mrf.mxu0
    %5864 = vdwg.mxu0
    %v5865 = vadd.f32 %v5780, %v5862
    %v5866 = vld [vmem:[#allocation4 + $0x9] sm:$0x1]
    %v5867 = vld [vmem:[%s5247] sm:$0xff]
    %v5868 = vld [vmem:[%s5247 + $0x8] sm:$0xff]
    %v5869 = vld [vmem:[%s5247 + $0x10] sm:$0xff]
    %v5870 = vld [vmem:[%s5247 + $0x18] sm:$0xff]
    %v5871 = vld [vmem:[%s5247 + $0x20] sm:$0xff]
    %v5872 = vld [vmem:[%s5247 + $0x28] sm:$0xff]
    %v5873 = vld [vmem:[%s5247 + $0x30] sm:$0xff]
    %v5874 = vld [vmem:[%s5247 + $0x38] sm:$0xff]
    %v5875 = vld [vmem:[%s5247 + $0x40] sm:$0xff]
    %v5876 = vld [vmem:[%s5247 + $0x48] sm:$0xff]
    %v5878 = vsel %vm4927, %v5866, 0
    %5880 = vmatprep.subr.mxu0 0.0
    %5881 = vmatpush1.msra.mxu0 0.0
    %5882 = vmatprep.subr.mxu0 0.0
    %5883 = vmatpush1.msra.mxu0 0.0
    %5884 = vmatprep.subr.mxu0 0.0
    %5885 = vmatpush1.msra.mxu0 0.0
    %5886 = vmatprep.subr.mxu0 0.0
    %5887 = vmatpush1.msra.mxu0 0.0
    %5888 = vmatprep.subr.mxu0 0.0
    %5889 = vmatpush1.msra.mxu0 0.0
    %5890 = vmatprep.subr.mxu0 0.0
    %5891 = vmatpush1.msra.mxu0 0.0
    %5892 = vmatprep.subr.mxu0 0.0
    %5893 = vmatpush1.msra.mxu0 %v5876
    %5894 = vmatprep.subr.mxu0 0.0
    %5895 = vmatpush1.msra.mxu0 %v5875
    %5896 = vmatprep.subr.mxu0 0.0
    %5897 = vmatpush1.msra.mxu0 %v5874
    %5898 = vmatprep.subr.mxu0 0.0
    %5899 = vmatpush1.msra.mxu0 %v5873
    %5900 = vmatprep.subr.mxu0 0.0
    %5901 = vmatpush1.msra.mxu0 %v5872
    %5902 = vmatprep.subr.mxu0 0.0
    %5903 = vmatpush1.msra.mxu0 %v5871
    %5904 = vmatprep.subr.mxu0 0.0
    %5905 = vmatpush1.msra.mxu0 %v5870
    %5906 = vmatprep.subr.mxu0 0.0
    %5907 = vmatpush1.msra.mxu0 %v5869
    %5908 = vmatprep.subr.mxu0 0.0
    %5909 = vmatpush1.msra.mxu0 %v5868
    %5910 = vmatprep.subr.mxu0 0.0
    %5911 = vmatpush1.msra.mxu0 %v5867
    %5912 = vmatprep.subr.mxu0 0.0
    %5913 = vmatpush2.msra.mxu0 0.0
    %5914 = vmatprep.subr.mxu0 0.0
    %5915 = vmatpush2.msra.mxu0 0.0
    %5916 = vmatprep.subr.mxu0 0.0
    %5917 = vmatpush2.msra.mxu0 0.0
    %5918 = vmatprep.subr.mxu0 0.0
    %5919 = vmatpush2.msra.mxu0 0.0
    %5920 = vmatprep.subr.mxu0 0.0
    %5921 = vmatpush2.msra.mxu0 0.0
    %5922 = vmatprep.subr.mxu0 0.0
    %5923 = vmatpush2.msra.mxu0 0.0
    %5924 = vmatprep.subr.mxu0 0.0
    %5925 = vmatpush2.msra.mxu0 0.0
    %5926 = vmatprep.subr.mxu0 0.0
    %5927 = vmatpush2.msra.mxu0 0.0
    %5928 = vmatprep.subr.mxu0 0.0
    %5929 = vmatpush2.msra.mxu0 0.0
    %5930 = vmatprep.subr.mxu0 0.0
    %5931 = vmatpush2.msra.mxu0 0.0
    %5932 = vmatprep.subr.mxu0 0.0
    %5933 = vmatpush2.msra.mxu0 0.0
    %5934 = vmatprep.subr.mxu0 0.0
    %5935 = vmatpush2.msra.mxu0 0.0
    %5936 = vmatprep.subr.mxu0 0.0
    %5937 = vmatpush2.msra.mxu0 0.0
    %5938 = vmatprep.subr.mxu0 0.0
    %5939 = vmatpush2.msra.mxu0 0.0
    %5940 = vmatprep.subr.mxu0 0.0
    %5941 = vmatpush2.msra.mxu0 0.0
    %5942 = vmatprep.subr.mxu0 0.0
    %5943 = vmatpush2.msra.mxu0 0.0
    %5944 = vmatprep.mubr.f32.mxu0 0.0
    %5945 = vmatmul.mubr.f32.gmra.mxu0 %v5878
    %v5946 = vpop.f32.mrf.mxu0
    %v5947 = vadd.f32 0.0, %v5946
    %v5948 = vpop.f32.mrf.mxu0
    %5949 = vdwg.mxu0
    %v5950 = vadd.f32 %v5865, %v5947
    %v5951 = vld [vmem:[%s18] sm:$0x1]
    %v5952 = vadd.f32 %v5950, %v5951
    %v5953 = vmax.f32 %v5952, 0.0
    %v5954 = vld [vmem:[%s19] sm:$0xff]
    %v5955 = vld [vmem:[%s19 + $0x8] sm:$0xff]
    %v5956 = vld [vmem:[%s19 + $0x10] sm:$0xff]
    %v5957 = vld [vmem:[%s19 + $0x18] sm:$0xff]
    %v5958 = vld [vmem:[%s19 + $0x20] sm:$0xff]
    %v5959 = vld [vmem:[%s19 + $0x28] sm:$0xff]
    %v5960 = vld [vmem:[%s19 + $0x30] sm:$0xff]
    %v5961 = vld [vmem:[%s19 + $0x38] sm:$0xff]
    %v5962 = vld [vmem:[%s19 + $0x40] sm:$0xff]
    %v5963 = vld [vmem:[%s19 + $0x48] sm:$0xff]
    %v5964 = vld [vmem:[%s19 + $0x50] sm:$0xff]
    %v5965 = vld [vmem:[%s19 + $0x58] sm:$0xff]
    %v5966 = vld [vmem:[%s19 + $0x60] sm:$0xff]
    %v5967 = vld [vmem:[%s19 + $0x68] sm:$0xff]
    %v5968 = vld [vmem:[%s19 + $0x70] sm:$0xff]
    %v5969 = vld [vmem:[%s20] sm:$0x1]
    %v5971 = vsel %vm5351, %v5953, 0
    %5973 = vmatprep.subr.mxu0 0.0
    %5974 = vmatpush1.msra.mxu0 0.0
    %5975 = vmatprep.subr.mxu0 0.0
    %5976 = vmatpush1.msra.mxu0 %v5968
    %5977 = vmatprep.subr.mxu0 0.0
    %5978 = vmatpush1.msra.mxu0 %v5967
    %5979 = vmatprep.subr.mxu0 0.0
    %5980 = vmatpush1.msra.mxu0 %v5966
    %5981 = vmatprep.subr.mxu0 0.0
    %5982 = vmatpush1.msra.mxu0 %v5965
    %5983 = vmatprep.subr.mxu0 0.0
    %5984 = vmatpush1.msra.mxu0 %v5964
    %5985 = vmatprep.subr.mxu0 0.0
    %5986 = vmatpush1.msra.mxu0 %v5963
    %5987 = vmatprep.subr.mxu0 0.0
    %5988 = vmatpush1.msra.mxu0 %v5962
    %5989 = vmatprep.subr.mxu0 0.0
    %5990 = vmatpush1.msra.mxu0 %v5961
    %5991 = vmatprep.subr.mxu0 0.0
    %5992 = vmatpush1.msra.mxu0 %v5960
    %5993 = vmatprep.subr.mxu0 0.0
    %5994 = vmatpush1.msra.mxu0 %v5959
    %5995 = vmatprep.subr.mxu0 0.0
    %5996 = vmatpush1.msra.mxu0 %v5958
    %5997 = vmatprep.subr.mxu0 0.0
    %5998 = vmatpush1.msra.mxu0 %v5957
    %5999 = vmatprep.subr.mxu0 0.0
    %6000 = vmatpush1.msra.mxu0 %v5956
    %6001 = vmatprep.subr.mxu0 0.0
    %6002 = vmatpush1.msra.mxu0 %v5955
    %6003 = vmatprep.subr.mxu0 0.0
    %6004 = vmatpush1.msra.mxu0 %v5954
    %6005 = vmatprep.subr.mxu0 0.0
    %6006 = vmatpush2.msra.mxu0 0.0
    %6007 = vmatprep.subr.mxu0 0.0
    %6008 = vmatpush2.msra.mxu0 0.0
    %6009 = vmatprep.subr.mxu0 0.0
    %6010 = vmatpush2.msra.mxu0 0.0
    %6011 = vmatprep.subr.mxu0 0.0
    %6012 = vmatpush2.msra.mxu0 0.0
    %6013 = vmatprep.subr.mxu0 0.0
    %6014 = vmatpush2.msra.mxu0 0.0
    %6015 = vmatprep.subr.mxu0 0.0
    %6016 = vmatpush2.msra.mxu0 0.0
    %6017 = vmatprep.subr.mxu0 0.0
    %6018 = vmatpush2.msra.mxu0 0.0
    %6019 = vmatprep.subr.mxu0 0.0
    %6020 = vmatpush2.msra.mxu0 0.0
    %6021 = vmatprep.subr.mxu0 0.0
    %6022 = vmatpush2.msra.mxu0 0.0
    %6023 = vmatprep.subr.mxu0 0.0
    %6024 = vmatpush2.msra.mxu0 0.0
    %6025 = vmatprep.subr.mxu0 0.0
    %6026 = vmatpush2.msra.mxu0 0.0
    %6027 = vmatprep.subr.mxu0 0.0
    %6028 = vmatpush2.msra.mxu0 0.0
    %6029 = vmatprep.subr.mxu0 0.0
    %6030 = vmatpush2.msra.mxu0 0.0
    %6031 = vmatprep.subr.mxu0 0.0
    %6032 = vmatpush2.msra.mxu0 0.0
    %6033 = vmatprep.subr.mxu0 0.0
    %6034 = vmatpush2.msra.mxu0 0.0
    %6035 = vmatprep.subr.mxu0 0.0
    %6036 = vmatpush2.msra.mxu0 0.0
    %6037 = vmatprep.mubr.f32.mxu0 0.0
    %6038 = vmatmul.mubr.f32.gmra.mxu0 %v5971
    %v6039 = vpop.f32.mrf.mxu0
    %v6040 = vadd.f32 %v5969, %v6039
    %v6041 = vpop.f32.mrf.mxu0
    %6042 = vdwg.mxu0
    %v6043 = vmax.f32 %v6040, 0.0
    %v6044 = vld [vmem:[%s21] sm:$0xff]
    %v6045 = vld [vmem:[%s21 + $0x8] sm:$0xff]
    %v6046 = vld [vmem:[%s21 + $0x10] sm:$0xff]
    %v6047 = vld [vmem:[%s21 + $0x18] sm:$0xff]
    %v6048 = vld [vmem:[%s21 + $0x20] sm:$0xff]
    %v6049 = vld [vmem:[%s21 + $0x28] sm:$0xff]
    %v6050 = vld [vmem:[%s21 + $0x30] sm:$0xff]
    %v6051 = vld [vmem:[%s21 + $0x38] sm:$0xff]
    %v6052 = vld [vmem:[%s21 + $0x40] sm:$0xff]
    %v6053 = vld [vmem:[%s21 + $0x48] sm:$0xff]
    %v6054 = vld [vmem:[%s21 + $0x50] sm:$0xf]
    %v6055 = vld [vmem:[%s22] sm:$0x1]
    %v6057 = vsel %vm5438, %v6043, 0
    %v6060 = vsel %vm1278, %v6054, 0
    %6062 = vmatprep.subr.mxu0 0.0
    %6063 = vmatpush1.msra.mxu0 0.0
    %6064 = vmatprep.subr.mxu0 0.0
    %6065 = vmatpush1.msra.mxu0 0.0
    %6066 = vmatprep.subr.mxu0 0.0
    %6067 = vmatpush1.msra.mxu0 0.0
    %6068 = vmatprep.subr.mxu0 0.0
    %6069 = vmatpush1.msra.mxu0 0.0
    %6070 = vmatprep.subr.mxu0 0.0
    %6071 = vmatpush1.msra.mxu0 0.0
    %6072 = vmatprep.subr.mxu0 0.0
    %6073 = vmatpush1.msra.mxu0 %v6060
    %6074 = vmatprep.subr.mxu0 0.0
    %6075 = vmatpush1.msra.mxu0 %v6053
    %6076 = vmatprep.subr.mxu0 0.0
    %6077 = vmatpush1.msra.mxu0 %v6052
    %6078 = vmatprep.subr.mxu0 0.0
    %6079 = vmatpush1.msra.mxu0 %v6051
    %6080 = vmatprep.subr.mxu0 0.0
    %6081 = vmatpush1.msra.mxu0 %v6050
    %6082 = vmatprep.subr.mxu0 0.0
    %6083 = vmatpush1.msra.mxu0 %v6049
    %6084 = vmatprep.subr.mxu0 0.0
    %6085 = vmatpush1.msra.mxu0 %v6048
    %6086 = vmatprep.subr.mxu0 0.0
    %6087 = vmatpush1.msra.mxu0 %v6047
    %6088 = vmatprep.subr.mxu0 0.0
    %6089 = vmatpush1.msra.mxu0 %v6046
    %6090 = vmatprep.subr.mxu0 0.0
    %6091 = vmatpush1.msra.mxu0 %v6045
    %6092 = vmatprep.subr.mxu0 0.0
    %6093 = vmatpush1.msra.mxu0 %v6044
    %6094 = vmatprep.subr.mxu0 0.0
    %6095 = vmatpush2.msra.mxu0 0.0
    %6096 = vmatprep.subr.mxu0 0.0
    %6097 = vmatpush2.msra.mxu0 0.0
    %6098 = vmatprep.subr.mxu0 0.0
    %6099 = vmatpush2.msra.mxu0 0.0
    %6100 = vmatprep.subr.mxu0 0.0
    %6101 = vmatpush2.msra.mxu0 0.0
    %6102 = vmatprep.subr.mxu0 0.0
    %6103 = vmatpush2.msra.mxu0 0.0
    %6104 = vmatprep.subr.mxu0 0.0
    %6105 = vmatpush2.msra.mxu0 0.0
    %6106 = vmatprep.subr.mxu0 0.0
    %6107 = vmatpush2.msra.mxu0 0.0
    %6108 = vmatprep.subr.mxu0 0.0
    %6109 = vmatpush2.msra.mxu0 0.0
    %6110 = vmatprep.subr.mxu0 0.0
    %6111 = vmatpush2.msra.mxu0 0.0
    %6112 = vmatprep.subr.mxu0 0.0
    %6113 = vmatpush2.msra.mxu0 0.0
    %6114 = vmatprep.subr.mxu0 0.0
    %6115 = vmatpush2.msra.mxu0 0.0
    %6116 = vmatprep.subr.mxu0 0.0
    %6117 = vmatpush2.msra.mxu0 0.0
    %6118 = vmatprep.subr.mxu0 0.0
    %6119 = vmatpush2.msra.mxu0 0.0
    %6120 = vmatprep.subr.mxu0 0.0
    %6121 = vmatpush2.msra.mxu0 0.0
    %6122 = vmatprep.subr.mxu0 0.0
    %6123 = vmatpush2.msra.mxu0 0.0
    %6124 = vmatprep.subr.mxu0 0.0
    %6125 = vmatpush2.msra.mxu0 0.0
    %6126 = vmatprep.mubr.f32.mxu0 0.0
    %6127 = vmatmul.mubr.f32.gmra.mxu0 %v6057
    %v6128 = vpop.f32.mrf.mxu0
    %v6129 = vadd.f32 %v6055, %v6128
    %v6130 = vpop.f32.mrf.mxu0
    %6131 = vdwg.mxu0
    %v6132 = vsel %vm5515, %v6129, -inf
    %6133 = vmax.xlane.f32.xlu0 %v6132
    %v6134 = vpop.xlane.xlu0 %6133
    %v6135 = vsub.f32 %v6129, %v6134
    %v6136 = vmul.f32 %v6135, 1.442695
    %v6137 = vpow.pop %v6136
    %v6138 = vsel %vm5515, %v6137, 0.0
    %6139 = vadd.xlane.f32.xlu0 %v6138
    %v6140 = vpop.xlane.xlu0 %6139
    %v6141 = vrcp.pop %v6140
    %v6142 = vmul.f32 %v6137, %v6141
    %6143 = vst.msk [vmem:[#allocation5 + $0x1] sm:$0x1] %vm5515, %v6142
    // Predicated region
    $region94: #{forward.1} parent=1 // pred_check
      _
    $region95: #{forward.1} parent=1 // pred_check_branch
      %6145 = sbr.rel (0) target = $region97
    $region96: #{forward.1} parent=1 // pred_region
      %s6147 = ssub.s32 32, 32
      %6148 = vsyncadd [#allocation6], %s6147
      %s6150 = sshll.u32 [#allocation5], 4
      %s6151 = int_to_ptr.vmem [resolvable:$true] %s6150
      %6153 = dma.vmem_to_hbm [thread:$0]  %s6151, 32, %s23, [#allocation6]
    $region97: #{forward.1} parent=1 // pred_fallthru
      _
    // Predicated region
    $region98: #{forward.1} parent=1 // pred_check
      _
    $region99: #{forward.1} parent=1 // pred_check_branch
      %6155 = sbr.rel (0) target = $region101
    $region100: #{forward.1} parent=1 // pred_region
      %6156 = dma.done [#allocation6], 32
    $region101: #{forward.1} parent=1 // pred_fallthru
      _
    %6157 = vsyncpa [#allocation6], 1

</llo_original>
